<compile_context>
chip_gen: v5e
topology: v5e:2x2
jax: 0.10.0
libtpu: 0.0.40
codegen_flags: <defaults>
</compile_context>

<pallas_src>
import functools

import jax
import jax.numpy as jnp
from jax import lax
from jax.experimental import pallas as pl
from jax.experimental.pallas import tpu as pltpu

F32 = jnp.float32
VMEM = pltpu.MemorySpace.VMEM


# --------------------------------------------------------------------------------------
# Fused forward kernel
# --------------------------------------------------------------------------------------

def _san_fused_kernel(
    # ---- inputs ----
    xpad_ref, xq_ref,
    c1w_ref, c1b_ref, c2w_ref, c2b_ref, clsw_ref, clsb_ref, ifw_ref, ifb_ref,
    wih0_ref, whh0_ref, b0_ref, w1cat_ref, b1_ref, qfcw_ref, qfcb_ref,
    wi_ref, bi_ref, wq_ref, bq_ref, wa_ref, ba_ref, mlpw_ref, mlpb_ref,
    # ---- outputs ----
    out_ref, pi0_ref, pi1_ref,
    # ---- VMEM scratch ----
    xp0_s, pool1_s, pad2_s, pool2_s, p2b_s,
    *, B, T, R):
  H1 = W1 = 16      # conv1 spatial
  C1 = 8            # conv1 channels
  H2 = W2 = 8       # conv2 spatial (after pool1)
  C2 = 16           # conv2 channels
  H3 = W3 = 4       # after pool2

  # ---------- helpers ----------
  def conv3x3_relu(src_ref, Hc, Wc, w_ref, b_ref, w_off):
    # src_ref holds a zero-padded NHWC activation; the valid image starts at
    # row 1 and column `w_off` (column offset chosen so stores stay vreg-aligned).
    taps = [src_ref[:, dy:dy + Hc, w_off + dx - 1:w_off + dx - 1 + Wc, :]
            for dy in range(3) for dx in range(3)]
    cols = jnp.concatenate(taps, axis=-1)                       # (B, Hc, Wc, 9*Cin)
    cols2d = cols.reshape(B * Hc * Wc, cols.shape[-1])          # leading-dim collapse
    y = jnp.dot(cols2d, w_ref[...], preferred_element_type=jnp.float32) + b_ref[...]
    return jnp.maximum(y, 0.0)                                  # (B*Hc*Wc, Cout)

  def maxpool2x2(y2d, Hc, Wc, Cc, row_s):
    # y2d: (B*Hc*Wc, Cc), rows ordered (b, h, w).  2x2/stride-2 max pool.
    v = y2d.reshape(B, Hc // 2, 2, Wc, Cc)                      # leading-dim split
    hmax = jnp.maximum(v[:, :, 0], v[:, :, 1])                  # pool along H
    row_s[...] = hmax.reshape(B * (Hc // 2) * Wc, Cc)
    n = B * (Hc // 2) * (Wc // 2)
    even = row_s[pl.ds(0, n, 2), :]                             # strided sublane reads
    odd = row_s[pl.ds(1, n, 2), :]
    return jnp.maximum(even, odd)                               # (n, Cc), rows (b, ho, wo)

  # ---------- ImageEncoder (VGG-style stand-in backbone) ----------
  y1 = conv3x3_relu(xpad_ref, H1, W1, c1w_ref, c1b_ref, w_off=1)    # (512, 8)
  p1 = maxpool2x2(y1, H1, W1, C1, pool1_s)                          # (128, 8)

  pad2_s[...] = jnp.zeros(pad2_s.shape, pad2_s.dtype)
  pad2_s[:, 1:H2 + 1, 8:8 + W2, :] = p1.reshape(B, H2, W2, C1)      # aligned interior store
  y2 = conv3x3_relu(pad2_s, H2, W2, c2w_ref, c2b_ref, w_off=8)      # (128, 16)
  p2 = maxpool2x2(y2, H2, W2, C2, pool2_s)                          # (32, 16)

  # flatten spatial positions into lanes: flat[b, s*C2 + c] = p2[b*16 + s, c]
  p2b_s[...] = p2
  blocks = [p2b_s[pl.ds(s, B, H3 * W3), :] for s in range(H3 * W3)]
  flat = jnp.concatenate(blocks, axis=-1)                           # (B, 256)

  feat = jnp.maximum(
      jnp.dot(flat, clsw_ref[...], preferred_element_type=jnp.float32) + clsb_ref[...], 0.0)
  imf = jnp.dot(feat, ifw_ref[...], preferred_element_type=jnp.float32) + ifb_ref[...]
  # torch: x / x.norm(p=2, dim=1, keepdim=True); eps only guards exactly-zero rows
  inv = lax.rsqrt(jnp.maximum(jnp.sum(imf * imf, axis=1, keepdims=True), 1e-24))
  vi = imf * inv                                                    # (B, E) image feature

  # ---------- QuestionEncoder: tanh(word2vec) -> 2-layer LSTM -> fc ----------
  # layer-0 input projection batched over all T steps (one matmul)
  xp0_s[...] = (jnp.dot(jnp.tanh(xq_ref[...]), wih0_ref[...],
                        preferred_element_type=jnp.float32) + b0_ref[...])
  whh0 = whh0_ref[...]
  w1cat = w1cat_ref[...]
  b1 = b1_ref[...]

  h0 = jnp.zeros((B, R), jnp.float32)
  c0 = jnp.zeros((B, R), jnp.float32)
  h1 = jnp.zeros((B, R), jnp.float32)
  c1 = jnp.zeros((B, R), jnp.float32)

  def lstm_cell(g, c_prev):
    sg = jax.nn.sigmoid(g)                 # full-tile activations, then gate slices
    tg = jnp.tanh(g)
    i = sg[:, 0 * R:1 * R]                 # PyTorch gate order: i, f, g, o
    f = sg[:, 1 * R:2 * R]
    gg = tg[:, 2 * R:3 * R]
    o = sg[:, 3 * R:4 * R]
    c_new = f * c_prev + i * gg
    return o * jnp.tanh(c_new), c_new

  for t in range(T):                       # T static & small -> unrolled at trace time
    g0 = xp0_s[pl.ds(t * B, B), :] + jnp.dot(h0, whh0, preferred_element_type=jnp.float32)
    h0, c0 = lstm_cell(g0, c0)
    g1 = jnp.dot(jnp.concatenate([h0, h1], axis=1), w1cat,
                 preferred_element_type=jnp.float32) + b1
    h1, c1 = lstm_cell(g1, c1)

  # torch.cat((hidden, cell), 2).transpose(0, 1).reshape(B, -1)  ->  [h0 | c0 | h1 | c1]
  hc = jnp.concatenate([h0, c0, h1, c1], axis=1)                    # (B, 4R)
  u = jnp.dot(jnp.tanh(hc), qfcw_ref[...],
              preferred_element_type=jnp.float32) + qfcb_ref[...]   # (B, E) question feature

  # ---------- Stacked attention: 2 layers sharing one weight set ----------
  hi = jnp.dot(vi, wi_ref[...], preferred_element_type=jnp.float32) + bi_ref[...]   # (B, 512)
  wa = wa_ref[...]
  ba = ba_ref[...]
  pis = []
  for _ in range(2):
    hq = jnp.dot(u, wq_ref[...], preferred_element_type=jnp.float32) + bq_ref[...]  # (B, 512)
    ha = jnp.tanh(hi[None, :, :] + hq[:, None, :])                  # (B, B, 512) torch broadcast
    # Dropout(p=0.5): eval-mode identity
    s = jnp.sum(ha * wa, axis=-1) + ba                              # ff_attention -> (B, B)
    m = jnp.max(s, axis=1, keepdims=True)
    e = jnp.exp(s - m)
    pi = e * pl.reciprocal(jnp.sum(e, axis=1, keepdims=True), approx=True)  # softmax(dim=1)
    u = jnp.dot(pi, vi, preferred_element_type=jnp.float32) + u     # (pi * vi).sum(1) + vq
    pis.append(pi)

  # ---------- MLP head (Dropout eval == identity) ----------
  out_ref[...] = jnp.dot(u, mlpw_ref[...],
                         preferred_element_type=jnp.float32) + mlpb_ref[...]
  pi0_ref[...] = pis[0]
  pi1_ref[...] = pis[1]


def san_fused(xpad, xq, p):
  B = xpad.shape[0]
  assert xpad.shape == (B, 18, 18, 3)
  T = xq.shape[0] // B
  R = p["whh0"].shape[0]
  A = p["mlp_w"].shape[1]

  kernel = functools.partial(_san_fused_kernel, B=B, T=T, R=R)
  n_in = 25
  return pl.pallas_call(
      kernel,
      out_shape=(jax.ShapeDtypeStruct((B, A), F32),
                 jax.ShapeDtypeStruct((B, B), F32),
                 jax.ShapeDtypeStruct((B, B), F32)),
      in_specs=[pl.BlockSpec(memory_space=VMEM)] * n_in,
      out_specs=(pl.BlockSpec(memory_space=VMEM),
                 pl.BlockSpec(memory_space=VMEM),
                 pl.BlockSpec(memory_space=VMEM)),
      scratch_shapes=[
          pltpu.VMEM((T * B, 4 * R), F32),        # batched layer-0 LSTM input projection
          pltpu.VMEM((B * 8 * 16, 8), F32),       # pool1 row buffer
          pltpu.VMEM((B, 10, 24, 8), F32),        # zero-padded conv2 input (aligned store)
          pltpu.VMEM((B * 4 * 8, 16), F32),       # pool2 row buffer
          pltpu.VMEM((B * 16, 16), F32),          # pooled features for spatial flatten
      ],
  )(xpad, xq,
    p["conv1_w"], p["conv1_b"], p["conv2_w"], p["conv2_b"],
    p["cls_w"], p["cls_b"], p["imgfc_w"], p["imgfc_b"],
    p["wih0"], p["whh0"], p["b0"], p["w1cat"], p["b1"],
    p["qfc_w"], p["qfc_b"],
    p["wi"], p["bi"], p["wq"], p["bq"], p["wa"], p["ba"],
    p["mlp_w"], p["mlp_b"])


# --------------------------------------------------------------------------------------
# Parameters (deterministic, synthetic) and forward pass
# --------------------------------------------------------------------------------------

def init_params(key, *, vocab=50, Wd=16, R=16, E=32, A=10):
  ks = jax.random.split(key, 19)

  def lin(k, i, o, scale=0.05):
    kw, kb = jax.random.split(k)
    return (jax.random.normal(kw, (i, o), F32) * scale,
            jax.random.normal(kb, (1, o), F32) * scale)

  def conv_mat(k, cin, cout):
    # generate in torch OIHW layout, then pre-layout ONCE for the in-kernel im2col:
    # [Cout, Cin, kh, kw] -> row index (kh*3 + kw)*Cin + cin   (matches tap concat order)
    w_oihw = jax.random.normal(k, (cout, cin, 3, 3), F32) * 0.1
    return jnp.transpose(w_oihw, (2, 3, 1, 0)).reshape(9 * cin, cout)

  p = {}
  # mini VGG-style backbone (stand-in, see TODO at top of file)
  p["conv1_w"] = conv_mat(ks[0], 3, 8)
  p["conv1_b"] = jax.random.normal(ks[1], (1, 8), F32) * 0.1
  p["conv2_w"] = conv_mat(ks[2], 8, 16)
  p["conv2_b"] = jax.random.normal(ks[3], (1, 16), F32) * 0.1
  # VGG classifier stand-in; rows ordered to match the kernel's (h, w, c) spatial flatten
  # (a fixed permutation of torch's NCHW flatten of the same synthetic weight).
  p["cls_w"], p["cls_b"] = lin(ks[4], 4 * 4 * 16, 64)
  p["imgfc_w"], p["imgfc_b"] = lin(ks[5], 64, E)                 # ImageEncoder.fc
  # QuestionEncoder
  p["word2vec"] = jax.random.normal(ks[6], (vocab, Wd), F32) * 0.1
  p["wih0"] = jax.random.normal(ks[7], (Wd, 4 * R), F32) * 0.05
  p["whh0"] = jax.random.normal(ks[8], (R, 4 * R), F32) * 0.05
  p["b0"] = jax.random.normal(ks[9], (1, 4 * R), F32) * 0.05     # b_ih + b_hh combined
  wih1 = jax.random.normal(ks[10], (R, 4 * R), F32) * 0.05
  whh1 = jax.random.normal(ks[11], (R, 4 * R), F32) * 0.05
  p["w1cat"] = jnp.concatenate([wih1, whh1], axis=0)             # [Wih1; Whh1] pre-stacked
  p["b1"] = jax.random.normal(ks[12], (1, 4 * R), F32) * 0.05
  p["qfc_w"], p["qfc_b"] = lin(ks[13], 4 * R, E)                 # QuestionEncoder.fc
  # shared Attention(512, E) weights (both SAN layers are the same module instance)
  p["wi"], p["bi"] = lin(ks[14], E, 512)                         # ff_image
  p["wq"], p["bq"] = lin(ks[15], E, 512)                         # ff_questions
  p["wa"] = jax.random.normal(ks[16], (1, 512), F32) * 0.05      # ff_attention weight
  p["ba"] = jax.random.normal(ks[17], (1, 1), F32) * 0.05        # ff_attention bias
  # MLP head (Dropout + Linear(E, ans_vocab))
  p["mlp_w"], p["mlp_b"] = lin(ks[18], E, A)
  return p


def san_forward(params, img_nchw, qst):
  B = img_nchw.shape[0]
  T = qst.shape[1]
  # image: NCHW (torch) -> NHWC, zero-pad H/W by 1 for the in-kernel 3x3 im2col
  x = jnp.transpose(img_nchw, (0, 2, 3, 1)).astype(F32)
  xpad = jnp.pad(x, ((0, 0), (1, 1), (1, 1), (0, 0)))            # (B, 18, 18, 3)
  # question: embedding gather (glue), laid out time-major as (T*B, Wd)
  # TODO(synk): the embedding lookup stays in XLA glue; an in-kernel gather would need
  # per-token dynamic VMEM indexing and buys nothing at this size.
  emb = jnp.take(params["word2vec"], qst, axis=0)                # (B, T, Wd)
  xq = jnp.transpose(emb, (1, 0, 2)).reshape(T * B, emb.shape[-1])

  out, pi0, pi1 = san_fused(xpad, xq, params)
  return out, [pi0, pi1]


if __name__ == "__main__":
  key = jax.random.PRNGKey(0)
  kp, ki, kq = jax.random.split(key, 3)
  B, T, VOCAB, ANS = 2, 8, 50, 10

  params = init_params(kp, vocab=VOCAB, Wd=16, R=16, E=32, A=ANS)
  img = jax.random.normal(ki, (B, 3, 16, 16), F32)               # NCHW image
  qst = jax.random.randint(kq, (B, T), 0, VOCAB, dtype=jnp.int32)  # token ids

  out, attn_maps = jax.jit(san_forward)(params, img, qst)
  jax.block_until_ready(out)
  assert out.shape == (B, ANS) and out.dtype == F32
  assert attn_maps[0].shape == (B, B) and attn_maps[1].shape == (B, B)
  print("KERNEL_OK")
</pallas_src>

<mosaic_0001>
module attributes {stable_mosaic.version = 11 : i64} {
  func.func @_san_fused_kernel(%arg0: memref<2x18x18x3xf32, #tpu.memory_space<vmem>>, %arg1: memref<16x16xf32, #tpu.memory_space<vmem>>, %arg2: memref<27x8xf32, #tpu.memory_space<vmem>>, %arg3: memref<1x8xf32, #tpu.memory_space<vmem>>, %arg4: memref<72x16xf32, #tpu.memory_space<vmem>>, %arg5: memref<1x16xf32, #tpu.memory_space<vmem>>, %arg6: memref<256x64xf32, #tpu.memory_space<vmem>>, %arg7: memref<1x64xf32, #tpu.memory_space<vmem>>, %arg8: memref<64x32xf32, #tpu.memory_space<vmem>>, %arg9: memref<1x32xf32, #tpu.memory_space<vmem>>, %arg10: memref<16x64xf32, #tpu.memory_space<vmem>>, %arg11: memref<16x64xf32, #tpu.memory_space<vmem>>, %arg12: memref<1x64xf32, #tpu.memory_space<vmem>>, %arg13: memref<32x64xf32, #tpu.memory_space<vmem>>, %arg14: memref<1x64xf32, #tpu.memory_space<vmem>>, %arg15: memref<64x32xf32, #tpu.memory_space<vmem>>, %arg16: memref<1x32xf32, #tpu.memory_space<vmem>>, %arg17: memref<32x512xf32, #tpu.memory_space<vmem>>, %arg18: memref<1x512xf32, #tpu.memory_space<vmem>>, %arg19: memref<32x512xf32, #tpu.memory_space<vmem>>, %arg20: memref<1x512xf32, #tpu.memory_space<vmem>>, %arg21: memref<1x512xf32, #tpu.memory_space<vmem>>, %arg22: memref<1x1xf32, #tpu.memory_space<vmem>>, %arg23: memref<32x10xf32, #tpu.memory_space<vmem>>, %arg24: memref<1x10xf32, #tpu.memory_space<vmem>>, %arg25: memref<2x10xf32, #tpu.memory_space<vmem>>, %arg26: memref<2x2xf32, #tpu.memory_space<vmem>>, %arg27: memref<2x2xf32, #tpu.memory_space<vmem>>, %arg28: memref<16x64xf32, #tpu.memory_space<vmem>>, %arg29: memref<256x8xf32, #tpu.memory_space<vmem>>, %arg30: memref<2x10x24x8xf32, #tpu.memory_space<vmem>>, %arg31: memref<64x16xf32, #tpu.memory_space<vmem>>, %arg32: memref<32x16xf32, #tpu.memory_space<vmem>>) attributes {dimension_semantics = [], scalar_prefetch = 0 : i64, scratch_operands = 5 : i64, tpu.core_type = #tpu.core_type<tc>} {
    %c0 = arith.constant 0 : index
    %c0_0 = arith.constant 0 : index
    %c0_1 = arith.constant 0 : index
    %c0_2 = arith.constant 0 : index
    %0 = vector.load %arg0[%c0, %c0_0, %c0_1, %c0_2] : memref<2x18x18x3xf32, #tpu.memory_space<vmem>>, vector<2x16x16x3xf32>
    %c0_3 = arith.constant 0 : index
    %c0_4 = arith.constant 0 : index
    %c1 = arith.constant 1 : index
    %c0_5 = arith.constant 0 : index
    %1 = vector.load %arg0[%c0_3, %c0_4, %c1, %c0_5] : memref<2x18x18x3xf32, #tpu.memory_space<vmem>>, vector<2x16x16x3xf32>
    %c0_6 = arith.constant 0 : index
    %c0_7 = arith.constant 0 : index
    %c2 = arith.constant 2 : index
    %c0_8 = arith.constant 0 : index
    %2 = vector.load %arg0[%c0_6, %c0_7, %c2, %c0_8] : memref<2x18x18x3xf32, #tpu.memory_space<vmem>>, vector<2x16x16x3xf32>
    %c0_9 = arith.constant 0 : index
    %c1_10 = arith.constant 1 : index
    %c0_11 = arith.constant 0 : index
    %c0_12 = arith.constant 0 : index
    %3 = vector.load %arg0[%c0_9, %c1_10, %c0_11, %c0_12] : memref<2x18x18x3xf32, #tpu.memory_space<vmem>>, vector<2x16x16x3xf32>
    %c0_13 = arith.constant 0 : index
    %c1_14 = arith.constant 1 : index
    %c1_15 = arith.constant 1 : index
    %c0_16 = arith.constant 0 : index
    %4 = vector.load %arg0[%c0_13, %c1_14, %c1_15, %c0_16] : memref<2x18x18x3xf32, #tpu.memory_space<vmem>>, vector<2x16x16x3xf32>
    %c0_17 = arith.constant 0 : index
    %c1_18 = arith.constant 1 : index
    %c2_19 = arith.constant 2 : index
    %c0_20 = arith.constant 0 : index
    %5 = vector.load %arg0[%c0_17, %c1_18, %c2_19, %c0_20] : memref<2x18x18x3xf32, #tpu.memory_space<vmem>>, vector<2x16x16x3xf32>
    %c0_21 = arith.constant 0 : index
    %c2_22 = arith.constant 2 : index
    %c0_23 = arith.constant 0 : index
    %c0_24 = arith.constant 0 : index
    %6 = vector.load %arg0[%c0_21, %c2_22, %c0_23, %c0_24] : memref<2x18x18x3xf32, #tpu.memory_space<vmem>>, vector<2x16x16x3xf32>
    %c0_25 = arith.constant 0 : index
    %c2_26 = arith.constant 2 : index
    %c1_27 = arith.constant 1 : index
    %c0_28 = arith.constant 0 : index
    %7 = vector.load %arg0[%c0_25, %c2_26, %c1_27, %c0_28] : memref<2x18x18x3xf32, #tpu.memory_space<vmem>>, vector<2x16x16x3xf32>
    %c0_29 = arith.constant 0 : index
    %c2_30 = arith.constant 2 : index
    %c2_31 = arith.constant 2 : index
    %c0_32 = arith.constant 0 : index
    %8 = vector.load %arg0[%c0_29, %c2_30, %c2_31, %c0_32] : memref<2x18x18x3xf32, #tpu.memory_space<vmem>>, vector<2x16x16x3xf32>
    %9 = tpu.concatenate %0, %1, %2, %3, %4, %5, %6, %7, %8 in 3 : vector<2x16x16x3xf32>, vector<2x16x16x3xf32>, vector<2x16x16x3xf32>, vector<2x16x16x3xf32>, vector<2x16x16x3xf32>, vector<2x16x16x3xf32>, vector<2x16x16x3xf32>, vector<2x16x16x3xf32>, vector<2x16x16x3xf32> -> vector<2x16x16x27xf32>
    %10 = vector.shape_cast %9 : vector<2x16x16x27xf32> to vector<512x27xf32>
    %c0_33 = arith.constant 0 : index
    %c0_34 = arith.constant 0 : index
    %11 = vector.load %arg2[%c0_33, %c0_34] : memref<27x8xf32, #tpu.memory_space<vmem>>, vector<27x8xf32>
    %cst = arith.constant dense<0.000000e+00> : vector<512x8xf32>
    %12 = tpu.matmul %10, %11, %cst {dimension_numbers = #tpu.dot_dimension_numbers<[1], [0], [0], [1], [0, 0, 1, 1], [], []>} : vector<512x27xf32>, vector<27x8xf32>, vector<512x8xf32> -> vector<512x8xf32>
    %c0_35 = arith.constant 0 : index
    %c0_36 = arith.constant 0 : index
    %13 = vector.load %arg3[%c0_35, %c0_36] : memref<1x8xf32, #tpu.memory_space<vmem>>, vector<1x8xf32>
    %14 = vector.broadcast %13 : vector<1x8xf32> to vector<512x8xf32>
    %15 = arith.addf %12, %14 : vector<512x8xf32>
    %cst_37 = arith.constant 0.000000e+00 : f32
    %16 = vector.broadcast %cst_37 : f32 to vector<512x8xf32>
    %17 = arith.maximumf %15, %16 : vector<512x8xf32>
    %18 = vector.shape_cast %17 : vector<512x8xf32> to vector<2x8x2x16x8xf32>
    %19 = vector.extract_strided_slice %18 {offsets = [0, 0, 0, 0, 0], sizes = [2, 8, 1, 16, 8], strides = [1, 1, 1, 1, 1]} : vector<2x8x2x16x8xf32> to vector<2x8x1x16x8xf32>
    %20 = vector.shape_cast %19 : vector<2x8x1x16x8xf32> to vector<2x8x16x8xf32>
    %21 = vector.extract_strided_slice %18 {offsets = [0, 0, 1, 0, 0], sizes = [2, 8, 1, 16, 8], strides = [1, 1, 1, 1, 1]} : vector<2x8x2x16x8xf32> to vector<2x8x1x16x8xf32>
    %22 = vector.shape_cast %21 : vector<2x8x1x16x8xf32> to vector<2x8x16x8xf32>
    %23 = arith.maximumf %20, %22 : vector<2x8x16x8xf32>
    %24 = vector.shape_cast %23 : vector<2x8x16x8xf32> to vector<256x8xf32>
    %c0_38 = arith.constant 0 : index
    %c0_39 = arith.constant 0 : index
    %25 = vector.load %arg29[%c0_38, %c0_39] : memref<256x8xf32, #tpu.memory_space<vmem>>, vector<256x8xf32>
    tpu.vector_store %arg29[%c0_38, %c0_39], %24 {strides = array<i32>} : memref<256x8xf32, #tpu.memory_space<vmem>>, vector<256x8xf32>,
    %c0_40 = arith.constant 0 : index
    %c0_41 = arith.constant 0 : index
    %26 = tpu.strided_load %arg29[%c0_40, %c0_41] {strides = array<i32: 2, 1>} : memref<256x8xf32, #tpu.memory_space<vmem>>, vector<128x8xf32>
    %c1_42 = arith.constant 1 : index
    %c0_43 = arith.constant 0 : index
    %27 = tpu.strided_load %arg29[%c1_42, %c0_43] {strides = array<i32: 2, 1>} : memref<256x8xf32, #tpu.memory_space<vmem>>, vector<128x8xf32>
    %28 = arith.maximumf %26, %27 : vector<128x8xf32>
    %cst_44 = arith.constant 0.000000e+00 : f32
    %29 = vector.broadcast %cst_44 : f32 to vector<2x10x24x8xf32>
    %c0_45 = arith.constant 0 : index
    %c0_46 = arith.constant 0 : index
    %c0_47 = arith.constant 0 : index
    %c0_48 = arith.constant 0 : index
    %30 = vector.load %arg30[%c0_45, %c0_46, %c0_47, %c0_48] : memref<2x10x24x8xf32, #tpu.memory_space<vmem>>, vector<2x10x24x8xf32>
    tpu.vector_store %arg30[%c0_45, %c0_46, %c0_47, %c0_48], %29 {strides = array<i32>} : memref<2x10x24x8xf32, #tpu.memory_space<vmem>>, vector<2x10x24x8xf32>,
    %31 = vector.shape_cast %28 : vector<128x8xf32> to vector<2x8x8x8xf32>
    %c0_49 = arith.constant 0 : index
    %c1_50 = arith.constant 1 : index
    %c8 = arith.constant 8 : index
    %c0_51 = arith.constant 0 : index
    %32 = vector.load %arg30[%c0_49, %c1_50, %c8, %c0_51] : memref<2x10x24x8xf32, #tpu.memory_space<vmem>>, vector<2x8x8x8xf32>
    tpu.vector_store %arg30[%c0_49, %c1_50, %c8, %c0_51], %31 {strides = array<i32>} : memref<2x10x24x8xf32, #tpu.memory_space<vmem>>, vector<2x8x8x8xf32>,
    %c0_52 = arith.constant 0 : index
    %c0_53 = arith.constant 0 : index
    %c7 = arith.constant 7 : index
    %c0_54 = arith.constant 0 : index
    %33 = vector.load %arg30[%c0_52, %c0_53, %c7, %c0_54] : memref<2x10x24x8xf32, #tpu.memory_space<vmem>>, vector<2x8x8x8xf32>
    %c0_55 = arith.constant 0 : index
    %c0_56 = arith.constant 0 : index
    %c8_57 = arith.constant 8 : index
    %c0_58 = arith.constant 0 : index
    %34 = vector.load %arg30[%c0_55, %c0_56, %c8_57, %c0_58] : memref<2x10x24x8xf32, #tpu.memory_space<vmem>>, vector<2x8x8x8xf32>
    %c0_59 = arith.constant 0 : index
    %c0_60 = arith.constant 0 : index
    %c9 = arith.constant 9 : index
    %c0_61 = arith.constant 0 : index
    %35 = vector.load %arg30[%c0_59, %c0_60, %c9, %c0_61] : memref<2x10x24x8xf32, #tpu.memory_space<vmem>>, vector<2x8x8x8xf32>
    %c0_62 = arith.constant 0 : index
    %c1_63 = arith.constant 1 : index
    %c7_64 = arith.constant 7 : index
    %c0_65 = arith.constant 0 : index
    %36 = vector.load %arg30[%c0_62, %c1_63, %c7_64, %c0_65] : memref<2x10x24x8xf32, #tpu.memory_space<vmem>>, vector<2x8x8x8xf32>
    %c0_66 = arith.constant 0 : index
    %c1_67 = arith.constant 1 : index
    %c8_68 = arith.constant 8 : index
    %c0_69 = arith.constant 0 : index
    %37 = vector.load %arg30[%c0_66, %c1_67, %c8_68, %c0_69] : memref<2x10x24x8xf32, #tpu.memory_space<vmem>>, vector<2x8x8x8xf32>
    %c0_70 = arith.constant 0 : index
    %c1_71 = arith.constant 1 : index
    %c9_72 = arith.constant 9 : index
    %c0_73 = arith.constant 0 : index
    %38 = vector.load %arg30[%c0_70, %c1_71, %c9_72, %c0_73] : memref<2x10x24x8xf32, #tpu.memory_space<vmem>>, vector<2x8x8x8xf32>
    %c0_74 = arith.constant 0 : index
    %c2_75 = arith.constant 2 : index
    %c7_76 = arith.constant 7 : index
    %c0_77 = arith.constant 0 : index
    %39 = vector.load %arg30[%c0_74, %c2_75, %c7_76, %c0_77] : memref<2x10x24x8xf32, #tpu.memory_space<vmem>>, vector<2x8x8x8xf32>
    %c0_78 = arith.constant 0 : index
    %c2_79 = arith.constant 2 : index
    %c8_80 = arith.constant 8 : index
    %c0_81 = arith.constant 0 : index
    %40 = vector.load %arg30[%c0_78, %c2_79, %c8_80, %c0_81] : memref<2x10x24x8xf32, #tpu.memory_space<vmem>>, vector<2x8x8x8xf32>
    %c0_82 = arith.constant 0 : index
    %c2_83 = arith.constant 2 : index
    %c9_84 = arith.constant 9 : index
    %c0_85 = arith.constant 0 : index
    %41 = vector.load %arg30[%c0_82, %c2_83, %c9_84, %c0_85] : memref<2x10x24x8xf32, #tpu.memory_space<vmem>>, vector<2x8x8x8xf32>
    %42 = tpu.concatenate %33, %34, %35, %36, %37, %38, %39, %40, %41 in 3 : vector<2x8x8x8xf32>, vector<2x8x8x8xf32>, vector<2x8x8x8xf32>, vector<2x8x8x8xf32>, vector<2x8x8x8xf32>, vector<2x8x8x8xf32>, vector<2x8x8x8xf32>, vector<2x8x8x8xf32>, vector<2x8x8x8xf32> -> vector<2x8x8x72xf32>
    %43 = vector.shape_cast %42 : vector<2x8x8x72xf32> to vector<128x72xf32>
    %c0_86 = arith.constant 0 : index
    %c0_87 = arith.constant 0 : index
    %44 = vector.load %arg4[%c0_86, %c0_87] : memref<72x16xf32, #tpu.memory_space<vmem>>, vector<72x16xf32>
    %cst_88 = arith.constant dense<0.000000e+00> : vector<128x16xf32>
    %45 = tpu.matmul %43, %44, %cst_88 {dimension_numbers = #tpu.dot_dimension_numbers<[1], [0], [0], [1], [0, 0, 1, 1], [], []>} : vector<128x72xf32>, vector<72x16xf32>, vector<128x16xf32> -> vector<128x16xf32>
    %c0_89 = arith.constant 0 : index
    %c0_90 = arith.constant 0 : index
    %46 = vector.load %arg5[%c0_89, %c0_90] : memref<1x16xf32, #tpu.memory_space<vmem>>, vector<1x16xf32>
    %47 = vector.broadcast %46 : vector<1x16xf32> to vector<128x16xf32>
    %48 = arith.addf %45, %47 : vector<128x16xf32>
    %cst_91 = arith.constant 0.000000e+00 : f32
    %49 = vector.broadcast %cst_91 : f32 to vector<128x16xf32>
    %50 = arith.maximumf %48, %49 : vector<128x16xf32>
    %51 = vector.shape_cast %50 : vector<128x16xf32> to vector<2x4x2x8x16xf32>
    %52 = vector.extract_strided_slice %51 {offsets = [0, 0, 0, 0, 0], sizes = [2, 4, 1, 8, 16], strides = [1, 1, 1, 1, 1]} : vector<2x4x2x8x16xf32> to vector<2x4x1x8x16xf32>
    %53 = vector.shape_cast %52 : vector<2x4x1x8x16xf32> to vector<2x4x8x16xf32>
    %54 = vector.extract_strided_slice %51 {offsets = [0, 0, 1, 0, 0], sizes = [2, 4, 1, 8, 16], strides = [1, 1, 1, 1, 1]} : vector<2x4x2x8x16xf32> to vector<2x4x1x8x16xf32>
    %55 = vector.shape_cast %54 : vector<2x4x1x8x16xf32> to vector<2x4x8x16xf32>
    %56 = arith.maximumf %53, %55 : vector<2x4x8x16xf32>
    %57 = vector.shape_cast %56 : vector<2x4x8x16xf32> to vector<64x16xf32>
    %c0_92 = arith.constant 0 : index
    %c0_93 = arith.constant 0 : index
    %58 = vector.load %arg31[%c0_92, %c0_93] : memref<64x16xf32, #tpu.memory_space<vmem>>, vector<64x16xf32>
    tpu.vector_store %arg31[%c0_92, %c0_93], %57 {strides = array<i32>} : memref<64x16xf32, #tpu.memory_space<vmem>>, vector<64x16xf32>,
    %c0_94 = arith.constant 0 : index
    %c0_95 = arith.constant 0 : index
    %59 = tpu.strided_load %arg31[%c0_94, %c0_95] {strides = array<i32: 2, 1>} : memref<64x16xf32, #tpu.memory_space<vmem>>, vector<32x16xf32>
    %c1_96 = arith.constant 1 : index
    %c0_97 = arith.constant 0 : index
    %60 = tpu.strided_load %arg31[%c1_96, %c0_97] {strides = array<i32: 2, 1>} : memref<64x16xf32, #tpu.memory_space<vmem>>, vector<32x16xf32>
    %61 = arith.maximumf %59, %60 : vector<32x16xf32>
    %c0_98 = arith.constant 0 : index
    %c0_99 = arith.constant 0 : index
    %62 = vector.load %arg32[%c0_98, %c0_99] : memref<32x16xf32, #tpu.memory_space<vmem>>, vector<32x16xf32>
    tpu.vector_store %arg32[%c0_98, %c0_99], %61 {strides = array<i32>} : memref<32x16xf32, #tpu.memory_space<vmem>>, vector<32x16xf32>,
    %c0_100 = arith.constant 0 : index
    %c0_101 = arith.constant 0 : index
    %63 = tpu.strided_load %arg32[%c0_100, %c0_101] {strides = array<i32: 16, 1>} : memref<32x16xf32, #tpu.memory_space<vmem>>, vector<2x16xf32>
    %c1_102 = arith.constant 1 : index
    %c0_103 = arith.constant 0 : index
    %64 = tpu.strided_load %arg32[%c1_102, %c0_103] {strides = array<i32: 16, 1>} : memref<32x16xf32, #tpu.memory_space<vmem>>, vector<2x16xf32>
    %c2_104 = arith.constant 2 : index
    %c0_105 = arith.constant 0 : index
    %65 = tpu.strided_load %arg32[%c2_104, %c0_105] {strides = array<i32: 16, 1>} : memref<32x16xf32, #tpu.memory_space<vmem>>, vector<2x16xf32>
    %c3 = arith.constant 3 : index
    %c0_106 = arith.constant 0 : index
    %66 = tpu.strided_load %arg32[%c3, %c0_106] {strides = array<i32: 16, 1>} : memref<32x16xf32, #tpu.memory_space<vmem>>, vector<2x16xf32>
    %c4 = arith.constant 4 : index
    %c0_107 = arith.constant 0 : index
    %67 = tpu.strided_load %arg32[%c4, %c0_107] {strides = array<i32: 16, 1>} : memref<32x16xf32, #tpu.memory_space<vmem>>, vector<2x16xf32>
    %c5 = arith.constant 5 : index
    %c0_108 = arith.constant 0 : index
    %68 = tpu.strided_load %arg32[%c5, %c0_108] {strides = array<i32: 16, 1>} : memref<32x16xf32, #tpu.memory_space<vmem>>, vector<2x16xf32>
    %c6 = arith.constant 6 : index
    %c0_109 = arith.constant 0 : index
    %69 = tpu.strided_load %arg32[%c6, %c0_109] {strides = array<i32: 16, 1>} : memref<32x16xf32, #tpu.memory_space<vmem>>, vector<2x16xf32>
    %c7_110 = arith.constant 7 : index
    %c0_111 = arith.constant 0 : index
    %70 = tpu.strided_load %arg32[%c7_110, %c0_111] {strides = array<i32: 16, 1>} : memref<32x16xf32, #tpu.memory_space<vmem>>, vector<2x16xf32>
    %c8_112 = arith.constant 8 : index
    %c0_113 = arith.constant 0 : index
    %71 = tpu.strided_load %arg32[%c8_112, %c0_113] {strides = array<i32: 16, 1>} : memref<32x16xf32, #tpu.memory_space<vmem>>, vector<2x16xf32>
    %c9_114 = arith.constant 9 : index
    %c0_115 = arith.constant 0 : index
    %72 = tpu.strided_load %arg32[%c9_114, %c0_115] {strides = array<i32: 16, 1>} : memref<32x16xf32, #tpu.memory_space<vmem>>, vector<2x16xf32>
    %c10 = arith.constant 10 : index
    %c0_116 = arith.constant 0 : index
    %73 = tpu.strided_load %arg32[%c10, %c0_116] {strides = array<i32: 16, 1>} : memref<32x16xf32, #tpu.memory_space<vmem>>, vector<2x16xf32>
    %c11 = arith.constant 11 : index
    %c0_117 = arith.constant 0 : index
    %74 = tpu.strided_load %arg32[%c11, %c0_117] {strides = array<i32: 16, 1>} : memref<32x16xf32, #tpu.memory_space<vmem>>, vector<2x16xf32>
    %c12 = arith.constant 12 : index
    %c0_118 = arith.constant 0 : index
    %75 = tpu.strided_load %arg32[%c12, %c0_118] {strides = array<i32: 16, 1>} : memref<32x16xf32, #tpu.memory_space<vmem>>, vector<2x16xf32>
    %c13 = arith.constant 13 : index
    %c0_119 = arith.constant 0 : index
    %76 = tpu.strided_load %arg32[%c13, %c0_119] {strides = array<i32: 16, 1>} : memref<32x16xf32, #tpu.memory_space<vmem>>, vector<2x16xf32>
    %c14 = arith.constant 14 : index
    %c0_120 = arith.constant 0 : index
    %77 = tpu.strided_load %arg32[%c14, %c0_120] {strides = array<i32: 16, 1>} : memref<32x16xf32, #tpu.memory_space<vmem>>, vector<2x16xf32>
    %c15 = arith.constant 15 : index
    %c0_121 = arith.constant 0 : index
    %78 = tpu.strided_load %arg32[%c15, %c0_121] {strides = array<i32: 16, 1>} : memref<32x16xf32, #tpu.memory_space<vmem>>, vector<2x16xf32>
    %79 = tpu.concatenate %63, %64, %65, %66, %67, %68, %69, %70, %71, %72, %73, %74, %75, %76, %77, %78 in 1 : vector<2x16xf32>, vector<2x16xf32>, vector<2x16xf32>, vector<2x16xf32>, vector<2x16xf32>, vector<2x16xf32>, vector<2x16xf32>, vector<2x16xf32>, vector<2x16xf32>, vector<2x16xf32>, vector<2x16xf32>, vector<2x16xf32>, vector<2x16xf32>, vector<2x16xf32>, vector<2x16xf32>, vector<2x16xf32> -> vector<2x256xf32>
    %c0_122 = arith.constant 0 : index
    %c0_123 = arith.constant 0 : index
    %80 = vector.load %arg6[%c0_122, %c0_123] : memref<256x64xf32, #tpu.memory_space<vmem>>, vector<256x64xf32>
    %cst_124 = arith.constant dense<0.000000e+00> : vector<2x64xf32>
    %81 = tpu.matmul %79, %80, %cst_124 {dimension_numbers = #tpu.dot_dimension_numbers<[1], [0], [0], [1], [0, 0, 1, 1], [], []>} : vector<2x256xf32>, vector<256x64xf32>, vector<2x64xf32> -> vector<2x64xf32>
    %c0_125 = arith.constant 0 : index
    %c0_126 = arith.constant 0 : index
    %82 = vector.load %arg7[%c0_125, %c0_126] : memref<1x64xf32, #tpu.memory_space<vmem>>, vector<1x64xf32>
    %83 = vector.broadcast %82 : vector<1x64xf32> to vector<2x64xf32>
    %84 = arith.addf %81, %83 : vector<2x64xf32>
    %cst_127 = arith.constant 0.000000e+00 : f32
    %85 = vector.broadcast %cst_127 : f32 to vector<2x64xf32>
    %86 = arith.maximumf %84, %85 : vector<2x64xf32>
    %c0_128 = arith.constant 0 : index
    %c0_129 = arith.constant 0 : index
    %87 = vector.load %arg8[%c0_128, %c0_129] : memref<64x32xf32, #tpu.memory_space<vmem>>, vector<64x32xf32>
    %cst_130 = arith.constant dense<0.000000e+00> : vector<2x32xf32>
    %88 = tpu.matmul %86, %87, %cst_130 {dimension_numbers = #tpu.dot_dimension_numbers<[1], [0], [0], [1], [0, 0, 1, 1], [], []>} : vector<2x64xf32>, vector<64x32xf32>, vector<2x32xf32> -> vector<2x32xf32>
    %c0_131 = arith.constant 0 : index
    %c0_132 = arith.constant 0 : index
    %89 = vector.load %arg9[%c0_131, %c0_132] : memref<1x32xf32, #tpu.memory_space<vmem>>, vector<1x32xf32>
    %90 = vector.broadcast %89 : vector<1x32xf32> to vector<2x32xf32>
    %91 = arith.addf %88, %90 : vector<2x32xf32>
    %92 = arith.mulf %91, %91 : vector<2x32xf32>
    %cst_133 = arith.constant dense<0.000000e+00> : vector<2xf32>
    %93 = vector.multi_reduction <add>, %92, %cst_133 [1] : vector<2x32xf32> to vector<2xf32>
    %94 = vector.shape_cast %93 : vector<2xf32> to vector<2x1xf32>
    %cst_134 = arith.constant 1.000000e-24 : f32
    %95 = vector.broadcast %cst_134 : f32 to vector<2x1xf32>
    %96 = arith.maximumf %94, %95 : vector<2x1xf32>
    %97 = math.rsqrt %96 : vector<2x1xf32>
    %98 = vector.broadcast %97 : vector<2x1xf32> to vector<2x32xf32>
    %99 = arith.mulf %91, %98 : vector<2x32xf32>
    %c0_135 = arith.constant 0 : index
    %c0_136 = arith.constant 0 : index
    %100 = vector.load %arg1[%c0_135, %c0_136] : memref<16x16xf32, #tpu.memory_space<vmem>>, vector<16x16xf32>
    %101 = math.tanh %100 : vector<16x16xf32>
    %c0_137 = arith.constant 0 : index
    %c0_138 = arith.constant 0 : index
    %102 = vector.load %arg10[%c0_137, %c0_138] : memref<16x64xf32, #tpu.memory_space<vmem>>, vector<16x64xf32>
    %cst_139 = arith.constant dense<0.000000e+00> : vector<16x64xf32>
    %103 = tpu.matmul %101, %102, %cst_139 {dimension_numbers = #tpu.dot_dimension_numbers<[1], [0], [0], [1], [0, 0, 1, 1], [], []>} : vector<16x16xf32>, vector<16x64xf32>, vector<16x64xf32> -> vector<16x64xf32>
    %c0_140 = arith.constant 0 : index
    %c0_141 = arith.constant 0 : index
    %104 = vector.load %arg12[%c0_140, %c0_141] : memref<1x64xf32, #tpu.memory_space<vmem>>, vector<1x64xf32>
    %105 = vector.broadcast %104 : vector<1x64xf32> to vector<16x64xf32>
    %106 = arith.addf %103, %105 : vector<16x64xf32>
    %c0_142 = arith.constant 0 : index
    %c0_143 = arith.constant 0 : index
    %107 = vector.load %arg28[%c0_142, %c0_143] : memref<16x64xf32, #tpu.memory_space<vmem>>, vector<16x64xf32>
    tpu.vector_store %arg28[%c0_142, %c0_143], %106 {strides = array<i32>} : memref<16x64xf32, #tpu.memory_space<vmem>>, vector<16x64xf32>,
    %c0_144 = arith.constant 0 : index
    %c0_145 = arith.constant 0 : index
    %108 = vector.load %arg11[%c0_144, %c0_145] : memref<16x64xf32, #tpu.memory_space<vmem>>, vector<16x64xf32>
    %c0_146 = arith.constant 0 : index
    %c0_147 = arith.constant 0 : index
    %109 = vector.load %arg13[%c0_146, %c0_147] : memref<32x64xf32, #tpu.memory_space<vmem>>, vector<32x64xf32>
    %c0_148 = arith.constant 0 : index
    %c0_149 = arith.constant 0 : index
    %110 = vector.load %arg14[%c0_148, %c0_149] : memref<1x64xf32, #tpu.memory_space<vmem>>, vector<1x64xf32>
    %cst_150 = arith.constant 0.000000e+00 : f32
    %111 = vector.broadcast %cst_150 : f32 to vector<2x16xf32>
    %cst_151 = arith.constant 0.000000e+00 : f32
    %112 = vector.broadcast %cst_151 : f32 to vector<2x16xf32>
    %cst_152 = arith.constant 0.000000e+00 : f32
    %113 = vector.broadcast %cst_152 : f32 to vector<2x16xf32>
    %cst_153 = arith.constant 0.000000e+00 : f32
    %114 = vector.broadcast %cst_153 : f32 to vector<2x16xf32>
    %c0_154 = arith.constant 0 : index
    %c0_155 = arith.constant 0 : index
    %115 = vector.load %arg28[%c0_154, %c0_155] : memref<16x64xf32, #tpu.memory_space<vmem>>, vector<2x64xf32>
    %cst_156 = arith.constant dense<0.000000e+00> : vector<2x64xf32>
    %116 = tpu.matmul %111, %108, %cst_156 {dimension_numbers = #tpu.dot_dimension_numbers<[1], [0], [0], [1], [0, 0, 1, 1], [], []>} : vector<2x16xf32>, vector<16x64xf32>, vector<2x64xf32> -> vector<2x64xf32>
    %117 = arith.addf %115, %116 : vector<2x64xf32>
    %118 = arith.negf %117 : vector<2x64xf32>
    %119 = math.exp %118 : vector<2x64xf32>
    %cst_157 = arith.constant 1.000000e+00 : f32
    %120 = vector.broadcast %cst_157 : f32 to vector<2x64xf32>
    %121 = arith.addf %120, %119 : vector<2x64xf32>
    %122 = arith.divf %120, %121 : vector<2x64xf32>
    %123 = math.tanh %117 : vector<2x64xf32>
    %124 = vector.extract_strided_slice %122 {offsets = [0, 0], sizes = [2, 16], strides = [1, 1]} : vector<2x64xf32> to vector<2x16xf32>
    %125 = vector.extract_strided_slice %122 {offsets = [0, 16], sizes = [2, 16], strides = [1, 1]} : vector<2x64xf32> to vector<2x16xf32>
    %126 = vector.extract_strided_slice %123 {offsets = [0, 32], sizes = [2, 16], strides = [1, 1]} : vector<2x64xf32> to vector<2x16xf32>
    %127 = vector.extract_strided_slice %122 {offsets = [0, 48], sizes = [2, 16], strides = [1, 1]} : vector<2x64xf32> to vector<2x16xf32>
    %128 = arith.mulf %125, %112 : vector<2x16xf32>
    %129 = arith.mulf %124, %126 : vector<2x16xf32>
    %130 = arith.addf %128, %129 : vector<2x16xf32>
    %131 = math.tanh %130 : vector<2x16xf32>
    %132 = arith.mulf %127, %131 : vector<2x16xf32>
    %133 = tpu.concatenate %132, %113 in 1 : vector<2x16xf32>, vector<2x16xf32> -> vector<2x32xf32>
    %cst_158 = arith.constant dense<0.000000e+00> : vector<2x64xf32>
    %134 = tpu.matmul %133, %109, %cst_158 {dimension_numbers = #tpu.dot_dimension_numbers<[1], [0], [0], [1], [0, 0, 1, 1], [], []>} : vector<2x32xf32>, vector<32x64xf32>, vector<2x64xf32> -> vector<2x64xf32>
    %135 = vector.broadcast %110 : vector<1x64xf32> to vector<2x64xf32>
    %136 = arith.addf %134, %135 : vector<2x64xf32>
    %137 = arith.negf %136 : vector<2x64xf32>
    %138 = math.exp %137 : vector<2x64xf32>
    %cst_159 = arith.constant 1.000000e+00 : f32
    %139 = vector.broadcast %cst_159 : f32 to vector<2x64xf32>
    %140 = arith.addf %139, %138 : vector<2x64xf32>
    %141 = arith.divf %139, %140 : vector<2x64xf32>
    %142 = math.tanh %136 : vector<2x64xf32>
    %143 = vector.extract_strided_slice %141 {offsets = [0, 0], sizes = [2, 16], strides = [1, 1]} : vector<2x64xf32> to vector<2x16xf32>
    %144 = vector.extract_strided_slice %141 {offsets = [0, 16], sizes = [2, 16], strides = [1, 1]} : vector<2x64xf32> to vector<2x16xf32>
    %145 = vector.extract_strided_slice %142 {offsets = [0, 32], sizes = [2, 16], strides = [1, 1]} : vector<2x64xf32> to vector<2x16xf32>
    %146 = vector.extract_strided_slice %141 {offsets = [0, 48], sizes = [2, 16], strides = [1, 1]} : vector<2x64xf32> to vector<2x16xf32>
    %147 = arith.mulf %144, %114 : vector<2x16xf32>
    %148 = arith.mulf %143, %145 : vector<2x16xf32>
    %149 = arith.addf %147, %148 : vector<2x16xf32>
    %150 = math.tanh %149 : vector<2x16xf32>
    %151 = arith.mulf %146, %150 : vector<2x16xf32>
    %c2_160 = arith.constant 2 : index
    %c0_161 = arith.constant 0 : index
    %152 = vector.load %arg28[%c2_160, %c0_161] : memref<16x64xf32, #tpu.memory_space<vmem>>, vector<2x64xf32>
    %cst_162 = arith.constant dense<0.000000e+00> : vector<2x64xf32>
    %153 = tpu.matmul %132, %108, %cst_162 {dimension_numbers = #tpu.dot_dimension_numbers<[1], [0], [0], [1], [0, 0, 1, 1], [], []>} : vector<2x16xf32>, vector<16x64xf32>, vector<2x64xf32> -> vector<2x64xf32>
    %154 = arith.addf %152, %153 : vector<2x64xf32>
    %155 = arith.negf %154 : vector<2x64xf32>
    %156 = math.exp %155 : vector<2x64xf32>
    %cst_163 = arith.constant 1.000000e+00 : f32
    %157 = vector.broadcast %cst_163 : f32 to vector<2x64xf32>
    %158 = arith.addf %157, %156 : vector<2x64xf32>
    %159 = arith.divf %157, %158 : vector<2x64xf32>
    %160 = math.tanh %154 : vector<2x64xf32>
    %161 = vector.extract_strided_slice %159 {offsets = [0, 0], sizes = [2, 16], strides = [1, 1]} : vector<2x64xf32> to vector<2x16xf32>
    %162 = vector.extract_strided_slice %159 {offsets = [0, 16], sizes = [2, 16], strides = [1, 1]} : vector<2x64xf32> to vector<2x16xf32>
    %163 = vector.extract_strided_slice %160 {offsets = [0, 32], sizes = [2, 16], strides = [1, 1]} : vector<2x64xf32> to vector<2x16xf32>
    %164 = vector.extract_strided_slice %159 {offsets = [0, 48], sizes = [2, 16], strides = [1, 1]} : vector<2x64xf32> to vector<2x16xf32>
    %165 = arith.mulf %162, %130 : vector<2x16xf32>
    %166 = arith.mulf %161, %163 : vector<2x16xf32>
    %167 = arith.addf %165, %166 : vector<2x16xf32>
    %168 = math.tanh %167 : vector<2x16xf32>
    %169 = arith.mulf %164, %168 : vector<2x16xf32>
    %170 = tpu.concatenate %169, %151 in 1 : vector<2x16xf32>, vector<2x16xf32> -> vector<2x32xf32>
    %cst_164 = arith.constant dense<0.000000e+00> : vector<2x64xf32>
    %171 = tpu.matmul %170, %109, %cst_164 {dimension_numbers = #tpu.dot_dimension_numbers<[1], [0], [0], [1], [0, 0, 1, 1], [], []>} : vector<2x32xf32>, vector<32x64xf32>, vector<2x64xf32> -> vector<2x64xf32>
    %172 = vector.broadcast %110 : vector<1x64xf32> to vector<2x64xf32>
    %173 = arith.addf %171, %172 : vector<2x64xf32>
    %174 = arith.negf %173 : vector<2x64xf32>
    %175 = math.exp %174 : vector<2x64xf32>
    %cst_165 = arith.constant 1.000000e+00 : f32
    %176 = vector.broadcast %cst_165 : f32 to vector<2x64xf32>
    %177 = arith.addf %176, %175 : vector<2x64xf32>
    %178 = arith.divf %176, %177 : vector<2x64xf32>
    %179 = math.tanh %173 : vector<2x64xf32>
    %180 = vector.extract_strided_slice %178 {offsets = [0, 0], sizes = [2, 16], strides = [1, 1]} : vector<2x64xf32> to vector<2x16xf32>
    %181 = vector.extract_strided_slice %178 {offsets = [0, 16], sizes = [2, 16], strides = [1, 1]} : vector<2x64xf32> to vector<2x16xf32>
    %182 = vector.extract_strided_slice %179 {offsets = [0, 32], sizes = [2, 16], strides = [1, 1]} : vector<2x64xf32> to vector<2x16xf32>
    %183 = vector.extract_strided_slice %178 {offsets = [0, 48], sizes = [2, 16], strides = [1, 1]} : vector<2x64xf32> to vector<2x16xf32>
    %184 = arith.mulf %181, %149 : vector<2x16xf32>
    %185 = arith.mulf %180, %182 : vector<2x16xf32>
    %186 = arith.addf %184, %185 : vector<2x16xf32>
    %187 = math.tanh %186 : vector<2x16xf32>
    %188 = arith.mulf %183, %187 : vector<2x16xf32>
    %c4_166 = arith.constant 4 : index
    %c0_167 = arith.constant 0 : index
    %189 = vector.load %arg28[%c4_166, %c0_167] : memref<16x64xf32, #tpu.memory_space<vmem>>, vector<2x64xf32>
    %cst_168 = arith.constant dense<0.000000e+00> : vector<2x64xf32>
    %190 = tpu.matmul %169, %108, %cst_168 {dimension_numbers = #tpu.dot_dimension_numbers<[1], [0], [0], [1], [0, 0, 1, 1], [], []>} : vector<2x16xf32>, vector<16x64xf32>, vector<2x64xf32> -> vector<2x64xf32>
    %191 = arith.addf %189, %190 : vector<2x64xf32>
    %192 = arith.negf %191 : vector<2x64xf32>
    %193 = math.exp %192 : vector<2x64xf32>
    %cst_169 = arith.constant 1.000000e+00 : f32
    %194 = vector.broadcast %cst_169 : f32 to vector<2x64xf32>
    %195 = arith.addf %194, %193 : vector<2x64xf32>
    %196 = arith.divf %194, %195 : vector<2x64xf32>
    %197 = math.tanh %191 : vector<2x64xf32>
    %198 = vector.extract_strided_slice %196 {offsets = [0, 0], sizes = [2, 16], strides = [1, 1]} : vector<2x64xf32> to vector<2x16xf32>
    %199 = vector.extract_strided_slice %196 {offsets = [0, 16], sizes = [2, 16], strides = [1, 1]} : vector<2x64xf32> to vector<2x16xf32>
    %200 = vector.extract_strided_slice %197 {offsets = [0, 32], sizes = [2, 16], strides = [1, 1]} : vector<2x64xf32> to vector<2x16xf32>
    %201 = vector.extract_strided_slice %196 {offsets = [0, 48], sizes = [2, 16], strides = [1, 1]} : vector<2x64xf32> to vector<2x16xf32>
    %202 = arith.mulf %199, %167 : vector<2x16xf32>
    %203 = arith.mulf %198, %200 : vector<2x16xf32>
    %204 = arith.addf %202, %203 : vector<2x16xf32>
    %205 = math.tanh %204 : vector<2x16xf32>
    %206 = arith.mulf %201, %205 : vector<2x16xf32>
    %207 = tpu.concatenate %206, %188 in 1 : vector<2x16xf32>, vector<2x16xf32> -> vector<2x32xf32>
    %cst_170 = arith.constant dense<0.000000e+00> : vector<2x64xf32>
    %208 = tpu.matmul %207, %109, %cst_170 {dimension_numbers = #tpu.dot_dimension_numbers<[1], [0], [0], [1], [0, 0, 1, 1], [], []>} : vector<2x32xf32>, vector<32x64xf32>, vector<2x64xf32> -> vector<2x64xf32>
    %209 = vector.broadcast %110 : vector<1x64xf32> to vector<2x64xf32>
    %210 = arith.addf %208, %209 : vector<2x64xf32>
    %211 = arith.negf %210 : vector<2x64xf32>
    %212 = math.exp %211 : vector<2x64xf32>
    %cst_171 = arith.constant 1.000000e+00 : f32
    %213 = vector.broadcast %cst_171 : f32 to vector<2x64xf32>
    %214 = arith.addf %213, %212 : vector<2x64xf32>
    %215 = arith.divf %213, %214 : vector<2x64xf32>
    %216 = math.tanh %210 : vector<2x64xf32>
    %217 = vector.extract_strided_slice %215 {offsets = [0, 0], sizes = [2, 16], strides = [1, 1]} : vector<2x64xf32> to vector<2x16xf32>
    %218 = vector.extract_strided_slice %215 {offsets = [0, 16], sizes = [2, 16], strides = [1, 1]} : vector<2x64xf32> to vector<2x16xf32>
    %219 = vector.extract_strided_slice %216 {offsets = [0, 32], sizes = [2, 16], strides = [1, 1]} : vector<2x64xf32> to vector<2x16xf32>
    %220 = vector.extract_strided_slice %215 {offsets = [0, 48], sizes = [2, 16], strides = [1, 1]} : vector<2x64xf32> to vector<2x16xf32>
    %221 = arith.mulf %218, %186 : vector<2x16xf32>
    %222 = arith.mulf %217, %219 : vector<2x16xf32>
    %223 = arith.addf %221, %222 : vector<2x16xf32>
    %224 = math.tanh %223 : vector<2x16xf32>
    %225 = arith.mulf %220, %224 : vector<2x16xf32>
    %c6_172 = arith.constant 6 : index
    %c0_173 = arith.constant 0 : index
    %226 = vector.load %arg28[%c6_172, %c0_173] : memref<16x64xf32, #tpu.memory_space<vmem>>, vector<2x64xf32>
    %cst_174 = arith.constant dense<0.000000e+00> : vector<2x64xf32>
    %227 = tpu.matmul %206, %108, %cst_174 {dimension_numbers = #tpu.dot_dimension_numbers<[1], [0], [0], [1], [0, 0, 1, 1], [], []>} : vector<2x16xf32>, vector<16x64xf32>, vector<2x64xf32> -> vector<2x64xf32>
    %228 = arith.addf %226, %227 : vector<2x64xf32>
    %229 = arith.negf %228 : vector<2x64xf32>
    %230 = math.exp %229 : vector<2x64xf32>
    %cst_175 = arith.constant 1.000000e+00 : f32
    %231 = vector.broadcast %cst_175 : f32 to vector<2x64xf32>
    %232 = arith.addf %231, %230 : vector<2x64xf32>
    %233 = arith.divf %231, %232 : vector<2x64xf32>
    %234 = math.tanh %228 : vector<2x64xf32>
    %235 = vector.extract_strided_slice %233 {offsets = [0, 0], sizes = [2, 16], strides = [1, 1]} : vector<2x64xf32> to vector<2x16xf32>
    %236 = vector.extract_strided_slice %233 {offsets = [0, 16], sizes = [2, 16], strides = [1, 1]} : vector<2x64xf32> to vector<2x16xf32>
    %237 = vector.extract_strided_slice %234 {offsets = [0, 32], sizes = [2, 16], strides = [1, 1]} : vector<2x64xf32> to vector<2x16xf32>
    %238 = vector.extract_strided_slice %233 {offsets = [0, 48], sizes = [2, 16], strides = [1, 1]} : vector<2x64xf32> to vector<2x16xf32>
    %239 = arith.mulf %236, %204 : vector<2x16xf32>
    %240 = arith.mulf %235, %237 : vector<2x16xf32>
    %241 = arith.addf %239, %240 : vector<2x16xf32>
    %242 = math.tanh %241 : vector<2x16xf32>
    %243 = arith.mulf %238, %242 : vector<2x16xf32>
    %244 = tpu.concatenate %243, %225 in 1 : vector<2x16xf32>, vector<2x16xf32> -> vector<2x32xf32>
    %cst_176 = arith.constant dense<0.000000e+00> : vector<2x64xf32>
    %245 = tpu.matmul %244, %109, %cst_176 {dimension_numbers = #tpu.dot_dimension_numbers<[1], [0], [0], [1], [0, 0, 1, 1], [], []>} : vector<2x32xf32>, vector<32x64xf32>, vector<2x64xf32> -> vector<2x64xf32>
    %246 = vector.broadcast %110 : vector<1x64xf32> to vector<2x64xf32>
    %247 = arith.addf %245, %246 : vector<2x64xf32>
    %248 = arith.negf %247 : vector<2x64xf32>
    %249 = math.exp %248 : vector<2x64xf32>
    %cst_177 = arith.constant 1.000000e+00 : f32
    %250 = vector.broadcast %cst_177 : f32 to vector<2x64xf32>
    %251 = arith.addf %250, %249 : vector<2x64xf32>
    %252 = arith.divf %250, %251 : vector<2x64xf32>
    %253 = math.tanh %247 : vector<2x64xf32>
    %254 = vector.extract_strided_slice %252 {offsets = [0, 0], sizes = [2, 16], strides = [1, 1]} : vector<2x64xf32> to vector<2x16xf32>
    %255 = vector.extract_strided_slice %252 {offsets = [0, 16], sizes = [2, 16], strides = [1, 1]} : vector<2x64xf32> to vector<2x16xf32>
    %256 = vector.extract_strided_slice %253 {offsets = [0, 32], sizes = [2, 16], strides = [1, 1]} : vector<2x64xf32> to vector<2x16xf32>
    %257 = vector.extract_strided_slice %252 {offsets = [0, 48], sizes = [2, 16], strides = [1, 1]} : vector<2x64xf32> to vector<2x16xf32>
    %258 = arith.mulf %255, %223 : vector<2x16xf32>
    %259 = arith.mulf %254, %256 : vector<2x16xf32>
    %260 = arith.addf %258, %259 : vector<2x16xf32>
    %261 = math.tanh %260 : vector<2x16xf32>
    %262 = arith.mulf %257, %261 : vector<2x16xf32>
    %c8_178 = arith.constant 8 : index
    %c0_179 = arith.constant 0 : index
    %263 = vector.load %arg28[%c8_178, %c0_179] : memref<16x64xf32, #tpu.memory_space<vmem>>, vector<2x64xf32>
    %cst_180 = arith.constant dense<0.000000e+00> : vector<2x64xf32>
    %264 = tpu.matmul %243, %108, %cst_180 {dimension_numbers = #tpu.dot_dimension_numbers<[1], [0], [0], [1], [0, 0, 1, 1], [], []>} : vector<2x16xf32>, vector<16x64xf32>, vector<2x64xf32> -> vector<2x64xf32>
    %265 = arith.addf %263, %264 : vector<2x64xf32>
    %266 = arith.negf %265 : vector<2x64xf32>
    %267 = math.exp %266 : vector<2x64xf32>
    %cst_181 = arith.constant 1.000000e+00 : f32
    %268 = vector.broadcast %cst_181 : f32 to vector<2x64xf32>
    %269 = arith.addf %268, %267 : vector<2x64xf32>
    %270 = arith.divf %268, %269 : vector<2x64xf32>
    %271 = math.tanh %265 : vector<2x64xf32>
    %272 = vector.extract_strided_slice %270 {offsets = [0, 0], sizes = [2, 16], strides = [1, 1]} : vector<2x64xf32> to vector<2x16xf32>
    %273 = vector.extract_strided_slice %270 {offsets = [0, 16], sizes = [2, 16], strides = [1, 1]} : vector<2x64xf32> to vector<2x16xf32>
    %274 = vector.extract_strided_slice %271 {offsets = [0, 32], sizes = [2, 16], strides = [1, 1]} : vector<2x64xf32> to vector<2x16xf32>
    %275 = vector.extract_strided_slice %270 {offsets = [0, 48], sizes = [2, 16], strides = [1, 1]} : vector<2x64xf32> to vector<2x16xf32>
    %276 = arith.mulf %273, %241 : vector<2x16xf32>
    %277 = arith.mulf %272, %274 : vector<2x16xf32>
    %278 = arith.addf %276, %277 : vector<2x16xf32>
    %279 = math.tanh %278 : vector<2x16xf32>
    %280 = arith.mulf %275, %279 : vector<2x16xf32>
    %281 = tpu.concatenate %280, %262 in 1 : vector<2x16xf32>, vector<2x16xf32> -> vector<2x32xf32>
    %cst_182 = arith.constant dense<0.000000e+00> : vector<2x64xf32>
    %282 = tpu.matmul %281, %109, %cst_182 {dimension_numbers = #tpu.dot_dimension_numbers<[1], [0], [0], [1], [0, 0, 1, 1], [], []>} : vector<2x32xf32>, vector<32x64xf32>, vector<2x64xf32> -> vector<2x64xf32>
    %283 = vector.broadcast %110 : vector<1x64xf32> to vector<2x64xf32>
    %284 = arith.addf %282, %283 : vector<2x64xf32>
    %285 = arith.negf %284 : vector<2x64xf32>
    %286 = math.exp %285 : vector<2x64xf32>
    %cst_183 = arith.constant 1.000000e+00 : f32
    %287 = vector.broadcast %cst_183 : f32 to vector<2x64xf32>
    %288 = arith.addf %287, %286 : vector<2x64xf32>
    %289 = arith.divf %287, %288 : vector<2x64xf32>
    %290 = math.tanh %284 : vector<2x64xf32>
    %291 = vector.extract_strided_slice %289 {offsets = [0, 0], sizes = [2, 16], strides = [1, 1]} : vector<2x64xf32> to vector<2x16xf32>
    %292 = vector.extract_strided_slice %289 {offsets = [0, 16], sizes = [2, 16], strides = [1, 1]} : vector<2x64xf32> to vector<2x16xf32>
    %293 = vector.extract_strided_slice %290 {offsets = [0, 32], sizes = [2, 16], strides = [1, 1]} : vector<2x64xf32> to vector<2x16xf32>
    %294 = vector.extract_strided_slice %289 {offsets = [0, 48], sizes = [2, 16], strides = [1, 1]} : vector<2x64xf32> to vector<2x16xf32>
    %295 = arith.mulf %292, %260 : vector<2x16xf32>
    %296 = arith.mulf %291, %293 : vector<2x16xf32>
    %297 = arith.addf %295, %296 : vector<2x16xf32>
    %298 = math.tanh %297 : vector<2x16xf32>
    %299 = arith.mulf %294, %298 : vector<2x16xf32>
    %c10_184 = arith.constant 10 : index
    %c0_185 = arith.constant 0 : index
    %300 = vector.load %arg28[%c10_184, %c0_185] : memref<16x64xf32, #tpu.memory_space<vmem>>, vector<2x64xf32>
    %cst_186 = arith.constant dense<0.000000e+00> : vector<2x64xf32>
    %301 = tpu.matmul %280, %108, %cst_186 {dimension_numbers = #tpu.dot_dimension_numbers<[1], [0], [0], [1], [0, 0, 1, 1], [], []>} : vector<2x16xf32>, vector<16x64xf32>, vector<2x64xf32> -> vector<2x64xf32>
    %302 = arith.addf %300, %301 : vector<2x64xf32>
    %303 = arith.negf %302 : vector<2x64xf32>
    %304 = math.exp %303 : vector<2x64xf32>
    %cst_187 = arith.constant 1.000000e+00 : f32
    %305 = vector.broadcast %cst_187 : f32 to vector<2x64xf32>
    %306 = arith.addf %305, %304 : vector<2x64xf32>
    %307 = arith.divf %305, %306 : vector<2x64xf32>
    %308 = math.tanh %302 : vector<2x64xf32>
    %309 = vector.extract_strided_slice %307 {offsets = [0, 0], sizes = [2, 16], strides = [1, 1]} : vector<2x64xf32> to vector<2x16xf32>
    %310 = vector.extract_strided_slice %307 {offsets = [0, 16], sizes = [2, 16], strides = [1, 1]} : vector<2x64xf32> to vector<2x16xf32>
    %311 = vector.extract_strided_slice %308 {offsets = [0, 32], sizes = [2, 16], strides = [1, 1]} : vector<2x64xf32> to vector<2x16xf32>
    %312 = vector.extract_strided_slice %307 {offsets = [0, 48], sizes = [2, 16], strides = [1, 1]} : vector<2x64xf32> to vector<2x16xf32>
    %313 = arith.mulf %310, %278 : vector<2x16xf32>
    %314 = arith.mulf %309, %311 : vector<2x16xf32>
    %315 = arith.addf %313, %314 : vector<2x16xf32>
    %316 = math.tanh %315 : vector<2x16xf32>
    %317 = arith.mulf %312, %316 : vector<2x16xf32>
    %318 = tpu.concatenate %317, %299 in 1 : vector<2x16xf32>, vector<2x16xf32> -> vector<2x32xf32>
    %cst_188 = arith.constant dense<0.000000e+00> : vector<2x64xf32>
    %319 = tpu.matmul %318, %109, %cst_188 {dimension_numbers = #tpu.dot_dimension_numbers<[1], [0], [0], [1], [0, 0, 1, 1], [], []>} : vector<2x32xf32>, vector<32x64xf32>, vector<2x64xf32> -> vector<2x64xf32>
    %320 = vector.broadcast %110 : vector<1x64xf32> to vector<2x64xf32>
    %321 = arith.addf %319, %320 : vector<2x64xf32>
    %322 = arith.negf %321 : vector<2x64xf32>
    %323 = math.exp %322 : vector<2x64xf32>
    %cst_189 = arith.constant 1.000000e+00 : f32
    %324 = vector.broadcast %cst_189 : f32 to vector<2x64xf32>
    %325 = arith.addf %324, %323 : vector<2x64xf32>
    %326 = arith.divf %324, %325 : vector<2x64xf32>
    %327 = math.tanh %321 : vector<2x64xf32>
    %328 = vector.extract_strided_slice %326 {offsets = [0, 0], sizes = [2, 16], strides = [1, 1]} : vector<2x64xf32> to vector<2x16xf32>
    %329 = vector.extract_strided_slice %326 {offsets = [0, 16], sizes = [2, 16], strides = [1, 1]} : vector<2x64xf32> to vector<2x16xf32>
    %330 = vector.extract_strided_slice %327 {offsets = [0, 32], sizes = [2, 16], strides = [1, 1]} : vector<2x64xf32> to vector<2x16xf32>
    %331 = vector.extract_strided_slice %326 {offsets = [0, 48], sizes = [2, 16], strides = [1, 1]} : vector<2x64xf32> to vector<2x16xf32>
    %332 = arith.mulf %329, %297 : vector<2x16xf32>
    %333 = arith.mulf %328, %330 : vector<2x16xf32>
    %334 = arith.addf %332, %333 : vector<2x16xf32>
    %335 = math.tanh %334 : vector<2x16xf32>
    %336 = arith.mulf %331, %335 : vector<2x16xf32>
    %c12_190 = arith.constant 12 : index
    %c0_191 = arith.constant 0 : index
    %337 = vector.load %arg28[%c12_190, %c0_191] : memref<16x64xf32, #tpu.memory_space<vmem>>, vector<2x64xf32>
    %cst_192 = arith.constant dense<0.000000e+00> : vector<2x64xf32>
    %338 = tpu.matmul %317, %108, %cst_192 {dimension_numbers = #tpu.dot_dimension_numbers<[1], [0], [0], [1], [0, 0, 1, 1], [], []>} : vector<2x16xf32>, vector<16x64xf32>, vector<2x64xf32> -> vector<2x64xf32>
    %339 = arith.addf %337, %338 : vector<2x64xf32>
    %340 = arith.negf %339 : vector<2x64xf32>
    %341 = math.exp %340 : vector<2x64xf32>
    %cst_193 = arith.constant 1.000000e+00 : f32
    %342 = vector.broadcast %cst_193 : f32 to vector<2x64xf32>
    %343 = arith.addf %342, %341 : vector<2x64xf32>
    %344 = arith.divf %342, %343 : vector<2x64xf32>
    %345 = math.tanh %339 : vector<2x64xf32>
    %346 = vector.extract_strided_slice %344 {offsets = [0, 0], sizes = [2, 16], strides = [1, 1]} : vector<2x64xf32> to vector<2x16xf32>
    %347 = vector.extract_strided_slice %344 {offsets = [0, 16], sizes = [2, 16], strides = [1, 1]} : vector<2x64xf32> to vector<2x16xf32>
    %348 = vector.extract_strided_slice %345 {offsets = [0, 32], sizes = [2, 16], strides = [1, 1]} : vector<2x64xf32> to vector<2x16xf32>
    %349 = vector.extract_strided_slice %344 {offsets = [0, 48], sizes = [2, 16], strides = [1, 1]} : vector<2x64xf32> to vector<2x16xf32>
    %350 = arith.mulf %347, %315 : vector<2x16xf32>
    %351 = arith.mulf %346, %348 : vector<2x16xf32>
    %352 = arith.addf %350, %351 : vector<2x16xf32>
    %353 = math.tanh %352 : vector<2x16xf32>
    %354 = arith.mulf %349, %353 : vector<2x16xf32>
    %355 = tpu.concatenate %354, %336 in 1 : vector<2x16xf32>, vector<2x16xf32> -> vector<2x32xf32>
    %cst_194 = arith.constant dense<0.000000e+00> : vector<2x64xf32>
    %356 = tpu.matmul %355, %109, %cst_194 {dimension_numbers = #tpu.dot_dimension_numbers<[1], [0], [0], [1], [0, 0, 1, 1], [], []>} : vector<2x32xf32>, vector<32x64xf32>, vector<2x64xf32> -> vector<2x64xf32>
    %357 = vector.broadcast %110 : vector<1x64xf32> to vector<2x64xf32>
    %358 = arith.addf %356, %357 : vector<2x64xf32>
    %359 = arith.negf %358 : vector<2x64xf32>
    %360 = math.exp %359 : vector<2x64xf32>
    %cst_195 = arith.constant 1.000000e+00 : f32
    %361 = vector.broadcast %cst_195 : f32 to vector<2x64xf32>
    %362 = arith.addf %361, %360 : vector<2x64xf32>
    %363 = arith.divf %361, %362 : vector<2x64xf32>
    %364 = math.tanh %358 : vector<2x64xf32>
    %365 = vector.extract_strided_slice %363 {offsets = [0, 0], sizes = [2, 16], strides = [1, 1]} : vector<2x64xf32> to vector<2x16xf32>
    %366 = vector.extract_strided_slice %363 {offsets = [0, 16], sizes = [2, 16], strides = [1, 1]} : vector<2x64xf32> to vector<2x16xf32>
    %367 = vector.extract_strided_slice %364 {offsets = [0, 32], sizes = [2, 16], strides = [1, 1]} : vector<2x64xf32> to vector<2x16xf32>
    %368 = vector.extract_strided_slice %363 {offsets = [0, 48], sizes = [2, 16], strides = [1, 1]} : vector<2x64xf32> to vector<2x16xf32>
    %369 = arith.mulf %366, %334 : vector<2x16xf32>
    %370 = arith.mulf %365, %367 : vector<2x16xf32>
    %371 = arith.addf %369, %370 : vector<2x16xf32>
    %372 = math.tanh %371 : vector<2x16xf32>
    %373 = arith.mulf %368, %372 : vector<2x16xf32>
    %c14_196 = arith.constant 14 : index
    %c0_197 = arith.constant 0 : index
    %374 = vector.load %arg28[%c14_196, %c0_197] : memref<16x64xf32, #tpu.memory_space<vmem>>, vector<2x64xf32>
    %cst_198 = arith.constant dense<0.000000e+00> : vector<2x64xf32>
    %375 = tpu.matmul %354, %108, %cst_198 {dimension_numbers = #tpu.dot_dimension_numbers<[1], [0], [0], [1], [0, 0, 1, 1], [], []>} : vector<2x16xf32>, vector<16x64xf32>, vector<2x64xf32> -> vector<2x64xf32>
    %376 = arith.addf %374, %375 : vector<2x64xf32>
    %377 = arith.negf %376 : vector<2x64xf32>
    %378 = math.exp %377 : vector<2x64xf32>
    %cst_199 = arith.constant 1.000000e+00 : f32
    %379 = vector.broadcast %cst_199 : f32 to vector<2x64xf32>
    %380 = arith.addf %379, %378 : vector<2x64xf32>
    %381 = arith.divf %379, %380 : vector<2x64xf32>
    %382 = math.tanh %376 : vector<2x64xf32>
    %383 = vector.extract_strided_slice %381 {offsets = [0, 0], sizes = [2, 16], strides = [1, 1]} : vector<2x64xf32> to vector<2x16xf32>
    %384 = vector.extract_strided_slice %381 {offsets = [0, 16], sizes = [2, 16], strides = [1, 1]} : vector<2x64xf32> to vector<2x16xf32>
    %385 = vector.extract_strided_slice %382 {offsets = [0, 32], sizes = [2, 16], strides = [1, 1]} : vector<2x64xf32> to vector<2x16xf32>
    %386 = vector.extract_strided_slice %381 {offsets = [0, 48], sizes = [2, 16], strides = [1, 1]} : vector<2x64xf32> to vector<2x16xf32>
    %387 = arith.mulf %384, %352 : vector<2x16xf32>
    %388 = arith.mulf %383, %385 : vector<2x16xf32>
    %389 = arith.addf %387, %388 : vector<2x16xf32>
    %390 = math.tanh %389 : vector<2x16xf32>
    %391 = arith.mulf %386, %390 : vector<2x16xf32>
    %392 = tpu.concatenate %391, %373 in 1 : vector<2x16xf32>, vector<2x16xf32> -> vector<2x32xf32>
    %cst_200 = arith.constant dense<0.000000e+00> : vector<2x64xf32>
    %393 = tpu.matmul %392, %109, %cst_200 {dimension_numbers = #tpu.dot_dimension_numbers<[1], [0], [0], [1], [0, 0, 1, 1], [], []>} : vector<2x32xf32>, vector<32x64xf32>, vector<2x64xf32> -> vector<2x64xf32>
    %394 = vector.broadcast %110 : vector<1x64xf32> to vector<2x64xf32>
    %395 = arith.addf %393, %394 : vector<2x64xf32>
    %396 = arith.negf %395 : vector<2x64xf32>
    %397 = math.exp %396 : vector<2x64xf32>
    %cst_201 = arith.constant 1.000000e+00 : f32
    %398 = vector.broadcast %cst_201 : f32 to vector<2x64xf32>
    %399 = arith.addf %398, %397 : vector<2x64xf32>
    %400 = arith.divf %398, %399 : vector<2x64xf32>
    %401 = math.tanh %395 : vector<2x64xf32>
    %402 = vector.extract_strided_slice %400 {offsets = [0, 0], sizes = [2, 16], strides = [1, 1]} : vector<2x64xf32> to vector<2x16xf32>
    %403 = vector.extract_strided_slice %400 {offsets = [0, 16], sizes = [2, 16], strides = [1, 1]} : vector<2x64xf32> to vector<2x16xf32>
    %404 = vector.extract_strided_slice %401 {offsets = [0, 32], sizes = [2, 16], strides = [1, 1]} : vector<2x64xf32> to vector<2x16xf32>
    %405 = vector.extract_strided_slice %400 {offsets = [0, 48], sizes = [2, 16], strides = [1, 1]} : vector<2x64xf32> to vector<2x16xf32>
    %406 = arith.mulf %403, %371 : vector<2x16xf32>
    %407 = arith.mulf %402, %404 : vector<2x16xf32>
    %408 = arith.addf %406, %407 : vector<2x16xf32>
    %409 = math.tanh %408 : vector<2x16xf32>
    %410 = arith.mulf %405, %409 : vector<2x16xf32>
    %411 = tpu.concatenate %391, %389, %410, %408 in 1 : vector<2x16xf32>, vector<2x16xf32>, vector<2x16xf32>, vector<2x16xf32> -> vector<2x64xf32>
    %412 = math.tanh %411 : vector<2x64xf32>
    %c0_202 = arith.constant 0 : index
    %c0_203 = arith.constant 0 : index
    %413 = vector.load %arg15[%c0_202, %c0_203] : memref<64x32xf32, #tpu.memory_space<vmem>>, vector<64x32xf32>
    %cst_204 = arith.constant dense<0.000000e+00> : vector<2x32xf32>
    %414 = tpu.matmul %412, %413, %cst_204 {dimension_numbers = #tpu.dot_dimension_numbers<[1], [0], [0], [1], [0, 0, 1, 1], [], []>} : vector<2x64xf32>, vector<64x32xf32>, vector<2x32xf32> -> vector<2x32xf32>
    %c0_205 = arith.constant 0 : index
    %c0_206 = arith.constant 0 : index
    %415 = vector.load %arg16[%c0_205, %c0_206] : memref<1x32xf32, #tpu.memory_space<vmem>>, vector<1x32xf32>
    %416 = vector.broadcast %415 : vector<1x32xf32> to vector<2x32xf32>
    %417 = arith.addf %414, %416 : vector<2x32xf32>
    %c0_207 = arith.constant 0 : index
    %c0_208 = arith.constant 0 : index
    %418 = vector.load %arg17[%c0_207, %c0_208] : memref<32x512xf32, #tpu.memory_space<vmem>>, vector<32x512xf32>
    %cst_209 = arith.constant dense<0.000000e+00> : vector<2x512xf32>
    %419 = tpu.matmul %99, %418, %cst_209 {dimension_numbers = #tpu.dot_dimension_numbers<[1], [0], [0], [1], [0, 0, 1, 1], [], []>} : vector<2x32xf32>, vector<32x512xf32>, vector<2x512xf32> -> vector<2x512xf32>
    %c0_210 = arith.constant 0 : index
    %c0_211 = arith.constant 0 : index
    %420 = vector.load %arg18[%c0_210, %c0_211] : memref<1x512xf32, #tpu.memory_space<vmem>>, vector<1x512xf32>
    %421 = vector.broadcast %420 : vector<1x512xf32> to vector<2x512xf32>
    %422 = arith.addf %419, %421 : vector<2x512xf32>
    %c0_212 = arith.constant 0 : index
    %c0_213 = arith.constant 0 : index
    %423 = vector.load %arg21[%c0_212, %c0_213] : memref<1x512xf32, #tpu.memory_space<vmem>>, vector<1x512xf32>
    %c0_214 = arith.constant 0 : index
    %c0_215 = arith.constant 0 : index
    %424 = vector.load %arg22[%c0_214, %c0_215] : memref<1x1xf32, #tpu.memory_space<vmem>>, vector<1x1xf32>
    %c0_216 = arith.constant 0 : index
    %c0_217 = arith.constant 0 : index
    %425 = vector.load %arg19[%c0_216, %c0_217] : memref<32x512xf32, #tpu.memory_space<vmem>>, vector<32x512xf32>
    %cst_218 = arith.constant dense<0.000000e+00> : vector<2x512xf32>
    %426 = tpu.matmul %417, %425, %cst_218 {dimension_numbers = #tpu.dot_dimension_numbers<[1], [0], [0], [1], [0, 0, 1, 1], [], []>} : vector<2x32xf32>, vector<32x512xf32>, vector<2x512xf32> -> vector<2x512xf32>
    %c0_219 = arith.constant 0 : index
    %c0_220 = arith.constant 0 : index
    %427 = vector.load %arg20[%c0_219, %c0_220] : memref<1x512xf32, #tpu.memory_space<vmem>>, vector<1x512xf32>
    %428 = vector.broadcast %427 : vector<1x512xf32> to vector<2x512xf32>
    %429 = arith.addf %426, %428 : vector<2x512xf32>
    %430 = vector.shape_cast %422 : vector<2x512xf32> to vector<1x2x512xf32>
    %431 = vector.shape_cast %429 : vector<2x512xf32> to vector<2x1x512xf32>
    %432 = vector.broadcast %430 : vector<1x2x512xf32> to vector<2x2x512xf32>
    %433 = vector.broadcast %431 : vector<2x1x512xf32> to vector<2x2x512xf32>
    %434 = arith.addf %432, %433 : vector<2x2x512xf32>
    %435 = math.tanh %434 : vector<2x2x512xf32>
    %436 = vector.shape_cast %423 : vector<1x512xf32> to vector<1x1x512xf32>
    %437 = vector.broadcast %436 : vector<1x1x512xf32> to vector<2x2x512xf32>
    %438 = arith.mulf %435, %437 : vector<2x2x512xf32>
    %cst_221 = arith.constant dense<0.000000e+00> : vector<2x2xf32>
    %439 = vector.multi_reduction <add>, %438, %cst_221 [2] : vector<2x2x512xf32> to vector<2x2xf32>
    %440 = vector.broadcast %424 : vector<1x1xf32> to vector<2x2xf32>
    %441 = arith.addf %439, %440 : vector<2x2xf32>
    %cst_222 = arith.constant dense<0xFF800000> : vector<2xf32>
    %442 = vector.multi_reduction <maximumf>, %441, %cst_222 [1] : vector<2x2xf32> to vector<2xf32>
    %443 = vector.shape_cast %442 : vector<2xf32> to vector<2x1xf32>
    %444 = vector.broadcast %443 : vector<2x1xf32> to vector<2x2xf32>
    %445 = arith.subf %441, %444 : vector<2x2xf32>
    %446 = math.exp %445 : vector<2x2xf32>
    %cst_223 = arith.constant dense<0.000000e+00> : vector<2xf32>
    %447 = vector.multi_reduction <add>, %446, %cst_223 [1] : vector<2x2xf32> to vector<2xf32>
    %448 = vector.shape_cast %447 : vector<2xf32> to vector<2x1xf32>
    %449 = tpu.reciprocal %448 {approx = true} : vector<2x1xf32> -> vector<2x1xf32>
    %450 = vector.broadcast %449 : vector<2x1xf32> to vector<2x2xf32>
    %451 = arith.mulf %446, %450 : vector<2x2xf32>
    %cst_224 = arith.constant dense<0.000000e+00> : vector<2x32xf32>
    %452 = tpu.matmul %451, %99, %cst_224 {dimension_numbers = #tpu.dot_dimension_numbers<[1], [0], [0], [1], [0, 0, 1, 1], [], []>} : vector<2x2xf32>, vector<2x32xf32>, vector<2x32xf32> -> vector<2x32xf32>
    %453 = arith.addf %452, %417 : vector<2x32xf32>
    %c0_225 = arith.constant 0 : index
    %c0_226 = arith.constant 0 : index
    %454 = vector.load %arg19[%c0_225, %c0_226] : memref<32x512xf32, #tpu.memory_space<vmem>>, vector<32x512xf32>
    %cst_227 = arith.constant dense<0.000000e+00> : vector<2x512xf32>
    %455 = tpu.matmul %453, %454, %cst_227 {dimension_numbers = #tpu.dot_dimension_numbers<[1], [0], [0], [1], [0, 0, 1, 1], [], []>} : vector<2x32xf32>, vector<32x512xf32>, vector<2x512xf32> -> vector<2x512xf32>
    %c0_228 = arith.constant 0 : index
    %c0_229 = arith.constant 0 : index
    %456 = vector.load %arg20[%c0_228, %c0_229] : memref<1x512xf32, #tpu.memory_space<vmem>>, vector<1x512xf32>
    %457 = vector.broadcast %456 : vector<1x512xf32> to vector<2x512xf32>
    %458 = arith.addf %455, %457 : vector<2x512xf32>
    %459 = vector.shape_cast %422 : vector<2x512xf32> to vector<1x2x512xf32>
    %460 = vector.shape_cast %458 : vector<2x512xf32> to vector<2x1x512xf32>
    %461 = vector.broadcast %459 : vector<1x2x512xf32> to vector<2x2x512xf32>
    %462 = vector.broadcast %460 : vector<2x1x512xf32> to vector<2x2x512xf32>
    %463 = arith.addf %461, %462 : vector<2x2x512xf32>
    %464 = math.tanh %463 : vector<2x2x512xf32>
    %465 = vector.shape_cast %423 : vector<1x512xf32> to vector<1x1x512xf32>
    %466 = vector.broadcast %465 : vector<1x1x512xf32> to vector<2x2x512xf32>
    %467 = arith.mulf %464, %466 : vector<2x2x512xf32>
    %cst_230 = arith.constant dense<0.000000e+00> : vector<2x2xf32>
    %468 = vector.multi_reduction <add>, %467, %cst_230 [2] : vector<2x2x512xf32> to vector<2x2xf32>
    %469 = vector.broadcast %424 : vector<1x1xf32> to vector<2x2xf32>
    %470 = arith.addf %468, %469 : vector<2x2xf32>
    %cst_231 = arith.constant dense<0xFF800000> : vector<2xf32>
    %471 = vector.multi_reduction <maximumf>, %470, %cst_231 [1] : vector<2x2xf32> to vector<2xf32>
    %472 = vector.shape_cast %471 : vector<2xf32> to vector<2x1xf32>
    %473 = vector.broadcast %472 : vector<2x1xf32> to vector<2x2xf32>
    %474 = arith.subf %470, %473 : vector<2x2xf32>
    %475 = math.exp %474 : vector<2x2xf32>
    %cst_232 = arith.constant dense<0.000000e+00> : vector<2xf32>
    %476 = vector.multi_reduction <add>, %475, %cst_232 [1] : vector<2x2xf32> to vector<2xf32>
    %477 = vector.shape_cast %476 : vector<2xf32> to vector<2x1xf32>
    %478 = tpu.reciprocal %477 {approx = true} : vector<2x1xf32> -> vector<2x1xf32>
    %479 = vector.broadcast %478 : vector<2x1xf32> to vector<2x2xf32>
    %480 = arith.mulf %475, %479 : vector<2x2xf32>
    %cst_233 = arith.constant dense<0.000000e+00> : vector<2x32xf32>
    %481 = tpu.matmul %480, %99, %cst_233 {dimension_numbers = #tpu.dot_dimension_numbers<[1], [0], [0], [1], [0, 0, 1, 1], [], []>} : vector<2x2xf32>, vector<2x32xf32>, vector<2x32xf32> -> vector<2x32xf32>
    %482 = arith.addf %481, %453 : vector<2x32xf32>
    %c0_234 = arith.constant 0 : index
    %c0_235 = arith.constant 0 : index
    %483 = vector.load %arg23[%c0_234, %c0_235] : memref<32x10xf32, #tpu.memory_space<vmem>>, vector<32x10xf32>
    %cst_236 = arith.constant dense<0.000000e+00> : vector<2x10xf32>
    %484 = tpu.matmul %482, %483, %cst_236 {dimension_numbers = #tpu.dot_dimension_numbers<[1], [0], [0], [1], [0, 0, 1, 1], [], []>} : vector<2x32xf32>, vector<32x10xf32>, vector<2x10xf32> -> vector<2x10xf32>
    %c0_237 = arith.constant 0 : index
    %c0_238 = arith.constant 0 : index
    %485 = vector.load %arg24[%c0_237, %c0_238] : memref<1x10xf32, #tpu.memory_space<vmem>>, vector<1x10xf32>
    %486 = vector.broadcast %485 : vector<1x10xf32> to vector<2x10xf32>
    %487 = arith.addf %484, %486 : vector<2x10xf32>
    %c0_239 = arith.constant 0 : index
    %c0_240 = arith.constant 0 : index
    %488 = vector.load %arg25[%c0_239, %c0_240] : memref<2x10xf32, #tpu.memory_space<vmem>>, vector<2x10xf32>
    tpu.vector_store %arg25[%c0_239, %c0_240], %487 {strides = array<i32>} : memref<2x10xf32, #tpu.memory_space<vmem>>, vector<2x10xf32>,
    %c0_241 = arith.constant 0 : index
    %c0_242 = arith.constant 0 : index
    %489 = vector.load %arg26[%c0_241, %c0_242] : memref<2x2xf32, #tpu.memory_space<vmem>>, vector<2x2xf32>
    tpu.vector_store %arg26[%c0_241, %c0_242], %451 {strides = array<i32>} : memref<2x2xf32, #tpu.memory_space<vmem>>, vector<2x2xf32>,
    %c0_243 = arith.constant 0 : index
    %c0_244 = arith.constant 0 : index
    %490 = vector.load %arg27[%c0_243, %c0_244] : memref<2x2xf32, #tpu.memory_space<vmem>>, vector<2x2xf32>
    tpu.vector_store %arg27[%c0_243, %c0_244], %480 {strides = array<i32>} : memref<2x2xf32, #tpu.memory_space<vmem>>, vector<2x2xf32>,
    return
  }
}

</mosaic_0001>

<llo_original>
// kernel: san_forward.1
$region0: #{san_forward.1}
  #allocation0 [shape = 'u32[]', space=smem, size = 0x4, offset = 0x4, fixed_abs, tag = 'smem constant byte address 0x4 - core index']
  #allocation1 [shape = 'u32[72,128]{1,0:T(1,128)}', space=vmem, size = 0x9000, scoped, tag = 'internal scratch']
  #allocation2 [shape = 'f32[16,64]{1,0:T(8,128)}', space=vmem, size = 0x2000, scoped, tag = 'scratch operand']
  #allocation3 [shape = 'f32[256,8]{1,0:T(8,128)}', space=vmem, size = 0x20000, scoped, tag = 'scratch operand']
  #allocation4 [shape = 'f32[2,10,24,8]{3,2,1,0:T(8,128)}', space=vmem, size = 0x3c000, scoped, tag = 'scratch operand']
  #allocation5 [shape = 'f32[64,16]{1,0:T(8,128)}', space=vmem, size = 0x8000, scoped, tag = 'scratch operand']
  #allocation6 [shape = 'f32[32,16]{1,0:T(8,128)}', space=vmem, size = 0x4000, scoped, tag = 'scratch operand']
  #allocation7 [shape = 'f32[1,1]{1,0:T(1,128)S(1)}', space=vmem, size = 0x200, scoped, tag = 'scoped memory for san_forward.1']
  %s0 = inlined_call_operand.vmem [shape: f32[2,18,18,3], index: 0, kind: input, shape index: {}]
  %s1 = inlined_call_operand.vmem [shape: f32[16,16], index: 1, kind: input, shape index: {}]
  %s2 = inlined_call_operand.vmem [shape: f32[27,8], index: 2, kind: input, shape index: {}]
  %s3 = inlined_call_operand.vmem [shape: f32[1,8], index: 3, kind: input, shape index: {}]
  %s4 = inlined_call_operand.vmem [shape: f32[72,16], index: 4, kind: input, shape index: {}]
  %s5 = inlined_call_operand.vmem [shape: f32[1,16], index: 5, kind: input, shape index: {}]
  %s6 = inlined_call_operand.vmem [shape: f32[256,64], index: 6, kind: input, shape index: {}]
  %s7 = inlined_call_operand.vmem [shape: f32[1,64], index: 7, kind: input, shape index: {}]
  %s8 = inlined_call_operand.vmem [shape: f32[64,32], index: 8, kind: input, shape index: {}]
  %s9 = inlined_call_operand.vmem [shape: f32[1,32], index: 9, kind: input, shape index: {}]
  %s10 = inlined_call_operand.vmem [shape: f32[16,64], index: 10, kind: input, shape index: {}]
  %s11 = inlined_call_operand.vmem [shape: f32[16,64], index: 11, kind: input, shape index: {}]
  %s12 = inlined_call_operand.vmem [shape: f32[1,64], index: 12, kind: input, shape index: {}]
  %s13 = inlined_call_operand.vmem [shape: f32[32,64], index: 13, kind: input, shape index: {}]
  %s14 = inlined_call_operand.vmem [shape: f32[1,64], index: 14, kind: input, shape index: {}]
  %s15 = inlined_call_operand.vmem [shape: f32[64,32], index: 15, kind: input, shape index: {}]
  %s16 = inlined_call_operand.vmem [shape: f32[1,32], index: 16, kind: input, shape index: {}]
  %s17 = inlined_call_operand.vmem [shape: f32[32,512], index: 17, kind: input, shape index: {}]
  %s18 = inlined_call_operand.vmem [shape: f32[1,512], index: 18, kind: input, shape index: {}]
  %s19 = inlined_call_operand.vmem [shape: f32[32,512], index: 19, kind: input, shape index: {}]
  %s20 = inlined_call_operand.vmem [shape: f32[1,512], index: 20, kind: input, shape index: {}]
  %s21 = inlined_call_operand.vmem [shape: f32[1,512], index: 21, kind: input, shape index: {}]
  %s22 = inlined_call_operand.<no memory space> [shape: f32[1,1], index: 22, kind: input, shape index: {}]
  %s23 = inlined_call_operand.vmem [shape: f32[32,10], index: 23, kind: input, shape index: {}]
  %s24 = inlined_call_operand.vmem [shape: f32[1,10], index: 24, kind: input, shape index: {}]
  %s25 = inlined_call_operand.hbm [shape: f32[2,10], index: 25, kind: output, shape index: {0}]
  %s26 = inlined_call_operand.hbm [shape: f32[2,2], index: 26, kind: output, shape index: {1}]
  %s27 = inlined_call_operand.hbm [shape: f32[2,2], index: 27, kind: output, shape index: {2}]
  %28 = xla_tuple %s25, %s26, %s27
  %s29 = sld [smem:[#allocation0]]
  $region126: #{san_forward.1} parent=0
    _
  %s31 = ssub.s32 1, %s29
  %s32 = scalar_select 0, %s31, %s29
  %v33 = vstv %s22
  %34 = vst [vmem:[#allocation7] sm:$0x1] %v33
  $region1: #{san_forward.1} parent=0
    #allocation8 [shape = 'u8[1024]{0}', space=vmem, size = 0x400, scoped, tag = 'output window, operand 0, single buffered']
    #allocation9 [shape = 's32[1]{0}', space=sflag, size = 0x4, scoped, tag = 'scoped memory for san_forward.1']
    #allocation10 [shape = 'u8[1024]{0}', space=vmem, size = 0x400, scoped, tag = 'output window, operand 1, single buffered']
    #allocation11 [shape = 's32[1]{0}', space=sflag, size = 0x4, scoped, tag = 'scoped memory for san_forward.1']
    #allocation12 [shape = 'u8[1024]{0}', space=vmem, size = 0x400, scoped, tag = 'output window, operand 2, single buffered']
    %35 = vsyncpa [#allocation9], 0
    %36 = vsyncpa [#allocation11], 0
    // Predicated region
    $region2: #{san_forward.1} parent=1 // pred_check
      _
    $region3: #{san_forward.1} parent=1 // pred_check_branch
      %38 = sbr.rel (0) target = $region5
    $region4: #{san_forward.1} parent=1 // pred_region
      _
    $region5: #{san_forward.1} parent=1 // pred_fallthru
      _
    // Predicated region
    $region6: #{san_forward.1} parent=1 // pred_check
      _
    $region7: #{san_forward.1} parent=1 // pred_check_branch
      %40 = sbr.rel (0) target = $region9
    $region8: #{san_forward.1} parent=1 // pred_region
      _
    $region9: #{san_forward.1} parent=1 // pred_fallthru
      _
    // Predicated region
    $region10: #{san_forward.1} parent=1 // pred_check
      _
    $region11: #{san_forward.1} parent=1 // pred_check_branch
      %42 = sbr.rel (0) target = $region13
    $region12: #{san_forward.1} parent=1 // pred_region
      _
    $region13: #{san_forward.1} parent=1 // pred_fallthru
      _
    // Predicated region
    $region14: #{san_forward.1} parent=1 // pred_check
      _
    $region15: #{san_forward.1} parent=1 // pred_check_branch
      %44 = sbr.rel (0) target = $region17
    $region16: #{san_forward.1} parent=1 // pred_region
      _
    $region17: #{san_forward.1} parent=1 // pred_fallthru
      _
    // Predicated region
    $region18: #{san_forward.1} parent=1 // pred_check
      _
    $region19: #{san_forward.1} parent=1 // pred_check_branch
      %46 = sbr.rel (0) target = $region21
    $region20: #{san_forward.1} parent=1 // pred_region
      _
    $region21: #{san_forward.1} parent=1 // pred_fallthru
      _
    // Predicated region
    $region22: #{san_forward.1} parent=1 // pred_check
      _
    $region23: #{san_forward.1} parent=1 // pred_check_branch
      %48 = sbr.rel (0) target = $region25
    $region24: #{san_forward.1} parent=1 // pred_region
      _
    $region25: #{san_forward.1} parent=1 // pred_fallthru
      _
    // Predicated region
    $region26: #{san_forward.1} parent=1 // pred_check
      _
    $region27: #{san_forward.1} parent=1 // pred_check_branch
      %50 = sbr.rel (0) target = $region29
    $region28: #{san_forward.1} parent=1 // pred_region
      _
    $region29: #{san_forward.1} parent=1 // pred_fallthru
      _
    // Predicated region
    $region30: #{san_forward.1} parent=1 // pred_check
      _
    $region31: #{san_forward.1} parent=1 // pred_check_branch
      %52 = sbr.rel (0) target = $region33
    $region32: #{san_forward.1} parent=1 // pred_region
      _
    $region33: #{san_forward.1} parent=1 // pred_fallthru
      _
    // Predicated region
    $region34: #{san_forward.1} parent=1 // pred_check
      _
    $region35: #{san_forward.1} parent=1 // pred_check_branch
      %54 = sbr.rel (0) target = $region37
    $region36: #{san_forward.1} parent=1 // pred_region
      _
    $region37: #{san_forward.1} parent=1 // pred_fallthru
      _
    // Predicated region
    $region38: #{san_forward.1} parent=1 // pred_check
      _
    $region39: #{san_forward.1} parent=1 // pred_check_branch
      %56 = sbr.rel (0) target = $region41
    $region40: #{san_forward.1} parent=1 // pred_region
      _
    $region41: #{san_forward.1} parent=1 // pred_fallthru
      _
    // Predicated region
    $region42: #{san_forward.1} parent=1 // pred_check
      _
    $region43: #{san_forward.1} parent=1 // pred_check_branch
      %58 = sbr.rel (0) target = $region45
    $region44: #{san_forward.1} parent=1 // pred_region
      _
    $region45: #{san_forward.1} parent=1 // pred_fallthru
      _
    // Predicated region
    $region46: #{san_forward.1} parent=1 // pred_check
      _
    $region47: #{san_forward.1} parent=1 // pred_check_branch
      %60 = sbr.rel (0) target = $region49
    $region48: #{san_forward.1} parent=1 // pred_region
      _
    $region49: #{san_forward.1} parent=1 // pred_fallthru
      _
    // Predicated region
    $region50: #{san_forward.1} parent=1 // pred_check
      _
    $region51: #{san_forward.1} parent=1 // pred_check_branch
      %62 = sbr.rel (0) target = $region53
    $region52: #{san_forward.1} parent=1 // pred_region
      _
    $region53: #{san_forward.1} parent=1 // pred_fallthru
      _
    // Predicated region
    $region54: #{san_forward.1} parent=1 // pred_check
      _
    $region55: #{san_forward.1} parent=1 // pred_check_branch
      %64 = sbr.rel (0) target = $region57
    $region56: #{san_forward.1} parent=1 // pred_region
      _
    $region57: #{san_forward.1} parent=1 // pred_fallthru
      _
    // Predicated region
    $region58: #{san_forward.1} parent=1 // pred_check
      _
    $region59: #{san_forward.1} parent=1 // pred_check_branch
      %66 = sbr.rel (0) target = $region61
    $region60: #{san_forward.1} parent=1 // pred_region
      _
    $region61: #{san_forward.1} parent=1 // pred_fallthru
      _
    // Predicated region
    $region62: #{san_forward.1} parent=1 // pred_check
      _
    $region63: #{san_forward.1} parent=1 // pred_check_branch
      %68 = sbr.rel (0) target = $region65
    $region64: #{san_forward.1} parent=1 // pred_region
      _
    $region65: #{san_forward.1} parent=1 // pred_fallthru
      _
    // Predicated region
    $region66: #{san_forward.1} parent=1 // pred_check
      _
    $region67: #{san_forward.1} parent=1 // pred_check_branch
      %70 = sbr.rel (0) target = $region69
    $region68: #{san_forward.1} parent=1 // pred_region
      _
    $region69: #{san_forward.1} parent=1 // pred_fallthru
      _
    // Predicated region
    $region70: #{san_forward.1} parent=1 // pred_check
      _
    $region71: #{san_forward.1} parent=1 // pred_check_branch
      %72 = sbr.rel (0) target = $region73
    $region72: #{san_forward.1} parent=1 // pred_region
      _
    $region73: #{san_forward.1} parent=1 // pred_fallthru
      _
    // Predicated region
    $region74: #{san_forward.1} parent=1 // pred_check
      _
    $region75: #{san_forward.1} parent=1 // pred_check_branch
      %74 = sbr.rel (0) target = $region77
    $region76: #{san_forward.1} parent=1 // pred_region
      _
    $region77: #{san_forward.1} parent=1 // pred_fallthru
      _
    // Predicated region
    $region78: #{san_forward.1} parent=1 // pred_check
      _
    $region79: #{san_forward.1} parent=1 // pred_check_branch
      %76 = sbr.rel (0) target = $region81
    $region80: #{san_forward.1} parent=1 // pred_region
      _
    $region81: #{san_forward.1} parent=1 // pred_fallthru
      _
    // Predicated region
    $region82: #{san_forward.1} parent=1 // pred_check
      _
    $region83: #{san_forward.1} parent=1 // pred_check_branch
      %78 = sbr.rel (0) target = $region85
    $region84: #{san_forward.1} parent=1 // pred_region
      _
    $region85: #{san_forward.1} parent=1 // pred_fallthru
      _
    // Predicated region
    $region86: #{san_forward.1} parent=1 // pred_check
      _
    $region87: #{san_forward.1} parent=1 // pred_check_branch
      %80 = sbr.rel (0) target = $region89
    $region88: #{san_forward.1} parent=1 // pred_region
      _
    $region89: #{san_forward.1} parent=1 // pred_fallthru
      _
    // Predicated region
    $region90: #{san_forward.1} parent=1 // pred_check
      _
    $region91: #{san_forward.1} parent=1 // pred_check_branch
      %82 = sbr.rel (0) target = $region93
    $region92: #{san_forward.1} parent=1 // pred_region
      _
    $region93: #{san_forward.1} parent=1 // pred_fallthru
      _
    // Predicated region
    $region94: #{san_forward.1} parent=1 // pred_check
      _
    $region95: #{san_forward.1} parent=1 // pred_check_branch
      %84 = sbr.rel (0) target = $region97
    $region96: #{san_forward.1} parent=1 // pred_region
      _
    $region97: #{san_forward.1} parent=1 // pred_fallthru
      _
    // Predicated region
    $region98: #{san_forward.1} parent=1 // pred_check
      _
    $region99: #{san_forward.1} parent=1 // pred_check_branch
      %86 = sbr.rel (0) target = $region101
    $region100: #{san_forward.1} parent=1 // pred_region
      _
    $region101: #{san_forward.1} parent=1 // pred_fallthru
      _
    %v87 = vld [vmem:[%s0] sm:$0xff]
    %v88 = vld [vmem:[%s0 + $0x8] sm:$0xff]
    %v89 = vld [vmem:[%s0 + $0x18] sm:$0xff]
    %v90 = vld [vmem:[%s0 + $0x20] sm:$0xff]
    %v91 = vld [vmem:[%s0 + $0x30] sm:$0xff]
    %v92 = vld [vmem:[%s0 + $0x38] sm:$0xff]
    %v93 = vld [vmem:[%s0 + $0x48] sm:$0xff]
    %v94 = vld [vmem:[%s0 + $0x50] sm:$0xff]
    %v95 = vld [vmem:[%s0 + $0x60] sm:$0xff]
    %v96 = vld [vmem:[%s0 + $0x68] sm:$0xff]
    %v97 = vld [vmem:[%s0 + $0x78] sm:$0xff]
    %v98 = vld [vmem:[%s0 + $0x80] sm:$0xff]
    %v99 = vld [vmem:[%s0 + $0x90] sm:$0xff]
    %v100 = vld [vmem:[%s0 + $0x98] sm:$0xff]
    %v101 = vld [vmem:[%s0 + $0xa8] sm:$0xff]
    %v102 = vld [vmem:[%s0 + $0xb0] sm:$0xff]
    %v103 = vld [vmem:[%s0 + $0xc0] sm:$0xff]
    %v104 = vld [vmem:[%s0 + $0xc8] sm:$0xff]
    %v105 = vld [vmem:[%s0 + $0xd8] sm:$0xff]
    %v106 = vld [vmem:[%s0 + $0xe0] sm:$0xff]
    %v107 = vld [vmem:[%s0 + $0xf0] sm:$0xff]
    %v108 = vld [vmem:[%s0 + $0xf8] sm:$0xff]
    %v109 = vld [vmem:[%s0 + $0x108] sm:$0xff]
    %v110 = vld [vmem:[%s0 + $0x110] sm:$0xff]
    %v111 = vld [vmem:[%s0 + $0x120] sm:$0xff]
    %v112 = vld [vmem:[%s0 + $0x128] sm:$0xff]
    %v113 = vld [vmem:[%s0 + $0x138] sm:$0xff]
    %v114 = vld [vmem:[%s0 + $0x140] sm:$0xff]
    %v115 = vld [vmem:[%s0 + $0x150] sm:$0xff]
    %v116 = vld [vmem:[%s0 + $0x158] sm:$0xff]
    %v117 = vld [vmem:[%s0 + $0x168] sm:$0xff]
    %v118 = vld [vmem:[%s0 + $0x170] sm:$0xff]
    %v119 = vld [vmem:[%s0 + $0x1b0] sm:$0xff]
    %v120 = vld [vmem:[%s0 + $0x1b8] sm:$0xff]
    %v121 = vld [vmem:[%s0 + $0x1c8] sm:$0xff]
    %v122 = vld [vmem:[%s0 + $0x1d0] sm:$0xff]
    %v123 = vld [vmem:[%s0 + $0x1e0] sm:$0xff]
    %v124 = vld [vmem:[%s0 + $0x1e8] sm:$0xff]
    %v125 = vld [vmem:[%s0 + $0x1f8] sm:$0xff]
    %v126 = vld [vmem:[%s0 + $0x200] sm:$0xff]
    %v127 = vld [vmem:[%s0 + $0x210] sm:$0xff]
    %v128 = vld [vmem:[%s0 + $0x218] sm:$0xff]
    %v129 = vld [vmem:[%s0 + $0x228] sm:$0xff]
    %v130 = vld [vmem:[%s0 + $0x230] sm:$0xff]
    %v131 = vld [vmem:[%s0 + $0x240] sm:$0xff]
    %v132 = vld [vmem:[%s0 + $0x248] sm:$0xff]
    %v133 = vld [vmem:[%s0 + $0x258] sm:$0xff]
    %v134 = vld [vmem:[%s0 + $0x260] sm:$0xff]
    %v135 = vld [vmem:[%s0 + $0x270] sm:$0xff]
    %v136 = vld [vmem:[%s0 + $0x278] sm:$0xff]
    %v137 = vld [vmem:[%s0 + $0x288] sm:$0xff]
    %v138 = vld [vmem:[%s0 + $0x290] sm:$0xff]
    %v139 = vld [vmem:[%s0 + $0x2a0] sm:$0xff]
    %v140 = vld [vmem:[%s0 + $0x2a8] sm:$0xff]
    %v141 = vld [vmem:[%s0 + $0x2b8] sm:$0xff]
    %v142 = vld [vmem:[%s0 + $0x2c0] sm:$0xff]
    %v143 = vld [vmem:[%s0 + $0x2d0] sm:$0xff]
    %v144 = vld [vmem:[%s0 + $0x2d8] sm:$0xff]
    %v145 = vld [vmem:[%s0 + $0x2e8] sm:$0xff]
    %v146 = vld [vmem:[%s0 + $0x2f0] sm:$0xff]
    %v147 = vld [vmem:[%s0 + $0x300] sm:$0xff]
    %v148 = vld [vmem:[%s0 + $0x308] sm:$0xff]
    %v149 = vld [vmem:[%s0 + $0x318] sm:$0xff]
    %v150 = vld [vmem:[%s0 + $0x320] sm:$0xff]
    %v151 = vld [vmem:[%s0 + $0x1] sm:$0xff]
    %v152 = vld [vmem:[%s0 + $0x9] sm:$0xff]
    %v153 = vld [vmem:[%s0 + $0x19] sm:$0xff]
    %v154 = vld [vmem:[%s0 + $0x21] sm:$0xff]
    %v155 = vld [vmem:[%s0 + $0x31] sm:$0xff]
    %v156 = vld [vmem:[%s0 + $0x39] sm:$0xff]
    %v157 = vld [vmem:[%s0 + $0x49] sm:$0xff]
    %v158 = vld [vmem:[%s0 + $0x51] sm:$0xff]
    %v159 = vld [vmem:[%s0 + $0x61] sm:$0xff]
    %v160 = vld [vmem:[%s0 + $0x69] sm:$0xff]
    %v161 = vld [vmem:[%s0 + $0x79] sm:$0xff]
    %v162 = vld [vmem:[%s0 + $0x81] sm:$0xff]
    %v163 = vld [vmem:[%s0 + $0x91] sm:$0xff]
    %v164 = vld [vmem:[%s0 + $0x99] sm:$0xff]
    %v165 = vld [vmem:[%s0 + $0xa9] sm:$0xff]
    %v166 = vld [vmem:[%s0 + $0xb1] sm:$0xff]
    %v167 = vld [vmem:[%s0 + $0xc1] sm:$0xff]
    %v168 = vld [vmem:[%s0 + $0xc9] sm:$0xff]
    %v169 = vld [vmem:[%s0 + $0xd9] sm:$0xff]
    %v170 = vld [vmem:[%s0 + $0xe1] sm:$0xff]
    %v171 = vld [vmem:[%s0 + $0xf1] sm:$0xff]
    %v172 = vld [vmem:[%s0 + $0xf9] sm:$0xff]
    %v173 = vld [vmem:[%s0 + $0x109] sm:$0xff]
    %v174 = vld [vmem:[%s0 + $0x111] sm:$0xff]
    %v175 = vld [vmem:[%s0 + $0x121] sm:$0xff]
    %v176 = vld [vmem:[%s0 + $0x129] sm:$0xff]
    %v177 = vld [vmem:[%s0 + $0x139] sm:$0xff]
    %v178 = vld [vmem:[%s0 + $0x141] sm:$0xff]
    %v179 = vld [vmem:[%s0 + $0x151] sm:$0xff]
    %v180 = vld [vmem:[%s0 + $0x159] sm:$0xff]
    %v181 = vld [vmem:[%s0 + $0x169] sm:$0xff]
    %v182 = vld [vmem:[%s0 + $0x171] sm:$0xff]
    %v183 = vld [vmem:[%s0 + $0x1b1] sm:$0xff]
    %v184 = vld [vmem:[%s0 + $0x1b9] sm:$0xff]
    %v185 = vld [vmem:[%s0 + $0x1c9] sm:$0xff]
    %v186 = vld [vmem:[%s0 + $0x1d1] sm:$0xff]
    %v187 = vld [vmem:[%s0 + $0x1e1] sm:$0xff]
    %v188 = vld [vmem:[%s0 + $0x1e9] sm:$0xff]
    %v189 = vld [vmem:[%s0 + $0x1f9] sm:$0xff]
    %v190 = vld [vmem:[%s0 + $0x201] sm:$0xff]
    %v191 = vld [vmem:[%s0 + $0x211] sm:$0xff]
    %v192 = vld [vmem:[%s0 + $0x219] sm:$0xff]
    %v193 = vld [vmem:[%s0 + $0x229] sm:$0xff]
    %v194 = vld [vmem:[%s0 + $0x231] sm:$0xff]
    %v195 = vld [vmem:[%s0 + $0x241] sm:$0xff]
    %v196 = vld [vmem:[%s0 + $0x249] sm:$0xff]
    %v197 = vld [vmem:[%s0 + $0x259] sm:$0xff]
    %v198 = vld [vmem:[%s0 + $0x261] sm:$0xff]
    %v199 = vld [vmem:[%s0 + $0x271] sm:$0xff]
    %v200 = vld [vmem:[%s0 + $0x279] sm:$0xff]
    %v201 = vld [vmem:[%s0 + $0x289] sm:$0xff]
    %v202 = vld [vmem:[%s0 + $0x291] sm:$0xff]
    %v203 = vld [vmem:[%s0 + $0x2a1] sm:$0xff]
    %v204 = vld [vmem:[%s0 + $0x2a9] sm:$0xff]
    %v205 = vld [vmem:[%s0 + $0x2b9] sm:$0xff]
    %v206 = vld [vmem:[%s0 + $0x2c1] sm:$0xff]
    %v207 = vld [vmem:[%s0 + $0x2d1] sm:$0xff]
    %v208 = vld [vmem:[%s0 + $0x2d9] sm:$0xff]
    %v209 = vld [vmem:[%s0 + $0x2e9] sm:$0xff]
    %v210 = vld [vmem:[%s0 + $0x2f1] sm:$0xff]
    %v211 = vld [vmem:[%s0 + $0x301] sm:$0xff]
    %v212 = vld [vmem:[%s0 + $0x309] sm:$0xff]
    %v213 = vld [vmem:[%s0 + $0x319] sm:$0xff]
    %v214 = vld [vmem:[%s0 + $0x321] sm:$0xff]
    %v215 = vld [vmem:[%s0 + $0x2] sm:$0xff]
    %v216 = vld [vmem:[%s0 + $0xa] sm:$0xff]
    %v217 = vld [vmem:[%s0 + $0x1a] sm:$0xff]
    %v218 = vld [vmem:[%s0 + $0x22] sm:$0xff]
    %v219 = vld [vmem:[%s0 + $0x32] sm:$0xff]
    %v220 = vld [vmem:[%s0 + $0x3a] sm:$0xff]
    %v221 = vld [vmem:[%s0 + $0x4a] sm:$0xff]
    %v222 = vld [vmem:[%s0 + $0x52] sm:$0xff]
    %v223 = vld [vmem:[%s0 + $0x62] sm:$0xff]
    %v224 = vld [vmem:[%s0 + $0x6a] sm:$0xff]
    %v225 = vld [vmem:[%s0 + $0x7a] sm:$0xff]
    %v226 = vld [vmem:[%s0 + $0x82] sm:$0xff]
    %v227 = vld [vmem:[%s0 + $0x92] sm:$0xff]
    %v228 = vld [vmem:[%s0 + $0x9a] sm:$0xff]
    %v229 = vld [vmem:[%s0 + $0xaa] sm:$0xff]
    %v230 = vld [vmem:[%s0 + $0xb2] sm:$0xff]
    %v231 = vld [vmem:[%s0 + $0xc2] sm:$0xff]
    %v232 = vld [vmem:[%s0 + $0xca] sm:$0xff]
    %v233 = vld [vmem:[%s0 + $0xda] sm:$0xff]
    %v234 = vld [vmem:[%s0 + $0xe2] sm:$0xff]
    %v235 = vld [vmem:[%s0 + $0xf2] sm:$0xff]
    %v236 = vld [vmem:[%s0 + $0xfa] sm:$0xff]
    %v237 = vld [vmem:[%s0 + $0x10a] sm:$0xff]
    %v238 = vld [vmem:[%s0 + $0x112] sm:$0xff]
    %v239 = vld [vmem:[%s0 + $0x122] sm:$0xff]
    %v240 = vld [vmem:[%s0 + $0x12a] sm:$0xff]
    %v241 = vld [vmem:[%s0 + $0x13a] sm:$0xff]
    %v242 = vld [vmem:[%s0 + $0x142] sm:$0xff]
    %v243 = vld [vmem:[%s0 + $0x152] sm:$0xff]
    %v244 = vld [vmem:[%s0 + $0x15a] sm:$0xff]
    %v245 = vld [vmem:[%s0 + $0x16a] sm:$0xff]
    %v246 = vld [vmem:[%s0 + $0x172] sm:$0xff]
    %v247 = vld [vmem:[%s0 + $0x1b2] sm:$0xff]
    %v248 = vld [vmem:[%s0 + $0x1ba] sm:$0xff]
    %v249 = vld [vmem:[%s0 + $0x1ca] sm:$0xff]
    %v250 = vld [vmem:[%s0 + $0x1d2] sm:$0xff]
    %v251 = vld [vmem:[%s0 + $0x1e2] sm:$0xff]
    %v252 = vld [vmem:[%s0 + $0x1ea] sm:$0xff]
    %v253 = vld [vmem:[%s0 + $0x1fa] sm:$0xff]
    %v254 = vld [vmem:[%s0 + $0x202] sm:$0xff]
    %v255 = vld [vmem:[%s0 + $0x212] sm:$0xff]
    %v256 = vld [vmem:[%s0 + $0x21a] sm:$0xff]
    %v257 = vld [vmem:[%s0 + $0x22a] sm:$0xff]
    %v258 = vld [vmem:[%s0 + $0x232] sm:$0xff]
    %v259 = vld [vmem:[%s0 + $0x242] sm:$0xff]
    %v260 = vld [vmem:[%s0 + $0x24a] sm:$0xff]
    %v261 = vld [vmem:[%s0 + $0x25a] sm:$0xff]
    %v262 = vld [vmem:[%s0 + $0x262] sm:$0xff]
    %v263 = vld [vmem:[%s0 + $0x272] sm:$0xff]
    %v264 = vld [vmem:[%s0 + $0x27a] sm:$0xff]
    %v265 = vld [vmem:[%s0 + $0x28a] sm:$0xff]
    %v266 = vld [vmem:[%s0 + $0x292] sm:$0xff]
    %v267 = vld [vmem:[%s0 + $0x2a2] sm:$0xff]
    %v268 = vld [vmem:[%s0 + $0x2aa] sm:$0xff]
    %v269 = vld [vmem:[%s0 + $0x2ba] sm:$0xff]
    %v270 = vld [vmem:[%s0 + $0x2c2] sm:$0xff]
    %v271 = vld [vmem:[%s0 + $0x2d2] sm:$0xff]
    %v272 = vld [vmem:[%s0 + $0x2da] sm:$0xff]
    %v273 = vld [vmem:[%s0 + $0x2ea] sm:$0xff]
    %v274 = vld [vmem:[%s0 + $0x2f2] sm:$0xff]
    %v275 = vld [vmem:[%s0 + $0x302] sm:$0xff]
    %v276 = vld [vmem:[%s0 + $0x30a] sm:$0xff]
    %v277 = vld [vmem:[%s0 + $0x31a] sm:$0xff]
    %v278 = vld [vmem:[%s0 + $0x322] sm:$0xff]
    %s279 = scalar_lea.vmem %s0, 24
    %v280 = vld [vmem:[%s279] sm:$0xff]
    %v281 = vld [vmem:[%s279 + $0x8] sm:$0xff]
    %v282 = vld [vmem:[%s279 + $0x18] sm:$0xff]
    %v283 = vld [vmem:[%s279 + $0x20] sm:$0xff]
    %v284 = vld [vmem:[%s279 + $0x30] sm:$0xff]
    %v285 = vld [vmem:[%s279 + $0x38] sm:$0xff]
    %v286 = vld [vmem:[%s279 + $0x48] sm:$0xff]
    %v287 = vld [vmem:[%s279 + $0x50] sm:$0xff]
    %v288 = vld [vmem:[%s279 + $0x60] sm:$0xff]
    %v289 = vld [vmem:[%s279 + $0x68] sm:$0xff]
    %v290 = vld [vmem:[%s279 + $0x78] sm:$0xff]
    %v291 = vld [vmem:[%s279 + $0x80] sm:$0xff]
    %v292 = vld [vmem:[%s279 + $0x90] sm:$0xff]
    %v293 = vld [vmem:[%s279 + $0x98] sm:$0xff]
    %v294 = vld [vmem:[%s279 + $0xa8] sm:$0xff]
    %v295 = vld [vmem:[%s279 + $0xb0] sm:$0xff]
    %v296 = vld [vmem:[%s279 + $0xc0] sm:$0xff]
    %v297 = vld [vmem:[%s279 + $0xc8] sm:$0xff]
    %v298 = vld [vmem:[%s279 + $0xd8] sm:$0xff]
    %v299 = vld [vmem:[%s279 + $0xe0] sm:$0xff]
    %v300 = vld [vmem:[%s279 + $0xf0] sm:$0xff]
    %v301 = vld [vmem:[%s279 + $0xf8] sm:$0xff]
    %v302 = vld [vmem:[%s279 + $0x108] sm:$0xff]
    %v303 = vld [vmem:[%s279 + $0x110] sm:$0xff]
    %v304 = vld [vmem:[%s279 + $0x120] sm:$0xff]
    %v305 = vld [vmem:[%s279 + $0x128] sm:$0xff]
    %v306 = vld [vmem:[%s279 + $0x138] sm:$0xff]
    %v307 = vld [vmem:[%s279 + $0x140] sm:$0xff]
    %v308 = vld [vmem:[%s279 + $0x150] sm:$0xff]
    %v309 = vld [vmem:[%s279 + $0x158] sm:$0xff]
    %v310 = vld [vmem:[%s279 + $0x168] sm:$0xff]
    %v311 = vld [vmem:[%s279 + $0x170] sm:$0xff]
    %v312 = vld [vmem:[%s279 + $0x1b0] sm:$0xff]
    %v313 = vld [vmem:[%s279 + $0x1b8] sm:$0xff]
    %v314 = vld [vmem:[%s279 + $0x1c8] sm:$0xff]
    %v315 = vld [vmem:[%s279 + $0x1d0] sm:$0xff]
    %v316 = vld [vmem:[%s279 + $0x1e0] sm:$0xff]
    %v317 = vld [vmem:[%s279 + $0x1e8] sm:$0xff]
    %v318 = vld [vmem:[%s279 + $0x1f8] sm:$0xff]
    %v319 = vld [vmem:[%s279 + $0x200] sm:$0xff]
    %v320 = vld [vmem:[%s279 + $0x210] sm:$0xff]
    %v321 = vld [vmem:[%s279 + $0x218] sm:$0xff]
    %v322 = vld [vmem:[%s279 + $0x228] sm:$0xff]
    %v323 = vld [vmem:[%s279 + $0x230] sm:$0xff]
    %v324 = vld [vmem:[%s279 + $0x240] sm:$0xff]
    %v325 = vld [vmem:[%s279 + $0x248] sm:$0xff]
    %v326 = vld [vmem:[%s279 + $0x258] sm:$0xff]
    %v327 = vld [vmem:[%s279 + $0x260] sm:$0xff]
    %v328 = vld [vmem:[%s279 + $0x270] sm:$0xff]
    %v329 = vld [vmem:[%s279 + $0x278] sm:$0xff]
    %v330 = vld [vmem:[%s279 + $0x288] sm:$0xff]
    %v331 = vld [vmem:[%s279 + $0x290] sm:$0xff]
    %v332 = vld [vmem:[%s279 + $0x2a0] sm:$0xff]
    %v333 = vld [vmem:[%s279 + $0x2a8] sm:$0xff]
    %v334 = vld [vmem:[%s279 + $0x2b8] sm:$0xff]
    %v335 = vld [vmem:[%s279 + $0x2c0] sm:$0xff]
    %v336 = vld [vmem:[%s279 + $0x2d0] sm:$0xff]
    %v337 = vld [vmem:[%s279 + $0x2d8] sm:$0xff]
    %v338 = vld [vmem:[%s279 + $0x2e8] sm:$0xff]
    %v339 = vld [vmem:[%s279 + $0x2f0] sm:$0xff]
    %v340 = vld [vmem:[%s279 + $0x300] sm:$0xff]
    %v341 = vld [vmem:[%s279 + $0x308] sm:$0xff]
    %v342 = vld [vmem:[%s279 + $0x318] sm:$0xff]
    %v343 = vld [vmem:[%s279 + $0x320] sm:$0xff]
    %v344 = vld [vmem:[%s279 + $0x1] sm:$0xff]
    %v345 = vld [vmem:[%s279 + $0x9] sm:$0xff]
    %v346 = vld [vmem:[%s279 + $0x19] sm:$0xff]
    %v347 = vld [vmem:[%s279 + $0x21] sm:$0xff]
    %v348 = vld [vmem:[%s279 + $0x31] sm:$0xff]
    %v349 = vld [vmem:[%s279 + $0x39] sm:$0xff]
    %v350 = vld [vmem:[%s279 + $0x49] sm:$0xff]
    %v351 = vld [vmem:[%s279 + $0x51] sm:$0xff]
    %v352 = vld [vmem:[%s279 + $0x61] sm:$0xff]
    %v353 = vld [vmem:[%s279 + $0x69] sm:$0xff]
    %v354 = vld [vmem:[%s279 + $0x79] sm:$0xff]
    %v355 = vld [vmem:[%s279 + $0x81] sm:$0xff]
    %v356 = vld [vmem:[%s279 + $0x91] sm:$0xff]
    %v357 = vld [vmem:[%s279 + $0x99] sm:$0xff]
    %v358 = vld [vmem:[%s279 + $0xa9] sm:$0xff]
    %v359 = vld [vmem:[%s279 + $0xb1] sm:$0xff]
    %v360 = vld [vmem:[%s279 + $0xc1] sm:$0xff]
    %v361 = vld [vmem:[%s279 + $0xc9] sm:$0xff]
    %v362 = vld [vmem:[%s279 + $0xd9] sm:$0xff]
    %v363 = vld [vmem:[%s279 + $0xe1] sm:$0xff]
    %v364 = vld [vmem:[%s279 + $0xf1] sm:$0xff]
    %v365 = vld [vmem:[%s279 + $0xf9] sm:$0xff]
    %v366 = vld [vmem:[%s279 + $0x109] sm:$0xff]
    %v367 = vld [vmem:[%s279 + $0x111] sm:$0xff]
    %v368 = vld [vmem:[%s279 + $0x121] sm:$0xff]
    %v369 = vld [vmem:[%s279 + $0x129] sm:$0xff]
    %v370 = vld [vmem:[%s279 + $0x139] sm:$0xff]
    %v371 = vld [vmem:[%s279 + $0x141] sm:$0xff]
    %v372 = vld [vmem:[%s279 + $0x151] sm:$0xff]
    %v373 = vld [vmem:[%s279 + $0x159] sm:$0xff]
    %v374 = vld [vmem:[%s279 + $0x169] sm:$0xff]
    %v375 = vld [vmem:[%s279 + $0x171] sm:$0xff]
    %v376 = vld [vmem:[%s279 + $0x1b1] sm:$0xff]
    %v377 = vld [vmem:[%s279 + $0x1b9] sm:$0xff]
    %v378 = vld [vmem:[%s279 + $0x1c9] sm:$0xff]
    %v379 = vld [vmem:[%s279 + $0x1d1] sm:$0xff]
    %v380 = vld [vmem:[%s279 + $0x1e1] sm:$0xff]
    %v381 = vld [vmem:[%s279 + $0x1e9] sm:$0xff]
    %v382 = vld [vmem:[%s279 + $0x1f9] sm:$0xff]
    %v383 = vld [vmem:[%s279 + $0x201] sm:$0xff]
    %v384 = vld [vmem:[%s279 + $0x211] sm:$0xff]
    %v385 = vld [vmem:[%s279 + $0x219] sm:$0xff]
    %v386 = vld [vmem:[%s279 + $0x229] sm:$0xff]
    %v387 = vld [vmem:[%s279 + $0x231] sm:$0xff]
    %v388 = vld [vmem:[%s279 + $0x241] sm:$0xff]
    %v389 = vld [vmem:[%s279 + $0x249] sm:$0xff]
    %v390 = vld [vmem:[%s279 + $0x259] sm:$0xff]
    %v391 = vld [vmem:[%s279 + $0x261] sm:$0xff]
    %v392 = vld [vmem:[%s279 + $0x271] sm:$0xff]
    %v393 = vld [vmem:[%s279 + $0x279] sm:$0xff]
    %v394 = vld [vmem:[%s279 + $0x289] sm:$0xff]
    %v395 = vld [vmem:[%s279 + $0x291] sm:$0xff]
    %v396 = vld [vmem:[%s279 + $0x2a1] sm:$0xff]
    %v397 = vld [vmem:[%s279 + $0x2a9] sm:$0xff]
    %v398 = vld [vmem:[%s279 + $0x2b9] sm:$0xff]
    %v399 = vld [vmem:[%s279 + $0x2c1] sm:$0xff]
    %v400 = vld [vmem:[%s279 + $0x2d1] sm:$0xff]
    %v401 = vld [vmem:[%s279 + $0x2d9] sm:$0xff]
    %v402 = vld [vmem:[%s279 + $0x2e9] sm:$0xff]
    %v403 = vld [vmem:[%s279 + $0x2f1] sm:$0xff]
    %v404 = vld [vmem:[%s279 + $0x301] sm:$0xff]
    %v405 = vld [vmem:[%s279 + $0x309] sm:$0xff]
    %v406 = vld [vmem:[%s279 + $0x319] sm:$0xff]
    %v407 = vld [vmem:[%s279 + $0x321] sm:$0xff]
    %v408 = vld [vmem:[%s279 + $0x2] sm:$0xff]
    %v409 = vld [vmem:[%s279 + $0xa] sm:$0xff]
    %v410 = vld [vmem:[%s279 + $0x1a] sm:$0xff]
    %v411 = vld [vmem:[%s279 + $0x22] sm:$0xff]
    %v412 = vld [vmem:[%s279 + $0x32] sm:$0xff]
    %v413 = vld [vmem:[%s279 + $0x3a] sm:$0xff]
    %v414 = vld [vmem:[%s279 + $0x4a] sm:$0xff]
    %v415 = vld [vmem:[%s279 + $0x52] sm:$0xff]
    %v416 = vld [vmem:[%s279 + $0x62] sm:$0xff]
    %v417 = vld [vmem:[%s279 + $0x6a] sm:$0xff]
    %v418 = vld [vmem:[%s279 + $0x7a] sm:$0xff]
    %v419 = vld [vmem:[%s279 + $0x82] sm:$0xff]
    %v420 = vld [vmem:[%s279 + $0x92] sm:$0xff]
    %v421 = vld [vmem:[%s279 + $0x9a] sm:$0xff]
    %v422 = vld [vmem:[%s279 + $0xaa] sm:$0xff]
    %v423 = vld [vmem:[%s279 + $0xb2] sm:$0xff]
    %v424 = vld [vmem:[%s279 + $0xc2] sm:$0xff]
    %v425 = vld [vmem:[%s279 + $0xca] sm:$0xff]
    %v426 = vld [vmem:[%s279 + $0xda] sm:$0xff]
    %v427 = vld [vmem:[%s279 + $0xe2] sm:$0xff]
    %v428 = vld [vmem:[%s279 + $0xf2] sm:$0xff]
    %v429 = vld [vmem:[%s279 + $0xfa] sm:$0xff]
    %v430 = vld [vmem:[%s279 + $0x10a] sm:$0xff]
    %v431 = vld [vmem:[%s279 + $0x112] sm:$0xff]
    %v432 = vld [vmem:[%s279 + $0x122] sm:$0xff]
    %v433 = vld [vmem:[%s279 + $0x12a] sm:$0xff]
    %v434 = vld [vmem:[%s279 + $0x13a] sm:$0xff]
    %v435 = vld [vmem:[%s279 + $0x142] sm:$0xff]
    %v436 = vld [vmem:[%s279 + $0x152] sm:$0xff]
    %v437 = vld [vmem:[%s279 + $0x15a] sm:$0xff]
    %v438 = vld [vmem:[%s279 + $0x16a] sm:$0xff]
    %v439 = vld [vmem:[%s279 + $0x172] sm:$0xff]
    %v440 = vld [vmem:[%s279 + $0x1b2] sm:$0xff]
    %v441 = vld [vmem:[%s279 + $0x1ba] sm:$0xff]
    %v442 = vld [vmem:[%s279 + $0x1ca] sm:$0xff]
    %v443 = vld [vmem:[%s279 + $0x1d2] sm:$0xff]
    %v444 = vld [vmem:[%s279 + $0x1e2] sm:$0xff]
    %v445 = vld [vmem:[%s279 + $0x1ea] sm:$0xff]
    %v446 = vld [vmem:[%s279 + $0x1fa] sm:$0xff]
    %v447 = vld [vmem:[%s279 + $0x202] sm:$0xff]
    %v448 = vld [vmem:[%s279 + $0x212] sm:$0xff]
    %v449 = vld [vmem:[%s279 + $0x21a] sm:$0xff]
    %v450 = vld [vmem:[%s279 + $0x22a] sm:$0xff]
    %v451 = vld [vmem:[%s279 + $0x232] sm:$0xff]
    %v452 = vld [vmem:[%s279 + $0x242] sm:$0xff]
    %v453 = vld [vmem:[%s279 + $0x24a] sm:$0xff]
    %v454 = vld [vmem:[%s279 + $0x25a] sm:$0xff]
    %v455 = vld [vmem:[%s279 + $0x262] sm:$0xff]
    %v456 = vld [vmem:[%s279 + $0x272] sm:$0xff]
    %v457 = vld [vmem:[%s279 + $0x27a] sm:$0xff]
    %v458 = vld [vmem:[%s279 + $0x28a] sm:$0xff]
    %v459 = vld [vmem:[%s279 + $0x292] sm:$0xff]
    %v460 = vld [vmem:[%s279 + $0x2a2] sm:$0xff]
    %v461 = vld [vmem:[%s279 + $0x2aa] sm:$0xff]
    %v462 = vld [vmem:[%s279 + $0x2ba] sm:$0xff]
    %v463 = vld [vmem:[%s279 + $0x2c2] sm:$0xff]
    %v464 = vld [vmem:[%s279 + $0x2d2] sm:$0xff]
    %v465 = vld [vmem:[%s279 + $0x2da] sm:$0xff]
    %v466 = vld [vmem:[%s279 + $0x2ea] sm:$0xff]
    %v467 = vld [vmem:[%s279 + $0x2f2] sm:$0xff]
    %v468 = vld [vmem:[%s279 + $0x302] sm:$0xff]
    %v469 = vld [vmem:[%s279 + $0x30a] sm:$0xff]
    %v470 = vld [vmem:[%s279 + $0x31a] sm:$0xff]
    %v471 = vld [vmem:[%s279 + $0x322] sm:$0xff]
    %s472 = scalar_lea.vmem %s0, 48
    %v473 = vld [vmem:[%s472] sm:$0xff]
    %v474 = vld [vmem:[%s472 + $0x8] sm:$0xff]
    %v475 = vld [vmem:[%s472 + $0x18] sm:$0xff]
    %v476 = vld [vmem:[%s472 + $0x20] sm:$0xff]
    %v477 = vld [vmem:[%s472 + $0x30] sm:$0xff]
    %v478 = vld [vmem:[%s472 + $0x38] sm:$0xff]
    %v479 = vld [vmem:[%s472 + $0x48] sm:$0xff]
    %v480 = vld [vmem:[%s472 + $0x50] sm:$0xff]
    %v481 = vld [vmem:[%s472 + $0x60] sm:$0xff]
    %v482 = vld [vmem:[%s472 + $0x68] sm:$0xff]
    %v483 = vld [vmem:[%s472 + $0x78] sm:$0xff]
    %v484 = vld [vmem:[%s472 + $0x80] sm:$0xff]
    %v485 = vld [vmem:[%s472 + $0x90] sm:$0xff]
    %v486 = vld [vmem:[%s472 + $0x98] sm:$0xff]
    %v487 = vld [vmem:[%s472 + $0xa8] sm:$0xff]
    %v488 = vld [vmem:[%s472 + $0xb0] sm:$0xff]
    %v489 = vld [vmem:[%s472 + $0xc0] sm:$0xff]
    %v490 = vld [vmem:[%s472 + $0xc8] sm:$0xff]
    %v491 = vld [vmem:[%s472 + $0xd8] sm:$0xff]
    %v492 = vld [vmem:[%s472 + $0xe0] sm:$0xff]
    %v493 = vld [vmem:[%s472 + $0xf0] sm:$0xff]
    %v494 = vld [vmem:[%s472 + $0xf8] sm:$0xff]
    %v495 = vld [vmem:[%s472 + $0x108] sm:$0xff]
    %v496 = vld [vmem:[%s472 + $0x110] sm:$0xff]
    %v497 = vld [vmem:[%s472 + $0x120] sm:$0xff]
    %v498 = vld [vmem:[%s472 + $0x128] sm:$0xff]
    %v499 = vld [vmem:[%s472 + $0x138] sm:$0xff]
    %v500 = vld [vmem:[%s472 + $0x140] sm:$0xff]
    %v501 = vld [vmem:[%s472 + $0x150] sm:$0xff]
    %v502 = vld [vmem:[%s472 + $0x158] sm:$0xff]
    %v503 = vld [vmem:[%s472 + $0x168] sm:$0xff]
    %v504 = vld [vmem:[%s472 + $0x170] sm:$0xff]
    %v505 = vld [vmem:[%s472 + $0x1b0] sm:$0xff]
    %v506 = vld [vmem:[%s472 + $0x1b8] sm:$0xff]
    %v507 = vld [vmem:[%s472 + $0x1c8] sm:$0xff]
    %v508 = vld [vmem:[%s472 + $0x1d0] sm:$0xff]
    %v509 = vld [vmem:[%s472 + $0x1e0] sm:$0xff]
    %v510 = vld [vmem:[%s472 + $0x1e8] sm:$0xff]
    %v511 = vld [vmem:[%s472 + $0x1f8] sm:$0xff]
    %v512 = vld [vmem:[%s472 + $0x200] sm:$0xff]
    %v513 = vld [vmem:[%s472 + $0x210] sm:$0xff]
    %v514 = vld [vmem:[%s472 + $0x218] sm:$0xff]
    %v515 = vld [vmem:[%s472 + $0x228] sm:$0xff]
    %v516 = vld [vmem:[%s472 + $0x230] sm:$0xff]
    %v517 = vld [vmem:[%s472 + $0x240] sm:$0xff]
    %v518 = vld [vmem:[%s472 + $0x248] sm:$0xff]
    %v519 = vld [vmem:[%s472 + $0x258] sm:$0xff]
    %v520 = vld [vmem:[%s472 + $0x260] sm:$0xff]
    %v521 = vld [vmem:[%s472 + $0x270] sm:$0xff]
    %v522 = vld [vmem:[%s472 + $0x278] sm:$0xff]
    %v523 = vld [vmem:[%s472 + $0x288] sm:$0xff]
    %v524 = vld [vmem:[%s472 + $0x290] sm:$0xff]
    %v525 = vld [vmem:[%s472 + $0x2a0] sm:$0xff]
    %v526 = vld [vmem:[%s472 + $0x2a8] sm:$0xff]
    %v527 = vld [vmem:[%s472 + $0x2b8] sm:$0xff]
    %v528 = vld [vmem:[%s472 + $0x2c0] sm:$0xff]
    %v529 = vld [vmem:[%s472 + $0x2d0] sm:$0xff]
    %v530 = vld [vmem:[%s472 + $0x2d8] sm:$0xff]
    %v531 = vld [vmem:[%s472 + $0x2e8] sm:$0xff]
    %v532 = vld [vmem:[%s472 + $0x2f0] sm:$0xff]
    %v533 = vld [vmem:[%s472 + $0x300] sm:$0xff]
    %v534 = vld [vmem:[%s472 + $0x308] sm:$0xff]
    %v535 = vld [vmem:[%s472 + $0x318] sm:$0xff]
    %v536 = vld [vmem:[%s472 + $0x320] sm:$0xff]
    %v537 = vld [vmem:[%s472 + $0x1] sm:$0xff]
    %v538 = vld [vmem:[%s472 + $0x9] sm:$0xff]
    %v539 = vld [vmem:[%s472 + $0x19] sm:$0xff]
    %v540 = vld [vmem:[%s472 + $0x21] sm:$0xff]
    %v541 = vld [vmem:[%s472 + $0x31] sm:$0xff]
    %v542 = vld [vmem:[%s472 + $0x39] sm:$0xff]
    %v543 = vld [vmem:[%s472 + $0x49] sm:$0xff]
    %v544 = vld [vmem:[%s472 + $0x51] sm:$0xff]
    %v545 = vld [vmem:[%s472 + $0x61] sm:$0xff]
    %v546 = vld [vmem:[%s472 + $0x69] sm:$0xff]
    %v547 = vld [vmem:[%s472 + $0x79] sm:$0xff]
    %v548 = vld [vmem:[%s472 + $0x81] sm:$0xff]
    %v549 = vld [vmem:[%s472 + $0x91] sm:$0xff]
    %v550 = vld [vmem:[%s472 + $0x99] sm:$0xff]
    %v551 = vld [vmem:[%s472 + $0xa9] sm:$0xff]
    %v552 = vld [vmem:[%s472 + $0xb1] sm:$0xff]
    %v553 = vld [vmem:[%s472 + $0xc1] sm:$0xff]
    %v554 = vld [vmem:[%s472 + $0xc9] sm:$0xff]
    %v555 = vld [vmem:[%s472 + $0xd9] sm:$0xff]
    %v556 = vld [vmem:[%s472 + $0xe1] sm:$0xff]
    %v557 = vld [vmem:[%s472 + $0xf1] sm:$0xff]
    %v558 = vld [vmem:[%s472 + $0xf9] sm:$0xff]
    %v559 = vld [vmem:[%s472 + $0x109] sm:$0xff]
    %v560 = vld [vmem:[%s472 + $0x111] sm:$0xff]
    %v561 = vld [vmem:[%s472 + $0x121] sm:$0xff]
    %v562 = vld [vmem:[%s472 + $0x129] sm:$0xff]
    %v563 = vld [vmem:[%s472 + $0x139] sm:$0xff]
    %v564 = vld [vmem:[%s472 + $0x141] sm:$0xff]
    %v565 = vld [vmem:[%s472 + $0x151] sm:$0xff]
    %v566 = vld [vmem:[%s472 + $0x159] sm:$0xff]
    %v567 = vld [vmem:[%s472 + $0x169] sm:$0xff]
    %v568 = vld [vmem:[%s472 + $0x171] sm:$0xff]
    %v569 = vld [vmem:[%s472 + $0x1b1] sm:$0xff]
    %v570 = vld [vmem:[%s472 + $0x1b9] sm:$0xff]
    %v571 = vld [vmem:[%s472 + $0x1c9] sm:$0xff]
    %v572 = vld [vmem:[%s472 + $0x1d1] sm:$0xff]
    %v573 = vld [vmem:[%s472 + $0x1e1] sm:$0xff]
    %v574 = vld [vmem:[%s472 + $0x1e9] sm:$0xff]
    %v575 = vld [vmem:[%s472 + $0x1f9] sm:$0xff]
    %v576 = vld [vmem:[%s472 + $0x201] sm:$0xff]
    %v577 = vld [vmem:[%s472 + $0x211] sm:$0xff]
    %v578 = vld [vmem:[%s472 + $0x219] sm:$0xff]
    %v579 = vld [vmem:[%s472 + $0x229] sm:$0xff]
    %v580 = vld [vmem:[%s472 + $0x231] sm:$0xff]
    %v581 = vld [vmem:[%s472 + $0x241] sm:$0xff]
    %v582 = vld [vmem:[%s472 + $0x249] sm:$0xff]
    %v583 = vld [vmem:[%s472 + $0x259] sm:$0xff]
    %v584 = vld [vmem:[%s472 + $0x261] sm:$0xff]
    %v585 = vld [vmem:[%s472 + $0x271] sm:$0xff]
    %v586 = vld [vmem:[%s472 + $0x279] sm:$0xff]
    %v587 = vld [vmem:[%s472 + $0x289] sm:$0xff]
    %v588 = vld [vmem:[%s472 + $0x291] sm:$0xff]
    %v589 = vld [vmem:[%s472 + $0x2a1] sm:$0xff]
    %v590 = vld [vmem:[%s472 + $0x2a9] sm:$0xff]
    %v591 = vld [vmem:[%s472 + $0x2b9] sm:$0xff]
    %v592 = vld [vmem:[%s472 + $0x2c1] sm:$0xff]
    %v593 = vld [vmem:[%s472 + $0x2d1] sm:$0xff]
    %v594 = vld [vmem:[%s472 + $0x2d9] sm:$0xff]
    %v595 = vld [vmem:[%s472 + $0x2e9] sm:$0xff]
    %v596 = vld [vmem:[%s472 + $0x2f1] sm:$0xff]
    %v597 = vld [vmem:[%s472 + $0x301] sm:$0xff]
    %v598 = vld [vmem:[%s472 + $0x309] sm:$0xff]
    %v599 = vld [vmem:[%s472 + $0x319] sm:$0xff]
    %v600 = vld [vmem:[%s472 + $0x321] sm:$0xff]
    %v601 = vld [vmem:[%s472 + $0x2] sm:$0xff]
    %v602 = vld [vmem:[%s472 + $0xa] sm:$0xff]
    %v603 = vld [vmem:[%s472 + $0x1a] sm:$0xff]
    %v604 = vld [vmem:[%s472 + $0x22] sm:$0xff]
    %v605 = vld [vmem:[%s472 + $0x32] sm:$0xff]
    %v606 = vld [vmem:[%s472 + $0x3a] sm:$0xff]
    %v607 = vld [vmem:[%s472 + $0x4a] sm:$0xff]
    %v608 = vld [vmem:[%s472 + $0x52] sm:$0xff]
    %v609 = vld [vmem:[%s472 + $0x62] sm:$0xff]
    %v610 = vld [vmem:[%s472 + $0x6a] sm:$0xff]
    %v611 = vld [vmem:[%s472 + $0x7a] sm:$0xff]
    %v612 = vld [vmem:[%s472 + $0x82] sm:$0xff]
    %v613 = vld [vmem:[%s472 + $0x92] sm:$0xff]
    %v614 = vld [vmem:[%s472 + $0x9a] sm:$0xff]
    %v615 = vld [vmem:[%s472 + $0xaa] sm:$0xff]
    %v616 = vld [vmem:[%s472 + $0xb2] sm:$0xff]
    %v617 = vld [vmem:[%s472 + $0xc2] sm:$0xff]
    %v618 = vld [vmem:[%s472 + $0xca] sm:$0xff]
    %v619 = vld [vmem:[%s472 + $0xda] sm:$0xff]
    %v620 = vld [vmem:[%s472 + $0xe2] sm:$0xff]
    %v621 = vld [vmem:[%s472 + $0xf2] sm:$0xff]
    %v622 = vld [vmem:[%s472 + $0xfa] sm:$0xff]
    %v623 = vld [vmem:[%s472 + $0x10a] sm:$0xff]
    %v624 = vld [vmem:[%s472 + $0x112] sm:$0xff]
    %v625 = vld [vmem:[%s472 + $0x122] sm:$0xff]
    %v626 = vld [vmem:[%s472 + $0x12a] sm:$0xff]
    %v627 = vld [vmem:[%s472 + $0x13a] sm:$0xff]
    %v628 = vld [vmem:[%s472 + $0x142] sm:$0xff]
    %v629 = vld [vmem:[%s472 + $0x152] sm:$0xff]
    %v630 = vld [vmem:[%s472 + $0x15a] sm:$0xff]
    %v631 = vld [vmem:[%s472 + $0x16a] sm:$0xff]
    %v632 = vld [vmem:[%s472 + $0x172] sm:$0xff]
    %v633 = vld [vmem:[%s472 + $0x1b2] sm:$0xff]
    %v634 = vld [vmem:[%s472 + $0x1ba] sm:$0xff]
    %v635 = vld [vmem:[%s472 + $0x1ca] sm:$0xff]
    %v636 = vld [vmem:[%s472 + $0x1d2] sm:$0xff]
    %v637 = vld [vmem:[%s472 + $0x1e2] sm:$0xff]
    %v638 = vld [vmem:[%s472 + $0x1ea] sm:$0xff]
    %v639 = vld [vmem:[%s472 + $0x1fa] sm:$0xff]
    %v640 = vld [vmem:[%s472 + $0x202] sm:$0xff]
    %v641 = vld [vmem:[%s472 + $0x212] sm:$0xff]
    %v642 = vld [vmem:[%s472 + $0x21a] sm:$0xff]
    %v643 = vld [vmem:[%s472 + $0x22a] sm:$0xff]
    %v644 = vld [vmem:[%s472 + $0x232] sm:$0xff]
    %v645 = vld [vmem:[%s472 + $0x242] sm:$0xff]
    %v646 = vld [vmem:[%s472 + $0x24a] sm:$0xff]
    %v647 = vld [vmem:[%s472 + $0x25a] sm:$0xff]
    %v648 = vld [vmem:[%s472 + $0x262] sm:$0xff]
    %v649 = vld [vmem:[%s472 + $0x272] sm:$0xff]
    %v650 = vld [vmem:[%s472 + $0x27a] sm:$0xff]
    %v651 = vld [vmem:[%s472 + $0x28a] sm:$0xff]
    %v652 = vld [vmem:[%s472 + $0x292] sm:$0xff]
    %v653 = vld [vmem:[%s472 + $0x2a2] sm:$0xff]
    %v654 = vld [vmem:[%s472 + $0x2aa] sm:$0xff]
    %v655 = vld [vmem:[%s472 + $0x2ba] sm:$0xff]
    %v656 = vld [vmem:[%s472 + $0x2c2] sm:$0xff]
    %v657 = vld [vmem:[%s472 + $0x2d2] sm:$0xff]
    %v658 = vld [vmem:[%s472 + $0x2da] sm:$0xff]
    %v659 = vld [vmem:[%s472 + $0x2ea] sm:$0xff]
    %v660 = vld [vmem:[%s472 + $0x2f2] sm:$0xff]
    %v661 = vld [vmem:[%s472 + $0x302] sm:$0xff]
    %v662 = vld [vmem:[%s472 + $0x30a] sm:$0xff]
    %v663 = vld [vmem:[%s472 + $0x31a] sm:$0xff]
    %v664 = vld [vmem:[%s472 + $0x322] sm:$0xff]
    %729 = vrot.lane.b32.xlu0 %v151, 3
    %v730 = vpop.permute.xlu0 %729
    %731 = vrot.lane.b32.xlu0 %v152, 3
    %v732 = vpop.permute.xlu0 %731
    %733 = vrot.lane.b32.xlu0 %v153, 3
    %v734 = vpop.permute.xlu0 %733
    %735 = vrot.lane.b32.xlu0 %v154, 3
    %v736 = vpop.permute.xlu0 %735
    %737 = vrot.lane.b32.xlu0 %v155, 3
    %v738 = vpop.permute.xlu0 %737
    %739 = vrot.lane.b32.xlu0 %v156, 3
    %v740 = vpop.permute.xlu0 %739
    %741 = vrot.lane.b32.xlu0 %v157, 3
    %v742 = vpop.permute.xlu0 %741
    %743 = vrot.lane.b32.xlu0 %v158, 3
    %v744 = vpop.permute.xlu0 %743
    %745 = vrot.lane.b32.xlu0 %v159, 3
    %v746 = vpop.permute.xlu0 %745
    %747 = vrot.lane.b32.xlu0 %v160, 3
    %v748 = vpop.permute.xlu0 %747
    %749 = vrot.lane.b32.xlu0 %v161, 3
    %v750 = vpop.permute.xlu0 %749
    %751 = vrot.lane.b32.xlu0 %v162, 3
    %v752 = vpop.permute.xlu0 %751
    %753 = vrot.lane.b32.xlu0 %v163, 3
    %v754 = vpop.permute.xlu0 %753
    %755 = vrot.lane.b32.xlu0 %v164, 3
    %v756 = vpop.permute.xlu0 %755
    %757 = vrot.lane.b32.xlu0 %v165, 3
    %v758 = vpop.permute.xlu0 %757
    %759 = vrot.lane.b32.xlu0 %v166, 3
    %v760 = vpop.permute.xlu0 %759
    %761 = vrot.lane.b32.xlu0 %v167, 3
    %v762 = vpop.permute.xlu0 %761
    %763 = vrot.lane.b32.xlu0 %v168, 3
    %v764 = vpop.permute.xlu0 %763
    %765 = vrot.lane.b32.xlu0 %v169, 3
    %v766 = vpop.permute.xlu0 %765
    %767 = vrot.lane.b32.xlu0 %v170, 3
    %v768 = vpop.permute.xlu0 %767
    %769 = vrot.lane.b32.xlu0 %v171, 3
    %v770 = vpop.permute.xlu0 %769
    %771 = vrot.lane.b32.xlu0 %v172, 3
    %v772 = vpop.permute.xlu0 %771
    %773 = vrot.lane.b32.xlu0 %v173, 3
    %v774 = vpop.permute.xlu0 %773
    %775 = vrot.lane.b32.xlu0 %v174, 3
    %v776 = vpop.permute.xlu0 %775
    %777 = vrot.lane.b32.xlu0 %v175, 3
    %v778 = vpop.permute.xlu0 %777
    %779 = vrot.lane.b32.xlu0 %v176, 3
    %v780 = vpop.permute.xlu0 %779
    %781 = vrot.lane.b32.xlu0 %v177, 3
    %v782 = vpop.permute.xlu0 %781
    %783 = vrot.lane.b32.xlu0 %v178, 3
    %v784 = vpop.permute.xlu0 %783
    %785 = vrot.lane.b32.xlu0 %v179, 3
    %v786 = vpop.permute.xlu0 %785
    %787 = vrot.lane.b32.xlu0 %v180, 3
    %v788 = vpop.permute.xlu0 %787
    %789 = vrot.lane.b32.xlu0 %v181, 3
    %v790 = vpop.permute.xlu0 %789
    %791 = vrot.lane.b32.xlu0 %v182, 3
    %v792 = vpop.permute.xlu0 %791
    %793 = vrot.lane.b32.xlu0 %v183, 3
    %v794 = vpop.permute.xlu0 %793
    %795 = vrot.lane.b32.xlu0 %v184, 3
    %v796 = vpop.permute.xlu0 %795
    %797 = vrot.lane.b32.xlu0 %v185, 3
    %v798 = vpop.permute.xlu0 %797
    %799 = vrot.lane.b32.xlu0 %v186, 3
    %v800 = vpop.permute.xlu0 %799
    %801 = vrot.lane.b32.xlu0 %v187, 3
    %v802 = vpop.permute.xlu0 %801
    %803 = vrot.lane.b32.xlu0 %v188, 3
    %v804 = vpop.permute.xlu0 %803
    %805 = vrot.lane.b32.xlu0 %v189, 3
    %v806 = vpop.permute.xlu0 %805
    %807 = vrot.lane.b32.xlu0 %v190, 3
    %v808 = vpop.permute.xlu0 %807
    %809 = vrot.lane.b32.xlu0 %v191, 3
    %v810 = vpop.permute.xlu0 %809
    %811 = vrot.lane.b32.xlu0 %v192, 3
    %v812 = vpop.permute.xlu0 %811
    %813 = vrot.lane.b32.xlu0 %v193, 3
    %v814 = vpop.permute.xlu0 %813
    %815 = vrot.lane.b32.xlu0 %v194, 3
    %v816 = vpop.permute.xlu0 %815
    %817 = vrot.lane.b32.xlu0 %v195, 3
    %v818 = vpop.permute.xlu0 %817
    %819 = vrot.lane.b32.xlu0 %v196, 3
    %v820 = vpop.permute.xlu0 %819
    %821 = vrot.lane.b32.xlu0 %v197, 3
    %v822 = vpop.permute.xlu0 %821
    %823 = vrot.lane.b32.xlu0 %v198, 3
    %v824 = vpop.permute.xlu0 %823
    %825 = vrot.lane.b32.xlu0 %v199, 3
    %v826 = vpop.permute.xlu0 %825
    %827 = vrot.lane.b32.xlu0 %v200, 3
    %v828 = vpop.permute.xlu0 %827
    %829 = vrot.lane.b32.xlu0 %v201, 3
    %v830 = vpop.permute.xlu0 %829
    %831 = vrot.lane.b32.xlu0 %v202, 3
    %v832 = vpop.permute.xlu0 %831
    %833 = vrot.lane.b32.xlu0 %v203, 3
    %v834 = vpop.permute.xlu0 %833
    %835 = vrot.lane.b32.xlu0 %v204, 3
    %v836 = vpop.permute.xlu0 %835
    %837 = vrot.lane.b32.xlu0 %v205, 3
    %v838 = vpop.permute.xlu0 %837
    %839 = vrot.lane.b32.xlu0 %v206, 3
    %v840 = vpop.permute.xlu0 %839
    %841 = vrot.lane.b32.xlu0 %v207, 3
    %v842 = vpop.permute.xlu0 %841
    %843 = vrot.lane.b32.xlu0 %v208, 3
    %v844 = vpop.permute.xlu0 %843
    %845 = vrot.lane.b32.xlu0 %v209, 3
    %v846 = vpop.permute.xlu0 %845
    %847 = vrot.lane.b32.xlu0 %v210, 3
    %v848 = vpop.permute.xlu0 %847
    %849 = vrot.lane.b32.xlu0 %v211, 3
    %v850 = vpop.permute.xlu0 %849
    %851 = vrot.lane.b32.xlu0 %v212, 3
    %v852 = vpop.permute.xlu0 %851
    %853 = vrot.lane.b32.xlu0 %v213, 3
    %v854 = vpop.permute.xlu0 %853
    %855 = vrot.lane.b32.xlu0 %v214, 3
    %v856 = vpop.permute.xlu0 %855
    %985 = vrot.lane.b32.xlu0 %v215, 6
    %v986 = vpop.permute.xlu0 %985
    %987 = vrot.lane.b32.xlu0 %v216, 6
    %v988 = vpop.permute.xlu0 %987
    %989 = vrot.lane.b32.xlu0 %v217, 6
    %v990 = vpop.permute.xlu0 %989
    %991 = vrot.lane.b32.xlu0 %v218, 6
    %v992 = vpop.permute.xlu0 %991
    %993 = vrot.lane.b32.xlu0 %v219, 6
    %v994 = vpop.permute.xlu0 %993
    %995 = vrot.lane.b32.xlu0 %v220, 6
    %v996 = vpop.permute.xlu0 %995
    %997 = vrot.lane.b32.xlu0 %v221, 6
    %v998 = vpop.permute.xlu0 %997
    %999 = vrot.lane.b32.xlu0 %v222, 6
    %v1000 = vpop.permute.xlu0 %999
    %1001 = vrot.lane.b32.xlu0 %v223, 6
    %v1002 = vpop.permute.xlu0 %1001
    %1003 = vrot.lane.b32.xlu0 %v224, 6
    %v1004 = vpop.permute.xlu0 %1003
    %1005 = vrot.lane.b32.xlu0 %v225, 6
    %v1006 = vpop.permute.xlu0 %1005
    %1007 = vrot.lane.b32.xlu0 %v226, 6
    %v1008 = vpop.permute.xlu0 %1007
    %1009 = vrot.lane.b32.xlu0 %v227, 6
    %v1010 = vpop.permute.xlu0 %1009
    %1011 = vrot.lane.b32.xlu0 %v228, 6
    %v1012 = vpop.permute.xlu0 %1011
    %1013 = vrot.lane.b32.xlu0 %v229, 6
    %v1014 = vpop.permute.xlu0 %1013
    %1015 = vrot.lane.b32.xlu0 %v230, 6
    %v1016 = vpop.permute.xlu0 %1015
    %1017 = vrot.lane.b32.xlu0 %v231, 6
    %v1018 = vpop.permute.xlu0 %1017
    %1019 = vrot.lane.b32.xlu0 %v232, 6
    %v1020 = vpop.permute.xlu0 %1019
    %1021 = vrot.lane.b32.xlu0 %v233, 6
    %v1022 = vpop.permute.xlu0 %1021
    %1023 = vrot.lane.b32.xlu0 %v234, 6
    %v1024 = vpop.permute.xlu0 %1023
    %1025 = vrot.lane.b32.xlu0 %v235, 6
    %v1026 = vpop.permute.xlu0 %1025
    %1027 = vrot.lane.b32.xlu0 %v236, 6
    %v1028 = vpop.permute.xlu0 %1027
    %1029 = vrot.lane.b32.xlu0 %v237, 6
    %v1030 = vpop.permute.xlu0 %1029
    %1031 = vrot.lane.b32.xlu0 %v238, 6
    %v1032 = vpop.permute.xlu0 %1031
    %1033 = vrot.lane.b32.xlu0 %v239, 6
    %v1034 = vpop.permute.xlu0 %1033
    %1035 = vrot.lane.b32.xlu0 %v240, 6
    %v1036 = vpop.permute.xlu0 %1035
    %1037 = vrot.lane.b32.xlu0 %v241, 6
    %v1038 = vpop.permute.xlu0 %1037
    %1039 = vrot.lane.b32.xlu0 %v242, 6
    %v1040 = vpop.permute.xlu0 %1039
    %1041 = vrot.lane.b32.xlu0 %v243, 6
    %v1042 = vpop.permute.xlu0 %1041
    %1043 = vrot.lane.b32.xlu0 %v244, 6
    %v1044 = vpop.permute.xlu0 %1043
    %1045 = vrot.lane.b32.xlu0 %v245, 6
    %v1046 = vpop.permute.xlu0 %1045
    %1047 = vrot.lane.b32.xlu0 %v246, 6
    %v1048 = vpop.permute.xlu0 %1047
    %1049 = vrot.lane.b32.xlu0 %v247, 6
    %v1050 = vpop.permute.xlu0 %1049
    %1051 = vrot.lane.b32.xlu0 %v248, 6
    %v1052 = vpop.permute.xlu0 %1051
    %1053 = vrot.lane.b32.xlu0 %v249, 6
    %v1054 = vpop.permute.xlu0 %1053
    %1055 = vrot.lane.b32.xlu0 %v250, 6
    %v1056 = vpop.permute.xlu0 %1055
    %1057 = vrot.lane.b32.xlu0 %v251, 6
    %v1058 = vpop.permute.xlu0 %1057
    %1059 = vrot.lane.b32.xlu0 %v252, 6
    %v1060 = vpop.permute.xlu0 %1059
    %1061 = vrot.lane.b32.xlu0 %v253, 6
    %v1062 = vpop.permute.xlu0 %1061
    %1063 = vrot.lane.b32.xlu0 %v254, 6
    %v1064 = vpop.permute.xlu0 %1063
    %1065 = vrot.lane.b32.xlu0 %v255, 6
    %v1066 = vpop.permute.xlu0 %1065
    %1067 = vrot.lane.b32.xlu0 %v256, 6
    %v1068 = vpop.permute.xlu0 %1067
    %1069 = vrot.lane.b32.xlu0 %v257, 6
    %v1070 = vpop.permute.xlu0 %1069
    %1071 = vrot.lane.b32.xlu0 %v258, 6
    %v1072 = vpop.permute.xlu0 %1071
    %1073 = vrot.lane.b32.xlu0 %v259, 6
    %v1074 = vpop.permute.xlu0 %1073
    %1075 = vrot.lane.b32.xlu0 %v260, 6
    %v1076 = vpop.permute.xlu0 %1075
    %1077 = vrot.lane.b32.xlu0 %v261, 6
    %v1078 = vpop.permute.xlu0 %1077
    %1079 = vrot.lane.b32.xlu0 %v262, 6
    %v1080 = vpop.permute.xlu0 %1079
    %1081 = vrot.lane.b32.xlu0 %v263, 6
    %v1082 = vpop.permute.xlu0 %1081
    %1083 = vrot.lane.b32.xlu0 %v264, 6
    %v1084 = vpop.permute.xlu0 %1083
    %1085 = vrot.lane.b32.xlu0 %v265, 6
    %v1086 = vpop.permute.xlu0 %1085
    %1087 = vrot.lane.b32.xlu0 %v266, 6
    %v1088 = vpop.permute.xlu0 %1087
    %1089 = vrot.lane.b32.xlu0 %v267, 6
    %v1090 = vpop.permute.xlu0 %1089
    %1091 = vrot.lane.b32.xlu0 %v268, 6
    %v1092 = vpop.permute.xlu0 %1091
    %1093 = vrot.lane.b32.xlu0 %v269, 6
    %v1094 = vpop.permute.xlu0 %1093
    %1095 = vrot.lane.b32.xlu0 %v270, 6
    %v1096 = vpop.permute.xlu0 %1095
    %1097 = vrot.lane.b32.xlu0 %v271, 6
    %v1098 = vpop.permute.xlu0 %1097
    %1099 = vrot.lane.b32.xlu0 %v272, 6
    %v1100 = vpop.permute.xlu0 %1099
    %1101 = vrot.lane.b32.xlu0 %v273, 6
    %v1102 = vpop.permute.xlu0 %1101
    %1103 = vrot.lane.b32.xlu0 %v274, 6
    %v1104 = vpop.permute.xlu0 %1103
    %1105 = vrot.lane.b32.xlu0 %v275, 6
    %v1106 = vpop.permute.xlu0 %1105
    %1107 = vrot.lane.b32.xlu0 %v276, 6
    %v1108 = vpop.permute.xlu0 %1107
    %1109 = vrot.lane.b32.xlu0 %v277, 6
    %v1110 = vpop.permute.xlu0 %1109
    %1111 = vrot.lane.b32.xlu0 %v278, 6
    %v1112 = vpop.permute.xlu0 %1111
    %1241 = vrot.lane.b32.xlu0 %v280, 9
    %v1242 = vpop.permute.xlu0 %1241
    %1243 = vrot.lane.b32.xlu0 %v281, 9
    %v1244 = vpop.permute.xlu0 %1243
    %1245 = vrot.lane.b32.xlu0 %v282, 9
    %v1246 = vpop.permute.xlu0 %1245
    %1247 = vrot.lane.b32.xlu0 %v283, 9
    %v1248 = vpop.permute.xlu0 %1247
    %1249 = vrot.lane.b32.xlu0 %v284, 9
    %v1250 = vpop.permute.xlu0 %1249
    %1251 = vrot.lane.b32.xlu0 %v285, 9
    %v1252 = vpop.permute.xlu0 %1251
    %1253 = vrot.lane.b32.xlu0 %v286, 9
    %v1254 = vpop.permute.xlu0 %1253
    %1255 = vrot.lane.b32.xlu0 %v287, 9
    %v1256 = vpop.permute.xlu0 %1255
    %1257 = vrot.lane.b32.xlu0 %v288, 9
    %v1258 = vpop.permute.xlu0 %1257
    %1259 = vrot.lane.b32.xlu0 %v289, 9
    %v1260 = vpop.permute.xlu0 %1259
    %1261 = vrot.lane.b32.xlu0 %v290, 9
    %v1262 = vpop.permute.xlu0 %1261
    %1263 = vrot.lane.b32.xlu0 %v291, 9
    %v1264 = vpop.permute.xlu0 %1263
    %1265 = vrot.lane.b32.xlu0 %v292, 9
    %v1266 = vpop.permute.xlu0 %1265
    %1267 = vrot.lane.b32.xlu0 %v293, 9
    %v1268 = vpop.permute.xlu0 %1267
    %1269 = vrot.lane.b32.xlu0 %v294, 9
    %v1270 = vpop.permute.xlu0 %1269
    %1271 = vrot.lane.b32.xlu0 %v295, 9
    %v1272 = vpop.permute.xlu0 %1271
    %1273 = vrot.lane.b32.xlu0 %v296, 9
    %v1274 = vpop.permute.xlu0 %1273
    %1275 = vrot.lane.b32.xlu0 %v297, 9
    %v1276 = vpop.permute.xlu0 %1275
    %1277 = vrot.lane.b32.xlu0 %v298, 9
    %v1278 = vpop.permute.xlu0 %1277
    %1279 = vrot.lane.b32.xlu0 %v299, 9
    %v1280 = vpop.permute.xlu0 %1279
    %1281 = vrot.lane.b32.xlu0 %v300, 9
    %v1282 = vpop.permute.xlu0 %1281
    %1283 = vrot.lane.b32.xlu0 %v301, 9
    %v1284 = vpop.permute.xlu0 %1283
    %1285 = vrot.lane.b32.xlu0 %v302, 9
    %v1286 = vpop.permute.xlu0 %1285
    %1287 = vrot.lane.b32.xlu0 %v303, 9
    %v1288 = vpop.permute.xlu0 %1287
    %1289 = vrot.lane.b32.xlu0 %v304, 9
    %v1290 = vpop.permute.xlu0 %1289
    %1291 = vrot.lane.b32.xlu0 %v305, 9
    %v1292 = vpop.permute.xlu0 %1291
    %1293 = vrot.lane.b32.xlu0 %v306, 9
    %v1294 = vpop.permute.xlu0 %1293
    %1295 = vrot.lane.b32.xlu0 %v307, 9
    %v1296 = vpop.permute.xlu0 %1295
    %1297 = vrot.lane.b32.xlu0 %v308, 9
    %v1298 = vpop.permute.xlu0 %1297
    %1299 = vrot.lane.b32.xlu0 %v309, 9
    %v1300 = vpop.permute.xlu0 %1299
    %1301 = vrot.lane.b32.xlu0 %v310, 9
    %v1302 = vpop.permute.xlu0 %1301
    %1303 = vrot.lane.b32.xlu0 %v311, 9
    %v1304 = vpop.permute.xlu0 %1303
    %1305 = vrot.lane.b32.xlu0 %v312, 9
    %v1306 = vpop.permute.xlu0 %1305
    %1307 = vrot.lane.b32.xlu0 %v313, 9
    %v1308 = vpop.permute.xlu0 %1307
    %1309 = vrot.lane.b32.xlu0 %v314, 9
    %v1310 = vpop.permute.xlu0 %1309
    %1311 = vrot.lane.b32.xlu0 %v315, 9
    %v1312 = vpop.permute.xlu0 %1311
    %1313 = vrot.lane.b32.xlu0 %v316, 9
    %v1314 = vpop.permute.xlu0 %1313
    %1315 = vrot.lane.b32.xlu0 %v317, 9
    %v1316 = vpop.permute.xlu0 %1315
    %1317 = vrot.lane.b32.xlu0 %v318, 9
    %v1318 = vpop.permute.xlu0 %1317
    %1319 = vrot.lane.b32.xlu0 %v319, 9
    %v1320 = vpop.permute.xlu0 %1319
    %1321 = vrot.lane.b32.xlu0 %v320, 9
    %v1322 = vpop.permute.xlu0 %1321
    %1323 = vrot.lane.b32.xlu0 %v321, 9
    %v1324 = vpop.permute.xlu0 %1323
    %1325 = vrot.lane.b32.xlu0 %v322, 9
    %v1326 = vpop.permute.xlu0 %1325
    %1327 = vrot.lane.b32.xlu0 %v323, 9
    %v1328 = vpop.permute.xlu0 %1327
    %1329 = vrot.lane.b32.xlu0 %v324, 9
    %v1330 = vpop.permute.xlu0 %1329
    %1331 = vrot.lane.b32.xlu0 %v325, 9
    %v1332 = vpop.permute.xlu0 %1331
    %1333 = vrot.lane.b32.xlu0 %v326, 9
    %v1334 = vpop.permute.xlu0 %1333
    %1335 = vrot.lane.b32.xlu0 %v327, 9
    %v1336 = vpop.permute.xlu0 %1335
    %1337 = vrot.lane.b32.xlu0 %v328, 9
    %v1338 = vpop.permute.xlu0 %1337
    %1339 = vrot.lane.b32.xlu0 %v329, 9
    %v1340 = vpop.permute.xlu0 %1339
    %1341 = vrot.lane.b32.xlu0 %v330, 9
    %v1342 = vpop.permute.xlu0 %1341
    %1343 = vrot.lane.b32.xlu0 %v331, 9
    %v1344 = vpop.permute.xlu0 %1343
    %1345 = vrot.lane.b32.xlu0 %v332, 9
    %v1346 = vpop.permute.xlu0 %1345
    %1347 = vrot.lane.b32.xlu0 %v333, 9
    %v1348 = vpop.permute.xlu0 %1347
    %1349 = vrot.lane.b32.xlu0 %v334, 9
    %v1350 = vpop.permute.xlu0 %1349
    %1351 = vrot.lane.b32.xlu0 %v335, 9
    %v1352 = vpop.permute.xlu0 %1351
    %1353 = vrot.lane.b32.xlu0 %v336, 9
    %v1354 = vpop.permute.xlu0 %1353
    %1355 = vrot.lane.b32.xlu0 %v337, 9
    %v1356 = vpop.permute.xlu0 %1355
    %1357 = vrot.lane.b32.xlu0 %v338, 9
    %v1358 = vpop.permute.xlu0 %1357
    %1359 = vrot.lane.b32.xlu0 %v339, 9
    %v1360 = vpop.permute.xlu0 %1359
    %1361 = vrot.lane.b32.xlu0 %v340, 9
    %v1362 = vpop.permute.xlu0 %1361
    %1363 = vrot.lane.b32.xlu0 %v341, 9
    %v1364 = vpop.permute.xlu0 %1363
    %1365 = vrot.lane.b32.xlu0 %v342, 9
    %v1366 = vpop.permute.xlu0 %1365
    %1367 = vrot.lane.b32.xlu0 %v343, 9
    %v1368 = vpop.permute.xlu0 %1367
    %1497 = vrot.lane.b32.xlu0 %v344, 12
    %v1498 = vpop.permute.xlu0 %1497
    %1499 = vrot.lane.b32.xlu0 %v345, 12
    %v1500 = vpop.permute.xlu0 %1499
    %1501 = vrot.lane.b32.xlu0 %v346, 12
    %v1502 = vpop.permute.xlu0 %1501
    %1503 = vrot.lane.b32.xlu0 %v347, 12
    %v1504 = vpop.permute.xlu0 %1503
    %1505 = vrot.lane.b32.xlu0 %v348, 12
    %v1506 = vpop.permute.xlu0 %1505
    %1507 = vrot.lane.b32.xlu0 %v349, 12
    %v1508 = vpop.permute.xlu0 %1507
    %1509 = vrot.lane.b32.xlu0 %v350, 12
    %v1510 = vpop.permute.xlu0 %1509
    %1511 = vrot.lane.b32.xlu0 %v351, 12
    %v1512 = vpop.permute.xlu0 %1511
    %1513 = vrot.lane.b32.xlu0 %v352, 12
    %v1514 = vpop.permute.xlu0 %1513
    %1515 = vrot.lane.b32.xlu0 %v353, 12
    %v1516 = vpop.permute.xlu0 %1515
    %1517 = vrot.lane.b32.xlu0 %v354, 12
    %v1518 = vpop.permute.xlu0 %1517
    %1519 = vrot.lane.b32.xlu0 %v355, 12
    %v1520 = vpop.permute.xlu0 %1519
    %1521 = vrot.lane.b32.xlu0 %v356, 12
    %v1522 = vpop.permute.xlu0 %1521
    %1523 = vrot.lane.b32.xlu0 %v357, 12
    %v1524 = vpop.permute.xlu0 %1523
    %1525 = vrot.lane.b32.xlu0 %v358, 12
    %v1526 = vpop.permute.xlu0 %1525
    %1527 = vrot.lane.b32.xlu0 %v359, 12
    %v1528 = vpop.permute.xlu0 %1527
    %1529 = vrot.lane.b32.xlu0 %v360, 12
    %v1530 = vpop.permute.xlu0 %1529
    %1531 = vrot.lane.b32.xlu0 %v361, 12
    %v1532 = vpop.permute.xlu0 %1531
    %1533 = vrot.lane.b32.xlu0 %v362, 12
    %v1534 = vpop.permute.xlu0 %1533
    %1535 = vrot.lane.b32.xlu0 %v363, 12
    %v1536 = vpop.permute.xlu0 %1535
    %1537 = vrot.lane.b32.xlu0 %v364, 12
    %v1538 = vpop.permute.xlu0 %1537
    %1539 = vrot.lane.b32.xlu0 %v365, 12
    %v1540 = vpop.permute.xlu0 %1539
    %1541 = vrot.lane.b32.xlu0 %v366, 12
    %v1542 = vpop.permute.xlu0 %1541
    %1543 = vrot.lane.b32.xlu0 %v367, 12
    %v1544 = vpop.permute.xlu0 %1543
    %1545 = vrot.lane.b32.xlu0 %v368, 12
    %v1546 = vpop.permute.xlu0 %1545
    %1547 = vrot.lane.b32.xlu0 %v369, 12
    %v1548 = vpop.permute.xlu0 %1547
    %1549 = vrot.lane.b32.xlu0 %v370, 12
    %v1550 = vpop.permute.xlu0 %1549
    %1551 = vrot.lane.b32.xlu0 %v371, 12
    %v1552 = vpop.permute.xlu0 %1551
    %1553 = vrot.lane.b32.xlu0 %v372, 12
    %v1554 = vpop.permute.xlu0 %1553
    %1555 = vrot.lane.b32.xlu0 %v373, 12
    %v1556 = vpop.permute.xlu0 %1555
    %1557 = vrot.lane.b32.xlu0 %v374, 12
    %v1558 = vpop.permute.xlu0 %1557
    %1559 = vrot.lane.b32.xlu0 %v375, 12
    %v1560 = vpop.permute.xlu0 %1559
    %1561 = vrot.lane.b32.xlu0 %v376, 12
    %v1562 = vpop.permute.xlu0 %1561
    %1563 = vrot.lane.b32.xlu0 %v377, 12
    %v1564 = vpop.permute.xlu0 %1563
    %1565 = vrot.lane.b32.xlu0 %v378, 12
    %v1566 = vpop.permute.xlu0 %1565
    %1567 = vrot.lane.b32.xlu0 %v379, 12
    %v1568 = vpop.permute.xlu0 %1567
    %1569 = vrot.lane.b32.xlu0 %v380, 12
    %v1570 = vpop.permute.xlu0 %1569
    %1571 = vrot.lane.b32.xlu0 %v381, 12
    %v1572 = vpop.permute.xlu0 %1571
    %1573 = vrot.lane.b32.xlu0 %v382, 12
    %v1574 = vpop.permute.xlu0 %1573
    %1575 = vrot.lane.b32.xlu0 %v383, 12
    %v1576 = vpop.permute.xlu0 %1575
    %1577 = vrot.lane.b32.xlu0 %v384, 12
    %v1578 = vpop.permute.xlu0 %1577
    %1579 = vrot.lane.b32.xlu0 %v385, 12
    %v1580 = vpop.permute.xlu0 %1579
    %1581 = vrot.lane.b32.xlu0 %v386, 12
    %v1582 = vpop.permute.xlu0 %1581
    %1583 = vrot.lane.b32.xlu0 %v387, 12
    %v1584 = vpop.permute.xlu0 %1583
    %1585 = vrot.lane.b32.xlu0 %v388, 12
    %v1586 = vpop.permute.xlu0 %1585
    %1587 = vrot.lane.b32.xlu0 %v389, 12
    %v1588 = vpop.permute.xlu0 %1587
    %1589 = vrot.lane.b32.xlu0 %v390, 12
    %v1590 = vpop.permute.xlu0 %1589
    %1591 = vrot.lane.b32.xlu0 %v391, 12
    %v1592 = vpop.permute.xlu0 %1591
    %1593 = vrot.lane.b32.xlu0 %v392, 12
    %v1594 = vpop.permute.xlu0 %1593
    %1595 = vrot.lane.b32.xlu0 %v393, 12
    %v1596 = vpop.permute.xlu0 %1595
    %1597 = vrot.lane.b32.xlu0 %v394, 12
    %v1598 = vpop.permute.xlu0 %1597
    %1599 = vrot.lane.b32.xlu0 %v395, 12
    %v1600 = vpop.permute.xlu0 %1599
    %1601 = vrot.lane.b32.xlu0 %v396, 12
    %v1602 = vpop.permute.xlu0 %1601
    %1603 = vrot.lane.b32.xlu0 %v397, 12
    %v1604 = vpop.permute.xlu0 %1603
    %1605 = vrot.lane.b32.xlu0 %v398, 12
    %v1606 = vpop.permute.xlu0 %1605
    %1607 = vrot.lane.b32.xlu0 %v399, 12
    %v1608 = vpop.permute.xlu0 %1607
    %1609 = vrot.lane.b32.xlu0 %v400, 12
    %v1610 = vpop.permute.xlu0 %1609
    %1611 = vrot.lane.b32.xlu0 %v401, 12
    %v1612 = vpop.permute.xlu0 %1611
    %1613 = vrot.lane.b32.xlu0 %v402, 12
    %v1614 = vpop.permute.xlu0 %1613
    %1615 = vrot.lane.b32.xlu0 %v403, 12
    %v1616 = vpop.permute.xlu0 %1615
    %1617 = vrot.lane.b32.xlu0 %v404, 12
    %v1618 = vpop.permute.xlu0 %1617
    %1619 = vrot.lane.b32.xlu0 %v405, 12
    %v1620 = vpop.permute.xlu0 %1619
    %1621 = vrot.lane.b32.xlu0 %v406, 12
    %v1622 = vpop.permute.xlu0 %1621
    %1623 = vrot.lane.b32.xlu0 %v407, 12
    %v1624 = vpop.permute.xlu0 %1623
    %1753 = vrot.lane.b32.xlu0 %v408, 15
    %v1754 = vpop.permute.xlu0 %1753
    %1755 = vrot.lane.b32.xlu0 %v409, 15
    %v1756 = vpop.permute.xlu0 %1755
    %1757 = vrot.lane.b32.xlu0 %v410, 15
    %v1758 = vpop.permute.xlu0 %1757
    %1759 = vrot.lane.b32.xlu0 %v411, 15
    %v1760 = vpop.permute.xlu0 %1759
    %1761 = vrot.lane.b32.xlu0 %v412, 15
    %v1762 = vpop.permute.xlu0 %1761
    %1763 = vrot.lane.b32.xlu0 %v413, 15
    %v1764 = vpop.permute.xlu0 %1763
    %1765 = vrot.lane.b32.xlu0 %v414, 15
    %v1766 = vpop.permute.xlu0 %1765
    %1767 = vrot.lane.b32.xlu0 %v415, 15
    %v1768 = vpop.permute.xlu0 %1767
    %1769 = vrot.lane.b32.xlu0 %v416, 15
    %v1770 = vpop.permute.xlu0 %1769
    %1771 = vrot.lane.b32.xlu0 %v417, 15
    %v1772 = vpop.permute.xlu0 %1771
    %1773 = vrot.lane.b32.xlu0 %v418, 15
    %v1774 = vpop.permute.xlu0 %1773
    %1775 = vrot.lane.b32.xlu0 %v419, 15
    %v1776 = vpop.permute.xlu0 %1775
    %1777 = vrot.lane.b32.xlu0 %v420, 15
    %v1778 = vpop.permute.xlu0 %1777
    %1779 = vrot.lane.b32.xlu0 %v421, 15
    %v1780 = vpop.permute.xlu0 %1779
    %1781 = vrot.lane.b32.xlu0 %v422, 15
    %v1782 = vpop.permute.xlu0 %1781
    %1783 = vrot.lane.b32.xlu0 %v423, 15
    %v1784 = vpop.permute.xlu0 %1783
    %1785 = vrot.lane.b32.xlu0 %v424, 15
    %v1786 = vpop.permute.xlu0 %1785
    %1787 = vrot.lane.b32.xlu0 %v425, 15
    %v1788 = vpop.permute.xlu0 %1787
    %1789 = vrot.lane.b32.xlu0 %v426, 15
    %v1790 = vpop.permute.xlu0 %1789
    %1791 = vrot.lane.b32.xlu0 %v427, 15
    %v1792 = vpop.permute.xlu0 %1791
    %1793 = vrot.lane.b32.xlu0 %v428, 15
    %v1794 = vpop.permute.xlu0 %1793
    %1795 = vrot.lane.b32.xlu0 %v429, 15
    %v1796 = vpop.permute.xlu0 %1795
    %1797 = vrot.lane.b32.xlu0 %v430, 15
    %v1798 = vpop.permute.xlu0 %1797
    %1799 = vrot.lane.b32.xlu0 %v431, 15
    %v1800 = vpop.permute.xlu0 %1799
    %1801 = vrot.lane.b32.xlu0 %v432, 15
    %v1802 = vpop.permute.xlu0 %1801
    %1803 = vrot.lane.b32.xlu0 %v433, 15
    %v1804 = vpop.permute.xlu0 %1803
    %1805 = vrot.lane.b32.xlu0 %v434, 15
    %v1806 = vpop.permute.xlu0 %1805
    %1807 = vrot.lane.b32.xlu0 %v435, 15
    %v1808 = vpop.permute.xlu0 %1807
    %1809 = vrot.lane.b32.xlu0 %v436, 15
    %v1810 = vpop.permute.xlu0 %1809
    %1811 = vrot.lane.b32.xlu0 %v437, 15
    %v1812 = vpop.permute.xlu0 %1811
    %1813 = vrot.lane.b32.xlu0 %v438, 15
    %v1814 = vpop.permute.xlu0 %1813
    %1815 = vrot.lane.b32.xlu0 %v439, 15
    %v1816 = vpop.permute.xlu0 %1815
    %1817 = vrot.lane.b32.xlu0 %v440, 15
    %v1818 = vpop.permute.xlu0 %1817
    %1819 = vrot.lane.b32.xlu0 %v441, 15
    %v1820 = vpop.permute.xlu0 %1819
    %1821 = vrot.lane.b32.xlu0 %v442, 15
    %v1822 = vpop.permute.xlu0 %1821
    %1823 = vrot.lane.b32.xlu0 %v443, 15
    %v1824 = vpop.permute.xlu0 %1823
    %1825 = vrot.lane.b32.xlu0 %v444, 15
    %v1826 = vpop.permute.xlu0 %1825
    %1827 = vrot.lane.b32.xlu0 %v445, 15
    %v1828 = vpop.permute.xlu0 %1827
    %1829 = vrot.lane.b32.xlu0 %v446, 15
    %v1830 = vpop.permute.xlu0 %1829
    %1831 = vrot.lane.b32.xlu0 %v447, 15
    %v1832 = vpop.permute.xlu0 %1831
    %1833 = vrot.lane.b32.xlu0 %v448, 15
    %v1834 = vpop.permute.xlu0 %1833
    %1835 = vrot.lane.b32.xlu0 %v449, 15
    %v1836 = vpop.permute.xlu0 %1835
    %1837 = vrot.lane.b32.xlu0 %v450, 15
    %v1838 = vpop.permute.xlu0 %1837
    %1839 = vrot.lane.b32.xlu0 %v451, 15
    %v1840 = vpop.permute.xlu0 %1839
    %1841 = vrot.lane.b32.xlu0 %v452, 15
    %v1842 = vpop.permute.xlu0 %1841
    %1843 = vrot.lane.b32.xlu0 %v453, 15
    %v1844 = vpop.permute.xlu0 %1843
    %1845 = vrot.lane.b32.xlu0 %v454, 15
    %v1846 = vpop.permute.xlu0 %1845
    %1847 = vrot.lane.b32.xlu0 %v455, 15
    %v1848 = vpop.permute.xlu0 %1847
    %1849 = vrot.lane.b32.xlu0 %v456, 15
    %v1850 = vpop.permute.xlu0 %1849
    %1851 = vrot.lane.b32.xlu0 %v457, 15
    %v1852 = vpop.permute.xlu0 %1851
    %1853 = vrot.lane.b32.xlu0 %v458, 15
    %v1854 = vpop.permute.xlu0 %1853
    %1855 = vrot.lane.b32.xlu0 %v459, 15
    %v1856 = vpop.permute.xlu0 %1855
    %1857 = vrot.lane.b32.xlu0 %v460, 15
    %v1858 = vpop.permute.xlu0 %1857
    %1859 = vrot.lane.b32.xlu0 %v461, 15
    %v1860 = vpop.permute.xlu0 %1859
    %1861 = vrot.lane.b32.xlu0 %v462, 15
    %v1862 = vpop.permute.xlu0 %1861
    %1863 = vrot.lane.b32.xlu0 %v463, 15
    %v1864 = vpop.permute.xlu0 %1863
    %1865 = vrot.lane.b32.xlu0 %v464, 15
    %v1866 = vpop.permute.xlu0 %1865
    %1867 = vrot.lane.b32.xlu0 %v465, 15
    %v1868 = vpop.permute.xlu0 %1867
    %1869 = vrot.lane.b32.xlu0 %v466, 15
    %v1870 = vpop.permute.xlu0 %1869
    %1871 = vrot.lane.b32.xlu0 %v467, 15
    %v1872 = vpop.permute.xlu0 %1871
    %1873 = vrot.lane.b32.xlu0 %v468, 15
    %v1874 = vpop.permute.xlu0 %1873
    %1875 = vrot.lane.b32.xlu0 %v469, 15
    %v1876 = vpop.permute.xlu0 %1875
    %1877 = vrot.lane.b32.xlu0 %v470, 15
    %v1878 = vpop.permute.xlu0 %1877
    %1879 = vrot.lane.b32.xlu0 %v471, 15
    %v1880 = vpop.permute.xlu0 %1879
    %2009 = vrot.lane.b32.xlu0 %v473, 18
    %v2010 = vpop.permute.xlu0 %2009
    %2011 = vrot.lane.b32.xlu0 %v474, 18
    %v2012 = vpop.permute.xlu0 %2011
    %2013 = vrot.lane.b32.xlu0 %v475, 18
    %v2014 = vpop.permute.xlu0 %2013
    %2015 = vrot.lane.b32.xlu0 %v476, 18
    %v2016 = vpop.permute.xlu0 %2015
    %2017 = vrot.lane.b32.xlu0 %v477, 18
    %v2018 = vpop.permute.xlu0 %2017
    %2019 = vrot.lane.b32.xlu0 %v478, 18
    %v2020 = vpop.permute.xlu0 %2019
    %2021 = vrot.lane.b32.xlu0 %v479, 18
    %v2022 = vpop.permute.xlu0 %2021
    %2023 = vrot.lane.b32.xlu0 %v480, 18
    %v2024 = vpop.permute.xlu0 %2023
    %2025 = vrot.lane.b32.xlu0 %v481, 18
    %v2026 = vpop.permute.xlu0 %2025
    %2027 = vrot.lane.b32.xlu0 %v482, 18
    %v2028 = vpop.permute.xlu0 %2027
    %2029 = vrot.lane.b32.xlu0 %v483, 18
    %v2030 = vpop.permute.xlu0 %2029
    %2031 = vrot.lane.b32.xlu0 %v484, 18
    %v2032 = vpop.permute.xlu0 %2031
    %2033 = vrot.lane.b32.xlu0 %v485, 18
    %v2034 = vpop.permute.xlu0 %2033
    %2035 = vrot.lane.b32.xlu0 %v486, 18
    %v2036 = vpop.permute.xlu0 %2035
    %2037 = vrot.lane.b32.xlu0 %v487, 18
    %v2038 = vpop.permute.xlu0 %2037
    %2039 = vrot.lane.b32.xlu0 %v488, 18
    %v2040 = vpop.permute.xlu0 %2039
    %2041 = vrot.lane.b32.xlu0 %v489, 18
    %v2042 = vpop.permute.xlu0 %2041
    %2043 = vrot.lane.b32.xlu0 %v490, 18
    %v2044 = vpop.permute.xlu0 %2043
    %2045 = vrot.lane.b32.xlu0 %v491, 18
    %v2046 = vpop.permute.xlu0 %2045
    %2047 = vrot.lane.b32.xlu0 %v492, 18
    %v2048 = vpop.permute.xlu0 %2047
    %2049 = vrot.lane.b32.xlu0 %v493, 18
    %v2050 = vpop.permute.xlu0 %2049
    %2051 = vrot.lane.b32.xlu0 %v494, 18
    %v2052 = vpop.permute.xlu0 %2051
    %2053 = vrot.lane.b32.xlu0 %v495, 18
    %v2054 = vpop.permute.xlu0 %2053
    %2055 = vrot.lane.b32.xlu0 %v496, 18
    %v2056 = vpop.permute.xlu0 %2055
    %2057 = vrot.lane.b32.xlu0 %v497, 18
    %v2058 = vpop.permute.xlu0 %2057
    %2059 = vrot.lane.b32.xlu0 %v498, 18
    %v2060 = vpop.permute.xlu0 %2059
    %2061 = vrot.lane.b32.xlu0 %v499, 18
    %v2062 = vpop.permute.xlu0 %2061
    %2063 = vrot.lane.b32.xlu0 %v500, 18
    %v2064 = vpop.permute.xlu0 %2063
    %2065 = vrot.lane.b32.xlu0 %v501, 18
    %v2066 = vpop.permute.xlu0 %2065
    %2067 = vrot.lane.b32.xlu0 %v502, 18
    %v2068 = vpop.permute.xlu0 %2067
    %2069 = vrot.lane.b32.xlu0 %v503, 18
    %v2070 = vpop.permute.xlu0 %2069
    %2071 = vrot.lane.b32.xlu0 %v504, 18
    %v2072 = vpop.permute.xlu0 %2071
    %2073 = vrot.lane.b32.xlu0 %v505, 18
    %v2074 = vpop.permute.xlu0 %2073
    %2075 = vrot.lane.b32.xlu0 %v506, 18
    %v2076 = vpop.permute.xlu0 %2075
    %2077 = vrot.lane.b32.xlu0 %v507, 18
    %v2078 = vpop.permute.xlu0 %2077
    %2079 = vrot.lane.b32.xlu0 %v508, 18
    %v2080 = vpop.permute.xlu0 %2079
    %2081 = vrot.lane.b32.xlu0 %v509, 18
    %v2082 = vpop.permute.xlu0 %2081
    %2083 = vrot.lane.b32.xlu0 %v510, 18
    %v2084 = vpop.permute.xlu0 %2083
    %2085 = vrot.lane.b32.xlu0 %v511, 18
    %v2086 = vpop.permute.xlu0 %2085
    %2087 = vrot.lane.b32.xlu0 %v512, 18
    %v2088 = vpop.permute.xlu0 %2087
    %2089 = vrot.lane.b32.xlu0 %v513, 18
    %v2090 = vpop.permute.xlu0 %2089
    %2091 = vrot.lane.b32.xlu0 %v514, 18
    %v2092 = vpop.permute.xlu0 %2091
    %2093 = vrot.lane.b32.xlu0 %v515, 18
    %v2094 = vpop.permute.xlu0 %2093
    %2095 = vrot.lane.b32.xlu0 %v516, 18
    %v2096 = vpop.permute.xlu0 %2095
    %2097 = vrot.lane.b32.xlu0 %v517, 18
    %v2098 = vpop.permute.xlu0 %2097
    %2099 = vrot.lane.b32.xlu0 %v518, 18
    %v2100 = vpop.permute.xlu0 %2099
    %2101 = vrot.lane.b32.xlu0 %v519, 18
    %v2102 = vpop.permute.xlu0 %2101
    %2103 = vrot.lane.b32.xlu0 %v520, 18
    %v2104 = vpop.permute.xlu0 %2103
    %2105 = vrot.lane.b32.xlu0 %v521, 18
    %v2106 = vpop.permute.xlu0 %2105
    %2107 = vrot.lane.b32.xlu0 %v522, 18
    %v2108 = vpop.permute.xlu0 %2107
    %2109 = vrot.lane.b32.xlu0 %v523, 18
    %v2110 = vpop.permute.xlu0 %2109
    %2111 = vrot.lane.b32.xlu0 %v524, 18
    %v2112 = vpop.permute.xlu0 %2111
    %2113 = vrot.lane.b32.xlu0 %v525, 18
    %v2114 = vpop.permute.xlu0 %2113
    %2115 = vrot.lane.b32.xlu0 %v526, 18
    %v2116 = vpop.permute.xlu0 %2115
    %2117 = vrot.lane.b32.xlu0 %v527, 18
    %v2118 = vpop.permute.xlu0 %2117
    %2119 = vrot.lane.b32.xlu0 %v528, 18
    %v2120 = vpop.permute.xlu0 %2119
    %2121 = vrot.lane.b32.xlu0 %v529, 18
    %v2122 = vpop.permute.xlu0 %2121
    %2123 = vrot.lane.b32.xlu0 %v530, 18
    %v2124 = vpop.permute.xlu0 %2123
    %2125 = vrot.lane.b32.xlu0 %v531, 18
    %v2126 = vpop.permute.xlu0 %2125
    %2127 = vrot.lane.b32.xlu0 %v532, 18
    %v2128 = vpop.permute.xlu0 %2127
    %2129 = vrot.lane.b32.xlu0 %v533, 18
    %v2130 = vpop.permute.xlu0 %2129
    %2131 = vrot.lane.b32.xlu0 %v534, 18
    %v2132 = vpop.permute.xlu0 %2131
    %2133 = vrot.lane.b32.xlu0 %v535, 18
    %v2134 = vpop.permute.xlu0 %2133
    %2135 = vrot.lane.b32.xlu0 %v536, 18
    %v2136 = vpop.permute.xlu0 %2135
    %2265 = vrot.lane.b32.xlu0 %v537, 21
    %v2266 = vpop.permute.xlu0 %2265
    %2267 = vrot.lane.b32.xlu0 %v538, 21
    %v2268 = vpop.permute.xlu0 %2267
    %2269 = vrot.lane.b32.xlu0 %v539, 21
    %v2270 = vpop.permute.xlu0 %2269
    %2271 = vrot.lane.b32.xlu0 %v540, 21
    %v2272 = vpop.permute.xlu0 %2271
    %2273 = vrot.lane.b32.xlu0 %v541, 21
    %v2274 = vpop.permute.xlu0 %2273
    %2275 = vrot.lane.b32.xlu0 %v542, 21
    %v2276 = vpop.permute.xlu0 %2275
    %2277 = vrot.lane.b32.xlu0 %v543, 21
    %v2278 = vpop.permute.xlu0 %2277
    %2279 = vrot.lane.b32.xlu0 %v544, 21
    %v2280 = vpop.permute.xlu0 %2279
    %2281 = vrot.lane.b32.xlu0 %v545, 21
    %v2282 = vpop.permute.xlu0 %2281
    %2283 = vrot.lane.b32.xlu0 %v546, 21
    %v2284 = vpop.permute.xlu0 %2283
    %2285 = vrot.lane.b32.xlu0 %v547, 21
    %v2286 = vpop.permute.xlu0 %2285
    %2287 = vrot.lane.b32.xlu0 %v548, 21
    %v2288 = vpop.permute.xlu0 %2287
    %2289 = vrot.lane.b32.xlu0 %v549, 21
    %v2290 = vpop.permute.xlu0 %2289
    %2291 = vrot.lane.b32.xlu0 %v550, 21
    %v2292 = vpop.permute.xlu0 %2291
    %2293 = vrot.lane.b32.xlu0 %v551, 21
    %v2294 = vpop.permute.xlu0 %2293
    %2295 = vrot.lane.b32.xlu0 %v552, 21
    %v2296 = vpop.permute.xlu0 %2295
    %2297 = vrot.lane.b32.xlu0 %v553, 21
    %v2298 = vpop.permute.xlu0 %2297
    %2299 = vrot.lane.b32.xlu0 %v554, 21
    %v2300 = vpop.permute.xlu0 %2299
    %2301 = vrot.lane.b32.xlu0 %v555, 21
    %v2302 = vpop.permute.xlu0 %2301
    %2303 = vrot.lane.b32.xlu0 %v556, 21
    %v2304 = vpop.permute.xlu0 %2303
    %2305 = vrot.lane.b32.xlu0 %v557, 21
    %v2306 = vpop.permute.xlu0 %2305
    %2307 = vrot.lane.b32.xlu0 %v558, 21
    %v2308 = vpop.permute.xlu0 %2307
    %2309 = vrot.lane.b32.xlu0 %v559, 21
    %v2310 = vpop.permute.xlu0 %2309
    %2311 = vrot.lane.b32.xlu0 %v560, 21
    %v2312 = vpop.permute.xlu0 %2311
    %2313 = vrot.lane.b32.xlu0 %v561, 21
    %v2314 = vpop.permute.xlu0 %2313
    %2315 = vrot.lane.b32.xlu0 %v562, 21
    %v2316 = vpop.permute.xlu0 %2315
    %2317 = vrot.lane.b32.xlu0 %v563, 21
    %v2318 = vpop.permute.xlu0 %2317
    %2319 = vrot.lane.b32.xlu0 %v564, 21
    %v2320 = vpop.permute.xlu0 %2319
    %2321 = vrot.lane.b32.xlu0 %v565, 21
    %v2322 = vpop.permute.xlu0 %2321
    %2323 = vrot.lane.b32.xlu0 %v566, 21
    %v2324 = vpop.permute.xlu0 %2323
    %2325 = vrot.lane.b32.xlu0 %v567, 21
    %v2326 = vpop.permute.xlu0 %2325
    %2327 = vrot.lane.b32.xlu0 %v568, 21
    %v2328 = vpop.permute.xlu0 %2327
    %2329 = vrot.lane.b32.xlu0 %v569, 21
    %v2330 = vpop.permute.xlu0 %2329
    %2331 = vrot.lane.b32.xlu0 %v570, 21
    %v2332 = vpop.permute.xlu0 %2331
    %2333 = vrot.lane.b32.xlu0 %v571, 21
    %v2334 = vpop.permute.xlu0 %2333
    %2335 = vrot.lane.b32.xlu0 %v572, 21
    %v2336 = vpop.permute.xlu0 %2335
    %2337 = vrot.lane.b32.xlu0 %v573, 21
    %v2338 = vpop.permute.xlu0 %2337
    %2339 = vrot.lane.b32.xlu0 %v574, 21
    %v2340 = vpop.permute.xlu0 %2339
    %2341 = vrot.lane.b32.xlu0 %v575, 21
    %v2342 = vpop.permute.xlu0 %2341
    %2343 = vrot.lane.b32.xlu0 %v576, 21
    %v2344 = vpop.permute.xlu0 %2343
    %2345 = vrot.lane.b32.xlu0 %v577, 21
    %v2346 = vpop.permute.xlu0 %2345
    %2347 = vrot.lane.b32.xlu0 %v578, 21
    %v2348 = vpop.permute.xlu0 %2347
    %2349 = vrot.lane.b32.xlu0 %v579, 21
    %v2350 = vpop.permute.xlu0 %2349
    %2351 = vrot.lane.b32.xlu0 %v580, 21
    %v2352 = vpop.permute.xlu0 %2351
    %2353 = vrot.lane.b32.xlu0 %v581, 21
    %v2354 = vpop.permute.xlu0 %2353
    %2355 = vrot.lane.b32.xlu0 %v582, 21
    %v2356 = vpop.permute.xlu0 %2355
    %2357 = vrot.lane.b32.xlu0 %v583, 21
    %v2358 = vpop.permute.xlu0 %2357
    %2359 = vrot.lane.b32.xlu0 %v584, 21
    %v2360 = vpop.permute.xlu0 %2359
    %2361 = vrot.lane.b32.xlu0 %v585, 21
    %v2362 = vpop.permute.xlu0 %2361
    %2363 = vrot.lane.b32.xlu0 %v586, 21
    %v2364 = vpop.permute.xlu0 %2363
    %2365 = vrot.lane.b32.xlu0 %v587, 21
    %v2366 = vpop.permute.xlu0 %2365
    %2367 = vrot.lane.b32.xlu0 %v588, 21
    %v2368 = vpop.permute.xlu0 %2367
    %2369 = vrot.lane.b32.xlu0 %v589, 21
    %v2370 = vpop.permute.xlu0 %2369
    %2371 = vrot.lane.b32.xlu0 %v590, 21
    %v2372 = vpop.permute.xlu0 %2371
    %2373 = vrot.lane.b32.xlu0 %v591, 21
    %v2374 = vpop.permute.xlu0 %2373
    %2375 = vrot.lane.b32.xlu0 %v592, 21
    %v2376 = vpop.permute.xlu0 %2375
    %2377 = vrot.lane.b32.xlu0 %v593, 21
    %v2378 = vpop.permute.xlu0 %2377
    %2379 = vrot.lane.b32.xlu0 %v594, 21
    %v2380 = vpop.permute.xlu0 %2379
    %2381 = vrot.lane.b32.xlu0 %v595, 21
    %v2382 = vpop.permute.xlu0 %2381
    %2383 = vrot.lane.b32.xlu0 %v596, 21
    %v2384 = vpop.permute.xlu0 %2383
    %2385 = vrot.lane.b32.xlu0 %v597, 21
    %v2386 = vpop.permute.xlu0 %2385
    %2387 = vrot.lane.b32.xlu0 %v598, 21
    %v2388 = vpop.permute.xlu0 %2387
    %2389 = vrot.lane.b32.xlu0 %v599, 21
    %v2390 = vpop.permute.xlu0 %2389
    %2391 = vrot.lane.b32.xlu0 %v600, 21
    %v2392 = vpop.permute.xlu0 %2391
    %2521 = vrot.lane.b32.xlu0 %v601, 24
    %v2522 = vpop.permute.xlu0 %2521
    %2523 = vrot.lane.b32.xlu0 %v602, 24
    %v2524 = vpop.permute.xlu0 %2523
    %2525 = vrot.lane.b32.xlu0 %v603, 24
    %v2526 = vpop.permute.xlu0 %2525
    %2527 = vrot.lane.b32.xlu0 %v604, 24
    %v2528 = vpop.permute.xlu0 %2527
    %2529 = vrot.lane.b32.xlu0 %v605, 24
    %v2530 = vpop.permute.xlu0 %2529
    %2531 = vrot.lane.b32.xlu0 %v606, 24
    %v2532 = vpop.permute.xlu0 %2531
    %2533 = vrot.lane.b32.xlu0 %v607, 24
    %v2534 = vpop.permute.xlu0 %2533
    %2535 = vrot.lane.b32.xlu0 %v608, 24
    %v2536 = vpop.permute.xlu0 %2535
    %2537 = vrot.lane.b32.xlu0 %v609, 24
    %v2538 = vpop.permute.xlu0 %2537
    %2539 = vrot.lane.b32.xlu0 %v610, 24
    %v2540 = vpop.permute.xlu0 %2539
    %2541 = vrot.lane.b32.xlu0 %v611, 24
    %v2542 = vpop.permute.xlu0 %2541
    %2543 = vrot.lane.b32.xlu0 %v612, 24
    %v2544 = vpop.permute.xlu0 %2543
    %2545 = vrot.lane.b32.xlu0 %v613, 24
    %v2546 = vpop.permute.xlu0 %2545
    %2547 = vrot.lane.b32.xlu0 %v614, 24
    %v2548 = vpop.permute.xlu0 %2547
    %2549 = vrot.lane.b32.xlu0 %v615, 24
    %v2550 = vpop.permute.xlu0 %2549
    %2551 = vrot.lane.b32.xlu0 %v616, 24
    %v2552 = vpop.permute.xlu0 %2551
    %2553 = vrot.lane.b32.xlu0 %v617, 24
    %v2554 = vpop.permute.xlu0 %2553
    %2555 = vrot.lane.b32.xlu0 %v618, 24
    %v2556 = vpop.permute.xlu0 %2555
    %2557 = vrot.lane.b32.xlu0 %v619, 24
    %v2558 = vpop.permute.xlu0 %2557
    %2559 = vrot.lane.b32.xlu0 %v620, 24
    %v2560 = vpop.permute.xlu0 %2559
    %2561 = vrot.lane.b32.xlu0 %v621, 24
    %v2562 = vpop.permute.xlu0 %2561
    %2563 = vrot.lane.b32.xlu0 %v622, 24
    %v2564 = vpop.permute.xlu0 %2563
    %2565 = vrot.lane.b32.xlu0 %v623, 24
    %v2566 = vpop.permute.xlu0 %2565
    %2567 = vrot.lane.b32.xlu0 %v624, 24
    %v2568 = vpop.permute.xlu0 %2567
    %2569 = vrot.lane.b32.xlu0 %v625, 24
    %v2570 = vpop.permute.xlu0 %2569
    %2571 = vrot.lane.b32.xlu0 %v626, 24
    %v2572 = vpop.permute.xlu0 %2571
    %2573 = vrot.lane.b32.xlu0 %v627, 24
    %v2574 = vpop.permute.xlu0 %2573
    %2575 = vrot.lane.b32.xlu0 %v628, 24
    %v2576 = vpop.permute.xlu0 %2575
    %2577 = vrot.lane.b32.xlu0 %v629, 24
    %v2578 = vpop.permute.xlu0 %2577
    %2579 = vrot.lane.b32.xlu0 %v630, 24
    %v2580 = vpop.permute.xlu0 %2579
    %2581 = vrot.lane.b32.xlu0 %v631, 24
    %v2582 = vpop.permute.xlu0 %2581
    %2583 = vrot.lane.b32.xlu0 %v632, 24
    %v2584 = vpop.permute.xlu0 %2583
    %2585 = vrot.lane.b32.xlu0 %v633, 24
    %v2586 = vpop.permute.xlu0 %2585
    %2587 = vrot.lane.b32.xlu0 %v634, 24
    %v2588 = vpop.permute.xlu0 %2587
    %2589 = vrot.lane.b32.xlu0 %v635, 24
    %v2590 = vpop.permute.xlu0 %2589
    %2591 = vrot.lane.b32.xlu0 %v636, 24
    %v2592 = vpop.permute.xlu0 %2591
    %2593 = vrot.lane.b32.xlu0 %v637, 24
    %v2594 = vpop.permute.xlu0 %2593
    %2595 = vrot.lane.b32.xlu0 %v638, 24
    %v2596 = vpop.permute.xlu0 %2595
    %2597 = vrot.lane.b32.xlu0 %v639, 24
    %v2598 = vpop.permute.xlu0 %2597
    %2599 = vrot.lane.b32.xlu0 %v640, 24
    %v2600 = vpop.permute.xlu0 %2599
    %2601 = vrot.lane.b32.xlu0 %v641, 24
    %v2602 = vpop.permute.xlu0 %2601
    %2603 = vrot.lane.b32.xlu0 %v642, 24
    %v2604 = vpop.permute.xlu0 %2603
    %2605 = vrot.lane.b32.xlu0 %v643, 24
    %v2606 = vpop.permute.xlu0 %2605
    %2607 = vrot.lane.b32.xlu0 %v644, 24
    %v2608 = vpop.permute.xlu0 %2607
    %2609 = vrot.lane.b32.xlu0 %v645, 24
    %v2610 = vpop.permute.xlu0 %2609
    %2611 = vrot.lane.b32.xlu0 %v646, 24
    %v2612 = vpop.permute.xlu0 %2611
    %2613 = vrot.lane.b32.xlu0 %v647, 24
    %v2614 = vpop.permute.xlu0 %2613
    %2615 = vrot.lane.b32.xlu0 %v648, 24
    %v2616 = vpop.permute.xlu0 %2615
    %2617 = vrot.lane.b32.xlu0 %v649, 24
    %v2618 = vpop.permute.xlu0 %2617
    %2619 = vrot.lane.b32.xlu0 %v650, 24
    %v2620 = vpop.permute.xlu0 %2619
    %2621 = vrot.lane.b32.xlu0 %v651, 24
    %v2622 = vpop.permute.xlu0 %2621
    %2623 = vrot.lane.b32.xlu0 %v652, 24
    %v2624 = vpop.permute.xlu0 %2623
    %2625 = vrot.lane.b32.xlu0 %v653, 24
    %v2626 = vpop.permute.xlu0 %2625
    %2627 = vrot.lane.b32.xlu0 %v654, 24
    %v2628 = vpop.permute.xlu0 %2627
    %2629 = vrot.lane.b32.xlu0 %v655, 24
    %v2630 = vpop.permute.xlu0 %2629
    %2631 = vrot.lane.b32.xlu0 %v656, 24
    %v2632 = vpop.permute.xlu0 %2631
    %2633 = vrot.lane.b32.xlu0 %v657, 24
    %v2634 = vpop.permute.xlu0 %2633
    %2635 = vrot.lane.b32.xlu0 %v658, 24
    %v2636 = vpop.permute.xlu0 %2635
    %2637 = vrot.lane.b32.xlu0 %v659, 24
    %v2638 = vpop.permute.xlu0 %2637
    %2639 = vrot.lane.b32.xlu0 %v660, 24
    %v2640 = vpop.permute.xlu0 %2639
    %2641 = vrot.lane.b32.xlu0 %v661, 24
    %v2642 = vpop.permute.xlu0 %2641
    %2643 = vrot.lane.b32.xlu0 %v662, 24
    %v2644 = vpop.permute.xlu0 %2643
    %2645 = vrot.lane.b32.xlu0 %v663, 24
    %v2646 = vpop.permute.xlu0 %2645
    %2647 = vrot.lane.b32.xlu0 %v664, 24
    %v2648 = vpop.permute.xlu0 %2647
    %vm2713 = vcmask 23552
    %v2714 = vsel %vm2713, %v87, %v730
    %v2715 = vsel %vm2713, %v88, %v732
    %v2716 = vsel %vm2713, %v89, %v734
    %v2717 = vsel %vm2713, %v90, %v736
    %v2718 = vsel %vm2713, %v91, %v738
    %v2719 = vsel %vm2713, %v92, %v740
    %v2720 = vsel %vm2713, %v93, %v742
    %v2721 = vsel %vm2713, %v94, %v744
    %v2722 = vsel %vm2713, %v95, %v746
    %v2723 = vsel %vm2713, %v96, %v748
    %v2724 = vsel %vm2713, %v97, %v750
    %v2725 = vsel %vm2713, %v98, %v752
    %v2726 = vsel %vm2713, %v99, %v754
    %v2727 = vsel %vm2713, %v100, %v756
    %v2728 = vsel %vm2713, %v101, %v758
    %v2729 = vsel %vm2713, %v102, %v760
    %v2730 = vsel %vm2713, %v103, %v762
    %v2731 = vsel %vm2713, %v104, %v764
    %v2732 = vsel %vm2713, %v105, %v766
    %v2733 = vsel %vm2713, %v106, %v768
    %v2734 = vsel %vm2713, %v107, %v770
    %v2735 = vsel %vm2713, %v108, %v772
    %v2736 = vsel %vm2713, %v109, %v774
    %v2737 = vsel %vm2713, %v110, %v776
    %v2738 = vsel %vm2713, %v111, %v778
    %v2739 = vsel %vm2713, %v112, %v780
    %v2740 = vsel %vm2713, %v113, %v782
    %v2741 = vsel %vm2713, %v114, %v784
    %v2742 = vsel %vm2713, %v115, %v786
    %v2743 = vsel %vm2713, %v116, %v788
    %v2744 = vsel %vm2713, %v117, %v790
    %v2745 = vsel %vm2713, %v118, %v792
    %v2746 = vsel %vm2713, %v119, %v794
    %v2747 = vsel %vm2713, %v120, %v796
    %v2748 = vsel %vm2713, %v121, %v798
    %v2749 = vsel %vm2713, %v122, %v800
    %v2750 = vsel %vm2713, %v123, %v802
    %v2751 = vsel %vm2713, %v124, %v804
    %v2752 = vsel %vm2713, %v125, %v806
    %v2753 = vsel %vm2713, %v126, %v808
    %v2754 = vsel %vm2713, %v127, %v810
    %v2755 = vsel %vm2713, %v128, %v812
    %v2756 = vsel %vm2713, %v129, %v814
    %v2757 = vsel %vm2713, %v130, %v816
    %v2758 = vsel %vm2713, %v131, %v818
    %v2759 = vsel %vm2713, %v132, %v820
    %v2760 = vsel %vm2713, %v133, %v822
    %v2761 = vsel %vm2713, %v134, %v824
    %v2762 = vsel %vm2713, %v135, %v826
    %v2763 = vsel %vm2713, %v136, %v828
    %v2764 = vsel %vm2713, %v137, %v830
    %v2765 = vsel %vm2713, %v138, %v832
    %v2766 = vsel %vm2713, %v139, %v834
    %v2767 = vsel %vm2713, %v140, %v836
    %v2768 = vsel %vm2713, %v141, %v838
    %v2769 = vsel %vm2713, %v142, %v840
    %v2770 = vsel %vm2713, %v143, %v842
    %v2771 = vsel %vm2713, %v144, %v844
    %v2772 = vsel %vm2713, %v145, %v846
    %v2773 = vsel %vm2713, %v146, %v848
    %v2774 = vsel %vm2713, %v147, %v850
    %v2775 = vsel %vm2713, %v148, %v852
    %v2776 = vsel %vm2713, %v149, %v854
    %v2777 = vsel %vm2713, %v150, %v856
    %vm2778 = vcmask 48128
    %v2779 = vsel %vm2778, %v2714, %v986
    %v2780 = vsel %vm2778, %v2715, %v988
    %v2781 = vsel %vm2778, %v2716, %v990
    %v2782 = vsel %vm2778, %v2717, %v992
    %v2783 = vsel %vm2778, %v2718, %v994
    %v2784 = vsel %vm2778, %v2719, %v996
    %v2785 = vsel %vm2778, %v2720, %v998
    %v2786 = vsel %vm2778, %v2721, %v1000
    %v2787 = vsel %vm2778, %v2722, %v1002
    %v2788 = vsel %vm2778, %v2723, %v1004
    %v2789 = vsel %vm2778, %v2724, %v1006
    %v2790 = vsel %vm2778, %v2725, %v1008
    %v2791 = vsel %vm2778, %v2726, %v1010
    %v2792 = vsel %vm2778, %v2727, %v1012
    %v2793 = vsel %vm2778, %v2728, %v1014
    %v2794 = vsel %vm2778, %v2729, %v1016
    %v2795 = vsel %vm2778, %v2730, %v1018
    %v2796 = vsel %vm2778, %v2731, %v1020
    %v2797 = vsel %vm2778, %v2732, %v1022
    %v2798 = vsel %vm2778, %v2733, %v1024
    %v2799 = vsel %vm2778, %v2734, %v1026
    %v2800 = vsel %vm2778, %v2735, %v1028
    %v2801 = vsel %vm2778, %v2736, %v1030
    %v2802 = vsel %vm2778, %v2737, %v1032
    %v2803 = vsel %vm2778, %v2738, %v1034
    %v2804 = vsel %vm2778, %v2739, %v1036
    %v2805 = vsel %vm2778, %v2740, %v1038
    %v2806 = vsel %vm2778, %v2741, %v1040
    %v2807 = vsel %vm2778, %v2742, %v1042
    %v2808 = vsel %vm2778, %v2743, %v1044
    %v2809 = vsel %vm2778, %v2744, %v1046
    %v2810 = vsel %vm2778, %v2745, %v1048
    %v2811 = vsel %vm2778, %v2746, %v1050
    %v2812 = vsel %vm2778, %v2747, %v1052
    %v2813 = vsel %vm2778, %v2748, %v1054
    %v2814 = vsel %vm2778, %v2749, %v1056
    %v2815 = vsel %vm2778, %v2750, %v1058
    %v2816 = vsel %vm2778, %v2751, %v1060
    %v2817 = vsel %vm2778, %v2752, %v1062
    %v2818 = vsel %vm2778, %v2753, %v1064
    %v2819 = vsel %vm2778, %v2754, %v1066
    %v2820 = vsel %vm2778, %v2755, %v1068
    %v2821 = vsel %vm2778, %v2756, %v1070
    %v2822 = vsel %vm2778, %v2757, %v1072
    %v2823 = vsel %vm2778, %v2758, %v1074
    %v2824 = vsel %vm2778, %v2759, %v1076
    %v2825 = vsel %vm2778, %v2760, %v1078
    %v2826 = vsel %vm2778, %v2761, %v1080
    %v2827 = vsel %vm2778, %v2762, %v1082
    %v2828 = vsel %vm2778, %v2763, %v1084
    %v2829 = vsel %vm2778, %v2764, %v1086
    %v2830 = vsel %vm2778, %v2765, %v1088
    %v2831 = vsel %vm2778, %v2766, %v1090
    %v2832 = vsel %vm2778, %v2767, %v1092
    %v2833 = vsel %vm2778, %v2768, %v1094
    %v2834 = vsel %vm2778, %v2769, %v1096
    %v2835 = vsel %vm2778, %v2770, %v1098
    %v2836 = vsel %vm2778, %v2771, %v1100
    %v2837 = vsel %vm2778, %v2772, %v1102
    %v2838 = vsel %vm2778, %v2773, %v1104
    %v2839 = vsel %vm2778, %v2774, %v1106
    %v2840 = vsel %vm2778, %v2775, %v1108
    %v2841 = vsel %vm2778, %v2776, %v1110
    %v2842 = vsel %vm2778, %v2777, %v1112
    %vm2843 = vcmask 72704
    %v2844 = vsel %vm2843, %v2779, %v1242
    %v2845 = vsel %vm2843, %v2780, %v1244
    %v2846 = vsel %vm2843, %v2781, %v1246
    %v2847 = vsel %vm2843, %v2782, %v1248
    %v2848 = vsel %vm2843, %v2783, %v1250
    %v2849 = vsel %vm2843, %v2784, %v1252
    %v2850 = vsel %vm2843, %v2785, %v1254
    %v2851 = vsel %vm2843, %v2786, %v1256
    %v2852 = vsel %vm2843, %v2787, %v1258
    %v2853 = vsel %vm2843, %v2788, %v1260
    %v2854 = vsel %vm2843, %v2789, %v1262
    %v2855 = vsel %vm2843, %v2790, %v1264
    %v2856 = vsel %vm2843, %v2791, %v1266
    %v2857 = vsel %vm2843, %v2792, %v1268
    %v2858 = vsel %vm2843, %v2793, %v1270
    %v2859 = vsel %vm2843, %v2794, %v1272
    %v2860 = vsel %vm2843, %v2795, %v1274
    %v2861 = vsel %vm2843, %v2796, %v1276
    %v2862 = vsel %vm2843, %v2797, %v1278
    %v2863 = vsel %vm2843, %v2798, %v1280
    %v2864 = vsel %vm2843, %v2799, %v1282
    %v2865 = vsel %vm2843, %v2800, %v1284
    %v2866 = vsel %vm2843, %v2801, %v1286
    %v2867 = vsel %vm2843, %v2802, %v1288
    %v2868 = vsel %vm2843, %v2803, %v1290
    %v2869 = vsel %vm2843, %v2804, %v1292
    %v2870 = vsel %vm2843, %v2805, %v1294
    %v2871 = vsel %vm2843, %v2806, %v1296
    %v2872 = vsel %vm2843, %v2807, %v1298
    %v2873 = vsel %vm2843, %v2808, %v1300
    %v2874 = vsel %vm2843, %v2809, %v1302
    %v2875 = vsel %vm2843, %v2810, %v1304
    %v2876 = vsel %vm2843, %v2811, %v1306
    %v2877 = vsel %vm2843, %v2812, %v1308
    %v2878 = vsel %vm2843, %v2813, %v1310
    %v2879 = vsel %vm2843, %v2814, %v1312
    %v2880 = vsel %vm2843, %v2815, %v1314
    %v2881 = vsel %vm2843, %v2816, %v1316
    %v2882 = vsel %vm2843, %v2817, %v1318
    %v2883 = vsel %vm2843, %v2818, %v1320
    %v2884 = vsel %vm2843, %v2819, %v1322
    %v2885 = vsel %vm2843, %v2820, %v1324
    %v2886 = vsel %vm2843, %v2821, %v1326
    %v2887 = vsel %vm2843, %v2822, %v1328
    %v2888 = vsel %vm2843, %v2823, %v1330
    %v2889 = vsel %vm2843, %v2824, %v1332
    %v2890 = vsel %vm2843, %v2825, %v1334
    %v2891 = vsel %vm2843, %v2826, %v1336
    %v2892 = vsel %vm2843, %v2827, %v1338
    %v2893 = vsel %vm2843, %v2828, %v1340
    %v2894 = vsel %vm2843, %v2829, %v1342
    %v2895 = vsel %vm2843, %v2830, %v1344
    %v2896 = vsel %vm2843, %v2831, %v1346
    %v2897 = vsel %vm2843, %v2832, %v1348
    %v2898 = vsel %vm2843, %v2833, %v1350
    %v2899 = vsel %vm2843, %v2834, %v1352
    %v2900 = vsel %vm2843, %v2835, %v1354
    %v2901 = vsel %vm2843, %v2836, %v1356
    %v2902 = vsel %vm2843, %v2837, %v1358
    %v2903 = vsel %vm2843, %v2838, %v1360
    %v2904 = vsel %vm2843, %v2839, %v1362
    %v2905 = vsel %vm2843, %v2840, %v1364
    %v2906 = vsel %vm2843, %v2841, %v1366
    %v2907 = vsel %vm2843, %v2842, %v1368
    %vm2908 = vcmask 97280
    %v2909 = vsel %vm2908, %v2844, %v1498
    %v2910 = vsel %vm2908, %v2845, %v1500
    %v2911 = vsel %vm2908, %v2846, %v1502
    %v2912 = vsel %vm2908, %v2847, %v1504
    %v2913 = vsel %vm2908, %v2848, %v1506
    %v2914 = vsel %vm2908, %v2849, %v1508
    %v2915 = vsel %vm2908, %v2850, %v1510
    %v2916 = vsel %vm2908, %v2851, %v1512
    %v2917 = vsel %vm2908, %v2852, %v1514
    %v2918 = vsel %vm2908, %v2853, %v1516
    %v2919 = vsel %vm2908, %v2854, %v1518
    %v2920 = vsel %vm2908, %v2855, %v1520
    %v2921 = vsel %vm2908, %v2856, %v1522
    %v2922 = vsel %vm2908, %v2857, %v1524
    %v2923 = vsel %vm2908, %v2858, %v1526
    %v2924 = vsel %vm2908, %v2859, %v1528
    %v2925 = vsel %vm2908, %v2860, %v1530
    %v2926 = vsel %vm2908, %v2861, %v1532
    %v2927 = vsel %vm2908, %v2862, %v1534
    %v2928 = vsel %vm2908, %v2863, %v1536
    %v2929 = vsel %vm2908, %v2864, %v1538
    %v2930 = vsel %vm2908, %v2865, %v1540
    %v2931 = vsel %vm2908, %v2866, %v1542
    %v2932 = vsel %vm2908, %v2867, %v1544
    %v2933 = vsel %vm2908, %v2868, %v1546
    %v2934 = vsel %vm2908, %v2869, %v1548
    %v2935 = vsel %vm2908, %v2870, %v1550
    %v2936 = vsel %vm2908, %v2871, %v1552
    %v2937 = vsel %vm2908, %v2872, %v1554
    %v2938 = vsel %vm2908, %v2873, %v1556
    %v2939 = vsel %vm2908, %v2874, %v1558
    %v2940 = vsel %vm2908, %v2875, %v1560
    %v2941 = vsel %vm2908, %v2876, %v1562
    %v2942 = vsel %vm2908, %v2877, %v1564
    %v2943 = vsel %vm2908, %v2878, %v1566
    %v2944 = vsel %vm2908, %v2879, %v1568
    %v2945 = vsel %vm2908, %v2880, %v1570
    %v2946 = vsel %vm2908, %v2881, %v1572
    %v2947 = vsel %vm2908, %v2882, %v1574
    %v2948 = vsel %vm2908, %v2883, %v1576
    %v2949 = vsel %vm2908, %v2884, %v1578
    %v2950 = vsel %vm2908, %v2885, %v1580
    %v2951 = vsel %vm2908, %v2886, %v1582
    %v2952 = vsel %vm2908, %v2887, %v1584
    %v2953 = vsel %vm2908, %v2888, %v1586
    %v2954 = vsel %vm2908, %v2889, %v1588
    %v2955 = vsel %vm2908, %v2890, %v1590
    %v2956 = vsel %vm2908, %v2891, %v1592
    %v2957 = vsel %vm2908, %v2892, %v1594
    %v2958 = vsel %vm2908, %v2893, %v1596
    %v2959 = vsel %vm2908, %v2894, %v1598
    %v2960 = vsel %vm2908, %v2895, %v1600
    %v2961 = vsel %vm2908, %v2896, %v1602
    %v2962 = vsel %vm2908, %v2897, %v1604
    %v2963 = vsel %vm2908, %v2898, %v1606
    %v2964 = vsel %vm2908, %v2899, %v1608
    %v2965 = vsel %vm2908, %v2900, %v1610
    %v2966 = vsel %vm2908, %v2901, %v1612
    %v2967 = vsel %vm2908, %v2902, %v1614
    %v2968 = vsel %vm2908, %v2903, %v1616
    %v2969 = vsel %vm2908, %v2904, %v1618
    %v2970 = vsel %vm2908, %v2905, %v1620
    %v2971 = vsel %vm2908, %v2906, %v1622
    %v2972 = vsel %vm2908, %v2907, %v1624
    %vm2973 = vcmask 121856
    %v2974 = vsel %vm2973, %v2909, %v1754
    %v2975 = vsel %vm2973, %v2910, %v1756
    %v2976 = vsel %vm2973, %v2911, %v1758
    %v2977 = vsel %vm2973, %v2912, %v1760
    %v2978 = vsel %vm2973, %v2913, %v1762
    %v2979 = vsel %vm2973, %v2914, %v1764
    %v2980 = vsel %vm2973, %v2915, %v1766
    %v2981 = vsel %vm2973, %v2916, %v1768
    %v2982 = vsel %vm2973, %v2917, %v1770
    %v2983 = vsel %vm2973, %v2918, %v1772
    %v2984 = vsel %vm2973, %v2919, %v1774
    %v2985 = vsel %vm2973, %v2920, %v1776
    %v2986 = vsel %vm2973, %v2921, %v1778
    %v2987 = vsel %vm2973, %v2922, %v1780
    %v2988 = vsel %vm2973, %v2923, %v1782
    %v2989 = vsel %vm2973, %v2924, %v1784
    %v2990 = vsel %vm2973, %v2925, %v1786
    %v2991 = vsel %vm2973, %v2926, %v1788
    %v2992 = vsel %vm2973, %v2927, %v1790
    %v2993 = vsel %vm2973, %v2928, %v1792
    %v2994 = vsel %vm2973, %v2929, %v1794
    %v2995 = vsel %vm2973, %v2930, %v1796
    %v2996 = vsel %vm2973, %v2931, %v1798
    %v2997 = vsel %vm2973, %v2932, %v1800
    %v2998 = vsel %vm2973, %v2933, %v1802
    %v2999 = vsel %vm2973, %v2934, %v1804
    %v3000 = vsel %vm2973, %v2935, %v1806
    %v3001 = vsel %vm2973, %v2936, %v1808
    %v3002 = vsel %vm2973, %v2937, %v1810
    %v3003 = vsel %vm2973, %v2938, %v1812
    %v3004 = vsel %vm2973, %v2939, %v1814
    %v3005 = vsel %vm2973, %v2940, %v1816
    %v3006 = vsel %vm2973, %v2941, %v1818
    %v3007 = vsel %vm2973, %v2942, %v1820
    %v3008 = vsel %vm2973, %v2943, %v1822
    %v3009 = vsel %vm2973, %v2944, %v1824
    %v3010 = vsel %vm2973, %v2945, %v1826
    %v3011 = vsel %vm2973, %v2946, %v1828
    %v3012 = vsel %vm2973, %v2947, %v1830
    %v3013 = vsel %vm2973, %v2948, %v1832
    %v3014 = vsel %vm2973, %v2949, %v1834
    %v3015 = vsel %vm2973, %v2950, %v1836
    %v3016 = vsel %vm2973, %v2951, %v1838
    %v3017 = vsel %vm2973, %v2952, %v1840
    %v3018 = vsel %vm2973, %v2953, %v1842
    %v3019 = vsel %vm2973, %v2954, %v1844
    %v3020 = vsel %vm2973, %v2955, %v1846
    %v3021 = vsel %vm2973, %v2956, %v1848
    %v3022 = vsel %vm2973, %v2957, %v1850
    %v3023 = vsel %vm2973, %v2958, %v1852
    %v3024 = vsel %vm2973, %v2959, %v1854
    %v3025 = vsel %vm2973, %v2960, %v1856
    %v3026 = vsel %vm2973, %v2961, %v1858
    %v3027 = vsel %vm2973, %v2962, %v1860
    %v3028 = vsel %vm2973, %v2963, %v1862
    %v3029 = vsel %vm2973, %v2964, %v1864
    %v3030 = vsel %vm2973, %v2965, %v1866
    %v3031 = vsel %vm2973, %v2966, %v1868
    %v3032 = vsel %vm2973, %v2967, %v1870
    %v3033 = vsel %vm2973, %v2968, %v1872
    %v3034 = vsel %vm2973, %v2969, %v1874
    %v3035 = vsel %vm2973, %v2970, %v1876
    %v3036 = vsel %vm2973, %v2971, %v1878
    %v3037 = vsel %vm2973, %v2972, %v1880
    %vm3038 = vcmask 146432
    %v3039 = vsel %vm3038, %v2974, %v2010
    %v3040 = vsel %vm3038, %v2975, %v2012
    %v3041 = vsel %vm3038, %v2976, %v2014
    %v3042 = vsel %vm3038, %v2977, %v2016
    %v3043 = vsel %vm3038, %v2978, %v2018
    %v3044 = vsel %vm3038, %v2979, %v2020
    %v3045 = vsel %vm3038, %v2980, %v2022
    %v3046 = vsel %vm3038, %v2981, %v2024
    %v3047 = vsel %vm3038, %v2982, %v2026
    %v3048 = vsel %vm3038, %v2983, %v2028
    %v3049 = vsel %vm3038, %v2984, %v2030
    %v3050 = vsel %vm3038, %v2985, %v2032
    %v3051 = vsel %vm3038, %v2986, %v2034
    %v3052 = vsel %vm3038, %v2987, %v2036
    %v3053 = vsel %vm3038, %v2988, %v2038
    %v3054 = vsel %vm3038, %v2989, %v2040
    %v3055 = vsel %vm3038, %v2990, %v2042
    %v3056 = vsel %vm3038, %v2991, %v2044
    %v3057 = vsel %vm3038, %v2992, %v2046
    %v3058 = vsel %vm3038, %v2993, %v2048
    %v3059 = vsel %vm3038, %v2994, %v2050
    %v3060 = vsel %vm3038, %v2995, %v2052
    %v3061 = vsel %vm3038, %v2996, %v2054
    %v3062 = vsel %vm3038, %v2997, %v2056
    %v3063 = vsel %vm3038, %v2998, %v2058
    %v3064 = vsel %vm3038, %v2999, %v2060
    %v3065 = vsel %vm3038, %v3000, %v2062
    %v3066 = vsel %vm3038, %v3001, %v2064
    %v3067 = vsel %vm3038, %v3002, %v2066
    %v3068 = vsel %vm3038, %v3003, %v2068
    %v3069 = vsel %vm3038, %v3004, %v2070
    %v3070 = vsel %vm3038, %v3005, %v2072
    %v3071 = vsel %vm3038, %v3006, %v2074
    %v3072 = vsel %vm3038, %v3007, %v2076
    %v3073 = vsel %vm3038, %v3008, %v2078
    %v3074 = vsel %vm3038, %v3009, %v2080
    %v3075 = vsel %vm3038, %v3010, %v2082
    %v3076 = vsel %vm3038, %v3011, %v2084
    %v3077 = vsel %vm3038, %v3012, %v2086
    %v3078 = vsel %vm3038, %v3013, %v2088
    %v3079 = vsel %vm3038, %v3014, %v2090
    %v3080 = vsel %vm3038, %v3015, %v2092
    %v3081 = vsel %vm3038, %v3016, %v2094
    %v3082 = vsel %vm3038, %v3017, %v2096
    %v3083 = vsel %vm3038, %v3018, %v2098
    %v3084 = vsel %vm3038, %v3019, %v2100
    %v3085 = vsel %vm3038, %v3020, %v2102
    %v3086 = vsel %vm3038, %v3021, %v2104
    %v3087 = vsel %vm3038, %v3022, %v2106
    %v3088 = vsel %vm3038, %v3023, %v2108
    %v3089 = vsel %vm3038, %v3024, %v2110
    %v3090 = vsel %vm3038, %v3025, %v2112
    %v3091 = vsel %vm3038, %v3026, %v2114
    %v3092 = vsel %vm3038, %v3027, %v2116
    %v3093 = vsel %vm3038, %v3028, %v2118
    %v3094 = vsel %vm3038, %v3029, %v2120
    %v3095 = vsel %vm3038, %v3030, %v2122
    %v3096 = vsel %vm3038, %v3031, %v2124
    %v3097 = vsel %vm3038, %v3032, %v2126
    %v3098 = vsel %vm3038, %v3033, %v2128
    %v3099 = vsel %vm3038, %v3034, %v2130
    %v3100 = vsel %vm3038, %v3035, %v2132
    %v3101 = vsel %vm3038, %v3036, %v2134
    %v3102 = vsel %vm3038, %v3037, %v2136
    %vm3103 = vcmask 171008
    %v3104 = vsel %vm3103, %v3039, %v2266
    %v3105 = vsel %vm3103, %v3040, %v2268
    %v3106 = vsel %vm3103, %v3041, %v2270
    %v3107 = vsel %vm3103, %v3042, %v2272
    %v3108 = vsel %vm3103, %v3043, %v2274
    %v3109 = vsel %vm3103, %v3044, %v2276
    %v3110 = vsel %vm3103, %v3045, %v2278
    %v3111 = vsel %vm3103, %v3046, %v2280
    %v3112 = vsel %vm3103, %v3047, %v2282
    %v3113 = vsel %vm3103, %v3048, %v2284
    %v3114 = vsel %vm3103, %v3049, %v2286
    %v3115 = vsel %vm3103, %v3050, %v2288
    %v3116 = vsel %vm3103, %v3051, %v2290
    %v3117 = vsel %vm3103, %v3052, %v2292
    %v3118 = vsel %vm3103, %v3053, %v2294
    %v3119 = vsel %vm3103, %v3054, %v2296
    %v3120 = vsel %vm3103, %v3055, %v2298
    %v3121 = vsel %vm3103, %v3056, %v2300
    %v3122 = vsel %vm3103, %v3057, %v2302
    %v3123 = vsel %vm3103, %v3058, %v2304
    %v3124 = vsel %vm3103, %v3059, %v2306
    %v3125 = vsel %vm3103, %v3060, %v2308
    %v3126 = vsel %vm3103, %v3061, %v2310
    %v3127 = vsel %vm3103, %v3062, %v2312
    %v3128 = vsel %vm3103, %v3063, %v2314
    %v3129 = vsel %vm3103, %v3064, %v2316
    %v3130 = vsel %vm3103, %v3065, %v2318
    %v3131 = vsel %vm3103, %v3066, %v2320
    %v3132 = vsel %vm3103, %v3067, %v2322
    %v3133 = vsel %vm3103, %v3068, %v2324
    %v3134 = vsel %vm3103, %v3069, %v2326
    %v3135 = vsel %vm3103, %v3070, %v2328
    %v3136 = vsel %vm3103, %v3071, %v2330
    %v3137 = vsel %vm3103, %v3072, %v2332
    %v3138 = vsel %vm3103, %v3073, %v2334
    %v3139 = vsel %vm3103, %v3074, %v2336
    %v3140 = vsel %vm3103, %v3075, %v2338
    %v3141 = vsel %vm3103, %v3076, %v2340
    %v3142 = vsel %vm3103, %v3077, %v2342
    %v3143 = vsel %vm3103, %v3078, %v2344
    %v3144 = vsel %vm3103, %v3079, %v2346
    %v3145 = vsel %vm3103, %v3080, %v2348
    %v3146 = vsel %vm3103, %v3081, %v2350
    %v3147 = vsel %vm3103, %v3082, %v2352
    %v3148 = vsel %vm3103, %v3083, %v2354
    %v3149 = vsel %vm3103, %v3084, %v2356
    %v3150 = vsel %vm3103, %v3085, %v2358
    %v3151 = vsel %vm3103, %v3086, %v2360
    %v3152 = vsel %vm3103, %v3087, %v2362
    %v3153 = vsel %vm3103, %v3088, %v2364
    %v3154 = vsel %vm3103, %v3089, %v2366
    %v3155 = vsel %vm3103, %v3090, %v2368
    %v3156 = vsel %vm3103, %v3091, %v2370
    %v3157 = vsel %vm3103, %v3092, %v2372
    %v3158 = vsel %vm3103, %v3093, %v2374
    %v3159 = vsel %vm3103, %v3094, %v2376
    %v3160 = vsel %vm3103, %v3095, %v2378
    %v3161 = vsel %vm3103, %v3096, %v2380
    %v3162 = vsel %vm3103, %v3097, %v2382
    %v3163 = vsel %vm3103, %v3098, %v2384
    %v3164 = vsel %vm3103, %v3099, %v2386
    %v3165 = vsel %vm3103, %v3100, %v2388
    %v3166 = vsel %vm3103, %v3101, %v2390
    %v3167 = vsel %vm3103, %v3102, %v2392
    %vm3168 = vcmask 195584
    %v3169 = vsel %vm3168, %v3104, %v2522
    %v3170 = vsel %vm3168, %v3105, %v2524
    %v3171 = vsel %vm3168, %v3106, %v2526
    %v3172 = vsel %vm3168, %v3107, %v2528
    %v3173 = vsel %vm3168, %v3108, %v2530
    %v3174 = vsel %vm3168, %v3109, %v2532
    %v3175 = vsel %vm3168, %v3110, %v2534
    %v3176 = vsel %vm3168, %v3111, %v2536
    %v3177 = vsel %vm3168, %v3112, %v2538
    %v3178 = vsel %vm3168, %v3113, %v2540
    %v3179 = vsel %vm3168, %v3114, %v2542
    %v3180 = vsel %vm3168, %v3115, %v2544
    %v3181 = vsel %vm3168, %v3116, %v2546
    %v3182 = vsel %vm3168, %v3117, %v2548
    %v3183 = vsel %vm3168, %v3118, %v2550
    %v3184 = vsel %vm3168, %v3119, %v2552
    %v3185 = vsel %vm3168, %v3120, %v2554
    %v3186 = vsel %vm3168, %v3121, %v2556
    %v3187 = vsel %vm3168, %v3122, %v2558
    %v3188 = vsel %vm3168, %v3123, %v2560
    %v3189 = vsel %vm3168, %v3124, %v2562
    %v3190 = vsel %vm3168, %v3125, %v2564
    %v3191 = vsel %vm3168, %v3126, %v2566
    %v3192 = vsel %vm3168, %v3127, %v2568
    %v3193 = vsel %vm3168, %v3128, %v2570
    %v3194 = vsel %vm3168, %v3129, %v2572
    %v3195 = vsel %vm3168, %v3130, %v2574
    %v3196 = vsel %vm3168, %v3131, %v2576
    %v3197 = vsel %vm3168, %v3132, %v2578
    %v3198 = vsel %vm3168, %v3133, %v2580
    %v3199 = vsel %vm3168, %v3134, %v2582
    %v3200 = vsel %vm3168, %v3135, %v2584
    %v3201 = vsel %vm3168, %v3136, %v2586
    %v3202 = vsel %vm3168, %v3137, %v2588
    %v3203 = vsel %vm3168, %v3138, %v2590
    %v3204 = vsel %vm3168, %v3139, %v2592
    %v3205 = vsel %vm3168, %v3140, %v2594
    %v3206 = vsel %vm3168, %v3141, %v2596
    %v3207 = vsel %vm3168, %v3142, %v2598
    %v3208 = vsel %vm3168, %v3143, %v2600
    %v3209 = vsel %vm3168, %v3144, %v2602
    %v3210 = vsel %vm3168, %v3145, %v2604
    %v3211 = vsel %vm3168, %v3146, %v2606
    %v3212 = vsel %vm3168, %v3147, %v2608
    %v3213 = vsel %vm3168, %v3148, %v2610
    %v3214 = vsel %vm3168, %v3149, %v2612
    %v3215 = vsel %vm3168, %v3150, %v2614
    %v3216 = vsel %vm3168, %v3151, %v2616
    %v3217 = vsel %vm3168, %v3152, %v2618
    %v3218 = vsel %vm3168, %v3153, %v2620
    %v3219 = vsel %vm3168, %v3154, %v2622
    %v3220 = vsel %vm3168, %v3155, %v2624
    %v3221 = vsel %vm3168, %v3156, %v2626
    %v3222 = vsel %vm3168, %v3157, %v2628
    %v3223 = vsel %vm3168, %v3158, %v2630
    %v3224 = vsel %vm3168, %v3159, %v2632
    %v3225 = vsel %vm3168, %v3160, %v2634
    %v3226 = vsel %vm3168, %v3161, %v2636
    %v3227 = vsel %vm3168, %v3162, %v2638
    %v3228 = vsel %vm3168, %v3163, %v2640
    %v3229 = vsel %vm3168, %v3164, %v2642
    %v3230 = vsel %vm3168, %v3165, %v2644
    %v3231 = vsel %vm3168, %v3166, %v2646
    %v3232 = vsel %vm3168, %v3167, %v2648
    %v3233 = vld [vmem:[%s2] sm:$0xff]
    %v3234 = vld [vmem:[%s2 + $0x8] sm:$0xff]
    %v3235 = vld [vmem:[%s2 + $0x10] sm:$0xff]
    %v3236 = vld [vmem:[%s2 + $0x18] sm:$0x7]
    %v3237 = vld [vmem:[%s3] sm:$0x1]
    %v3239 = vperm.slane %v3237, 0
    %vm3241 = vcmask 220160
    %v3243 = vsel %vm3241, %v3169, 0
    %v3246 = vsel %vm3241, %v3170, 0
    %v3249 = vsel %vm3241, %v3171, 0
    %v3252 = vsel %vm3241, %v3172, 0
    %v3255 = vsel %vm3241, %v3173, 0
    %v3258 = vsel %vm3241, %v3174, 0
    %v3261 = vsel %vm3241, %v3175, 0
    %v3264 = vsel %vm3241, %v3176, 0
    %v3267 = vsel %vm3241, %v3177, 0
    %v3270 = vsel %vm3241, %v3178, 0
    %v3273 = vsel %vm3241, %v3179, 0
    %v3276 = vsel %vm3241, %v3180, 0
    %v3279 = vsel %vm3241, %v3181, 0
    %v3282 = vsel %vm3241, %v3182, 0
    %v3285 = vsel %vm3241, %v3183, 0
    %v3288 = vsel %vm3241, %v3184, 0
    %v3291 = vsel %vm3241, %v3185, 0
    %v3294 = vsel %vm3241, %v3186, 0
    %v3297 = vsel %vm3241, %v3187, 0
    %v3300 = vsel %vm3241, %v3188, 0
    %v3303 = vsel %vm3241, %v3189, 0
    %v3306 = vsel %vm3241, %v3190, 0
    %v3309 = vsel %vm3241, %v3191, 0
    %v3312 = vsel %vm3241, %v3192, 0
    %v3315 = vsel %vm3241, %v3193, 0
    %v3318 = vsel %vm3241, %v3194, 0
    %v3321 = vsel %vm3241, %v3195, 0
    %v3324 = vsel %vm3241, %v3196, 0
    %v3327 = vsel %vm3241, %v3197, 0
    %v3330 = vsel %vm3241, %v3198, 0
    %v3333 = vsel %vm3241, %v3199, 0
    %v3336 = vsel %vm3241, %v3200, 0
    %v3339 = vsel %vm3241, %v3201, 0
    %v3342 = vsel %vm3241, %v3202, 0
    %v3345 = vsel %vm3241, %v3203, 0
    %v3348 = vsel %vm3241, %v3204, 0
    %v3351 = vsel %vm3241, %v3205, 0
    %v3354 = vsel %vm3241, %v3206, 0
    %v3357 = vsel %vm3241, %v3207, 0
    %v3360 = vsel %vm3241, %v3208, 0
    %v3363 = vsel %vm3241, %v3209, 0
    %v3366 = vsel %vm3241, %v3210, 0
    %v3369 = vsel %vm3241, %v3211, 0
    %v3372 = vsel %vm3241, %v3212, 0
    %v3375 = vsel %vm3241, %v3213, 0
    %v3378 = vsel %vm3241, %v3214, 0
    %v3381 = vsel %vm3241, %v3215, 0
    %v3384 = vsel %vm3241, %v3216, 0
    %v3387 = vsel %vm3241, %v3217, 0
    %v3390 = vsel %vm3241, %v3218, 0
    %v3393 = vsel %vm3241, %v3219, 0
    %v3396 = vsel %vm3241, %v3220, 0
    %v3399 = vsel %vm3241, %v3221, 0
    %v3402 = vsel %vm3241, %v3222, 0
    %v3405 = vsel %vm3241, %v3223, 0
    %v3408 = vsel %vm3241, %v3224, 0
    %v3411 = vsel %vm3241, %v3225, 0
    %v3414 = vsel %vm3241, %v3226, 0
    %v3417 = vsel %vm3241, %v3227, 0
    %v3420 = vsel %vm3241, %v3228, 0
    %v3423 = vsel %vm3241, %v3229, 0
    %v3426 = vsel %vm3241, %v3230, 0
    %v3429 = vsel %vm3241, %v3231, 0
    %v3432 = vsel %vm3241, %v3232, 0
    %vm3434 = vcmask 1042432
    %v3436 = vsel %vm3434, %v3236, 0
    %3438 = vmatpush.msra.mxu0 0.0
    %3439 = vmatpush.msra.mxu0 0.0
    %3440 = vmatpush.msra.mxu0 0.0
    %3441 = vmatpush.msra.mxu0 0.0
    %3442 = vmatpush.msra.mxu0 0.0
    %3443 = vmatpush.msra.mxu0 0.0
    %3444 = vmatpush.msra.mxu0 0.0
    %3445 = vmatpush.msra.mxu0 0.0
    %3446 = vmatpush.msra.mxu0 0.0
    %3447 = vmatpush.msra.mxu0 0.0
    %3448 = vmatpush.msra.mxu0 0.0
    %3449 = vmatpush.msra.mxu0 0.0
    %3450 = vmatpush.msra.mxu0 %v3436
    %3451 = vmatpush.msra.mxu0 %v3235
    %3452 = vmatpush.msra.mxu0 %v3234
    %3453 = vmatpush.msra.mxu0 %v3233
    %3454 = vmatmul.f32.gmra.mxu0 %v3243
    %v3455 = vpop.f32.mrf.mxu0
    %v3456 = vadd.f32 %v3239, %v3455
    %3457 = vmatmul.f32.gmra.mxu0 %v3246
    %v3458 = vpop.f32.mrf.mxu0
    %v3459 = vadd.f32 %v3239, %v3458
    %3460 = vmatmul.f32.gmra.mxu0 %v3249
    %v3461 = vpop.f32.mrf.mxu0
    %v3462 = vadd.f32 %v3239, %v3461
    %3463 = vmatmul.f32.gmra.mxu0 %v3252
    %v3464 = vpop.f32.mrf.mxu0
    %v3465 = vadd.f32 %v3239, %v3464
    %3466 = vmatmul.f32.gmra.mxu0 %v3255
    %v3467 = vpop.f32.mrf.mxu0
    %v3468 = vadd.f32 %v3239, %v3467
    %3469 = vmatmul.f32.gmra.mxu0 %v3258
    %v3470 = vpop.f32.mrf.mxu0
    %v3471 = vadd.f32 %v3239, %v3470
    %3472 = vmatmul.f32.gmra.mxu0 %v3261
    %v3473 = vpop.f32.mrf.mxu0
    %v3474 = vadd.f32 %v3239, %v3473
    %3475 = vmatmul.f32.gmra.mxu0 %v3264
    %v3476 = vpop.f32.mrf.mxu0
    %v3477 = vadd.f32 %v3239, %v3476
    %3478 = vmatmul.f32.gmra.mxu0 %v3267
    %v3479 = vpop.f32.mrf.mxu0
    %v3480 = vadd.f32 %v3239, %v3479
    %3481 = vmatmul.f32.gmra.mxu0 %v3270
    %v3482 = vpop.f32.mrf.mxu0
    %v3483 = vadd.f32 %v3239, %v3482
    %3484 = vmatmul.f32.gmra.mxu0 %v3273
    %v3485 = vpop.f32.mrf.mxu0
    %v3486 = vadd.f32 %v3239, %v3485
    %3487 = vmatmul.f32.gmra.mxu0 %v3276
    %v3488 = vpop.f32.mrf.mxu0
    %v3489 = vadd.f32 %v3239, %v3488
    %3490 = vmatmul.f32.gmra.mxu0 %v3279
    %v3491 = vpop.f32.mrf.mxu0
    %v3492 = vadd.f32 %v3239, %v3491
    %3493 = vmatmul.f32.gmra.mxu0 %v3282
    %v3494 = vpop.f32.mrf.mxu0
    %v3495 = vadd.f32 %v3239, %v3494
    %3496 = vmatmul.f32.gmra.mxu0 %v3285
    %v3497 = vpop.f32.mrf.mxu0
    %v3498 = vadd.f32 %v3239, %v3497
    %3499 = vmatmul.f32.gmra.mxu0 %v3288
    %v3500 = vpop.f32.mrf.mxu0
    %v3501 = vadd.f32 %v3239, %v3500
    %3502 = vmatmul.f32.gmra.mxu0 %v3291
    %v3503 = vpop.f32.mrf.mxu0
    %v3504 = vadd.f32 %v3239, %v3503
    %3505 = vmatmul.f32.gmra.mxu0 %v3294
    %v3506 = vpop.f32.mrf.mxu0
    %v3507 = vadd.f32 %v3239, %v3506
    %3508 = vmatmul.f32.gmra.mxu0 %v3297
    %v3509 = vpop.f32.mrf.mxu0
    %v3510 = vadd.f32 %v3239, %v3509
    %3511 = vmatmul.f32.gmra.mxu0 %v3300
    %v3512 = vpop.f32.mrf.mxu0
    %v3513 = vadd.f32 %v3239, %v3512
    %3514 = vmatmul.f32.gmra.mxu0 %v3303
    %v3515 = vpop.f32.mrf.mxu0
    %v3516 = vadd.f32 %v3239, %v3515
    %3517 = vmatmul.f32.gmra.mxu0 %v3306
    %v3518 = vpop.f32.mrf.mxu0
    %v3519 = vadd.f32 %v3239, %v3518
    %3520 = vmatmul.f32.gmra.mxu0 %v3309
    %v3521 = vpop.f32.mrf.mxu0
    %v3522 = vadd.f32 %v3239, %v3521
    %3523 = vmatmul.f32.gmra.mxu0 %v3312
    %v3524 = vpop.f32.mrf.mxu0
    %v3525 = vadd.f32 %v3239, %v3524
    %3526 = vmatmul.f32.gmra.mxu0 %v3315
    %v3527 = vpop.f32.mrf.mxu0
    %v3528 = vadd.f32 %v3239, %v3527
    %3529 = vmatmul.f32.gmra.mxu0 %v3318
    %v3530 = vpop.f32.mrf.mxu0
    %v3531 = vadd.f32 %v3239, %v3530
    %3532 = vmatmul.f32.gmra.mxu0 %v3321
    %v3533 = vpop.f32.mrf.mxu0
    %v3534 = vadd.f32 %v3239, %v3533
    %3535 = vmatmul.f32.gmra.mxu0 %v3324
    %v3536 = vpop.f32.mrf.mxu0
    %v3537 = vadd.f32 %v3239, %v3536
    %3538 = vmatmul.f32.gmra.mxu0 %v3327
    %v3539 = vpop.f32.mrf.mxu0
    %v3540 = vadd.f32 %v3239, %v3539
    %3541 = vmatmul.f32.gmra.mxu0 %v3330
    %v3542 = vpop.f32.mrf.mxu0
    %v3543 = vadd.f32 %v3239, %v3542
    %3544 = vmatmul.f32.gmra.mxu0 %v3333
    %v3545 = vpop.f32.mrf.mxu0
    %v3546 = vadd.f32 %v3239, %v3545
    %3547 = vmatmul.f32.gmra.mxu0 %v3336
    %v3548 = vpop.f32.mrf.mxu0
    %v3549 = vadd.f32 %v3239, %v3548
    %3550 = vmatmul.f32.gmra.mxu0 %v3339
    %v3551 = vpop.f32.mrf.mxu0
    %v3552 = vadd.f32 %v3239, %v3551
    %3553 = vmatmul.f32.gmra.mxu0 %v3342
    %v3554 = vpop.f32.mrf.mxu0
    %v3555 = vadd.f32 %v3239, %v3554
    %3556 = vmatmul.f32.gmra.mxu0 %v3345
    %v3557 = vpop.f32.mrf.mxu0
    %v3558 = vadd.f32 %v3239, %v3557
    %3559 = vmatmul.f32.gmra.mxu0 %v3348
    %v3560 = vpop.f32.mrf.mxu0
    %v3561 = vadd.f32 %v3239, %v3560
    %3562 = vmatmul.f32.gmra.mxu0 %v3351
    %v3563 = vpop.f32.mrf.mxu0
    %v3564 = vadd.f32 %v3239, %v3563
    %3565 = vmatmul.f32.gmra.mxu0 %v3354
    %v3566 = vpop.f32.mrf.mxu0
    %v3567 = vadd.f32 %v3239, %v3566
    %3568 = vmatmul.f32.gmra.mxu0 %v3357
    %v3569 = vpop.f32.mrf.mxu0
    %v3570 = vadd.f32 %v3239, %v3569
    %3571 = vmatmul.f32.gmra.mxu0 %v3360
    %v3572 = vpop.f32.mrf.mxu0
    %v3573 = vadd.f32 %v3239, %v3572
    %3574 = vmatmul.f32.gmra.mxu0 %v3363
    %v3575 = vpop.f32.mrf.mxu0
    %v3576 = vadd.f32 %v3239, %v3575
    %3577 = vmatmul.f32.gmra.mxu0 %v3366
    %v3578 = vpop.f32.mrf.mxu0
    %v3579 = vadd.f32 %v3239, %v3578
    %3580 = vmatmul.f32.gmra.mxu0 %v3369
    %v3581 = vpop.f32.mrf.mxu0
    %v3582 = vadd.f32 %v3239, %v3581
    %3583 = vmatmul.f32.gmra.mxu0 %v3372
    %v3584 = vpop.f32.mrf.mxu0
    %v3585 = vadd.f32 %v3239, %v3584
    %3586 = vmatmul.f32.gmra.mxu0 %v3375
    %v3587 = vpop.f32.mrf.mxu0
    %v3588 = vadd.f32 %v3239, %v3587
    %3589 = vmatmul.f32.gmra.mxu0 %v3378
    %v3590 = vpop.f32.mrf.mxu0
    %v3591 = vadd.f32 %v3239, %v3590
    %3592 = vmatmul.f32.gmra.mxu0 %v3381
    %v3593 = vpop.f32.mrf.mxu0
    %v3594 = vadd.f32 %v3239, %v3593
    %3595 = vmatmul.f32.gmra.mxu0 %v3384
    %v3596 = vpop.f32.mrf.mxu0
    %v3597 = vadd.f32 %v3239, %v3596
    %3598 = vmatmul.f32.gmra.mxu0 %v3387
    %v3599 = vpop.f32.mrf.mxu0
    %v3600 = vadd.f32 %v3239, %v3599
    %3601 = vmatmul.f32.gmra.mxu0 %v3390
    %v3602 = vpop.f32.mrf.mxu0
    %v3603 = vadd.f32 %v3239, %v3602
    %3604 = vmatmul.f32.gmra.mxu0 %v3393
    %v3605 = vpop.f32.mrf.mxu0
    %v3606 = vadd.f32 %v3239, %v3605
    %3607 = vmatmul.f32.gmra.mxu0 %v3396
    %v3608 = vpop.f32.mrf.mxu0
    %v3609 = vadd.f32 %v3239, %v3608
    %3610 = vmatmul.f32.gmra.mxu0 %v3399
    %v3611 = vpop.f32.mrf.mxu0
    %v3612 = vadd.f32 %v3239, %v3611
    %3613 = vmatmul.f32.gmra.mxu0 %v3402
    %v3614 = vpop.f32.mrf.mxu0
    %v3615 = vadd.f32 %v3239, %v3614
    %3616 = vmatmul.f32.gmra.mxu0 %v3405
    %v3617 = vpop.f32.mrf.mxu0
    %v3618 = vadd.f32 %v3239, %v3617
    %3619 = vmatmul.f32.gmra.mxu0 %v3408
    %v3620 = vpop.f32.mrf.mxu0
    %v3621 = vadd.f32 %v3239, %v3620
    %3622 = vmatmul.f32.gmra.mxu0 %v3411
    %v3623 = vpop.f32.mrf.mxu0
    %v3624 = vadd.f32 %v3239, %v3623
    %3625 = vmatmul.f32.gmra.mxu0 %v3414
    %v3626 = vpop.f32.mrf.mxu0
    %v3627 = vadd.f32 %v3239, %v3626
    %3628 = vmatmul.f32.gmra.mxu0 %v3417
    %v3629 = vpop.f32.mrf.mxu0
    %v3630 = vadd.f32 %v3239, %v3629
    %3631 = vmatmul.f32.gmra.mxu0 %v3420
    %v3632 = vpop.f32.mrf.mxu0
    %v3633 = vadd.f32 %v3239, %v3632
    %3634 = vmatmul.f32.gmra.mxu0 %v3423
    %v3635 = vpop.f32.mrf.mxu0
    %v3636 = vadd.f32 %v3239, %v3635
    %3637 = vmatmul.f32.gmra.mxu0 %v3426
    %v3638 = vpop.f32.mrf.mxu0
    %v3639 = vadd.f32 %v3239, %v3638
    %3640 = vmatmul.f32.gmra.mxu0 %v3429
    %v3641 = vpop.f32.mrf.mxu0
    %v3642 = vadd.f32 %v3239, %v3641
    %3643 = vmatmul.f32.gmra.mxu0 %v3432
    %v3644 = vpop.f32.mrf.mxu0
    %v3645 = vadd.f32 %v3239, %v3644
    %3646 = vdwg.mxu0
    %v3647 = vmax.f32 %v3456, 0.0
    %v3648 = vmax.f32 %v3459, 0.0
    %v3649 = vmax.f32 %v3462, 0.0
    %v3650 = vmax.f32 %v3465, 0.0
    %v3651 = vmax.f32 %v3468, 0.0
    %v3652 = vmax.f32 %v3471, 0.0
    %v3653 = vmax.f32 %v3474, 0.0
    %v3654 = vmax.f32 %v3477, 0.0
    %v3655 = vmax.f32 %v3480, 0.0
    %v3656 = vmax.f32 %v3483, 0.0
    %v3657 = vmax.f32 %v3486, 0.0
    %v3658 = vmax.f32 %v3489, 0.0
    %v3659 = vmax.f32 %v3492, 0.0
    %v3660 = vmax.f32 %v3495, 0.0
    %v3661 = vmax.f32 %v3498, 0.0
    %v3662 = vmax.f32 %v3501, 0.0
    %v3663 = vmax.f32 %v3504, 0.0
    %v3664 = vmax.f32 %v3507, 0.0
    %v3665 = vmax.f32 %v3510, 0.0
    %v3666 = vmax.f32 %v3513, 0.0
    %v3667 = vmax.f32 %v3516, 0.0
    %v3668 = vmax.f32 %v3519, 0.0
    %v3669 = vmax.f32 %v3522, 0.0
    %v3670 = vmax.f32 %v3525, 0.0
    %v3671 = vmax.f32 %v3528, 0.0
    %v3672 = vmax.f32 %v3531, 0.0
    %v3673 = vmax.f32 %v3534, 0.0
    %v3674 = vmax.f32 %v3537, 0.0
    %v3675 = vmax.f32 %v3540, 0.0
    %v3676 = vmax.f32 %v3543, 0.0
    %v3677 = vmax.f32 %v3546, 0.0
    %v3678 = vmax.f32 %v3549, 0.0
    %v3679 = vmax.f32 %v3552, 0.0
    %v3680 = vmax.f32 %v3555, 0.0
    %v3681 = vmax.f32 %v3558, 0.0
    %v3682 = vmax.f32 %v3561, 0.0
    %v3683 = vmax.f32 %v3564, 0.0
    %v3684 = vmax.f32 %v3567, 0.0
    %v3685 = vmax.f32 %v3570, 0.0
    %v3686 = vmax.f32 %v3573, 0.0
    %v3687 = vmax.f32 %v3576, 0.0
    %v3688 = vmax.f32 %v3579, 0.0
    %v3689 = vmax.f32 %v3582, 0.0
    %v3690 = vmax.f32 %v3585, 0.0
    %v3691 = vmax.f32 %v3588, 0.0
    %v3692 = vmax.f32 %v3591, 0.0
    %v3693 = vmax.f32 %v3594, 0.0
    %v3694 = vmax.f32 %v3597, 0.0
    %v3695 = vmax.f32 %v3600, 0.0
    %v3696 = vmax.f32 %v3603, 0.0
    %v3697 = vmax.f32 %v3606, 0.0
    %v3698 = vmax.f32 %v3609, 0.0
    %v3699 = vmax.f32 %v3612, 0.0
    %v3700 = vmax.f32 %v3615, 0.0
    %v3701 = vmax.f32 %v3618, 0.0
    %v3702 = vmax.f32 %v3621, 0.0
    %v3703 = vmax.f32 %v3624, 0.0
    %v3704 = vmax.f32 %v3627, 0.0
    %v3705 = vmax.f32 %v3630, 0.0
    %v3706 = vmax.f32 %v3633, 0.0
    %v3707 = vmax.f32 %v3636, 0.0
    %v3708 = vmax.f32 %v3639, 0.0
    %v3709 = vmax.f32 %v3642, 0.0
    %v3710 = vmax.f32 %v3645, 0.0
    %v3711 = vmax.f32 %v3647, %v3649
    %v3712 = vmax.f32 %v3648, %v3650
    %v3713 = vmax.f32 %v3651, %v3653
    %v3714 = vmax.f32 %v3652, %v3654
    %v3715 = vmax.f32 %v3655, %v3657
    %v3716 = vmax.f32 %v3656, %v3658
    %v3717 = vmax.f32 %v3659, %v3661
    %v3718 = vmax.f32 %v3660, %v3662
    %v3719 = vmax.f32 %v3663, %v3665
    %v3720 = vmax.f32 %v3664, %v3666
    %v3721 = vmax.f32 %v3667, %v3669
    %v3722 = vmax.f32 %v3668, %v3670
    %v3723 = vmax.f32 %v3671, %v3673
    %v3724 = vmax.f32 %v3672, %v3674
    %v3725 = vmax.f32 %v3675, %v3677
    %v3726 = vmax.f32 %v3676, %v3678
    %v3727 = vmax.f32 %v3679, %v3681
    %v3728 = vmax.f32 %v3680, %v3682
    %v3729 = vmax.f32 %v3683, %v3685
    %v3730 = vmax.f32 %v3684, %v3686
    %v3731 = vmax.f32 %v3687, %v3689
    %v3732 = vmax.f32 %v3688, %v3690
    %v3733 = vmax.f32 %v3691, %v3693
    %v3734 = vmax.f32 %v3692, %v3694
    %v3735 = vmax.f32 %v3695, %v3697
    %v3736 = vmax.f32 %v3696, %v3698
    %v3737 = vmax.f32 %v3699, %v3701
    %v3738 = vmax.f32 %v3700, %v3702
    %v3739 = vmax.f32 %v3703, %v3705
    %v3740 = vmax.f32 %v3704, %v3706
    %v3741 = vmax.f32 %v3707, %v3709
    %v3742 = vmax.f32 %v3708, %v3710
    %vm3743 = vcmask 64512
    %3744 = vst.msk [vmem:[#allocation3] sm:$0xff] %vm3743, %v3711
    %3745 = vst.msk [vmem:[#allocation3 + $0x8] sm:$0xff] %vm3743, %v3712
    %3746 = vst.msk [vmem:[#allocation3 + $0x10] sm:$0xff] %vm3743, %v3713
    %3747 = vst.msk [vmem:[#allocation3 + $0x18] sm:$0xff] %vm3743, %v3714
    %3748 = vst.msk [vmem:[#allocation3 + $0x20] sm:$0xff] %vm3743, %v3715
    %3749 = vst.msk [vmem:[#allocation3 + $0x28] sm:$0xff] %vm3743, %v3716
    %3750 = vst.msk [vmem:[#allocation3 + $0x30] sm:$0xff] %vm3743, %v3717
    %3751 = vst.msk [vmem:[#allocation3 + $0x38] sm:$0xff] %vm3743, %v3718
    %3752 = vst.msk [vmem:[#allocation3 + $0x40] sm:$0xff] %vm3743, %v3719
    %3753 = vst.msk [vmem:[#allocation3 + $0x48] sm:$0xff] %vm3743, %v3720
    %3754 = vst.msk [vmem:[#allocation3 + $0x50] sm:$0xff] %vm3743, %v3721
    %3755 = vst.msk [vmem:[#allocation3 + $0x58] sm:$0xff] %vm3743, %v3722
    %3756 = vst.msk [vmem:[#allocation3 + $0x60] sm:$0xff] %vm3743, %v3723
    %3757 = vst.msk [vmem:[#allocation3 + $0x68] sm:$0xff] %vm3743, %v3724
    %3758 = vst.msk [vmem:[#allocation3 + $0x70] sm:$0xff] %vm3743, %v3725
    %3759 = vst.msk [vmem:[#allocation3 + $0x78] sm:$0xff] %vm3743, %v3726
    %3760 = vst.msk [vmem:[#allocation3 + $0x80] sm:$0xff] %vm3743, %v3727
    %3761 = vst.msk [vmem:[#allocation3 + $0x88] sm:$0xff] %vm3743, %v3728
    %3762 = vst.msk [vmem:[#allocation3 + $0x90] sm:$0xff] %vm3743, %v3729
    %3763 = vst.msk [vmem:[#allocation3 + $0x98] sm:$0xff] %vm3743, %v3730
    %3764 = vst.msk [vmem:[#allocation3 + $0xa0] sm:$0xff] %vm3743, %v3731
    %3765 = vst.msk [vmem:[#allocation3 + $0xa8] sm:$0xff] %vm3743, %v3732
    %3766 = vst.msk [vmem:[#allocation3 + $0xb0] sm:$0xff] %vm3743, %v3733
    %3767 = vst.msk [vmem:[#allocation3 + $0xb8] sm:$0xff] %vm3743, %v3734
    %3768 = vst.msk [vmem:[#allocation3 + $0xc0] sm:$0xff] %vm3743, %v3735
    %3769 = vst.msk [vmem:[#allocation3 + $0xc8] sm:$0xff] %vm3743, %v3736
    %3770 = vst.msk [vmem:[#allocation3 + $0xd0] sm:$0xff] %vm3743, %v3737
    %3771 = vst.msk [vmem:[#allocation3 + $0xd8] sm:$0xff] %vm3743, %v3738
    %3772 = vst.msk [vmem:[#allocation3 + $0xe0] sm:$0xff] %vm3743, %v3739
    %3773 = vst.msk [vmem:[#allocation3 + $0xe8] sm:$0xff] %vm3743, %v3740
    %3774 = vst.msk [vmem:[#allocation3 + $0xf0] sm:$0xff] %vm3743, %v3741
    %3775 = vst.msk [vmem:[#allocation3 + $0xf8] sm:$0xff] %vm3743, %v3742
    %v3776 = vld [vmem:[#allocation3] ss:$2 sm:$0xff]
    %s3777 = scalar_lea.vmem [#allocation3], 16
    %v3778 = vld [vmem:[%s3777] ss:$2 sm:$0xff]
    %s3779 = scalar_lea.vmem [#allocation3], 32
    %v3780 = vld [vmem:[%s3779] ss:$2 sm:$0xff]
    %s3781 = scalar_lea.vmem [#allocation3], 48
    %v3782 = vld [vmem:[%s3781] ss:$2 sm:$0xff]
    %s3783 = scalar_lea.vmem [#allocation3], 64
    %v3784 = vld [vmem:[%s3783] ss:$2 sm:$0xff]
    %s3785 = scalar_lea.vmem [#allocation3], 80
    %v3786 = vld [vmem:[%s3785] ss:$2 sm:$0xff]
    %s3787 = scalar_lea.vmem [#allocation3], 96
    %v3788 = vld [vmem:[%s3787] ss:$2 sm:$0xff]
    %s3789 = scalar_lea.vmem [#allocation3], 112
    %v3790 = vld [vmem:[%s3789] ss:$2 sm:$0xff]
    %s3791 = scalar_lea.vmem [#allocation3], 128
    %v3792 = vld [vmem:[%s3791] ss:$2 sm:$0xff]
    %s3793 = scalar_lea.vmem [#allocation3], 144
    %v3794 = vld [vmem:[%s3793] ss:$2 sm:$0xff]
    %s3795 = scalar_lea.vmem [#allocation3], 160
    %v3796 = vld [vmem:[%s3795] ss:$2 sm:$0xff]
    %s3797 = scalar_lea.vmem [#allocation3], 176
    %v3798 = vld [vmem:[%s3797] ss:$2 sm:$0xff]
    %s3799 = scalar_lea.vmem [#allocation3], 192
    %v3800 = vld [vmem:[%s3799] ss:$2 sm:$0xff]
    %s3801 = scalar_lea.vmem [#allocation3], 208
    %v3802 = vld [vmem:[%s3801] ss:$2 sm:$0xff]
    %s3803 = scalar_lea.vmem [#allocation3], 224
    %v3804 = vld [vmem:[%s3803] ss:$2 sm:$0xff]
    %s3805 = scalar_lea.vmem [#allocation3], 240
    %v3806 = vld [vmem:[%s3805] ss:$2 sm:$0xff]
    %s3807 = scalar_lea.vmem [#allocation3], 1
    %v3808 = vld [vmem:[%s3807] ss:$2 sm:$0xff]
    %s3809 = scalar_lea.vmem [#allocation3], 17
    %v3810 = vld [vmem:[%s3809] ss:$2 sm:$0xff]
    %s3811 = scalar_lea.vmem [#allocation3], 33
    %v3812 = vld [vmem:[%s3811] ss:$2 sm:$0xff]
    %s3813 = scalar_lea.vmem [#allocation3], 49
    %v3814 = vld [vmem:[%s3813] ss:$2 sm:$0xff]
    %s3815 = scalar_lea.vmem [#allocation3], 65
    %v3816 = vld [vmem:[%s3815] ss:$2 sm:$0xff]
    %s3817 = scalar_lea.vmem [#allocation3], 81
    %v3818 = vld [vmem:[%s3817] ss:$2 sm:$0xff]
    %s3819 = scalar_lea.vmem [#allocation3], 97
    %v3820 = vld [vmem:[%s3819] ss:$2 sm:$0xff]
    %s3821 = scalar_lea.vmem [#allocation3], 113
    %v3822 = vld [vmem:[%s3821] ss:$2 sm:$0xff]
    %s3823 = scalar_lea.vmem [#allocation3], 129
    %v3824 = vld [vmem:[%s3823] ss:$2 sm:$0xff]
    %s3825 = scalar_lea.vmem [#allocation3], 145
    %v3826 = vld [vmem:[%s3825] ss:$2 sm:$0xff]
    %s3827 = scalar_lea.vmem [#allocation3], 161
    %v3828 = vld [vmem:[%s3827] ss:$2 sm:$0xff]
    %s3829 = scalar_lea.vmem [#allocation3], 177
    %v3830 = vld [vmem:[%s3829] ss:$2 sm:$0xff]
    %s3831 = scalar_lea.vmem [#allocation3], 193
    %v3832 = vld [vmem:[%s3831] ss:$2 sm:$0xff]
    %s3833 = scalar_lea.vmem [#allocation3], 209
    %v3834 = vld [vmem:[%s3833] ss:$2 sm:$0xff]
    %s3835 = scalar_lea.vmem [#allocation3], 225
    %v3836 = vld [vmem:[%s3835] ss:$2 sm:$0xff]
    %s3837 = scalar_lea.vmem [#allocation3], 241
    %v3838 = vld [vmem:[%s3837] ss:$2 sm:$0xff]
    %v3839 = vmax.f32 %v3776, %v3808
    %v3840 = vmax.f32 %v3778, %v3810
    %v3841 = vmax.f32 %v3780, %v3812
    %v3842 = vmax.f32 %v3782, %v3814
    %v3843 = vmax.f32 %v3784, %v3816
    %v3844 = vmax.f32 %v3786, %v3818
    %v3845 = vmax.f32 %v3788, %v3820
    %v3846 = vmax.f32 %v3790, %v3822
    %v3847 = vmax.f32 %v3792, %v3824
    %v3848 = vmax.f32 %v3794, %v3826
    %v3849 = vmax.f32 %v3796, %v3828
    %v3850 = vmax.f32 %v3798, %v3830
    %v3851 = vmax.f32 %v3800, %v3832
    %v3852 = vmax.f32 %v3802, %v3834
    %v3853 = vmax.f32 %v3804, %v3836
    %v3854 = vmax.f32 %v3806, %v3838
    %3855 = vst.msk [vmem:[#allocation4] sm:$0xff] %vm3743, 0.0
    %3856 = vst.msk [vmem:[#allocation4 + $0x8] sm:$0xff] %vm3743, 0.0
    %3857 = vst.msk [vmem:[#allocation4 + $0x10] sm:$0xff] %vm3743, 0.0
    %3858 = vst.msk [vmem:[#allocation4 + $0x18] sm:$0xff] %vm3743, 0.0
    %3859 = vst.msk [vmem:[#allocation4 + $0x20] sm:$0xff] %vm3743, 0.0
    %3860 = vst.msk [vmem:[#allocation4 + $0x28] sm:$0xff] %vm3743, 0.0
    %3861 = vst.msk [vmem:[#allocation4 + $0x30] sm:$0xff] %vm3743, 0.0
    %3862 = vst.msk [vmem:[#allocation4 + $0x38] sm:$0xff] %vm3743, 0.0
    %3863 = vst.msk [vmem:[#allocation4 + $0x40] sm:$0xff] %vm3743, 0.0
    %3864 = vst.msk [vmem:[#allocation4 + $0x48] sm:$0xff] %vm3743, 0.0
    %3865 = vst.msk [vmem:[#allocation4 + $0x50] sm:$0xff] %vm3743, 0.0
    %3866 = vst.msk [vmem:[#allocation4 + $0x58] sm:$0xff] %vm3743, 0.0
    %3867 = vst.msk [vmem:[#allocation4 + $0x60] sm:$0xff] %vm3743, 0.0
    %3868 = vst.msk [vmem:[#allocation4 + $0x68] sm:$0xff] %vm3743, 0.0
    %3869 = vst.msk [vmem:[#allocation4 + $0x70] sm:$0xff] %vm3743, 0.0
    %3870 = vst.msk [vmem:[#allocation4 + $0x78] sm:$0xff] %vm3743, 0.0
    %3871 = vst.msk [vmem:[#allocation4 + $0x80] sm:$0xff] %vm3743, 0.0
    %3872 = vst.msk [vmem:[#allocation4 + $0x88] sm:$0xff] %vm3743, 0.0
    %3873 = vst.msk [vmem:[#allocation4 + $0x90] sm:$0xff] %vm3743, 0.0
    %3874 = vst.msk [vmem:[#allocation4 + $0x98] sm:$0xff] %vm3743, 0.0
    %3875 = vst.msk [vmem:[#allocation4 + $0xa0] sm:$0xff] %vm3743, 0.0
    %3876 = vst.msk [vmem:[#allocation4 + $0xa8] sm:$0xff] %vm3743, 0.0
    %3877 = vst.msk [vmem:[#allocation4 + $0xb0] sm:$0xff] %vm3743, 0.0
    %3878 = vst.msk [vmem:[#allocation4 + $0xb8] sm:$0xff] %vm3743, 0.0
    %3879 = vst.msk [vmem:[#allocation4 + $0xc0] sm:$0xff] %vm3743, 0.0
    %3880 = vst.msk [vmem:[#allocation4 + $0xc8] sm:$0xff] %vm3743, 0.0
    %3881 = vst.msk [vmem:[#allocation4 + $0xd0] sm:$0xff] %vm3743, 0.0
    %3882 = vst.msk [vmem:[#allocation4 + $0xd8] sm:$0xff] %vm3743, 0.0
    %3883 = vst.msk [vmem:[#allocation4 + $0xe0] sm:$0xff] %vm3743, 0.0
    %3884 = vst.msk [vmem:[#allocation4 + $0xe8] sm:$0xff] %vm3743, 0.0
    %3885 = vst.msk [vmem:[#allocation4 + $0xf0] sm:$0xff] %vm3743, 0.0
    %3886 = vst.msk [vmem:[#allocation4 + $0xf8] sm:$0xff] %vm3743, 0.0
    %3887 = vst.msk [vmem:[#allocation4 + $0x100] sm:$0xff] %vm3743, 0.0
    %3888 = vst.msk [vmem:[#allocation4 + $0x108] sm:$0xff] %vm3743, 0.0
    %3889 = vst.msk [vmem:[#allocation4 + $0x110] sm:$0xff] %vm3743, 0.0
    %3890 = vst.msk [vmem:[#allocation4 + $0x118] sm:$0xff] %vm3743, 0.0
    %3891 = vst.msk [vmem:[#allocation4 + $0x120] sm:$0xff] %vm3743, 0.0
    %3892 = vst.msk [vmem:[#allocation4 + $0x128] sm:$0xff] %vm3743, 0.0
    %3893 = vst.msk [vmem:[#allocation4 + $0x130] sm:$0xff] %vm3743, 0.0
    %3894 = vst.msk [vmem:[#allocation4 + $0x138] sm:$0xff] %vm3743, 0.0
    %3895 = vst.msk [vmem:[#allocation4 + $0x140] sm:$0xff] %vm3743, 0.0
    %3896 = vst.msk [vmem:[#allocation4 + $0x148] sm:$0xff] %vm3743, 0.0
    %3897 = vst.msk [vmem:[#allocation4 + $0x150] sm:$0xff] %vm3743, 0.0
    %3898 = vst.msk [vmem:[#allocation4 + $0x158] sm:$0xff] %vm3743, 0.0
    %3899 = vst.msk [vmem:[#allocation4 + $0x160] sm:$0xff] %vm3743, 0.0
    %3900 = vst.msk [vmem:[#allocation4 + $0x168] sm:$0xff] %vm3743, 0.0
    %3901 = vst.msk [vmem:[#allocation4 + $0x170] sm:$0xff] %vm3743, 0.0
    %3902 = vst.msk [vmem:[#allocation4 + $0x178] sm:$0xff] %vm3743, 0.0
    %3903 = vst.msk [vmem:[#allocation4 + $0x180] sm:$0xff] %vm3743, 0.0
    %3904 = vst.msk [vmem:[#allocation4 + $0x188] sm:$0xff] %vm3743, 0.0
    %3905 = vst.msk [vmem:[#allocation4 + $0x190] sm:$0xff] %vm3743, 0.0
    %3906 = vst.msk [vmem:[#allocation4 + $0x198] sm:$0xff] %vm3743, 0.0
    %3907 = vst.msk [vmem:[#allocation4 + $0x1a0] sm:$0xff] %vm3743, 0.0
    %3908 = vst.msk [vmem:[#allocation4 + $0x1a8] sm:$0xff] %vm3743, 0.0
    %3909 = vst.msk [vmem:[#allocation4 + $0x1b0] sm:$0xff] %vm3743, 0.0
    %3910 = vst.msk [vmem:[#allocation4 + $0x1b8] sm:$0xff] %vm3743, 0.0
    %3911 = vst.msk [vmem:[#allocation4 + $0x1c0] sm:$0xff] %vm3743, 0.0
    %3912 = vst.msk [vmem:[#allocation4 + $0x1c8] sm:$0xff] %vm3743, 0.0
    %3913 = vst.msk [vmem:[#allocation4 + $0x1d0] sm:$0xff] %vm3743, 0.0
    %3914 = vst.msk [vmem:[#allocation4 + $0x1d8] sm:$0xff] %vm3743, 0.0
    %s3915 = scalar_lea.vmem [#allocation4], 24
    %3916 = vst.msk [vmem:[%s3915 + $0x8] sm:$0xff] %vm3743, %v3839
    %3917 = vst.msk [vmem:[%s3915 + $0x20] sm:$0xff] %vm3743, %v3840
    %3918 = vst.msk [vmem:[%s3915 + $0x38] sm:$0xff] %vm3743, %v3841
    %3919 = vst.msk [vmem:[%s3915 + $0x50] sm:$0xff] %vm3743, %v3842
    %3920 = vst.msk [vmem:[%s3915 + $0x68] sm:$0xff] %vm3743, %v3843
    %3921 = vst.msk [vmem:[%s3915 + $0x80] sm:$0xff] %vm3743, %v3844
    %3922 = vst.msk [vmem:[%s3915 + $0x98] sm:$0xff] %vm3743, %v3845
    %3923 = vst.msk [vmem:[%s3915 + $0xb0] sm:$0xff] %vm3743, %v3846
    %3924 = vst.msk [vmem:[%s3915 + $0xf8] sm:$0xff] %vm3743, %v3847
    %3925 = vst.msk [vmem:[%s3915 + $0x110] sm:$0xff] %vm3743, %v3848
    %3926 = vst.msk [vmem:[%s3915 + $0x128] sm:$0xff] %vm3743, %v3849
    %3927 = vst.msk [vmem:[%s3915 + $0x140] sm:$0xff] %vm3743, %v3850
    %3928 = vst.msk [vmem:[%s3915 + $0x158] sm:$0xff] %vm3743, %v3851
    %3929 = vst.msk [vmem:[%s3915 + $0x170] sm:$0xff] %vm3743, %v3852
    %3930 = vst.msk [vmem:[%s3915 + $0x188] sm:$0xff] %vm3743, %v3853
    %3931 = vst.msk [vmem:[%s3915 + $0x1a0] sm:$0xff] %vm3743, %v3854
    %v3932 = vld [vmem:[#allocation4 + $0x7] sm:$0xff]
    %v3933 = vld [vmem:[#allocation4 + $0x1f] sm:$0xff]
    %v3934 = vld [vmem:[#allocation4 + $0x37] sm:$0xff]
    %v3935 = vld [vmem:[#allocation4 + $0x4f] sm:$0xff]
    %v3936 = vld [vmem:[#allocation4 + $0x67] sm:$0xff]
    %v3937 = vld [vmem:[#allocation4 + $0x7f] sm:$0xff]
    %v3938 = vld [vmem:[#allocation4 + $0x97] sm:$0xff]
    %v3939 = vld [vmem:[#allocation4 + $0xaf] sm:$0xff]
    %v3940 = vld [vmem:[#allocation4 + $0xf7] sm:$0xff]
    %v3941 = vld [vmem:[#allocation4 + $0x10f] sm:$0xff]
    %v3942 = vld [vmem:[#allocation4 + $0x127] sm:$0xff]
    %v3943 = vld [vmem:[#allocation4 + $0x13f] sm:$0xff]
    %v3944 = vld [vmem:[#allocation4 + $0x157] sm:$0xff]
    %v3945 = vld [vmem:[#allocation4 + $0x16f] sm:$0xff]
    %v3946 = vld [vmem:[#allocation4 + $0x187] sm:$0xff]
    %v3947 = vld [vmem:[#allocation4 + $0x19f] sm:$0xff]
    %v3948 = vld [vmem:[#allocation4 + $0x8] sm:$0xff]
    %v3949 = vld [vmem:[#allocation4 + $0x20] sm:$0xff]
    %v3950 = vld [vmem:[#allocation4 + $0x38] sm:$0xff]
    %v3951 = vld [vmem:[#allocation4 + $0x50] sm:$0xff]
    %v3952 = vld [vmem:[#allocation4 + $0x68] sm:$0xff]
    %v3953 = vld [vmem:[#allocation4 + $0x80] sm:$0xff]
    %v3954 = vld [vmem:[#allocation4 + $0x98] sm:$0xff]
    %v3955 = vld [vmem:[#allocation4 + $0xb0] sm:$0xff]
    %v3956 = vld [vmem:[#allocation4 + $0xf8] sm:$0xff]
    %v3957 = vld [vmem:[#allocation4 + $0x110] sm:$0xff]
    %v3958 = vld [vmem:[#allocation4 + $0x128] sm:$0xff]
    %v3959 = vld [vmem:[#allocation4 + $0x140] sm:$0xff]
    %v3960 = vld [vmem:[#allocation4 + $0x158] sm:$0xff]
    %v3961 = vld [vmem:[#allocation4 + $0x170] sm:$0xff]
    %v3962 = vld [vmem:[#allocation4 + $0x188] sm:$0xff]
    %v3963 = vld [vmem:[#allocation4 + $0x1a0] sm:$0xff]
    %v3964 = vld [vmem:[#allocation4 + $0x9] sm:$0xff]
    %v3965 = vld [vmem:[#allocation4 + $0x21] sm:$0xff]
    %v3966 = vld [vmem:[#allocation4 + $0x39] sm:$0xff]
    %v3967 = vld [vmem:[#allocation4 + $0x51] sm:$0xff]
    %v3968 = vld [vmem:[#allocation4 + $0x69] sm:$0xff]
    %v3969 = vld [vmem:[#allocation4 + $0x81] sm:$0xff]
    %v3970 = vld [vmem:[#allocation4 + $0x99] sm:$0xff]
    %v3971 = vld [vmem:[#allocation4 + $0xb1] sm:$0xff]
    %v3972 = vld [vmem:[#allocation4 + $0xf9] sm:$0xff]
    %v3973 = vld [vmem:[#allocation4 + $0x111] sm:$0xff]
    %v3974 = vld [vmem:[#allocation4 + $0x129] sm:$0xff]
    %v3975 = vld [vmem:[#allocation4 + $0x141] sm:$0xff]
    %v3976 = vld [vmem:[#allocation4 + $0x159] sm:$0xff]
    %v3977 = vld [vmem:[#allocation4 + $0x171] sm:$0xff]
    %v3978 = vld [vmem:[#allocation4 + $0x189] sm:$0xff]
    %v3979 = vld [vmem:[#allocation4 + $0x1a1] sm:$0xff]
    %v3980 = vld [vmem:[%s3915 + $0x7] sm:$0xff]
    %v3981 = vld [vmem:[%s3915 + $0x1f] sm:$0xff]
    %v3982 = vld [vmem:[%s3915 + $0x37] sm:$0xff]
    %v3983 = vld [vmem:[%s3915 + $0x4f] sm:$0xff]
    %v3984 = vld [vmem:[%s3915 + $0x67] sm:$0xff]
    %v3985 = vld [vmem:[%s3915 + $0x7f] sm:$0xff]
    %v3986 = vld [vmem:[%s3915 + $0x97] sm:$0xff]
    %v3987 = vld [vmem:[%s3915 + $0xaf] sm:$0xff]
    %v3988 = vld [vmem:[%s3915 + $0xf7] sm:$0xff]
    %v3989 = vld [vmem:[%s3915 + $0x10f] sm:$0xff]
    %v3990 = vld [vmem:[%s3915 + $0x127] sm:$0xff]
    %v3991 = vld [vmem:[%s3915 + $0x13f] sm:$0xff]
    %v3992 = vld [vmem:[%s3915 + $0x157] sm:$0xff]
    %v3993 = vld [vmem:[%s3915 + $0x16f] sm:$0xff]
    %v3994 = vld [vmem:[%s3915 + $0x187] sm:$0xff]
    %v3995 = vld [vmem:[%s3915 + $0x19f] sm:$0xff]
    %v3996 = vld [vmem:[%s3915 + $0x8] sm:$0xff]
    %v3997 = vld [vmem:[%s3915 + $0x20] sm:$0xff]
    %v3998 = vld [vmem:[%s3915 + $0x38] sm:$0xff]
    %v3999 = vld [vmem:[%s3915 + $0x50] sm:$0xff]
    %v4000 = vld [vmem:[%s3915 + $0x68] sm:$0xff]
    %v4001 = vld [vmem:[%s3915 + $0x80] sm:$0xff]
    %v4002 = vld [vmem:[%s3915 + $0x98] sm:$0xff]
    %v4003 = vld [vmem:[%s3915 + $0xb0] sm:$0xff]
    %v4004 = vld [vmem:[%s3915 + $0xf8] sm:$0xff]
    %v4005 = vld [vmem:[%s3915 + $0x110] sm:$0xff]
    %v4006 = vld [vmem:[%s3915 + $0x128] sm:$0xff]
    %v4007 = vld [vmem:[%s3915 + $0x140] sm:$0xff]
    %v4008 = vld [vmem:[%s3915 + $0x158] sm:$0xff]
    %v4009 = vld [vmem:[%s3915 + $0x170] sm:$0xff]
    %v4010 = vld [vmem:[%s3915 + $0x188] sm:$0xff]
    %v4011 = vld [vmem:[%s3915 + $0x1a0] sm:$0xff]
    %v4012 = vld [vmem:[%s3915 + $0x9] sm:$0xff]
    %v4013 = vld [vmem:[%s3915 + $0x21] sm:$0xff]
    %v4014 = vld [vmem:[%s3915 + $0x39] sm:$0xff]
    %v4015 = vld [vmem:[%s3915 + $0x51] sm:$0xff]
    %v4016 = vld [vmem:[%s3915 + $0x69] sm:$0xff]
    %v4017 = vld [vmem:[%s3915 + $0x81] sm:$0xff]
    %v4018 = vld [vmem:[%s3915 + $0x99] sm:$0xff]
    %v4019 = vld [vmem:[%s3915 + $0xb1] sm:$0xff]
    %v4020 = vld [vmem:[%s3915 + $0xf9] sm:$0xff]
    %v4021 = vld [vmem:[%s3915 + $0x111] sm:$0xff]
    %v4022 = vld [vmem:[%s3915 + $0x129] sm:$0xff]
    %v4023 = vld [vmem:[%s3915 + $0x141] sm:$0xff]
    %v4024 = vld [vmem:[%s3915 + $0x159] sm:$0xff]
    %v4025 = vld [vmem:[%s3915 + $0x171] sm:$0xff]
    %v4026 = vld [vmem:[%s3915 + $0x189] sm:$0xff]
    %v4027 = vld [vmem:[%s3915 + $0x1a1] sm:$0xff]
    %s4028 = scalar_lea.vmem [#allocation4], 48
    %v4029 = vld [vmem:[%s4028 + $0x7] sm:$0xff]
    %v4030 = vld [vmem:[%s4028 + $0x1f] sm:$0xff]
    %v4031 = vld [vmem:[%s4028 + $0x37] sm:$0xff]
    %v4032 = vld [vmem:[%s4028 + $0x4f] sm:$0xff]
    %v4033 = vld [vmem:[%s4028 + $0x67] sm:$0xff]
    %v4034 = vld [vmem:[%s4028 + $0x7f] sm:$0xff]
    %v4035 = vld [vmem:[%s4028 + $0x97] sm:$0xff]
    %v4036 = vld [vmem:[%s4028 + $0xaf] sm:$0xff]
    %v4037 = vld [vmem:[%s4028 + $0xf7] sm:$0xff]
    %v4038 = vld [vmem:[%s4028 + $0x10f] sm:$0xff]
    %v4039 = vld [vmem:[%s4028 + $0x127] sm:$0xff]
    %v4040 = vld [vmem:[%s4028 + $0x13f] sm:$0xff]
    %v4041 = vld [vmem:[%s4028 + $0x157] sm:$0xff]
    %v4042 = vld [vmem:[%s4028 + $0x16f] sm:$0xff]
    %v4043 = vld [vmem:[%s4028 + $0x187] sm:$0xff]
    %v4044 = vld [vmem:[%s4028 + $0x19f] sm:$0xff]
    %v4045 = vld [vmem:[%s4028 + $0x8] sm:$0xff]
    %v4046 = vld [vmem:[%s4028 + $0x20] sm:$0xff]
    %v4047 = vld [vmem:[%s4028 + $0x38] sm:$0xff]
    %v4048 = vld [vmem:[%s4028 + $0x50] sm:$0xff]
    %v4049 = vld [vmem:[%s4028 + $0x68] sm:$0xff]
    %v4050 = vld [vmem:[%s4028 + $0x80] sm:$0xff]
    %v4051 = vld [vmem:[%s4028 + $0x98] sm:$0xff]
    %v4052 = vld [vmem:[%s4028 + $0xb0] sm:$0xff]
    %v4053 = vld [vmem:[%s4028 + $0xf8] sm:$0xff]
    %v4054 = vld [vmem:[%s4028 + $0x110] sm:$0xff]
    %v4055 = vld [vmem:[%s4028 + $0x128] sm:$0xff]
    %v4056 = vld [vmem:[%s4028 + $0x140] sm:$0xff]
    %v4057 = vld [vmem:[%s4028 + $0x158] sm:$0xff]
    %v4058 = vld [vmem:[%s4028 + $0x170] sm:$0xff]
    %v4059 = vld [vmem:[%s4028 + $0x188] sm:$0xff]
    %v4060 = vld [vmem:[%s4028 + $0x1a0] sm:$0xff]
    %v4061 = vld [vmem:[%s4028 + $0x9] sm:$0xff]
    %v4062 = vld [vmem:[%s4028 + $0x21] sm:$0xff]
    %v4063 = vld [vmem:[%s4028 + $0x39] sm:$0xff]
    %v4064 = vld [vmem:[%s4028 + $0x51] sm:$0xff]
    %v4065 = vld [vmem:[%s4028 + $0x69] sm:$0xff]
    %v4066 = vld [vmem:[%s4028 + $0x81] sm:$0xff]
    %v4067 = vld [vmem:[%s4028 + $0x99] sm:$0xff]
    %v4068 = vld [vmem:[%s4028 + $0xb1] sm:$0xff]
    %v4069 = vld [vmem:[%s4028 + $0xf9] sm:$0xff]
    %v4070 = vld [vmem:[%s4028 + $0x111] sm:$0xff]
    %v4071 = vld [vmem:[%s4028 + $0x129] sm:$0xff]
    %v4072 = vld [vmem:[%s4028 + $0x141] sm:$0xff]
    %v4073 = vld [vmem:[%s4028 + $0x159] sm:$0xff]
    %v4074 = vld [vmem:[%s4028 + $0x171] sm:$0xff]
    %v4075 = vld [vmem:[%s4028 + $0x189] sm:$0xff]
    %v4076 = vld [vmem:[%s4028 + $0x1a1] sm:$0xff]
    %4093 = vrot.lane.b32.xlu0 %v3948, 8
    %v4094 = vpop.permute.xlu0 %4093
    %4095 = vrot.lane.b32.xlu0 %v3949, 8
    %v4096 = vpop.permute.xlu0 %4095
    %4097 = vrot.lane.b32.xlu0 %v3950, 8
    %v4098 = vpop.permute.xlu0 %4097
    %4099 = vrot.lane.b32.xlu0 %v3951, 8
    %v4100 = vpop.permute.xlu0 %4099
    %4101 = vrot.lane.b32.xlu0 %v3952, 8
    %v4102 = vpop.permute.xlu0 %4101
    %4103 = vrot.lane.b32.xlu0 %v3953, 8
    %v4104 = vpop.permute.xlu0 %4103
    %4105 = vrot.lane.b32.xlu0 %v3954, 8
    %v4106 = vpop.permute.xlu0 %4105
    %4107 = vrot.lane.b32.xlu0 %v3955, 8
    %v4108 = vpop.permute.xlu0 %4107
    %4109 = vrot.lane.b32.xlu0 %v3956, 8
    %v4110 = vpop.permute.xlu0 %4109
    %4111 = vrot.lane.b32.xlu0 %v3957, 8
    %v4112 = vpop.permute.xlu0 %4111
    %4113 = vrot.lane.b32.xlu0 %v3958, 8
    %v4114 = vpop.permute.xlu0 %4113
    %4115 = vrot.lane.b32.xlu0 %v3959, 8
    %v4116 = vpop.permute.xlu0 %4115
    %4117 = vrot.lane.b32.xlu0 %v3960, 8
    %v4118 = vpop.permute.xlu0 %4117
    %4119 = vrot.lane.b32.xlu0 %v3961, 8
    %v4120 = vpop.permute.xlu0 %4119
    %4121 = vrot.lane.b32.xlu0 %v3962, 8
    %v4122 = vpop.permute.xlu0 %4121
    %4123 = vrot.lane.b32.xlu0 %v3963, 8
    %v4124 = vpop.permute.xlu0 %4123
    %4157 = vrot.lane.b32.xlu0 %v3964, 16
    %v4158 = vpop.permute.xlu0 %4157
    %4159 = vrot.lane.b32.xlu0 %v3965, 16
    %v4160 = vpop.permute.xlu0 %4159
    %4161 = vrot.lane.b32.xlu0 %v3966, 16
    %v4162 = vpop.permute.xlu0 %4161
    %4163 = vrot.lane.b32.xlu0 %v3967, 16
    %v4164 = vpop.permute.xlu0 %4163
    %4165 = vrot.lane.b32.xlu0 %v3968, 16
    %v4166 = vpop.permute.xlu0 %4165
    %4167 = vrot.lane.b32.xlu0 %v3969, 16
    %v4168 = vpop.permute.xlu0 %4167
    %4169 = vrot.lane.b32.xlu0 %v3970, 16
    %v4170 = vpop.permute.xlu0 %4169
    %4171 = vrot.lane.b32.xlu0 %v3971, 16
    %v4172 = vpop.permute.xlu0 %4171
    %4173 = vrot.lane.b32.xlu0 %v3972, 16
    %v4174 = vpop.permute.xlu0 %4173
    %4175 = vrot.lane.b32.xlu0 %v3973, 16
    %v4176 = vpop.permute.xlu0 %4175
    %4177 = vrot.lane.b32.xlu0 %v3974, 16
    %v4178 = vpop.permute.xlu0 %4177
    %4179 = vrot.lane.b32.xlu0 %v3975, 16
    %v4180 = vpop.permute.xlu0 %4179
    %4181 = vrot.lane.b32.xlu0 %v3976, 16
    %v4182 = vpop.permute.xlu0 %4181
    %4183 = vrot.lane.b32.xlu0 %v3977, 16
    %v4184 = vpop.permute.xlu0 %4183
    %4185 = vrot.lane.b32.xlu0 %v3978, 16
    %v4186 = vpop.permute.xlu0 %4185
    %4187 = vrot.lane.b32.xlu0 %v3979, 16
    %v4188 = vpop.permute.xlu0 %4187
    %4221 = vrot.lane.b32.xlu0 %v3980, 24
    %v4222 = vpop.permute.xlu0 %4221
    %4223 = vrot.lane.b32.xlu0 %v3981, 24
    %v4224 = vpop.permute.xlu0 %4223
    %4225 = vrot.lane.b32.xlu0 %v3982, 24
    %v4226 = vpop.permute.xlu0 %4225
    %4227 = vrot.lane.b32.xlu0 %v3983, 24
    %v4228 = vpop.permute.xlu0 %4227
    %4229 = vrot.lane.b32.xlu0 %v3984, 24
    %v4230 = vpop.permute.xlu0 %4229
    %4231 = vrot.lane.b32.xlu0 %v3985, 24
    %v4232 = vpop.permute.xlu0 %4231
    %4233 = vrot.lane.b32.xlu0 %v3986, 24
    %v4234 = vpop.permute.xlu0 %4233
    %4235 = vrot.lane.b32.xlu0 %v3987, 24
    %v4236 = vpop.permute.xlu0 %4235
    %4237 = vrot.lane.b32.xlu0 %v3988, 24
    %v4238 = vpop.permute.xlu0 %4237
    %4239 = vrot.lane.b32.xlu0 %v3989, 24
    %v4240 = vpop.permute.xlu0 %4239
    %4241 = vrot.lane.b32.xlu0 %v3990, 24
    %v4242 = vpop.permute.xlu0 %4241
    %4243 = vrot.lane.b32.xlu0 %v3991, 24
    %v4244 = vpop.permute.xlu0 %4243
    %4245 = vrot.lane.b32.xlu0 %v3992, 24
    %v4246 = vpop.permute.xlu0 %4245
    %4247 = vrot.lane.b32.xlu0 %v3993, 24
    %v4248 = vpop.permute.xlu0 %4247
    %4249 = vrot.lane.b32.xlu0 %v3994, 24
    %v4250 = vpop.permute.xlu0 %4249
    %4251 = vrot.lane.b32.xlu0 %v3995, 24
    %v4252 = vpop.permute.xlu0 %4251
    %4285 = vrot.lane.b32.xlu0 %v3996, 32
    %v4286 = vpop.permute.xlu0 %4285
    %4287 = vrot.lane.b32.xlu0 %v3997, 32
    %v4288 = vpop.permute.xlu0 %4287
    %4289 = vrot.lane.b32.xlu0 %v3998, 32
    %v4290 = vpop.permute.xlu0 %4289
    %4291 = vrot.lane.b32.xlu0 %v3999, 32
    %v4292 = vpop.permute.xlu0 %4291
    %4293 = vrot.lane.b32.xlu0 %v4000, 32
    %v4294 = vpop.permute.xlu0 %4293
    %4295 = vrot.lane.b32.xlu0 %v4001, 32
    %v4296 = vpop.permute.xlu0 %4295
    %4297 = vrot.lane.b32.xlu0 %v4002, 32
    %v4298 = vpop.permute.xlu0 %4297
    %4299 = vrot.lane.b32.xlu0 %v4003, 32
    %v4300 = vpop.permute.xlu0 %4299
    %4301 = vrot.lane.b32.xlu0 %v4004, 32
    %v4302 = vpop.permute.xlu0 %4301
    %4303 = vrot.lane.b32.xlu0 %v4005, 32
    %v4304 = vpop.permute.xlu0 %4303
    %4305 = vrot.lane.b32.xlu0 %v4006, 32
    %v4306 = vpop.permute.xlu0 %4305
    %4307 = vrot.lane.b32.xlu0 %v4007, 32
    %v4308 = vpop.permute.xlu0 %4307
    %4309 = vrot.lane.b32.xlu0 %v4008, 32
    %v4310 = vpop.permute.xlu0 %4309
    %4311 = vrot.lane.b32.xlu0 %v4009, 32
    %v4312 = vpop.permute.xlu0 %4311
    %4313 = vrot.lane.b32.xlu0 %v4010, 32
    %v4314 = vpop.permute.xlu0 %4313
    %4315 = vrot.lane.b32.xlu0 %v4011, 32
    %v4316 = vpop.permute.xlu0 %4315
    %4349 = vrot.lane.b32.xlu0 %v4012, 40
    %v4350 = vpop.permute.xlu0 %4349
    %4351 = vrot.lane.b32.xlu0 %v4013, 40
    %v4352 = vpop.permute.xlu0 %4351
    %4353 = vrot.lane.b32.xlu0 %v4014, 40
    %v4354 = vpop.permute.xlu0 %4353
    %4355 = vrot.lane.b32.xlu0 %v4015, 40
    %v4356 = vpop.permute.xlu0 %4355
    %4357 = vrot.lane.b32.xlu0 %v4016, 40
    %v4358 = vpop.permute.xlu0 %4357
    %4359 = vrot.lane.b32.xlu0 %v4017, 40
    %v4360 = vpop.permute.xlu0 %4359
    %4361 = vrot.lane.b32.xlu0 %v4018, 40
    %v4362 = vpop.permute.xlu0 %4361
    %4363 = vrot.lane.b32.xlu0 %v4019, 40
    %v4364 = vpop.permute.xlu0 %4363
    %4365 = vrot.lane.b32.xlu0 %v4020, 40
    %v4366 = vpop.permute.xlu0 %4365
    %4367 = vrot.lane.b32.xlu0 %v4021, 40
    %v4368 = vpop.permute.xlu0 %4367
    %4369 = vrot.lane.b32.xlu0 %v4022, 40
    %v4370 = vpop.permute.xlu0 %4369
    %4371 = vrot.lane.b32.xlu0 %v4023, 40
    %v4372 = vpop.permute.xlu0 %4371
    %4373 = vrot.lane.b32.xlu0 %v4024, 40
    %v4374 = vpop.permute.xlu0 %4373
    %4375 = vrot.lane.b32.xlu0 %v4025, 40
    %v4376 = vpop.permute.xlu0 %4375
    %4377 = vrot.lane.b32.xlu0 %v4026, 40
    %v4378 = vpop.permute.xlu0 %4377
    %4379 = vrot.lane.b32.xlu0 %v4027, 40
    %v4380 = vpop.permute.xlu0 %4379
    %4413 = vrot.lane.b32.xlu0 %v4029, 48
    %v4414 = vpop.permute.xlu0 %4413
    %4415 = vrot.lane.b32.xlu0 %v4030, 48
    %v4416 = vpop.permute.xlu0 %4415
    %4417 = vrot.lane.b32.xlu0 %v4031, 48
    %v4418 = vpop.permute.xlu0 %4417
    %4419 = vrot.lane.b32.xlu0 %v4032, 48
    %v4420 = vpop.permute.xlu0 %4419
    %4421 = vrot.lane.b32.xlu0 %v4033, 48
    %v4422 = vpop.permute.xlu0 %4421
    %4423 = vrot.lane.b32.xlu0 %v4034, 48
    %v4424 = vpop.permute.xlu0 %4423
    %4425 = vrot.lane.b32.xlu0 %v4035, 48
    %v4426 = vpop.permute.xlu0 %4425
    %4427 = vrot.lane.b32.xlu0 %v4036, 48
    %v4428 = vpop.permute.xlu0 %4427
    %4429 = vrot.lane.b32.xlu0 %v4037, 48
    %v4430 = vpop.permute.xlu0 %4429
    %4431 = vrot.lane.b32.xlu0 %v4038, 48
    %v4432 = vpop.permute.xlu0 %4431
    %4433 = vrot.lane.b32.xlu0 %v4039, 48
    %v4434 = vpop.permute.xlu0 %4433
    %4435 = vrot.lane.b32.xlu0 %v4040, 48
    %v4436 = vpop.permute.xlu0 %4435
    %4437 = vrot.lane.b32.xlu0 %v4041, 48
    %v4438 = vpop.permute.xlu0 %4437
    %4439 = vrot.lane.b32.xlu0 %v4042, 48
    %v4440 = vpop.permute.xlu0 %4439
    %4441 = vrot.lane.b32.xlu0 %v4043, 48
    %v4442 = vpop.permute.xlu0 %4441
    %4443 = vrot.lane.b32.xlu0 %v4044, 48
    %v4444 = vpop.permute.xlu0 %4443
    %4477 = vrot.lane.b32.xlu0 %v4045, 56
    %v4478 = vpop.permute.xlu0 %4477
    %4479 = vrot.lane.b32.xlu0 %v4046, 56
    %v4480 = vpop.permute.xlu0 %4479
    %4481 = vrot.lane.b32.xlu0 %v4047, 56
    %v4482 = vpop.permute.xlu0 %4481
    %4483 = vrot.lane.b32.xlu0 %v4048, 56
    %v4484 = vpop.permute.xlu0 %4483
    %4485 = vrot.lane.b32.xlu0 %v4049, 56
    %v4486 = vpop.permute.xlu0 %4485
    %4487 = vrot.lane.b32.xlu0 %v4050, 56
    %v4488 = vpop.permute.xlu0 %4487
    %4489 = vrot.lane.b32.xlu0 %v4051, 56
    %v4490 = vpop.permute.xlu0 %4489
    %4491 = vrot.lane.b32.xlu0 %v4052, 56
    %v4492 = vpop.permute.xlu0 %4491
    %4493 = vrot.lane.b32.xlu0 %v4053, 56
    %v4494 = vpop.permute.xlu0 %4493
    %4495 = vrot.lane.b32.xlu0 %v4054, 56
    %v4496 = vpop.permute.xlu0 %4495
    %4497 = vrot.lane.b32.xlu0 %v4055, 56
    %v4498 = vpop.permute.xlu0 %4497
    %4499 = vrot.lane.b32.xlu0 %v4056, 56
    %v4500 = vpop.permute.xlu0 %4499
    %4501 = vrot.lane.b32.xlu0 %v4057, 56
    %v4502 = vpop.permute.xlu0 %4501
    %4503 = vrot.lane.b32.xlu0 %v4058, 56
    %v4504 = vpop.permute.xlu0 %4503
    %4505 = vrot.lane.b32.xlu0 %v4059, 56
    %v4506 = vpop.permute.xlu0 %4505
    %4507 = vrot.lane.b32.xlu0 %v4060, 56
    %v4508 = vpop.permute.xlu0 %4507
    %4541 = vrot.lane.b32.xlu0 %v4061, 64
    %v4542 = vpop.permute.xlu0 %4541
    %4543 = vrot.lane.b32.xlu0 %v4062, 64
    %v4544 = vpop.permute.xlu0 %4543
    %4545 = vrot.lane.b32.xlu0 %v4063, 64
    %v4546 = vpop.permute.xlu0 %4545
    %4547 = vrot.lane.b32.xlu0 %v4064, 64
    %v4548 = vpop.permute.xlu0 %4547
    %4549 = vrot.lane.b32.xlu0 %v4065, 64
    %v4550 = vpop.permute.xlu0 %4549
    %4551 = vrot.lane.b32.xlu0 %v4066, 64
    %v4552 = vpop.permute.xlu0 %4551
    %4553 = vrot.lane.b32.xlu0 %v4067, 64
    %v4554 = vpop.permute.xlu0 %4553
    %4555 = vrot.lane.b32.xlu0 %v4068, 64
    %v4556 = vpop.permute.xlu0 %4555
    %4557 = vrot.lane.b32.xlu0 %v4069, 64
    %v4558 = vpop.permute.xlu0 %4557
    %4559 = vrot.lane.b32.xlu0 %v4070, 64
    %v4560 = vpop.permute.xlu0 %4559
    %4561 = vrot.lane.b32.xlu0 %v4071, 64
    %v4562 = vpop.permute.xlu0 %4561
    %4563 = vrot.lane.b32.xlu0 %v4072, 64
    %v4564 = vpop.permute.xlu0 %4563
    %4565 = vrot.lane.b32.xlu0 %v4073, 64
    %v4566 = vpop.permute.xlu0 %4565
    %4567 = vrot.lane.b32.xlu0 %v4074, 64
    %v4568 = vpop.permute.xlu0 %4567
    %4569 = vrot.lane.b32.xlu0 %v4075, 64
    %v4570 = vpop.permute.xlu0 %4569
    %4571 = vrot.lane.b32.xlu0 %v4076, 64
    %v4572 = vpop.permute.xlu0 %4571
    %v4589 = vsel %vm3743, %v3932, %v4094
    %v4590 = vsel %vm3743, %v3933, %v4096
    %v4591 = vsel %vm3743, %v3934, %v4098
    %v4592 = vsel %vm3743, %v3935, %v4100
    %v4593 = vsel %vm3743, %v3936, %v4102
    %v4594 = vsel %vm3743, %v3937, %v4104
    %v4595 = vsel %vm3743, %v3938, %v4106
    %v4596 = vsel %vm3743, %v3939, %v4108
    %v4597 = vsel %vm3743, %v3940, %v4110
    %v4598 = vsel %vm3743, %v3941, %v4112
    %v4599 = vsel %vm3743, %v3942, %v4114
    %v4600 = vsel %vm3743, %v3943, %v4116
    %v4601 = vsel %vm3743, %v3944, %v4118
    %v4602 = vsel %vm3743, %v3945, %v4120
    %v4603 = vsel %vm3743, %v3946, %v4122
    %v4604 = vsel %vm3743, %v3947, %v4124
    %vm4605 = vcmask 130048
    %v4606 = vsel %vm4605, %v4589, %v4158
    %v4607 = vsel %vm4605, %v4590, %v4160
    %v4608 = vsel %vm4605, %v4591, %v4162
    %v4609 = vsel %vm4605, %v4592, %v4164
    %v4610 = vsel %vm4605, %v4593, %v4166
    %v4611 = vsel %vm4605, %v4594, %v4168
    %v4612 = vsel %vm4605, %v4595, %v4170
    %v4613 = vsel %vm4605, %v4596, %v4172
    %v4614 = vsel %vm4605, %v4597, %v4174
    %v4615 = vsel %vm4605, %v4598, %v4176
    %v4616 = vsel %vm4605, %v4599, %v4178
    %v4617 = vsel %vm4605, %v4600, %v4180
    %v4618 = vsel %vm4605, %v4601, %v4182
    %v4619 = vsel %vm4605, %v4602, %v4184
    %v4620 = vsel %vm4605, %v4603, %v4186
    %v4621 = vsel %vm4605, %v4604, %v4188
    %v4622 = vsel %vm3168, %v4606, %v4222
    %v4623 = vsel %vm3168, %v4607, %v4224
    %v4624 = vsel %vm3168, %v4608, %v4226
    %v4625 = vsel %vm3168, %v4609, %v4228
    %v4626 = vsel %vm3168, %v4610, %v4230
    %v4627 = vsel %vm3168, %v4611, %v4232
    %v4628 = vsel %vm3168, %v4612, %v4234
    %v4629 = vsel %vm3168, %v4613, %v4236
    %v4630 = vsel %vm3168, %v4614, %v4238
    %v4631 = vsel %vm3168, %v4615, %v4240
    %v4632 = vsel %vm3168, %v4616, %v4242
    %v4633 = vsel %vm3168, %v4617, %v4244
    %v4634 = vsel %vm3168, %v4618, %v4246
    %v4635 = vsel %vm3168, %v4619, %v4248
    %v4636 = vsel %vm3168, %v4620, %v4250
    %v4637 = vsel %vm3168, %v4621, %v4252
    %vm4638 = vcmask 261120
    %v4639 = vsel %vm4638, %v4622, %v4286
    %v4640 = vsel %vm4638, %v4623, %v4288
    %v4641 = vsel %vm4638, %v4624, %v4290
    %v4642 = vsel %vm4638, %v4625, %v4292
    %v4643 = vsel %vm4638, %v4626, %v4294
    %v4644 = vsel %vm4638, %v4627, %v4296
    %v4645 = vsel %vm4638, %v4628, %v4298
    %v4646 = vsel %vm4638, %v4629, %v4300
    %v4647 = vsel %vm4638, %v4630, %v4302
    %v4648 = vsel %vm4638, %v4631, %v4304
    %v4649 = vsel %vm4638, %v4632, %v4306
    %v4650 = vsel %vm4638, %v4633, %v4308
    %v4651 = vsel %vm4638, %v4634, %v4310
    %v4652 = vsel %vm4638, %v4635, %v4312
    %v4653 = vsel %vm4638, %v4636, %v4314
    %v4654 = vsel %vm4638, %v4637, %v4316
    %vm4655 = vcmask 326656
    %v4656 = vsel %vm4655, %v4639, %v4350
    %v4657 = vsel %vm4655, %v4640, %v4352
    %v4658 = vsel %vm4655, %v4641, %v4354
    %v4659 = vsel %vm4655, %v4642, %v4356
    %v4660 = vsel %vm4655, %v4643, %v4358
    %v4661 = vsel %vm4655, %v4644, %v4360
    %v4662 = vsel %vm4655, %v4645, %v4362
    %v4663 = vsel %vm4655, %v4646, %v4364
    %v4664 = vsel %vm4655, %v4647, %v4366
    %v4665 = vsel %vm4655, %v4648, %v4368
    %v4666 = vsel %vm4655, %v4649, %v4370
    %v4667 = vsel %vm4655, %v4650, %v4372
    %v4668 = vsel %vm4655, %v4651, %v4374
    %v4669 = vsel %vm4655, %v4652, %v4376
    %v4670 = vsel %vm4655, %v4653, %v4378
    %v4671 = vsel %vm4655, %v4654, %v4380
    %vm4672 = vcmask 392192
    %v4673 = vsel %vm4672, %v4656, %v4414
    %v4674 = vsel %vm4672, %v4657, %v4416
    %v4675 = vsel %vm4672, %v4658, %v4418
    %v4676 = vsel %vm4672, %v4659, %v4420
    %v4677 = vsel %vm4672, %v4660, %v4422
    %v4678 = vsel %vm4672, %v4661, %v4424
    %v4679 = vsel %vm4672, %v4662, %v4426
    %v4680 = vsel %vm4672, %v4663, %v4428
    %v4681 = vsel %vm4672, %v4664, %v4430
    %v4682 = vsel %vm4672, %v4665, %v4432
    %v4683 = vsel %vm4672, %v4666, %v4434
    %v4684 = vsel %vm4672, %v4667, %v4436
    %v4685 = vsel %vm4672, %v4668, %v4438
    %v4686 = vsel %vm4672, %v4669, %v4440
    %v4687 = vsel %vm4672, %v4670, %v4442
    %v4688 = vsel %vm4672, %v4671, %v4444
    %vm4689 = vcmask 457728
    %v4690 = vsel %vm4689, %v4673, %v4478
    %v4691 = vsel %vm4689, %v4674, %v4480
    %v4692 = vsel %vm4689, %v4675, %v4482
    %v4693 = vsel %vm4689, %v4676, %v4484
    %v4694 = vsel %vm4689, %v4677, %v4486
    %v4695 = vsel %vm4689, %v4678, %v4488
    %v4696 = vsel %vm4689, %v4679, %v4490
    %v4697 = vsel %vm4689, %v4680, %v4492
    %v4698 = vsel %vm4689, %v4681, %v4494
    %v4699 = vsel %vm4689, %v4682, %v4496
    %v4700 = vsel %vm4689, %v4683, %v4498
    %v4701 = vsel %vm4689, %v4684, %v4500
    %v4702 = vsel %vm4689, %v4685, %v4502
    %v4703 = vsel %vm4689, %v4686, %v4504
    %v4704 = vsel %vm4689, %v4687, %v4506
    %v4705 = vsel %vm4689, %v4688, %v4508
    %vm4706 = vcmask 523264
    %v4707 = vsel %vm4706, %v4690, %v4542
    %v4708 = vsel %vm4706, %v4691, %v4544
    %v4709 = vsel %vm4706, %v4692, %v4546
    %v4710 = vsel %vm4706, %v4693, %v4548
    %v4711 = vsel %vm4706, %v4694, %v4550
    %v4712 = vsel %vm4706, %v4695, %v4552
    %v4713 = vsel %vm4706, %v4696, %v4554
    %v4714 = vsel %vm4706, %v4697, %v4556
    %v4715 = vsel %vm4706, %v4698, %v4558
    %v4716 = vsel %vm4706, %v4699, %v4560
    %v4717 = vsel %vm4706, %v4700, %v4562
    %v4718 = vsel %vm4706, %v4701, %v4564
    %v4719 = vsel %vm4706, %v4702, %v4566
    %v4720 = vsel %vm4706, %v4703, %v4568
    %v4721 = vsel %vm4706, %v4704, %v4570
    %v4722 = vsel %vm4706, %v4705, %v4572
    %v4723 = vld [vmem:[%s4] sm:$0xff]
    %v4724 = vld [vmem:[%s4 + $0x8] sm:$0xff]
    %v4725 = vld [vmem:[%s4 + $0x10] sm:$0xff]
    %v4726 = vld [vmem:[%s4 + $0x18] sm:$0xff]
    %v4727 = vld [vmem:[%s4 + $0x20] sm:$0xff]
    %v4728 = vld [vmem:[%s4 + $0x28] sm:$0xff]
    %v4729 = vld [vmem:[%s4 + $0x30] sm:$0xff]
    %v4730 = vld [vmem:[%s4 + $0x38] sm:$0xff]
    %v4731 = vld [vmem:[%s4 + $0x40] sm:$0xff]
    %v4732 = vld [vmem:[%s5] sm:$0x1]
    %v4734 = vperm.slane %v4732, 0
    %vm4736 = vcmask 588800
    %v4738 = vsel %vm4736, %v4707, 0
    %v4741 = vsel %vm4736, %v4708, 0
    %v4744 = vsel %vm4736, %v4709, 0
    %v4747 = vsel %vm4736, %v4710, 0
    %v4750 = vsel %vm4736, %v4711, 0
    %v4753 = vsel %vm4736, %v4712, 0
    %v4756 = vsel %vm4736, %v4713, 0
    %v4759 = vsel %vm4736, %v4714, 0
    %v4762 = vsel %vm4736, %v4715, 0
    %v4765 = vsel %vm4736, %v4716, 0
    %v4768 = vsel %vm4736, %v4717, 0
    %v4771 = vsel %vm4736, %v4718, 0
    %v4774 = vsel %vm4736, %v4719, 0
    %v4777 = vsel %vm4736, %v4720, 0
    %v4780 = vsel %vm4736, %v4721, 0
    %v4783 = vsel %vm4736, %v4722, 0
    %4785 = vmatpush.msra.mxu0 0.0
    %4786 = vmatpush.msra.mxu0 0.0
    %4787 = vmatpush.msra.mxu0 0.0
    %4788 = vmatpush.msra.mxu0 0.0
    %4789 = vmatpush.msra.mxu0 0.0
    %4790 = vmatpush.msra.mxu0 0.0
    %4791 = vmatpush.msra.mxu0 0.0
    %4792 = vmatpush.msra.mxu0 %v4731
    %4793 = vmatpush.msra.mxu0 %v4730
    %4794 = vmatpush.msra.mxu0 %v4729
    %4795 = vmatpush.msra.mxu0 %v4728
    %4796 = vmatpush.msra.mxu0 %v4727
    %4797 = vmatpush.msra.mxu0 %v4726
    %4798 = vmatpush.msra.mxu0 %v4725
    %4799 = vmatpush.msra.mxu0 %v4724
    %4800 = vmatpush.msra.mxu0 %v4723
    %4801 = vmatmul.f32.gmra.mxu0 %v4738
    %v4802 = vpop.f32.mrf.mxu0
    %v4803 = vadd.f32 %v4734, %v4802
    %4804 = vmatmul.f32.gmra.mxu0 %v4741
    %v4805 = vpop.f32.mrf.mxu0
    %v4806 = vadd.f32 %v4734, %v4805
    %4807 = vmatmul.f32.gmra.mxu0 %v4744
    %v4808 = vpop.f32.mrf.mxu0
    %v4809 = vadd.f32 %v4734, %v4808
    %4810 = vmatmul.f32.gmra.mxu0 %v4747
    %v4811 = vpop.f32.mrf.mxu0
    %v4812 = vadd.f32 %v4734, %v4811
    %4813 = vmatmul.f32.gmra.mxu0 %v4750
    %v4814 = vpop.f32.mrf.mxu0
    %v4815 = vadd.f32 %v4734, %v4814
    %4816 = vmatmul.f32.gmra.mxu0 %v4753
    %v4817 = vpop.f32.mrf.mxu0
    %v4818 = vadd.f32 %v4734, %v4817
    %4819 = vmatmul.f32.gmra.mxu0 %v4756
    %v4820 = vpop.f32.mrf.mxu0
    %v4821 = vadd.f32 %v4734, %v4820
    %4822 = vmatmul.f32.gmra.mxu0 %v4759
    %v4823 = vpop.f32.mrf.mxu0
    %v4824 = vadd.f32 %v4734, %v4823
    %4825 = vmatmul.f32.gmra.mxu0 %v4762
    %v4826 = vpop.f32.mrf.mxu0
    %v4827 = vadd.f32 %v4734, %v4826
    %4828 = vmatmul.f32.gmra.mxu0 %v4765
    %v4829 = vpop.f32.mrf.mxu0
    %v4830 = vadd.f32 %v4734, %v4829
    %4831 = vmatmul.f32.gmra.mxu0 %v4768
    %v4832 = vpop.f32.mrf.mxu0
    %v4833 = vadd.f32 %v4734, %v4832
    %4834 = vmatmul.f32.gmra.mxu0 %v4771
    %v4835 = vpop.f32.mrf.mxu0
    %v4836 = vadd.f32 %v4734, %v4835
    %4837 = vmatmul.f32.gmra.mxu0 %v4774
    %v4838 = vpop.f32.mrf.mxu0
    %v4839 = vadd.f32 %v4734, %v4838
    %4840 = vmatmul.f32.gmra.mxu0 %v4777
    %v4841 = vpop.f32.mrf.mxu0
    %v4842 = vadd.f32 %v4734, %v4841
    %4843 = vmatmul.f32.gmra.mxu0 %v4780
    %v4844 = vpop.f32.mrf.mxu0
    %v4845 = vadd.f32 %v4734, %v4844
    %4846 = vmatmul.f32.gmra.mxu0 %v4783
    %v4847 = vpop.f32.mrf.mxu0
    %v4848 = vadd.f32 %v4734, %v4847
    %4849 = vdwg.mxu0
    %v4850 = vmax.f32 %v4803, 0.0
    %v4851 = vmax.f32 %v4806, 0.0
    %v4852 = vmax.f32 %v4809, 0.0
    %v4853 = vmax.f32 %v4812, 0.0
    %v4854 = vmax.f32 %v4815, 0.0
    %v4855 = vmax.f32 %v4818, 0.0
    %v4856 = vmax.f32 %v4821, 0.0
    %v4857 = vmax.f32 %v4824, 0.0
    %v4858 = vmax.f32 %v4827, 0.0
    %v4859 = vmax.f32 %v4830, 0.0
    %v4860 = vmax.f32 %v4833, 0.0
    %v4861 = vmax.f32 %v4836, 0.0
    %v4862 = vmax.f32 %v4839, 0.0
    %v4863 = vmax.f32 %v4842, 0.0
    %v4864 = vmax.f32 %v4845, 0.0
    %v4865 = vmax.f32 %v4848, 0.0
    %v4866 = vmax.f32 %v4850, %v4851
    %v4867 = vmax.f32 %v4852, %v4853
    %v4868 = vmax.f32 %v4854, %v4855
    %v4869 = vmax.f32 %v4856, %v4857
    %v4870 = vmax.f32 %v4858, %v4859
    %v4871 = vmax.f32 %v4860, %v4861
    %v4872 = vmax.f32 %v4862, %v4863
    %v4873 = vmax.f32 %v4864, %v4865
    %4874 = vst.msk [vmem:[#allocation5] sm:$0xff] %vm4605, %v4866
    %4875 = vst.msk [vmem:[#allocation5 + $0x8] sm:$0xff] %vm4605, %v4867
    %4876 = vst.msk [vmem:[#allocation5 + $0x10] sm:$0xff] %vm4605, %v4868
    %4877 = vst.msk [vmem:[#allocation5 + $0x18] sm:$0xff] %vm4605, %v4869
    %4878 = vst.msk [vmem:[#allocation5 + $0x20] sm:$0xff] %vm4605, %v4870
    %4879 = vst.msk [vmem:[#allocation5 + $0x28] sm:$0xff] %vm4605, %v4871
    %4880 = vst.msk [vmem:[#allocation5 + $0x30] sm:$0xff] %vm4605, %v4872
    %4881 = vst.msk [vmem:[#allocation5 + $0x38] sm:$0xff] %vm4605, %v4873
    %v4882 = vld [vmem:[#allocation5] ss:$2 sm:$0xff]
    %s4883 = scalar_lea.vmem [#allocation5], 16
    %v4884 = vld [vmem:[%s4883] ss:$2 sm:$0xff]
    %s4885 = scalar_lea.vmem [#allocation5], 32
    %v4886 = vld [vmem:[%s4885] ss:$2 sm:$0xff]
    %s4887 = scalar_lea.vmem [#allocation5], 48
    %v4888 = vld [vmem:[%s4887] ss:$2 sm:$0xff]
    %s4889 = scalar_lea.vmem [#allocation5], 1
    %v4890 = vld [vmem:[%s4889] ss:$2 sm:$0xff]
    %s4891 = scalar_lea.vmem [#allocation5], 17
    %v4892 = vld [vmem:[%s4891] ss:$2 sm:$0xff]
    %s4893 = scalar_lea.vmem [#allocation5], 33
    %v4894 = vld [vmem:[%s4893] ss:$2 sm:$0xff]
    %s4895 = scalar_lea.vmem [#allocation5], 49
    %v4896 = vld [vmem:[%s4895] ss:$2 sm:$0xff]
    %v4897 = vmax.f32 %v4882, %v4890
    %v4898 = vmax.f32 %v4884, %v4892
    %v4899 = vmax.f32 %v4886, %v4894
    %v4900 = vmax.f32 %v4888, %v4896
    %4901 = vst.msk [vmem:[#allocation6] sm:$0xff] %vm4605, %v4897
    %4902 = vst.msk [vmem:[#allocation6 + $0x8] sm:$0xff] %vm4605, %v4898
    %4903 = vst.msk [vmem:[#allocation6 + $0x10] sm:$0xff] %vm4605, %v4899
    %4904 = vst.msk [vmem:[#allocation6 + $0x18] sm:$0xff] %vm4605, %v4900
    %v4905 = vld [vmem:[#allocation6] ss:$16 sm:$0x3]
    %s4906 = scalar_lea.vmem [#allocation6], 1
    %v4907 = vld [vmem:[%s4906] ss:$16 sm:$0x3]
    %s4908 = scalar_lea.vmem [#allocation6], 2
    %v4909 = vld [vmem:[%s4908] ss:$16 sm:$0x3]
    %s4910 = scalar_lea.vmem [#allocation6], 3
    %v4911 = vld [vmem:[%s4910] ss:$16 sm:$0x3]
    %s4912 = scalar_lea.vmem [#allocation6], 4
    %v4913 = vld [vmem:[%s4912] ss:$16 sm:$0x3]
    %s4914 = scalar_lea.vmem [#allocation6], 5
    %v4915 = vld [vmem:[%s4914] ss:$16 sm:$0x3]
    %s4916 = scalar_lea.vmem [#allocation6], 6
    %v4917 = vld [vmem:[%s4916] ss:$16 sm:$0x3]
    %s4918 = scalar_lea.vmem [#allocation6], 7
    %v4919 = vld [vmem:[%s4918] ss:$16 sm:$0x3]
    %s4920 = scalar_lea.vmem [#allocation6], 8
    %v4921 = vld [vmem:[%s4920] ss:$16 sm:$0x3]
    %s4922 = scalar_lea.vmem [#allocation6], 9
    %v4923 = vld [vmem:[%s4922] ss:$16 sm:$0x3]
    %s4924 = scalar_lea.vmem [#allocation6], 10
    %v4925 = vld [vmem:[%s4924] ss:$16 sm:$0x3]
    %s4926 = scalar_lea.vmem [#allocation6], 11
    %v4927 = vld [vmem:[%s4926] ss:$16 sm:$0x3]
    %s4928 = scalar_lea.vmem [#allocation6], 12
    %v4929 = vld [vmem:[%s4928] ss:$16 sm:$0x3]
    %s4930 = scalar_lea.vmem [#allocation6], 13
    %v4931 = vld [vmem:[%s4930] ss:$16 sm:$0x3]
    %s4932 = scalar_lea.vmem [#allocation6], 14
    %v4933 = vld [vmem:[%s4932] ss:$16 sm:$0x3]
    %s4934 = scalar_lea.vmem [#allocation6], 15
    %v4935 = vld [vmem:[%s4934] ss:$16 sm:$0x3]
    %4937 = vrot.lane.b32.xlu0 %v4907, 16
    %v4938 = vpop.permute.xlu0 %4937
    %4941 = vrot.lane.b32.xlu0 %v4909, 32
    %v4942 = vpop.permute.xlu0 %4941
    %4945 = vrot.lane.b32.xlu0 %v4911, 48
    %v4946 = vpop.permute.xlu0 %4945
    %4949 = vrot.lane.b32.xlu0 %v4913, 64
    %v4950 = vpop.permute.xlu0 %4949
    %4953 = vrot.lane.b32.xlu0 %v4915, 80
    %v4954 = vpop.permute.xlu0 %4953
    %4957 = vrot.lane.b32.xlu0 %v4917, 96
    %v4958 = vpop.permute.xlu0 %4957
    %4961 = vrot.lane.b32.xlu0 %v4919, 112
    %v4962 = vpop.permute.xlu0 %4961
    %4965 = vrot.lane.b32.xlu0 %v4923, 16
    %v4966 = vpop.permute.xlu0 %4965
    %4969 = vrot.lane.b32.xlu0 %v4925, 32
    %v4970 = vpop.permute.xlu0 %4969
    %4973 = vrot.lane.b32.xlu0 %v4927, 48
    %v4974 = vpop.permute.xlu0 %4973
    %4977 = vrot.lane.b32.xlu0 %v4929, 64
    %v4978 = vpop.permute.xlu0 %4977
    %4981 = vrot.lane.b32.xlu0 %v4931, 80
    %v4982 = vpop.permute.xlu0 %4981
    %4985 = vrot.lane.b32.xlu0 %v4933, 96
    %v4986 = vpop.permute.xlu0 %4985
    %4989 = vrot.lane.b32.xlu0 %v4935, 112
    %v4990 = vpop.permute.xlu0 %4989
    %v4992 = vsel %vm4605, %v4905, %v4938
    %v4993 = vsel %vm4638, %v4992, %v4942
    %v4994 = vsel %vm4672, %v4993, %v4946
    %v4995 = vsel %vm4706, %v4994, %v4950
    %vm4996 = vcmask 654336
    %v4997 = vsel %vm4996, %v4995, %v4954
    %vm4998 = vcmask 785408
    %v4999 = vsel %vm4998, %v4997, %v4958
    %vm5000 = vcmask 916480
    %v5001 = vsel %vm5000, %v4999, %v4962
    %v5002 = vsel %vm4605, %v4921, %v4966
    %v5003 = vsel %vm4638, %v5002, %v4970
    %v5004 = vsel %vm4672, %v5003, %v4974
    %v5005 = vsel %vm4706, %v5004, %v4978
    %v5006 = vsel %vm4996, %v5005, %v4982
    %v5007 = vsel %vm4998, %v5006, %v4986
    %v5008 = vsel %vm5000, %v5007, %v4990
    %v5009 = vld [vmem:[%s6] sm:$0xff]
    %v5010 = vld [vmem:[%s6 + $0x8] sm:$0xff]
    %v5011 = vld [vmem:[%s6 + $0x10] sm:$0xff]
    %v5012 = vld [vmem:[%s6 + $0x18] sm:$0xff]
    %v5013 = vld [vmem:[%s6 + $0x20] sm:$0xff]
    %v5014 = vld [vmem:[%s6 + $0x28] sm:$0xff]
    %v5015 = vld [vmem:[%s6 + $0x30] sm:$0xff]
    %v5016 = vld [vmem:[%s6 + $0x38] sm:$0xff]
    %v5017 = vld [vmem:[%s6 + $0x40] sm:$0xff]
    %v5018 = vld [vmem:[%s6 + $0x48] sm:$0xff]
    %v5019 = vld [vmem:[%s6 + $0x50] sm:$0xff]
    %v5020 = vld [vmem:[%s6 + $0x58] sm:$0xff]
    %v5021 = vld [vmem:[%s6 + $0x60] sm:$0xff]
    %v5022 = vld [vmem:[%s6 + $0x68] sm:$0xff]
    %v5023 = vld [vmem:[%s6 + $0x70] sm:$0xff]
    %v5024 = vld [vmem:[%s6 + $0x78] sm:$0xff]
    %v5025 = vld [vmem:[%s6 + $0x80] sm:$0xff]
    %v5026 = vld [vmem:[%s6 + $0x88] sm:$0xff]
    %v5027 = vld [vmem:[%s6 + $0x90] sm:$0xff]
    %v5028 = vld [vmem:[%s6 + $0x98] sm:$0xff]
    %v5029 = vld [vmem:[%s6 + $0xa0] sm:$0xff]
    %v5030 = vld [vmem:[%s6 + $0xa8] sm:$0xff]
    %v5031 = vld [vmem:[%s6 + $0xb0] sm:$0xff]
    %v5032 = vld [vmem:[%s6 + $0xb8] sm:$0xff]
    %v5033 = vld [vmem:[%s6 + $0xc0] sm:$0xff]
    %v5034 = vld [vmem:[%s6 + $0xc8] sm:$0xff]
    %v5035 = vld [vmem:[%s6 + $0xd0] sm:$0xff]
    %v5036 = vld [vmem:[%s6 + $0xd8] sm:$0xff]
    %v5037 = vld [vmem:[%s6 + $0xe0] sm:$0xff]
    %v5038 = vld [vmem:[%s6 + $0xe8] sm:$0xff]
    %v5039 = vld [vmem:[%s6 + $0xf0] sm:$0xff]
    %v5040 = vld [vmem:[%s6 + $0xf8] sm:$0xff]
    %v5041 = vld [vmem:[%s7] sm:$0x1]
    %v5043 = vperm.slane %v5041, 0
    %5045 = vmatpush.msra.mxu0 %v5024
    %5046 = vmatpush.msra.mxu0 %v5023
    %5047 = vmatpush.msra.mxu0 %v5022
    %5048 = vmatpush.msra.mxu0 %v5021
    %5049 = vmatpush.msra.mxu0 %v5020
    %5050 = vmatpush.msra.mxu0 %v5019
    %5051 = vmatpush.msra.mxu0 %v5018
    %5052 = vmatpush.msra.mxu0 %v5017
    %5053 = vmatpush.msra.mxu0 %v5016
    %5054 = vmatpush.msra.mxu0 %v5015
    %5055 = vmatpush.msra.mxu0 %v5014
    %5056 = vmatpush.msra.mxu0 %v5013
    %5057 = vmatpush.msra.mxu0 %v5012
    %5058 = vmatpush.msra.mxu0 %v5011
    %5059 = vmatpush.msra.mxu0 %v5010
    %5060 = vmatpush.msra.mxu0 %v5009
    %5061 = vmatmul.f32.gmra.mxu0 %v5001
    %v5062 = vpop.f32.mrf.mxu0
    %v5063 = vadd.f32 %v5043, %v5062
    %5064 = vdwg.mxu0
    %5065 = vmatpush.msra.mxu0 %v5040
    %5066 = vmatpush.msra.mxu0 %v5039
    %5067 = vmatpush.msra.mxu0 %v5038
    %5068 = vmatpush.msra.mxu0 %v5037
    %5069 = vmatpush.msra.mxu0 %v5036
    %5070 = vmatpush.msra.mxu0 %v5035
    %5071 = vmatpush.msra.mxu0 %v5034
    %5072 = vmatpush.msra.mxu0 %v5033
    %5073 = vmatpush.msra.mxu0 %v5032
    %5074 = vmatpush.msra.mxu0 %v5031
    %5075 = vmatpush.msra.mxu0 %v5030
    %5076 = vmatpush.msra.mxu0 %v5029
    %5077 = vmatpush.msra.mxu0 %v5028
    %5078 = vmatpush.msra.mxu0 %v5027
    %5079 = vmatpush.msra.mxu0 %v5026
    %5080 = vmatpush.msra.mxu0 %v5025
    %5081 = vmatmul.f32.gmra.mxu0 %v5008
    %v5082 = vpop.f32.mrf.mxu0
    %v5083 = vadd.f32 %v5063, %v5082
    %5084 = vdwg.mxu0
    %v5085 = vmax.f32 %v5083, 0.0
    %v5086 = vld [vmem:[%s8] sm:$0xff]
    %v5087 = vld [vmem:[%s8 + $0x8] sm:$0xff]
    %v5088 = vld [vmem:[%s8 + $0x10] sm:$0xff]
    %v5089 = vld [vmem:[%s8 + $0x18] sm:$0xff]
    %v5090 = vld [vmem:[%s8 + $0x20] sm:$0xff]
    %v5091 = vld [vmem:[%s8 + $0x28] sm:$0xff]
    %v5092 = vld [vmem:[%s8 + $0x30] sm:$0xff]
    %v5093 = vld [vmem:[%s8 + $0x38] sm:$0xff]
    %v5094 = vld [vmem:[%s9] sm:$0x1]
    %v5096 = vperm.slane %v5094, 0
    %v5099 = vsel %vm4706, %v5085, 0
    %5101 = vmatpush.msra.mxu0 0.0
    %5102 = vmatpush.msra.mxu0 0.0
    %5103 = vmatpush.msra.mxu0 0.0
    %5104 = vmatpush.msra.mxu0 0.0
    %5105 = vmatpush.msra.mxu0 0.0
    %5106 = vmatpush.msra.mxu0 0.0
    %5107 = vmatpush.msra.mxu0 0.0
    %5108 = vmatpush.msra.mxu0 0.0
    %5109 = vmatpush.msra.mxu0 %v5093
    %5110 = vmatpush.msra.mxu0 %v5092
    %5111 = vmatpush.msra.mxu0 %v5091
    %5112 = vmatpush.msra.mxu0 %v5090
    %5113 = vmatpush.msra.mxu0 %v5089
    %5114 = vmatpush.msra.mxu0 %v5088
    %5115 = vmatpush.msra.mxu0 %v5087
    %5116 = vmatpush.msra.mxu0 %v5086
    %5117 = vmatmul.f32.gmra.mxu0 %v5099
    %v5118 = vpop.f32.mrf.mxu0
    %v5119 = vadd.f32 %v5096, %v5118
    %5120 = vdwg.mxu0
    %v5121 = vmul.f32 %v5119, %v5119
    %vm5122 = vcmask 254976
    %v5123 = vsel %vm5122, %v5121, 0.0
    %5124 = vadd.xlane.f32.xlu0 %v5123
    %v5125 = vpop.xlane.xlu0 %5124
    %v5126 = vmax.f32 %v5125, 1e-24
    %v5127 = vrsqrt.pop %v5126
    %v5128 = vmul.f32 %v5127, %v5126
    %v5129 = vmul.f32 %v5128, %v5127
    %v5130 = vmul.f32 0.5, %v5129
    %v5131 = vsub.f32 1.5, %v5130
    %v5132 = vmul.f32 %v5127, %v5131
    %vm5133 = vweird.f32 %v5126
    %vm5134 = vweird.f32 %v5127
    %vm5135 = vmor %vm5133, %vm5134
    %v5136 = vsel %vm5135, %v5127, %v5132
    %v5137 = vmul.f32 %v5119, %v5136
    %v5138 = vld [vmem:[%s1] sm:$0xff]
    %v5139 = vld [vmem:[%s1 + $0x8] sm:$0xff]
    %v5140 = vtanh.pop %v5138
    %v5141 = vtanh.pop %v5139
    %v5142 = vld [vmem:[%s10] sm:$0xff]
    %v5143 = vld [vmem:[%s10 + $0x8] sm:$0xff]
    %v5144 = vld [vmem:[%s12] sm:$0x1]
    %v5146 = vperm.slane %v5144, 0
    %v5149 = vsel %vm4605, %v5140, 0
    %v5152 = vsel %vm4605, %v5141, 0
    %5154 = vmatpush.msra.mxu0 0.0
    %5155 = vmatpush.msra.mxu0 0.0
    %5156 = vmatpush.msra.mxu0 0.0
    %5157 = vmatpush.msra.mxu0 0.0
    %5158 = vmatpush.msra.mxu0 0.0
    %5159 = vmatpush.msra.mxu0 0.0
    %5160 = vmatpush.msra.mxu0 0.0
    %5161 = vmatpush.msra.mxu0 0.0
    %5162 = vmatpush.msra.mxu0 0.0
    %5163 = vmatpush.msra.mxu0 0.0
    %5164 = vmatpush.msra.mxu0 0.0
    %5165 = vmatpush.msra.mxu0 0.0
    %5166 = vmatpush.msra.mxu0 0.0
    %5167 = vmatpush.msra.mxu0 0.0
    %5168 = vmatpush.msra.mxu0 %v5143
    %5169 = vmatpush.msra.mxu0 %v5142
    %5170 = vmatmul.f32.gmra.mxu0 %v5149
    %v5171 = vpop.f32.mrf.mxu0
    %v5172 = vadd.f32 %v5146, %v5171
    %5173 = vmatmul.f32.gmra.mxu0 %v5152
    %v5174 = vpop.f32.mrf.mxu0
    %v5175 = vadd.f32 %v5146, %v5174
    %5176 = vdwg.mxu0
    %5177 = vst.msk [vmem:[#allocation2] sm:$0xff] %vm4706, %v5172
    %5178 = vst.msk [vmem:[#allocation2 + $0x8] sm:$0xff] %vm4706, %v5175
    %v5179 = vld [vmem:[%s11] sm:$0xff]
    %v5180 = vld [vmem:[%s11 + $0x8] sm:$0xff]
    %v5181 = vld [vmem:[%s13] sm:$0xff]
    %v5182 = vld [vmem:[%s13 + $0x8] sm:$0xff]
    %v5183 = vld [vmem:[%s13 + $0x10] sm:$0xff]
    %v5184 = vld [vmem:[%s13 + $0x18] sm:$0xff]
    %v5185 = vld [vmem:[%s14] sm:$0x1]
    %v5186 = vld [vmem:[#allocation2] sm:$0x3]
    %v5188 = vsel %vm4605, 0.0, 0
    %5190 = vmatpush.msra.mxu0 0.0
    %5191 = vmatpush.msra.mxu0 0.0
    %5192 = vmatpush.msra.mxu0 0.0
    %5193 = vmatpush.msra.mxu0 0.0
    %5194 = vmatpush.msra.mxu0 0.0
    %5195 = vmatpush.msra.mxu0 0.0
    %5196 = vmatpush.msra.mxu0 0.0
    %5197 = vmatpush.msra.mxu0 0.0
    %5198 = vmatpush.msra.mxu0 0.0
    %5199 = vmatpush.msra.mxu0 0.0
    %5200 = vmatpush.msra.mxu0 0.0
    %5201 = vmatpush.msra.mxu0 0.0
    %5202 = vmatpush.msra.mxu0 0.0
    %5203 = vmatpush.msra.mxu0 0.0
    %5204 = vmatpush.msra.mxu0 %v5180
    %5205 = vmatpush.msra.mxu0 %v5179
    %5206 = vmatmul.f32.gmra.mxu0 %v5188
    %v5207 = vpop.f32.mrf.mxu0
    %v5208 = vadd.f32 0.0, %v5207
    %5209 = vdwg.mxu0
    %v5210 = vadd.f32 %v5186, %v5208
    %v5211 = vxor.u32 %v5210, 2147483648
    %v5212 = vmul.f32 %v5211, 1.442695
    %v5213 = vpow.pop %v5212
    %v5214 = vadd.f32 %v5213, 1.0
    %v5215 = vrcp.pop %v5214
    %v5216 = vmul.f32 %v5214, %v5215
    %v5217 = vsub.f32 1.0, %v5216
    %v5218 = vmul.f32 %v5215, %v5217
    %v5219 = vadd.f32 %v5215, %v5218
    %vm5220 = vweird.f32 %v5214
    %vm5221 = vweird.f32 %v5215
    %vm5222 = vmor %vm5220, %vm5221
    %v5223 = vsel %vm5222, %v5215, %v5219
    %v5224 = vand.u32 2147483647, %v5214
    %vm5225 = vcmp.eq.f32.partialorder %v5224, 8.507059e+37
    %v5226 = vand.u32 %v5214, 2147483648
    %v5227 = vor.u32 1.1754944e-38, %v5226
    %v5228 = vsel %vm5225, %v5227, %v5223
    %v5229 = vmul.f32 1.0, %v5228
    %v5230 = vtanh.pop %v5210
    %v5231 = vmul.f32 %v5229, 0.0
    %5233 = vrot.lane.b32.xlu0 %v5230, 96
    %v5234 = vpop.permute.xlu0 %5233
    %v5236 = vmul.f32 %v5229, %v5234
    %5238 = vrot.lane.b32.xlu0 %v5236, 16
    %v5239 = vpop.permute.xlu0 %5238
    %v5241 = vadd.f32 %v5231, %v5239
    %v5242 = vtanh.pop %v5241
    %5244 = vrot.lane.b32.xlu0 %v5242, 32
    %v5245 = vpop.permute.xlu0 %5244
    %v5247 = vmul.f32 %v5229, %v5245
    %5249 = vrot.lane.b32.xlu0 %v5247, 80
    %v5250 = vpop.permute.xlu0 %5249
    %v5252 = vsel %vm4605, %v5250, 0.0
    %v5254 = vperm.slane %v5185, 0
    %v5257 = vsel %vm4638, %v5252, 0
    %5259 = vmatpush.msra.mxu0 0.0
    %5260 = vmatpush.msra.mxu0 0.0
    %5261 = vmatpush.msra.mxu0 0.0
    %5262 = vmatpush.msra.mxu0 0.0
    %5263 = vmatpush.msra.mxu0 0.0
    %5264 = vmatpush.msra.mxu0 0.0
    %5265 = vmatpush.msra.mxu0 0.0
    %5266 = vmatpush.msra.mxu0 0.0
    %5267 = vmatpush.msra.mxu0 0.0
    %5268 = vmatpush.msra.mxu0 0.0
    %5269 = vmatpush.msra.mxu0 0.0
    %5270 = vmatpush.msra.mxu0 0.0
    %5271 = vmatpush.msra.mxu0 %v5184
    %5272 = vmatpush.msra.mxu0 %v5183
    %5273 = vmatpush.msra.mxu0 %v5182
    %5274 = vmatpush.msra.mxu0 %v5181
    %5275 = vmatmul.f32.gmra.mxu0 %v5257
    %v5276 = vpop.f32.mrf.mxu0
    %v5277 = vadd.f32 %v5254, %v5276
    %5278 = vdwg.mxu0
    %v5279 = vxor.u32 %v5277, 2147483648
    %v5280 = vmul.f32 %v5279, 1.442695
    %v5281 = vpow.pop %v5280
    %v5282 = vadd.f32 %v5281, 1.0
    %v5283 = vrcp.pop %v5282
    %v5284 = vmul.f32 %v5282, %v5283
    %v5285 = vsub.f32 1.0, %v5284
    %v5286 = vmul.f32 %v5283, %v5285
    %v5287 = vadd.f32 %v5283, %v5286
    %vm5288 = vweird.f32 %v5282
    %vm5289 = vweird.f32 %v5283
    %vm5290 = vmor %vm5288, %vm5289
    %v5291 = vsel %vm5290, %v5283, %v5287
    %v5292 = vand.u32 2147483647, %v5282
    %vm5293 = vcmp.eq.f32.partialorder %v5292, 8.507059e+37
    %v5294 = vand.u32 %v5282, 2147483648
    %v5295 = vor.u32 1.1754944e-38, %v5294
    %v5296 = vsel %vm5293, %v5295, %v5291
    %v5297 = vmul.f32 1.0, %v5296
    %v5298 = vtanh.pop %v5277
    %v5299 = vmul.f32 %v5297, 0.0
    %5301 = vrot.lane.b32.xlu0 %v5298, 96
    %v5302 = vpop.permute.xlu0 %5301
    %v5304 = vmul.f32 %v5297, %v5302
    %5306 = vrot.lane.b32.xlu0 %v5304, 16
    %v5307 = vpop.permute.xlu0 %5306
    %v5309 = vadd.f32 %v5299, %v5307
    %v5310 = vtanh.pop %v5309
    %5312 = vrot.lane.b32.xlu0 %v5310, 32
    %v5313 = vpop.permute.xlu0 %5312
    %v5315 = vmul.f32 %v5297, %v5313
    %v5316 = vld [vmem:[#allocation2 + $0x2] sm:$0x3]
    %v5317 = vsel %vm4605, %v5250, 0
    %5319 = vmatpush.msra.mxu0 0.0
    %5320 = vmatpush.msra.mxu0 0.0
    %5321 = vmatpush.msra.mxu0 0.0
    %5322 = vmatpush.msra.mxu0 0.0
    %5323 = vmatpush.msra.mxu0 0.0
    %5324 = vmatpush.msra.mxu0 0.0
    %5325 = vmatpush.msra.mxu0 0.0
    %5326 = vmatpush.msra.mxu0 0.0
    %5327 = vmatpush.msra.mxu0 0.0
    %5328 = vmatpush.msra.mxu0 0.0
    %5329 = vmatpush.msra.mxu0 0.0
    %5330 = vmatpush.msra.mxu0 0.0
    %5331 = vmatpush.msra.mxu0 0.0
    %5332 = vmatpush.msra.mxu0 0.0
    %5333 = vmatpush.msra.mxu0 %v5180
    %5334 = vmatpush.msra.mxu0 %v5179
    %5335 = vmatmul.f32.gmra.mxu0 %v5317
    %v5336 = vpop.f32.mrf.mxu0
    %v5337 = vadd.f32 0.0, %v5336
    %5338 = vdwg.mxu0
    %v5339 = vadd.f32 %v5316, %v5337
    %v5340 = vxor.u32 %v5339, 2147483648
    %v5341 = vmul.f32 %v5340, 1.442695
    %v5342 = vpow.pop %v5341
    %v5343 = vadd.f32 %v5342, 1.0
    %v5344 = vrcp.pop %v5343
    %v5345 = vmul.f32 %v5343, %v5344
    %v5346 = vsub.f32 1.0, %v5345
    %v5347 = vmul.f32 %v5344, %v5346
    %v5348 = vadd.f32 %v5344, %v5347
    %vm5349 = vweird.f32 %v5343
    %vm5350 = vweird.f32 %v5344
    %vm5351 = vmor %vm5349, %vm5350
    %v5352 = vsel %vm5351, %v5344, %v5348
    %v5353 = vand.u32 2147483647, %v5343
    %vm5354 = vcmp.eq.f32.partialorder %v5353, 8.507059e+37
    %v5355 = vand.u32 %v5343, 2147483648
    %v5356 = vor.u32 1.1754944e-38, %v5355
    %v5357 = vsel %vm5354, %v5356, %v5352
    %v5358 = vmul.f32 1.0, %v5357
    %v5359 = vtanh.pop %v5339
    %v5360 = vmul.f32 %v5358, %v5241
    %5362 = vrot.lane.b32.xlu0 %v5359, 96
    %v5363 = vpop.permute.xlu0 %5362
    %v5365 = vmul.f32 %v5358, %v5363
    %5367 = vrot.lane.b32.xlu0 %v5365, 16
    %v5368 = vpop.permute.xlu0 %5367
    %v5370 = vadd.f32 %v5360, %v5368
    %v5371 = vtanh.pop %v5370
    %5373 = vrot.lane.b32.xlu0 %v5371, 32
    %v5374 = vpop.permute.xlu0 %5373
    %v5376 = vmul.f32 %v5358, %v5374
    %5378 = vrot.lane.b32.xlu0 %v5376, 80
    %v5379 = vpop.permute.xlu0 %5378
    %5382 = vrot.lane.b32.xlu0 %v5315, 96
    %v5383 = vpop.permute.xlu0 %5382
    %v5385 = vsel %vm4605, %v5379, %v5383
    %v5387 = vsel %vm4638, %v5385, 0
    %5389 = vmatpush.msra.mxu0 0.0
    %5390 = vmatpush.msra.mxu0 0.0
    %5391 = vmatpush.msra.mxu0 0.0
    %5392 = vmatpush.msra.mxu0 0.0
    %5393 = vmatpush.msra.mxu0 0.0
    %5394 = vmatpush.msra.mxu0 0.0
    %5395 = vmatpush.msra.mxu0 0.0
    %5396 = vmatpush.msra.mxu0 0.0
    %5397 = vmatpush.msra.mxu0 0.0
    %5398 = vmatpush.msra.mxu0 0.0
    %5399 = vmatpush.msra.mxu0 0.0
    %5400 = vmatpush.msra.mxu0 0.0
    %5401 = vmatpush.msra.mxu0 %v5184
    %5402 = vmatpush.msra.mxu0 %v5183
    %5403 = vmatpush.msra.mxu0 %v5182
    %5404 = vmatpush.msra.mxu0 %v5181
    %5405 = vmatmul.f32.gmra.mxu0 %v5387
    %v5406 = vpop.f32.mrf.mxu0
    %v5407 = vadd.f32 %v5254, %v5406
    %5408 = vdwg.mxu0
    %v5409 = vxor.u32 %v5407, 2147483648
    %v5410 = vmul.f32 %v5409, 1.442695
    %v5411 = vpow.pop %v5410
    %v5412 = vadd.f32 %v5411, 1.0
    %v5413 = vrcp.pop %v5412
    %v5414 = vmul.f32 %v5412, %v5413
    %v5415 = vsub.f32 1.0, %v5414
    %v5416 = vmul.f32 %v5413, %v5415
    %v5417 = vadd.f32 %v5413, %v5416
    %vm5418 = vweird.f32 %v5412
    %vm5419 = vweird.f32 %v5413
    %vm5420 = vmor %vm5418, %vm5419
    %v5421 = vsel %vm5420, %v5413, %v5417
    %v5422 = vand.u32 2147483647, %v5412
    %vm5423 = vcmp.eq.f32.partialorder %v5422, 8.507059e+37
    %v5424 = vand.u32 %v5412, 2147483648
    %v5425 = vor.u32 1.1754944e-38, %v5424
    %v5426 = vsel %vm5423, %v5425, %v5421
    %v5427 = vmul.f32 1.0, %v5426
    %v5428 = vtanh.pop %v5407
    %v5429 = vmul.f32 %v5427, %v5309
    %5431 = vrot.lane.b32.xlu0 %v5428, 96
    %v5432 = vpop.permute.xlu0 %5431
    %v5434 = vmul.f32 %v5427, %v5432
    %5436 = vrot.lane.b32.xlu0 %v5434, 16
    %v5437 = vpop.permute.xlu0 %5436
    %v5439 = vadd.f32 %v5429, %v5437
    %v5440 = vtanh.pop %v5439
    %5442 = vrot.lane.b32.xlu0 %v5440, 32
    %v5443 = vpop.permute.xlu0 %5442
    %v5445 = vmul.f32 %v5427, %v5443
    %v5446 = vld [vmem:[#allocation2 + $0x4] sm:$0x3]
    %v5447 = vsel %vm4605, %v5379, 0
    %5449 = vmatpush.msra.mxu0 0.0
    %5450 = vmatpush.msra.mxu0 0.0
    %5451 = vmatpush.msra.mxu0 0.0
    %5452 = vmatpush.msra.mxu0 0.0
    %5453 = vmatpush.msra.mxu0 0.0
    %5454 = vmatpush.msra.mxu0 0.0
    %5455 = vmatpush.msra.mxu0 0.0
    %5456 = vmatpush.msra.mxu0 0.0
    %5457 = vmatpush.msra.mxu0 0.0
    %5458 = vmatpush.msra.mxu0 0.0
    %5459 = vmatpush.msra.mxu0 0.0
    %5460 = vmatpush.msra.mxu0 0.0
    %5461 = vmatpush.msra.mxu0 0.0
    %5462 = vmatpush.msra.mxu0 0.0
    %5463 = vmatpush.msra.mxu0 %v5180
    %5464 = vmatpush.msra.mxu0 %v5179
    %5465 = vmatmul.f32.gmra.mxu0 %v5447
    %v5466 = vpop.f32.mrf.mxu0
    %v5467 = vadd.f32 0.0, %v5466
    %5468 = vdwg.mxu0
    %v5469 = vadd.f32 %v5446, %v5467
    %v5470 = vxor.u32 %v5469, 2147483648
    %v5471 = vmul.f32 %v5470, 1.442695
    %v5472 = vpow.pop %v5471
    %v5473 = vadd.f32 %v5472, 1.0
    %v5474 = vrcp.pop %v5473
    %v5475 = vmul.f32 %v5473, %v5474
    %v5476 = vsub.f32 1.0, %v5475
    %v5477 = vmul.f32 %v5474, %v5476
    %v5478 = vadd.f32 %v5474, %v5477
    %vm5479 = vweird.f32 %v5473
    %vm5480 = vweird.f32 %v5474
    %vm5481 = vmor %vm5479, %vm5480
    %v5482 = vsel %vm5481, %v5474, %v5478
    %v5483 = vand.u32 2147483647, %v5473
    %vm5484 = vcmp.eq.f32.partialorder %v5483, 8.507059e+37
    %v5485 = vand.u32 %v5473, 2147483648
    %v5486 = vor.u32 1.1754944e-38, %v5485
    %v5487 = vsel %vm5484, %v5486, %v5482
    %v5488 = vmul.f32 1.0, %v5487
    %v5489 = vtanh.pop %v5469
    %v5490 = vmul.f32 %v5488, %v5370
    %5492 = vrot.lane.b32.xlu0 %v5489, 96
    %v5493 = vpop.permute.xlu0 %5492
    %v5495 = vmul.f32 %v5488, %v5493
    %5497 = vrot.lane.b32.xlu0 %v5495, 16
    %v5498 = vpop.permute.xlu0 %5497
    %v5500 = vadd.f32 %v5490, %v5498
    %v5501 = vtanh.pop %v5500
    %5503 = vrot.lane.b32.xlu0 %v5501, 32
    %v5504 = vpop.permute.xlu0 %5503
    %v5506 = vmul.f32 %v5488, %v5504
    %5508 = vrot.lane.b32.xlu0 %v5506, 80
    %v5509 = vpop.permute.xlu0 %5508
    %5512 = vrot.lane.b32.xlu0 %v5445, 96
    %v5513 = vpop.permute.xlu0 %5512
    %v5515 = vsel %vm4605, %v5509, %v5513
    %v5517 = vsel %vm4638, %v5515, 0
    %5519 = vmatpush.msra.mxu0 0.0
    %5520 = vmatpush.msra.mxu0 0.0
    %5521 = vmatpush.msra.mxu0 0.0
    %5522 = vmatpush.msra.mxu0 0.0
    %5523 = vmatpush.msra.mxu0 0.0
    %5524 = vmatpush.msra.mxu0 0.0
    %5525 = vmatpush.msra.mxu0 0.0
    %5526 = vmatpush.msra.mxu0 0.0
    %5527 = vmatpush.msra.mxu0 0.0
    %5528 = vmatpush.msra.mxu0 0.0
    %5529 = vmatpush.msra.mxu0 0.0
    %5530 = vmatpush.msra.mxu0 0.0
    %5531 = vmatpush.msra.mxu0 %v5184
    %5532 = vmatpush.msra.mxu0 %v5183
    %5533 = vmatpush.msra.mxu0 %v5182
    %5534 = vmatpush.msra.mxu0 %v5181
    %5535 = vmatmul.f32.gmra.mxu0 %v5517
    %v5536 = vpop.f32.mrf.mxu0
    %v5537 = vadd.f32 %v5254, %v5536
    %5538 = vdwg.mxu0
    %v5539 = vxor.u32 %v5537, 2147483648
    %v5540 = vmul.f32 %v5539, 1.442695
    %v5541 = vpow.pop %v5540
    %v5542 = vadd.f32 %v5541, 1.0
    %v5543 = vrcp.pop %v5542
    %v5544 = vmul.f32 %v5542, %v5543
    %v5545 = vsub.f32 1.0, %v5544
    %v5546 = vmul.f32 %v5543, %v5545
    %v5547 = vadd.f32 %v5543, %v5546
    %vm5548 = vweird.f32 %v5542
    %vm5549 = vweird.f32 %v5543
    %vm5550 = vmor %vm5548, %vm5549
    %v5551 = vsel %vm5550, %v5543, %v5547
    %v5552 = vand.u32 2147483647, %v5542
    %vm5553 = vcmp.eq.f32.partialorder %v5552, 8.507059e+37
    %v5554 = vand.u32 %v5542, 2147483648
    %v5555 = vor.u32 1.1754944e-38, %v5554
    %v5556 = vsel %vm5553, %v5555, %v5551
    %v5557 = vmul.f32 1.0, %v5556
    %v5558 = vtanh.pop %v5537
    %v5559 = vmul.f32 %v5557, %v5439
    %5561 = vrot.lane.b32.xlu0 %v5558, 96
    %v5562 = vpop.permute.xlu0 %5561
    %v5564 = vmul.f32 %v5557, %v5562
    %5566 = vrot.lane.b32.xlu0 %v5564, 16
    %v5567 = vpop.permute.xlu0 %5566
    %v5569 = vadd.f32 %v5559, %v5567
    %v5570 = vtanh.pop %v5569
    %5572 = vrot.lane.b32.xlu0 %v5570, 32
    %v5573 = vpop.permute.xlu0 %5572
    %v5575 = vmul.f32 %v5557, %v5573
    %v5576 = vld [vmem:[#allocation2 + $0x6] sm:$0x3]
    %v5577 = vsel %vm4605, %v5509, 0
    %5579 = vmatpush.msra.mxu0 0.0
    %5580 = vmatpush.msra.mxu0 0.0
    %5581 = vmatpush.msra.mxu0 0.0
    %5582 = vmatpush.msra.mxu0 0.0
    %5583 = vmatpush.msra.mxu0 0.0
    %5584 = vmatpush.msra.mxu0 0.0
    %5585 = vmatpush.msra.mxu0 0.0
    %5586 = vmatpush.msra.mxu0 0.0
    %5587 = vmatpush.msra.mxu0 0.0
    %5588 = vmatpush.msra.mxu0 0.0
    %5589 = vmatpush.msra.mxu0 0.0
    %5590 = vmatpush.msra.mxu0 0.0
    %5591 = vmatpush.msra.mxu0 0.0
    %5592 = vmatpush.msra.mxu0 0.0
    %5593 = vmatpush.msra.mxu0 %v5180
    %5594 = vmatpush.msra.mxu0 %v5179
    %5595 = vmatmul.f32.gmra.mxu0 %v5577
    %v5596 = vpop.f32.mrf.mxu0
    %v5597 = vadd.f32 0.0, %v5596
    %5598 = vdwg.mxu0
    %v5599 = vadd.f32 %v5576, %v5597
    %v5600 = vxor.u32 %v5599, 2147483648
    %v5601 = vmul.f32 %v5600, 1.442695
    %v5602 = vpow.pop %v5601
    %v5603 = vadd.f32 %v5602, 1.0
    %v5604 = vrcp.pop %v5603
    %v5605 = vmul.f32 %v5603, %v5604
    %v5606 = vsub.f32 1.0, %v5605
    %v5607 = vmul.f32 %v5604, %v5606
    %v5608 = vadd.f32 %v5604, %v5607
    %vm5609 = vweird.f32 %v5603
    %vm5610 = vweird.f32 %v5604
    %vm5611 = vmor %vm5609, %vm5610
    %v5612 = vsel %vm5611, %v5604, %v5608
    %v5613 = vand.u32 2147483647, %v5603
    %vm5614 = vcmp.eq.f32.partialorder %v5613, 8.507059e+37
    %v5615 = vand.u32 %v5603, 2147483648
    %v5616 = vor.u32 1.1754944e-38, %v5615
    %v5617 = vsel %vm5614, %v5616, %v5612
    %v5618 = vmul.f32 1.0, %v5617
    %v5619 = vtanh.pop %v5599
    %v5620 = vmul.f32 %v5618, %v5500
    %5622 = vrot.lane.b32.xlu0 %v5619, 96
    %v5623 = vpop.permute.xlu0 %5622
    %v5625 = vmul.f32 %v5618, %v5623
    %5627 = vrot.lane.b32.xlu0 %v5625, 16
    %v5628 = vpop.permute.xlu0 %5627
    %v5630 = vadd.f32 %v5620, %v5628
    %v5631 = vtanh.pop %v5630
    %5633 = vrot.lane.b32.xlu0 %v5631, 32
    %v5634 = vpop.permute.xlu0 %5633
    %v5636 = vmul.f32 %v5618, %v5634
    %5638 = vrot.lane.b32.xlu0 %v5636, 80
    %v5639 = vpop.permute.xlu0 %5638
    %5642 = vrot.lane.b32.xlu0 %v5575, 96
    %v5643 = vpop.permute.xlu0 %5642
    %v5645 = vsel %vm4605, %v5639, %v5643
    %v5647 = vsel %vm4638, %v5645, 0
    %5649 = vmatpush.msra.mxu0 0.0
    %5650 = vmatpush.msra.mxu0 0.0
    %5651 = vmatpush.msra.mxu0 0.0
    %5652 = vmatpush.msra.mxu0 0.0
    %5653 = vmatpush.msra.mxu0 0.0
    %5654 = vmatpush.msra.mxu0 0.0
    %5655 = vmatpush.msra.mxu0 0.0
    %5656 = vmatpush.msra.mxu0 0.0
    %5657 = vmatpush.msra.mxu0 0.0
    %5658 = vmatpush.msra.mxu0 0.0
    %5659 = vmatpush.msra.mxu0 0.0
    %5660 = vmatpush.msra.mxu0 0.0
    %5661 = vmatpush.msra.mxu0 %v5184
    %5662 = vmatpush.msra.mxu0 %v5183
    %5663 = vmatpush.msra.mxu0 %v5182
    %5664 = vmatpush.msra.mxu0 %v5181
    %5665 = vmatmul.f32.gmra.mxu0 %v5647
    %v5666 = vpop.f32.mrf.mxu0
    %v5667 = vadd.f32 %v5254, %v5666
    %5668 = vdwg.mxu0
    %v5669 = vxor.u32 %v5667, 2147483648
    %v5670 = vmul.f32 %v5669, 1.442695
    %v5671 = vpow.pop %v5670
    %v5672 = vadd.f32 %v5671, 1.0
    %v5673 = vrcp.pop %v5672
    %v5674 = vmul.f32 %v5672, %v5673
    %v5675 = vsub.f32 1.0, %v5674
    %v5676 = vmul.f32 %v5673, %v5675
    %v5677 = vadd.f32 %v5673, %v5676
    %vm5678 = vweird.f32 %v5672
    %vm5679 = vweird.f32 %v5673
    %vm5680 = vmor %vm5678, %vm5679
    %v5681 = vsel %vm5680, %v5673, %v5677
    %v5682 = vand.u32 2147483647, %v5672
    %vm5683 = vcmp.eq.f32.partialorder %v5682, 8.507059e+37
    %v5684 = vand.u32 %v5672, 2147483648
    %v5685 = vor.u32 1.1754944e-38, %v5684
    %v5686 = vsel %vm5683, %v5685, %v5681
    %v5687 = vmul.f32 1.0, %v5686
    %v5688 = vtanh.pop %v5667
    %v5689 = vmul.f32 %v5687, %v5569
    %5691 = vrot.lane.b32.xlu0 %v5688, 96
    %v5692 = vpop.permute.xlu0 %5691
    %v5694 = vmul.f32 %v5687, %v5692
    %5696 = vrot.lane.b32.xlu0 %v5694, 16
    %v5697 = vpop.permute.xlu0 %5696
    %v5699 = vadd.f32 %v5689, %v5697
    %v5700 = vtanh.pop %v5699
    %5702 = vrot.lane.b32.xlu0 %v5700, 32
    %v5703 = vpop.permute.xlu0 %5702
    %v5705 = vmul.f32 %v5687, %v5703
    %v5706 = vld [vmem:[#allocation2 + $0x8] sm:$0x3]
    %v5707 = vsel %vm4605, %v5639, 0
    %5709 = vmatpush.msra.mxu0 0.0
    %5710 = vmatpush.msra.mxu0 0.0
    %5711 = vmatpush.msra.mxu0 0.0
    %5712 = vmatpush.msra.mxu0 0.0
    %5713 = vmatpush.msra.mxu0 0.0
    %5714 = vmatpush.msra.mxu0 0.0
    %5715 = vmatpush.msra.mxu0 0.0
    %5716 = vmatpush.msra.mxu0 0.0
    %5717 = vmatpush.msra.mxu0 0.0
    %5718 = vmatpush.msra.mxu0 0.0
    %5719 = vmatpush.msra.mxu0 0.0
    %5720 = vmatpush.msra.mxu0 0.0
    %5721 = vmatpush.msra.mxu0 0.0
    %5722 = vmatpush.msra.mxu0 0.0
    %5723 = vmatpush.msra.mxu0 %v5180
    %5724 = vmatpush.msra.mxu0 %v5179
    %5725 = vmatmul.f32.gmra.mxu0 %v5707
    %v5726 = vpop.f32.mrf.mxu0
    %v5727 = vadd.f32 0.0, %v5726
    %5728 = vdwg.mxu0
    %v5729 = vadd.f32 %v5706, %v5727
    %v5730 = vxor.u32 %v5729, 2147483648
    %v5731 = vmul.f32 %v5730, 1.442695
    %v5732 = vpow.pop %v5731
    %v5733 = vadd.f32 %v5732, 1.0
    %v5734 = vrcp.pop %v5733
    %v5735 = vmul.f32 %v5733, %v5734
    %v5736 = vsub.f32 1.0, %v5735
    %v5737 = vmul.f32 %v5734, %v5736
    %v5738 = vadd.f32 %v5734, %v5737
    %vm5739 = vweird.f32 %v5733
    %vm5740 = vweird.f32 %v5734
    %vm5741 = vmor %vm5739, %vm5740
    %v5742 = vsel %vm5741, %v5734, %v5738
    %v5743 = vand.u32 2147483647, %v5733
    %vm5744 = vcmp.eq.f32.partialorder %v5743, 8.507059e+37
    %v5745 = vand.u32 %v5733, 2147483648
    %v5746 = vor.u32 1.1754944e-38, %v5745
    %v5747 = vsel %vm5744, %v5746, %v5742
    %v5748 = vmul.f32 1.0, %v5747
    %v5749 = vtanh.pop %v5729
    %v5750 = vmul.f32 %v5748, %v5630
    %5752 = vrot.lane.b32.xlu0 %v5749, 96
    %v5753 = vpop.permute.xlu0 %5752
    %v5755 = vmul.f32 %v5748, %v5753
    %5757 = vrot.lane.b32.xlu0 %v5755, 16
    %v5758 = vpop.permute.xlu0 %5757
    %v5760 = vadd.f32 %v5750, %v5758
    %v5761 = vtanh.pop %v5760
    %5763 = vrot.lane.b32.xlu0 %v5761, 32
    %v5764 = vpop.permute.xlu0 %5763
    %v5766 = vmul.f32 %v5748, %v5764
    %5768 = vrot.lane.b32.xlu0 %v5766, 80
    %v5769 = vpop.permute.xlu0 %5768
    %5772 = vrot.lane.b32.xlu0 %v5705, 96
    %v5773 = vpop.permute.xlu0 %5772
    %v5775 = vsel %vm4605, %v5769, %v5773
    %v5777 = vsel %vm4638, %v5775, 0
    %5779 = vmatpush.msra.mxu0 0.0
    %5780 = vmatpush.msra.mxu0 0.0
    %5781 = vmatpush.msra.mxu0 0.0
    %5782 = vmatpush.msra.mxu0 0.0
    %5783 = vmatpush.msra.mxu0 0.0
    %5784 = vmatpush.msra.mxu0 0.0
    %5785 = vmatpush.msra.mxu0 0.0
    %5786 = vmatpush.msra.mxu0 0.0
    %5787 = vmatpush.msra.mxu0 0.0
    %5788 = vmatpush.msra.mxu0 0.0
    %5789 = vmatpush.msra.mxu0 0.0
    %5790 = vmatpush.msra.mxu0 0.0
    %5791 = vmatpush.msra.mxu0 %v5184
    %5792 = vmatpush.msra.mxu0 %v5183
    %5793 = vmatpush.msra.mxu0 %v5182
    %5794 = vmatpush.msra.mxu0 %v5181
    %5795 = vmatmul.f32.gmra.mxu0 %v5777
    %v5796 = vpop.f32.mrf.mxu0
    %v5797 = vadd.f32 %v5254, %v5796
    %5798 = vdwg.mxu0
    %v5799 = vxor.u32 %v5797, 2147483648
    %v5800 = vmul.f32 %v5799, 1.442695
    %v5801 = vpow.pop %v5800
    %v5802 = vadd.f32 %v5801, 1.0
    %v5803 = vrcp.pop %v5802
    %v5804 = vmul.f32 %v5802, %v5803
    %v5805 = vsub.f32 1.0, %v5804
    %v5806 = vmul.f32 %v5803, %v5805
    %v5807 = vadd.f32 %v5803, %v5806
    %vm5808 = vweird.f32 %v5802
    %vm5809 = vweird.f32 %v5803
    %vm5810 = vmor %vm5808, %vm5809
    %v5811 = vsel %vm5810, %v5803, %v5807
    %v5812 = vand.u32 2147483647, %v5802
    %vm5813 = vcmp.eq.f32.partialorder %v5812, 8.507059e+37
    %v5814 = vand.u32 %v5802, 2147483648
    %v5815 = vor.u32 1.1754944e-38, %v5814
    %v5816 = vsel %vm5813, %v5815, %v5811
    %v5817 = vmul.f32 1.0, %v5816
    %v5818 = vtanh.pop %v5797
    %v5819 = vmul.f32 %v5817, %v5699
    %5821 = vrot.lane.b32.xlu0 %v5818, 96
    %v5822 = vpop.permute.xlu0 %5821
    %v5824 = vmul.f32 %v5817, %v5822
    %5826 = vrot.lane.b32.xlu0 %v5824, 16
    %v5827 = vpop.permute.xlu0 %5826
    %v5829 = vadd.f32 %v5819, %v5827
    %v5830 = vtanh.pop %v5829
    %5832 = vrot.lane.b32.xlu0 %v5830, 32
    %v5833 = vpop.permute.xlu0 %5832
    %v5835 = vmul.f32 %v5817, %v5833
    %v5836 = vld [vmem:[#allocation2 + $0xa] sm:$0x3]
    %v5837 = vsel %vm4605, %v5769, 0
    %5839 = vmatpush.msra.mxu0 0.0
    %5840 = vmatpush.msra.mxu0 0.0
    %5841 = vmatpush.msra.mxu0 0.0
    %5842 = vmatpush.msra.mxu0 0.0
    %5843 = vmatpush.msra.mxu0 0.0
    %5844 = vmatpush.msra.mxu0 0.0
    %5845 = vmatpush.msra.mxu0 0.0
    %5846 = vmatpush.msra.mxu0 0.0
    %5847 = vmatpush.msra.mxu0 0.0
    %5848 = vmatpush.msra.mxu0 0.0
    %5849 = vmatpush.msra.mxu0 0.0
    %5850 = vmatpush.msra.mxu0 0.0
    %5851 = vmatpush.msra.mxu0 0.0
    %5852 = vmatpush.msra.mxu0 0.0
    %5853 = vmatpush.msra.mxu0 %v5180
    %5854 = vmatpush.msra.mxu0 %v5179
    %5855 = vmatmul.f32.gmra.mxu0 %v5837
    %v5856 = vpop.f32.mrf.mxu0
    %v5857 = vadd.f32 0.0, %v5856
    %5858 = vdwg.mxu0
    %v5859 = vadd.f32 %v5836, %v5857
    %v5860 = vxor.u32 %v5859, 2147483648
    %v5861 = vmul.f32 %v5860, 1.442695
    %v5862 = vpow.pop %v5861
    %v5863 = vadd.f32 %v5862, 1.0
    %v5864 = vrcp.pop %v5863
    %v5865 = vmul.f32 %v5863, %v5864
    %v5866 = vsub.f32 1.0, %v5865
    %v5867 = vmul.f32 %v5864, %v5866
    %v5868 = vadd.f32 %v5864, %v5867
    %vm5869 = vweird.f32 %v5863
    %vm5870 = vweird.f32 %v5864
    %vm5871 = vmor %vm5869, %vm5870
    %v5872 = vsel %vm5871, %v5864, %v5868
    %v5873 = vand.u32 2147483647, %v5863
    %vm5874 = vcmp.eq.f32.partialorder %v5873, 8.507059e+37
    %v5875 = vand.u32 %v5863, 2147483648
    %v5876 = vor.u32 1.1754944e-38, %v5875
    %v5877 = vsel %vm5874, %v5876, %v5872
    %v5878 = vmul.f32 1.0, %v5877
    %v5879 = vtanh.pop %v5859
    %v5880 = vmul.f32 %v5878, %v5760
    %5882 = vrot.lane.b32.xlu0 %v5879, 96
    %v5883 = vpop.permute.xlu0 %5882
    %v5885 = vmul.f32 %v5878, %v5883
    %5887 = vrot.lane.b32.xlu0 %v5885, 16
    %v5888 = vpop.permute.xlu0 %5887
    %v5890 = vadd.f32 %v5880, %v5888
    %v5891 = vtanh.pop %v5890
    %5893 = vrot.lane.b32.xlu0 %v5891, 32
    %v5894 = vpop.permute.xlu0 %5893
    %v5896 = vmul.f32 %v5878, %v5894
    %5898 = vrot.lane.b32.xlu0 %v5896, 80
    %v5899 = vpop.permute.xlu0 %5898
    %5902 = vrot.lane.b32.xlu0 %v5835, 96
    %v5903 = vpop.permute.xlu0 %5902
    %v5905 = vsel %vm4605, %v5899, %v5903
    %v5907 = vsel %vm4638, %v5905, 0
    %5909 = vmatpush.msra.mxu0 0.0
    %5910 = vmatpush.msra.mxu0 0.0
    %5911 = vmatpush.msra.mxu0 0.0
    %5912 = vmatpush.msra.mxu0 0.0
    %5913 = vmatpush.msra.mxu0 0.0
    %5914 = vmatpush.msra.mxu0 0.0
    %5915 = vmatpush.msra.mxu0 0.0
    %5916 = vmatpush.msra.mxu0 0.0
    %5917 = vmatpush.msra.mxu0 0.0
    %5918 = vmatpush.msra.mxu0 0.0
    %5919 = vmatpush.msra.mxu0 0.0
    %5920 = vmatpush.msra.mxu0 0.0
    %5921 = vmatpush.msra.mxu0 %v5184
    %5922 = vmatpush.msra.mxu0 %v5183
    %5923 = vmatpush.msra.mxu0 %v5182
    %5924 = vmatpush.msra.mxu0 %v5181
    %5925 = vmatmul.f32.gmra.mxu0 %v5907
    %v5926 = vpop.f32.mrf.mxu0
    %v5927 = vadd.f32 %v5254, %v5926
    %5928 = vdwg.mxu0
    %v5929 = vxor.u32 %v5927, 2147483648
    %v5930 = vmul.f32 %v5929, 1.442695
    %v5931 = vpow.pop %v5930
    %v5932 = vadd.f32 %v5931, 1.0
    %v5933 = vrcp.pop %v5932
    %v5934 = vmul.f32 %v5932, %v5933
    %v5935 = vsub.f32 1.0, %v5934
    %v5936 = vmul.f32 %v5933, %v5935
    %v5937 = vadd.f32 %v5933, %v5936
    %vm5938 = vweird.f32 %v5932
    %vm5939 = vweird.f32 %v5933
    %vm5940 = vmor %vm5938, %vm5939
    %v5941 = vsel %vm5940, %v5933, %v5937
    %v5942 = vand.u32 2147483647, %v5932
    %vm5943 = vcmp.eq.f32.partialorder %v5942, 8.507059e+37
    %v5944 = vand.u32 %v5932, 2147483648
    %v5945 = vor.u32 1.1754944e-38, %v5944
    %v5946 = vsel %vm5943, %v5945, %v5941
    %v5947 = vmul.f32 1.0, %v5946
    %v5948 = vtanh.pop %v5927
    %v5949 = vmul.f32 %v5947, %v5829
    %5951 = vrot.lane.b32.xlu0 %v5948, 96
    %v5952 = vpop.permute.xlu0 %5951
    %v5954 = vmul.f32 %v5947, %v5952
    %5956 = vrot.lane.b32.xlu0 %v5954, 16
    %v5957 = vpop.permute.xlu0 %5956
    %v5959 = vadd.f32 %v5949, %v5957
    %v5960 = vtanh.pop %v5959
    %5962 = vrot.lane.b32.xlu0 %v5960, 32
    %v5963 = vpop.permute.xlu0 %5962
    %v5965 = vmul.f32 %v5947, %v5963
    %v5966 = vld [vmem:[#allocation2 + $0xc] sm:$0x3]
    %v5967 = vsel %vm4605, %v5899, 0
    %5969 = vmatpush.msra.mxu0 0.0
    %5970 = vmatpush.msra.mxu0 0.0
    %5971 = vmatpush.msra.mxu0 0.0
    %5972 = vmatpush.msra.mxu0 0.0
    %5973 = vmatpush.msra.mxu0 0.0
    %5974 = vmatpush.msra.mxu0 0.0
    %5975 = vmatpush.msra.mxu0 0.0
    %5976 = vmatpush.msra.mxu0 0.0
    %5977 = vmatpush.msra.mxu0 0.0
    %5978 = vmatpush.msra.mxu0 0.0
    %5979 = vmatpush.msra.mxu0 0.0
    %5980 = vmatpush.msra.mxu0 0.0
    %5981 = vmatpush.msra.mxu0 0.0
    %5982 = vmatpush.msra.mxu0 0.0
    %5983 = vmatpush.msra.mxu0 %v5180
    %5984 = vmatpush.msra.mxu0 %v5179
    %5985 = vmatmul.f32.gmra.mxu0 %v5967
    %v5986 = vpop.f32.mrf.mxu0
    %v5987 = vadd.f32 0.0, %v5986
    %5988 = vdwg.mxu0
    %v5989 = vadd.f32 %v5966, %v5987
    %v5990 = vxor.u32 %v5989, 2147483648
    %v5991 = vmul.f32 %v5990, 1.442695
    %v5992 = vpow.pop %v5991
    %v5993 = vadd.f32 %v5992, 1.0
    %v5994 = vrcp.pop %v5993
    %v5995 = vmul.f32 %v5993, %v5994
    %v5996 = vsub.f32 1.0, %v5995
    %v5997 = vmul.f32 %v5994, %v5996
    %v5998 = vadd.f32 %v5994, %v5997
    %vm5999 = vweird.f32 %v5993
    %vm6000 = vweird.f32 %v5994
    %vm6001 = vmor %vm5999, %vm6000
    %v6002 = vsel %vm6001, %v5994, %v5998
    %v6003 = vand.u32 2147483647, %v5993
    %vm6004 = vcmp.eq.f32.partialorder %v6003, 8.507059e+37
    %v6005 = vand.u32 %v5993, 2147483648
    %v6006 = vor.u32 1.1754944e-38, %v6005
    %v6007 = vsel %vm6004, %v6006, %v6002
    %v6008 = vmul.f32 1.0, %v6007
    %v6009 = vtanh.pop %v5989
    %v6010 = vmul.f32 %v6008, %v5890
    %6012 = vrot.lane.b32.xlu0 %v6009, 96
    %v6013 = vpop.permute.xlu0 %6012
    %v6015 = vmul.f32 %v6008, %v6013
    %6017 = vrot.lane.b32.xlu0 %v6015, 16
    %v6018 = vpop.permute.xlu0 %6017
    %v6020 = vadd.f32 %v6010, %v6018
    %v6021 = vtanh.pop %v6020
    %6023 = vrot.lane.b32.xlu0 %v6021, 32
    %v6024 = vpop.permute.xlu0 %6023
    %v6026 = vmul.f32 %v6008, %v6024
    %6028 = vrot.lane.b32.xlu0 %v6026, 80
    %v6029 = vpop.permute.xlu0 %6028
    %6032 = vrot.lane.b32.xlu0 %v5965, 96
    %v6033 = vpop.permute.xlu0 %6032
    %v6035 = vsel %vm4605, %v6029, %v6033
    %v6037 = vsel %vm4638, %v6035, 0
    %6039 = vmatpush.msra.mxu0 0.0
    %6040 = vmatpush.msra.mxu0 0.0
    %6041 = vmatpush.msra.mxu0 0.0
    %6042 = vmatpush.msra.mxu0 0.0
    %6043 = vmatpush.msra.mxu0 0.0
    %6044 = vmatpush.msra.mxu0 0.0
    %6045 = vmatpush.msra.mxu0 0.0
    %6046 = vmatpush.msra.mxu0 0.0
    %6047 = vmatpush.msra.mxu0 0.0
    %6048 = vmatpush.msra.mxu0 0.0
    %6049 = vmatpush.msra.mxu0 0.0
    %6050 = vmatpush.msra.mxu0 0.0
    %6051 = vmatpush.msra.mxu0 %v5184
    %6052 = vmatpush.msra.mxu0 %v5183
    %6053 = vmatpush.msra.mxu0 %v5182
    %6054 = vmatpush.msra.mxu0 %v5181
    %6055 = vmatmul.f32.gmra.mxu0 %v6037
    %v6056 = vpop.f32.mrf.mxu0
    %v6057 = vadd.f32 %v5254, %v6056
    %6058 = vdwg.mxu0
    %v6059 = vxor.u32 %v6057, 2147483648
    %v6060 = vmul.f32 %v6059, 1.442695
    %v6061 = vpow.pop %v6060
    %v6062 = vadd.f32 %v6061, 1.0
    %v6063 = vrcp.pop %v6062
    %v6064 = vmul.f32 %v6062, %v6063
    %v6065 = vsub.f32 1.0, %v6064
    %v6066 = vmul.f32 %v6063, %v6065
    %v6067 = vadd.f32 %v6063, %v6066
    %vm6068 = vweird.f32 %v6062
    %vm6069 = vweird.f32 %v6063
    %vm6070 = vmor %vm6068, %vm6069
    %v6071 = vsel %vm6070, %v6063, %v6067
    %v6072 = vand.u32 2147483647, %v6062
    %vm6073 = vcmp.eq.f32.partialorder %v6072, 8.507059e+37
    %v6074 = vand.u32 %v6062, 2147483648
    %v6075 = vor.u32 1.1754944e-38, %v6074
    %v6076 = vsel %vm6073, %v6075, %v6071
    %v6077 = vmul.f32 1.0, %v6076
    %v6078 = vtanh.pop %v6057
    %v6079 = vmul.f32 %v6077, %v5959
    %6081 = vrot.lane.b32.xlu0 %v6078, 96
    %v6082 = vpop.permute.xlu0 %6081
    %v6084 = vmul.f32 %v6077, %v6082
    %6086 = vrot.lane.b32.xlu0 %v6084, 16
    %v6087 = vpop.permute.xlu0 %6086
    %v6089 = vadd.f32 %v6079, %v6087
    %v6090 = vtanh.pop %v6089
    %6092 = vrot.lane.b32.xlu0 %v6090, 32
    %v6093 = vpop.permute.xlu0 %6092
    %v6095 = vmul.f32 %v6077, %v6093
    %v6096 = vld [vmem:[#allocation2 + $0xe] sm:$0x3]
    %v6097 = vsel %vm4605, %v6029, 0
    %6099 = vmatpush.msra.mxu0 0.0
    %6100 = vmatpush.msra.mxu0 0.0
    %6101 = vmatpush.msra.mxu0 0.0
    %6102 = vmatpush.msra.mxu0 0.0
    %6103 = vmatpush.msra.mxu0 0.0
    %6104 = vmatpush.msra.mxu0 0.0
    %6105 = vmatpush.msra.mxu0 0.0
    %6106 = vmatpush.msra.mxu0 0.0
    %6107 = vmatpush.msra.mxu0 0.0
    %6108 = vmatpush.msra.mxu0 0.0
    %6109 = vmatpush.msra.mxu0 0.0
    %6110 = vmatpush.msra.mxu0 0.0
    %6111 = vmatpush.msra.mxu0 0.0
    %6112 = vmatpush.msra.mxu0 0.0
    %6113 = vmatpush.msra.mxu0 %v5180
    %6114 = vmatpush.msra.mxu0 %v5179
    %6115 = vmatmul.f32.gmra.mxu0 %v6097
    %v6116 = vpop.f32.mrf.mxu0
    %v6117 = vadd.f32 0.0, %v6116
    %6118 = vdwg.mxu0
    %v6119 = vadd.f32 %v6096, %v6117
    %v6120 = vxor.u32 %v6119, 2147483648
    %v6121 = vmul.f32 %v6120, 1.442695
    %v6122 = vpow.pop %v6121
    %v6123 = vadd.f32 %v6122, 1.0
    %v6124 = vrcp.pop %v6123
    %v6125 = vmul.f32 %v6123, %v6124
    %v6126 = vsub.f32 1.0, %v6125
    %v6127 = vmul.f32 %v6124, %v6126
    %v6128 = vadd.f32 %v6124, %v6127
    %vm6129 = vweird.f32 %v6123
    %vm6130 = vweird.f32 %v6124
    %vm6131 = vmor %vm6129, %vm6130
    %v6132 = vsel %vm6131, %v6124, %v6128
    %v6133 = vand.u32 2147483647, %v6123
    %vm6134 = vcmp.eq.f32.partialorder %v6133, 8.507059e+37
    %v6135 = vand.u32 %v6123, 2147483648
    %v6136 = vor.u32 1.1754944e-38, %v6135
    %v6137 = vsel %vm6134, %v6136, %v6132
    %v6138 = vmul.f32 1.0, %v6137
    %v6139 = vtanh.pop %v6119
    %v6140 = vmul.f32 %v6138, %v6020
    %6142 = vrot.lane.b32.xlu0 %v6139, 96
    %v6143 = vpop.permute.xlu0 %6142
    %v6145 = vmul.f32 %v6138, %v6143
    %6147 = vrot.lane.b32.xlu0 %v6145, 16
    %v6148 = vpop.permute.xlu0 %6147
    %v6150 = vadd.f32 %v6140, %v6148
    %v6151 = vtanh.pop %v6150
    %6153 = vrot.lane.b32.xlu0 %v6151, 32
    %v6154 = vpop.permute.xlu0 %6153
    %v6156 = vmul.f32 %v6138, %v6154
    %6158 = vrot.lane.b32.xlu0 %v6156, 80
    %v6159 = vpop.permute.xlu0 %6158
    %6162 = vrot.lane.b32.xlu0 %v6095, 96
    %v6163 = vpop.permute.xlu0 %6162
    %v6165 = vsel %vm4605, %v6159, %v6163
    %v6167 = vsel %vm4638, %v6165, 0
    %6169 = vmatpush.msra.mxu0 0.0
    %6170 = vmatpush.msra.mxu0 0.0
    %6171 = vmatpush.msra.mxu0 0.0
    %6172 = vmatpush.msra.mxu0 0.0
    %6173 = vmatpush.msra.mxu0 0.0
    %6174 = vmatpush.msra.mxu0 0.0
    %6175 = vmatpush.msra.mxu0 0.0
    %6176 = vmatpush.msra.mxu0 0.0
    %6177 = vmatpush.msra.mxu0 0.0
    %6178 = vmatpush.msra.mxu0 0.0
    %6179 = vmatpush.msra.mxu0 0.0
    %6180 = vmatpush.msra.mxu0 0.0
    %6181 = vmatpush.msra.mxu0 %v5184
    %6182 = vmatpush.msra.mxu0 %v5183
    %6183 = vmatpush.msra.mxu0 %v5182
    %6184 = vmatpush.msra.mxu0 %v5181
    %6185 = vmatmul.f32.gmra.mxu0 %v6167
    %v6186 = vpop.f32.mrf.mxu0
    %v6187 = vadd.f32 %v5254, %v6186
    %6188 = vdwg.mxu0
    %v6189 = vxor.u32 %v6187, 2147483648
    %v6190 = vmul.f32 %v6189, 1.442695
    %v6191 = vpow.pop %v6190
    %v6192 = vadd.f32 %v6191, 1.0
    %v6193 = vrcp.pop %v6192
    %v6194 = vmul.f32 %v6192, %v6193
    %v6195 = vsub.f32 1.0, %v6194
    %v6196 = vmul.f32 %v6193, %v6195
    %v6197 = vadd.f32 %v6193, %v6196
    %vm6198 = vweird.f32 %v6192
    %vm6199 = vweird.f32 %v6193
    %vm6200 = vmor %vm6198, %vm6199
    %v6201 = vsel %vm6200, %v6193, %v6197
    %v6202 = vand.u32 2147483647, %v6192
    %vm6203 = vcmp.eq.f32.partialorder %v6202, 8.507059e+37
    %v6204 = vand.u32 %v6192, 2147483648
    %v6205 = vor.u32 1.1754944e-38, %v6204
    %v6206 = vsel %vm6203, %v6205, %v6201
    %v6207 = vmul.f32 1.0, %v6206
    %v6208 = vtanh.pop %v6187
    %v6209 = vmul.f32 %v6207, %v6089
    %6211 = vrot.lane.b32.xlu0 %v6208, 96
    %v6212 = vpop.permute.xlu0 %6211
    %v6214 = vmul.f32 %v6207, %v6212
    %6216 = vrot.lane.b32.xlu0 %v6214, 16
    %v6217 = vpop.permute.xlu0 %6216
    %v6219 = vadd.f32 %v6209, %v6217
    %v6220 = vtanh.pop %v6219
    %6222 = vrot.lane.b32.xlu0 %v6220, 32
    %v6223 = vpop.permute.xlu0 %6222
    %v6225 = vmul.f32 %v6207, %v6223
    %6227 = vrot.lane.b32.xlu0 %v6225, 112
    %v6228 = vpop.permute.xlu0 %6227
    %6231 = vrot.lane.b32.xlu0 %v6219, 32
    %v6232 = vpop.permute.xlu0 %6231
    %v6234 = vsel %vm4605, %v6159, %v6150
    %v6235 = vsel %vm4638, %v6234, %v6228
    %v6236 = vsel %vm4672, %v6235, %v6232
    %v6237 = vtanh.pop %v6236
    %v6238 = vld [vmem:[%s15] sm:$0xff]
    %v6239 = vld [vmem:[%s15 + $0x8] sm:$0xff]
    %v6240 = vld [vmem:[%s15 + $0x10] sm:$0xff]
    %v6241 = vld [vmem:[%s15 + $0x18] sm:$0xff]
    %v6242 = vld [vmem:[%s15 + $0x20] sm:$0xff]
    %v6243 = vld [vmem:[%s15 + $0x28] sm:$0xff]
    %v6244 = vld [vmem:[%s15 + $0x30] sm:$0xff]
    %v6245 = vld [vmem:[%s15 + $0x38] sm:$0xff]
    %v6246 = vld [vmem:[%s16] sm:$0x1]
    %v6248 = vperm.slane %v6246, 0
    %v6251 = vsel %vm4706, %v6237, 0
    %6253 = vmatpush.msra.mxu0 0.0
    %6254 = vmatpush.msra.mxu0 0.0
    %6255 = vmatpush.msra.mxu0 0.0
    %6256 = vmatpush.msra.mxu0 0.0
    %6257 = vmatpush.msra.mxu0 0.0
    %6258 = vmatpush.msra.mxu0 0.0
    %6259 = vmatpush.msra.mxu0 0.0
    %6260 = vmatpush.msra.mxu0 0.0
    %6261 = vmatpush.msra.mxu0 %v6245
    %6262 = vmatpush.msra.mxu0 %v6244
    %6263 = vmatpush.msra.mxu0 %v6243
    %6264 = vmatpush.msra.mxu0 %v6242
    %6265 = vmatpush.msra.mxu0 %v6241
    %6266 = vmatpush.msra.mxu0 %v6240
    %6267 = vmatpush.msra.mxu0 %v6239
    %6268 = vmatpush.msra.mxu0 %v6238
    %6269 = vmatmul.f32.gmra.mxu0 %v6251
    %v6270 = vpop.f32.mrf.mxu0
    %v6271 = vadd.f32 %v6248, %v6270
    %6272 = vdwg.mxu0
    %v6273 = vld [vmem:[%s17] sm:$0xff]
    %v6274 = vld [vmem:[%s17 + $0x8] sm:$0xff]
    %v6275 = vld [vmem:[%s17 + $0x10] sm:$0xff]
    %v6276 = vld [vmem:[%s17 + $0x18] sm:$0xff]
    %v6277 = vld [vmem:[%s17 + $0x20] sm:$0xff]
    %v6278 = vld [vmem:[%s17 + $0x28] sm:$0xff]
    %v6279 = vld [vmem:[%s17 + $0x30] sm:$0xff]
    %v6280 = vld [vmem:[%s17 + $0x38] sm:$0xff]
    %v6281 = vld [vmem:[%s17 + $0x40] sm:$0xff]
    %v6282 = vld [vmem:[%s17 + $0x48] sm:$0xff]
    %v6283 = vld [vmem:[%s17 + $0x50] sm:$0xff]
    %v6284 = vld [vmem:[%s17 + $0x58] sm:$0xff]
    %v6285 = vld [vmem:[%s17 + $0x60] sm:$0xff]
    %v6286 = vld [vmem:[%s17 + $0x68] sm:$0xff]
    %v6287 = vld [vmem:[%s17 + $0x70] sm:$0xff]
    %v6288 = vld [vmem:[%s17 + $0x78] sm:$0xff]
    %v6289 = vld [vmem:[%s18] sm:$0xf]
    %v6291 = vperm.slane %v6289, 0
    %v6292 = vperm.slane %v6289, 1
    %v6293 = vperm.slane %v6289, 2
    %v6294 = vperm.slane %v6289, 3
    %v6300 = vsel %vm4638, %v5137, 0
    %6302 = vmatpush.msra.mxu0 0.0
    %6303 = vmatpush.msra.mxu0 0.0
    %6304 = vmatpush.msra.mxu0 0.0
    %6305 = vmatpush.msra.mxu0 0.0
    %6306 = vmatpush.msra.mxu0 0.0
    %6307 = vmatpush.msra.mxu0 0.0
    %6308 = vmatpush.msra.mxu0 0.0
    %6309 = vmatpush.msra.mxu0 0.0
    %6310 = vmatpush.msra.mxu0 0.0
    %6311 = vmatpush.msra.mxu0 0.0
    %6312 = vmatpush.msra.mxu0 0.0
    %6313 = vmatpush.msra.mxu0 0.0
    %6314 = vmatpush.msra.mxu0 %v6285
    %6315 = vmatpush.msra.mxu0 %v6281
    %6316 = vmatpush.msra.mxu0 %v6277
    %6317 = vmatpush.msra.mxu0 %v6273
    %6318 = vmatmul.f32.gmra.mxu0 %v6300
    %v6319 = vpop.f32.mrf.mxu0
    %v6320 = vadd.f32 %v6291, %v6319
    %6321 = vdwg.mxu0
    %6322 = vmatpush.msra.mxu0 0.0
    %6323 = vmatpush.msra.mxu0 0.0
    %6324 = vmatpush.msra.mxu0 0.0
    %6325 = vmatpush.msra.mxu0 0.0
    %6326 = vmatpush.msra.mxu0 0.0
    %6327 = vmatpush.msra.mxu0 0.0
    %6328 = vmatpush.msra.mxu0 0.0
    %6329 = vmatpush.msra.mxu0 0.0
    %6330 = vmatpush.msra.mxu0 0.0
    %6331 = vmatpush.msra.mxu0 0.0
    %6332 = vmatpush.msra.mxu0 0.0
    %6333 = vmatpush.msra.mxu0 0.0
    %6334 = vmatpush.msra.mxu0 %v6286
    %6335 = vmatpush.msra.mxu0 %v6282
    %6336 = vmatpush.msra.mxu0 %v6278
    %6337 = vmatpush.msra.mxu0 %v6274
    %6338 = vmatmul.f32.gmra.mxu0 %v6300
    %v6339 = vpop.f32.mrf.mxu0
    %v6340 = vadd.f32 %v6292, %v6339
    %6341 = vdwg.mxu0
    %6342 = vmatpush.msra.mxu0 0.0
    %6343 = vmatpush.msra.mxu0 0.0
    %6344 = vmatpush.msra.mxu0 0.0
    %6345 = vmatpush.msra.mxu0 0.0
    %6346 = vmatpush.msra.mxu0 0.0
    %6347 = vmatpush.msra.mxu0 0.0
    %6348 = vmatpush.msra.mxu0 0.0
    %6349 = vmatpush.msra.mxu0 0.0
    %6350 = vmatpush.msra.mxu0 0.0
    %6351 = vmatpush.msra.mxu0 0.0
    %6352 = vmatpush.msra.mxu0 0.0
    %6353 = vmatpush.msra.mxu0 0.0
    %6354 = vmatpush.msra.mxu0 %v6287
    %6355 = vmatpush.msra.mxu0 %v6283
    %6356 = vmatpush.msra.mxu0 %v6279
    %6357 = vmatpush.msra.mxu0 %v6275
    %6358 = vmatmul.f32.gmra.mxu0 %v6300
    %v6359 = vpop.f32.mrf.mxu0
    %v6360 = vadd.f32 %v6293, %v6359
    %6361 = vdwg.mxu0
    %6362 = vmatpush.msra.mxu0 0.0
    %6363 = vmatpush.msra.mxu0 0.0
    %6364 = vmatpush.msra.mxu0 0.0
    %6365 = vmatpush.msra.mxu0 0.0
    %6366 = vmatpush.msra.mxu0 0.0
    %6367 = vmatpush.msra.mxu0 0.0
    %6368 = vmatpush.msra.mxu0 0.0
    %6369 = vmatpush.msra.mxu0 0.0
    %6370 = vmatpush.msra.mxu0 0.0
    %6371 = vmatpush.msra.mxu0 0.0
    %6372 = vmatpush.msra.mxu0 0.0
    %6373 = vmatpush.msra.mxu0 0.0
    %6374 = vmatpush.msra.mxu0 %v6288
    %6375 = vmatpush.msra.mxu0 %v6284
    %6376 = vmatpush.msra.mxu0 %v6280
    %6377 = vmatpush.msra.mxu0 %v6276
    %6378 = vmatmul.f32.gmra.mxu0 %v6300
    %v6379 = vpop.f32.mrf.mxu0
    %v6380 = vadd.f32 %v6294, %v6379
    %6381 = vdwg.mxu0
    %v6382 = vld [vmem:[%s21] sm:$0xf]
    %v6383 = vld [vmem:[#allocation7] sm:$0x1]
    %v6384 = vld [vmem:[%s19] sm:$0xff]
    %v6385 = vld [vmem:[%s19 + $0x8] sm:$0xff]
    %v6386 = vld [vmem:[%s19 + $0x10] sm:$0xff]
    %v6387 = vld [vmem:[%s19 + $0x18] sm:$0xff]
    %v6388 = vld [vmem:[%s19 + $0x20] sm:$0xff]
    %v6389 = vld [vmem:[%s19 + $0x28] sm:$0xff]
    %v6390 = vld [vmem:[%s19 + $0x30] sm:$0xff]
    %v6391 = vld [vmem:[%s19 + $0x38] sm:$0xff]
    %v6392 = vld [vmem:[%s19 + $0x40] sm:$0xff]
    %v6393 = vld [vmem:[%s19 + $0x48] sm:$0xff]
    %v6394 = vld [vmem:[%s19 + $0x50] sm:$0xff]
    %v6395 = vld [vmem:[%s19 + $0x58] sm:$0xff]
    %v6396 = vld [vmem:[%s19 + $0x60] sm:$0xff]
    %v6397 = vld [vmem:[%s19 + $0x68] sm:$0xff]
    %v6398 = vld [vmem:[%s19 + $0x70] sm:$0xff]
    %v6399 = vld [vmem:[%s19 + $0x78] sm:$0xff]
    %v6400 = vld [vmem:[%s20] sm:$0xf]
    %v6402 = vperm.slane %v6400, 0
    %v6403 = vperm.slane %v6400, 1
    %v6404 = vperm.slane %v6400, 2
    %v6405 = vperm.slane %v6400, 3
    %v6411 = vsel %vm4638, %v6271, 0
    %6413 = vmatpush.msra.mxu0 0.0
    %6414 = vmatpush.msra.mxu0 0.0
    %6415 = vmatpush.msra.mxu0 0.0
    %6416 = vmatpush.msra.mxu0 0.0
    %6417 = vmatpush.msra.mxu0 0.0
    %6418 = vmatpush.msra.mxu0 0.0
    %6419 = vmatpush.msra.mxu0 0.0
    %6420 = vmatpush.msra.mxu0 0.0
    %6421 = vmatpush.msra.mxu0 0.0
    %6422 = vmatpush.msra.mxu0 0.0
    %6423 = vmatpush.msra.mxu0 0.0
    %6424 = vmatpush.msra.mxu0 0.0
    %6425 = vmatpush.msra.mxu0 %v6396
    %6426 = vmatpush.msra.mxu0 %v6392
    %6427 = vmatpush.msra.mxu0 %v6388
    %6428 = vmatpush.msra.mxu0 %v6384
    %6429 = vmatmul.f32.gmra.mxu0 %v6411
    %v6430 = vpop.f32.mrf.mxu0
    %v6431 = vadd.f32 %v6402, %v6430
    %6432 = vdwg.mxu0
    %6433 = vmatpush.msra.mxu0 0.0
    %6434 = vmatpush.msra.mxu0 0.0
    %6435 = vmatpush.msra.mxu0 0.0
    %6436 = vmatpush.msra.mxu0 0.0
    %6437 = vmatpush.msra.mxu0 0.0
    %6438 = vmatpush.msra.mxu0 0.0
    %6439 = vmatpush.msra.mxu0 0.0
    %6440 = vmatpush.msra.mxu0 0.0
    %6441 = vmatpush.msra.mxu0 0.0
    %6442 = vmatpush.msra.mxu0 0.0
    %6443 = vmatpush.msra.mxu0 0.0
    %6444 = vmatpush.msra.mxu0 0.0
    %6445 = vmatpush.msra.mxu0 %v6397
    %6446 = vmatpush.msra.mxu0 %v6393
    %6447 = vmatpush.msra.mxu0 %v6389
    %6448 = vmatpush.msra.mxu0 %v6385
    %6449 = vmatmul.f32.gmra.mxu0 %v6411
    %v6450 = vpop.f32.mrf.mxu0
    %v6451 = vadd.f32 %v6403, %v6450
    %6452 = vdwg.mxu0
    %6453 = vmatpush.msra.mxu0 0.0
    %6454 = vmatpush.msra.mxu0 0.0
    %6455 = vmatpush.msra.mxu0 0.0
    %6456 = vmatpush.msra.mxu0 0.0
    %6457 = vmatpush.msra.mxu0 0.0
    %6458 = vmatpush.msra.mxu0 0.0
    %6459 = vmatpush.msra.mxu0 0.0
    %6460 = vmatpush.msra.mxu0 0.0
    %6461 = vmatpush.msra.mxu0 0.0
    %6462 = vmatpush.msra.mxu0 0.0
    %6463 = vmatpush.msra.mxu0 0.0
    %6464 = vmatpush.msra.mxu0 0.0
    %6465 = vmatpush.msra.mxu0 %v6398
    %6466 = vmatpush.msra.mxu0 %v6394
    %6467 = vmatpush.msra.mxu0 %v6390
    %6468 = vmatpush.msra.mxu0 %v6386
    %6469 = vmatmul.f32.gmra.mxu0 %v6411
    %v6470 = vpop.f32.mrf.mxu0
    %v6471 = vadd.f32 %v6404, %v6470
    %6472 = vdwg.mxu0
    %6473 = vmatpush.msra.mxu0 0.0
    %6474 = vmatpush.msra.mxu0 0.0
    %6475 = vmatpush.msra.mxu0 0.0
    %6476 = vmatpush.msra.mxu0 0.0
    %6477 = vmatpush.msra.mxu0 0.0
    %6478 = vmatpush.msra.mxu0 0.0
    %6479 = vmatpush.msra.mxu0 0.0
    %6480 = vmatpush.msra.mxu0 0.0
    %6481 = vmatpush.msra.mxu0 0.0
    %6482 = vmatpush.msra.mxu0 0.0
    %6483 = vmatpush.msra.mxu0 0.0
    %6484 = vmatpush.msra.mxu0 0.0
    %6485 = vmatpush.msra.mxu0 %v6399
    %6486 = vmatpush.msra.mxu0 %v6395
    %6487 = vmatpush.msra.mxu0 %v6391
    %6488 = vmatpush.msra.mxu0 %v6387
    %6489 = vmatmul.f32.gmra.mxu0 %v6411
    %v6490 = vpop.f32.mrf.mxu0
    %v6491 = vadd.f32 %v6405, %v6490
    %6492 = vdwg.mxu0
    %v6497 = vrot.slane %v6451, 7
    %v6498 = vrot.slane %v6471, 6
    %v6499 = vrot.slane %v6491, 5
    %vm6500 = vcmask 1040384
    %v6501 = vsel %vm6500, %v6431, %v6497
    %vm6502 = vcmask 1042434
    %v6503 = vsel %vm6502, %v6498, %v6499
    %vm6504 = vcmask 1041408
    %v6505 = vsel %vm6504, %v6501, %v6503
    %vm6506 = vcmask 1041409
    %v6507 = vsel %vm6506, %v6431, %v6497
    %vm6508 = vcmask 1043459
    %v6509 = vsel %vm6508, %v6498, %v6499
    %vm6510 = vcmask 1042433
    %v6511 = vsel %vm6510, %v6507, %v6509
    %v6512 = vrot.slane %v6511, 1
    %v6513 = vperm.slane %v6505, 0
    %v6514 = vperm.slane %v6505, 1
    %v6515 = vperm.slane %v6505, 2
    %v6516 = vperm.slane %v6505, 3
    %v6517 = vperm.slane %v6512, 0
    %v6518 = vperm.slane %v6512, 1
    %v6519 = vperm.slane %v6512, 2
    %v6520 = vperm.slane %v6512, 3
    %v6529 = vadd.f32 %v6320, %v6513
    %v6530 = vadd.f32 %v6340, %v6514
    %v6531 = vadd.f32 %v6360, %v6515
    %v6532 = vadd.f32 %v6380, %v6516
    %v6533 = vadd.f32 %v6320, %v6517
    %v6534 = vadd.f32 %v6340, %v6518
    %v6535 = vadd.f32 %v6360, %v6519
    %v6536 = vadd.f32 %v6380, %v6520
    %v6537 = vtanh.pop %v6529
    %v6538 = vtanh.pop %v6530
    %v6539 = vtanh.pop %v6531
    %v6540 = vtanh.pop %v6532
    %v6541 = vtanh.pop %v6533
    %v6542 = vtanh.pop %v6534
    %v6543 = vtanh.pop %v6535
    %v6544 = vtanh.pop %v6536
    %v6546 = vperm.slane %v6382, 0
    %v6547 = vperm.slane %v6382, 1
    %v6548 = vperm.slane %v6382, 2
    %v6549 = vperm.slane %v6382, 3
    %v6554 = vmul.f32 %v6537, %v6546
    %v6555 = vmul.f32 %v6538, %v6547
    %v6556 = vmul.f32 %v6539, %v6548
    %v6557 = vmul.f32 %v6540, %v6549
    %v6558 = vmul.f32 %v6541, %v6546
    %v6559 = vmul.f32 %v6542, %v6547
    %v6560 = vmul.f32 %v6543, %v6548
    %v6561 = vmul.f32 %v6544, %v6549
    %v6562 = vsel %vm6504, %v6554, 0.0
    %v6563 = vsel %vm6504, %v6555, 0.0
    %v6564 = vadd.f32 %v6562, %v6563
    %v6565 = vsel %vm6504, %v6556, 0.0
    %v6566 = vadd.f32 %v6564, %v6565
    %v6567 = vsel %vm6504, %v6557, 0.0
    %v6568 = vadd.f32 %v6566, %v6567
    %6569 = vadd.xlane.f32.xlu0 %v6568
    %v6570 = vpop.xlane.xlu0 %6569
    %v6571 = vsel %vm6504, %v6558, 0.0
    %v6572 = vsel %vm6504, %v6559, 0.0
    %v6573 = vadd.f32 %v6571, %v6572
    %v6574 = vsel %vm6504, %v6560, 0.0
    %v6575 = vadd.f32 %v6573, %v6574
    %v6576 = vsel %vm6504, %v6561, 0.0
    %v6577 = vadd.f32 %v6575, %v6576
    %6578 = vadd.xlane.f32.xlu0 %v6577
    %v6579 = vpop.xlane.xlu0 %6578
    %v6581 = vperm.slane %v6383, 0
    %6582 = vset.pattern.permute.xlu0 0
    %6583 = vperm.xlu0 %6582, %v6581
    %v6584 = vpop.permute.xlu0 %6583
    %v6586 = vadd.f32 %v6570, %v6584
    %v6587 = vadd.f32 %v6579, %v6584
    %v6590 = vlaneseq
    %v6591 = vand.u32 %v6590, 127
    %v6592 = vperm.slane %v6586, %v6591
    %v6593 = vperm.slane %v6587, %v6591
    %v6594 = vsel %vm6506, %v6593, %v6592
    %vm6596 = vcmask 9216
    %v6597 = vsel %vm6596, %v6594, -inf
    %6598 = vmax.xlane.f32.xlu0 %v6597
    %v6599 = vpop.xlane.xlu0 %6598
    %v6601 = vperm.slane %v6599, 0
    %v6602 = vperm.slane %v6599, 1
    %v6605 = vsub.f32 %v6586, %v6601
    %v6606 = vsub.f32 %v6587, %v6602
    %v6607 = vmul.f32 %v6605, 1.442695
    %v6608 = vpow.pop %v6607
    %v6609 = vmul.f32 %v6606, 1.442695
    %v6610 = vpow.pop %v6609
    %6613 = vset.pattern.permute.xlu0 0
    %6614 = vperm.xlu0 %6613, %v6608
    %v6615 = vpop.permute.xlu0 %6614
    %6616 = vset.pattern.permute.xlu0 0
    %6617 = vperm.xlu0 %6616, %v6610
    %v6618 = vpop.permute.xlu0 %6617
    %v6619 = vperm.slane %v6615, %v6591
    %v6620 = vperm.slane %v6618, %v6591
    %v6621 = vsel %vm6506, %v6620, %v6619
    %v6623 = vsel %vm6596, %v6621, 0.0
    %6624 = vadd.xlane.f32.xlu0 %v6623
    %v6625 = vpop.xlane.xlu0 %6624
    %v6626 = vrcp.pop %v6625
    %v6628 = vperm.slane %v6626, 0
    %v6629 = vperm.slane %v6626, 1
    %v6632 = vmul.f32 %v6608, %v6628
    %v6633 = vmul.f32 %v6610, %v6629
    %6636 = vset.pattern.permute.xlu0 0
    %6637 = vperm.xlu0 %6636, %v6632
    %v6638 = vpop.permute.xlu0 %6637
    %6639 = vset.pattern.permute.xlu0 0
    %6640 = vperm.xlu0 %6639, %v6633
    %v6641 = vpop.permute.xlu0 %6640
    %v6642 = vperm.slane %v6638, %v6591
    %v6643 = vperm.slane %v6641, %v6591
    %v6644 = vsel %vm6506, %v6643, %v6642
    %vm6645 = vcmask 15360
    %v6646 = vsel %vm6645, %v6644, 0
    %v6648 = vsel %vm6504, %v5137, 0
    %6650 = vmatpush.msra.mxu0 0.0
    %6651 = vmatpush.msra.mxu0 0.0
    %6652 = vmatpush.msra.mxu0 0.0
    %6653 = vmatpush.msra.mxu0 0.0
    %6654 = vmatpush.msra.mxu0 0.0
    %6655 = vmatpush.msra.mxu0 0.0
    %6656 = vmatpush.msra.mxu0 0.0
    %6657 = vmatpush.msra.mxu0 0.0
    %6658 = vmatpush.msra.mxu0 0.0
    %6659 = vmatpush.msra.mxu0 0.0
    %6660 = vmatpush.msra.mxu0 0.0
    %6661 = vmatpush.msra.mxu0 0.0
    %6662 = vmatpush.msra.mxu0 0.0
    %6663 = vmatpush.msra.mxu0 0.0
    %6664 = vmatpush.msra.mxu0 0.0
    %6665 = vmatpush.msra.mxu0 %v6648
    %6666 = vmatmul.f32.gmra.mxu0 %v6646
    %v6667 = vpop.f32.mrf.mxu0
    %v6668 = vadd.f32 %v6271, %v6667
    %6669 = vdwg.mxu0
    %v6671 = vsel %vm4638, %v6668, 0
    %6673 = vmatpush.msra.mxu0 0.0
    %6674 = vmatpush.msra.mxu0 0.0
    %6675 = vmatpush.msra.mxu0 0.0
    %6676 = vmatpush.msra.mxu0 0.0
    %6677 = vmatpush.msra.mxu0 0.0
    %6678 = vmatpush.msra.mxu0 0.0
    %6679 = vmatpush.msra.mxu0 0.0
    %6680 = vmatpush.msra.mxu0 0.0
    %6681 = vmatpush.msra.mxu0 0.0
    %6682 = vmatpush.msra.mxu0 0.0
    %6683 = vmatpush.msra.mxu0 0.0
    %6684 = vmatpush.msra.mxu0 0.0
    %6685 = vmatpush.msra.mxu0 %v6396
    %6686 = vmatpush.msra.mxu0 %v6392
    %6687 = vmatpush.msra.mxu0 %v6388
    %6688 = vmatpush.msra.mxu0 %v6384
    %6689 = vmatmul.f32.gmra.mxu0 %v6671
    %v6690 = vpop.f32.mrf.mxu0
    %v6691 = vadd.f32 %v6402, %v6690
    %6692 = vdwg.mxu0
    %6693 = vmatpush.msra.mxu0 0.0
    %6694 = vmatpush.msra.mxu0 0.0
    %6695 = vmatpush.msra.mxu0 0.0
    %6696 = vmatpush.msra.mxu0 0.0
    %6697 = vmatpush.msra.mxu0 0.0
    %6698 = vmatpush.msra.mxu0 0.0
    %6699 = vmatpush.msra.mxu0 0.0
    %6700 = vmatpush.msra.mxu0 0.0
    %6701 = vmatpush.msra.mxu0 0.0
    %6702 = vmatpush.msra.mxu0 0.0
    %6703 = vmatpush.msra.mxu0 0.0
    %6704 = vmatpush.msra.mxu0 0.0
    %6705 = vmatpush.msra.mxu0 %v6397
    %6706 = vmatpush.msra.mxu0 %v6393
    %6707 = vmatpush.msra.mxu0 %v6389
    %6708 = vmatpush.msra.mxu0 %v6385
    %6709 = vmatmul.f32.gmra.mxu0 %v6671
    %v6710 = vpop.f32.mrf.mxu0
    %v6711 = vadd.f32 %v6403, %v6710
    %6712 = vdwg.mxu0
    %6713 = vmatpush.msra.mxu0 0.0
    %6714 = vmatpush.msra.mxu0 0.0
    %6715 = vmatpush.msra.mxu0 0.0
    %6716 = vmatpush.msra.mxu0 0.0
    %6717 = vmatpush.msra.mxu0 0.0
    %6718 = vmatpush.msra.mxu0 0.0
    %6719 = vmatpush.msra.mxu0 0.0
    %6720 = vmatpush.msra.mxu0 0.0
    %6721 = vmatpush.msra.mxu0 0.0
    %6722 = vmatpush.msra.mxu0 0.0
    %6723 = vmatpush.msra.mxu0 0.0
    %6724 = vmatpush.msra.mxu0 0.0
    %6725 = vmatpush.msra.mxu0 %v6398
    %6726 = vmatpush.msra.mxu0 %v6394
    %6727 = vmatpush.msra.mxu0 %v6390
    %6728 = vmatpush.msra.mxu0 %v6386
    %6729 = vmatmul.f32.gmra.mxu0 %v6671
    %v6730 = vpop.f32.mrf.mxu0
    %v6731 = vadd.f32 %v6404, %v6730
    %6732 = vdwg.mxu0
    %6733 = vmatpush.msra.mxu0 0.0
    %6734 = vmatpush.msra.mxu0 0.0
    %6735 = vmatpush.msra.mxu0 0.0
    %6736 = vmatpush.msra.mxu0 0.0
    %6737 = vmatpush.msra.mxu0 0.0
    %6738 = vmatpush.msra.mxu0 0.0
    %6739 = vmatpush.msra.mxu0 0.0
    %6740 = vmatpush.msra.mxu0 0.0
    %6741 = vmatpush.msra.mxu0 0.0
    %6742 = vmatpush.msra.mxu0 0.0
    %6743 = vmatpush.msra.mxu0 0.0
    %6744 = vmatpush.msra.mxu0 0.0
    %6745 = vmatpush.msra.mxu0 %v6399
    %6746 = vmatpush.msra.mxu0 %v6395
    %6747 = vmatpush.msra.mxu0 %v6391
    %6748 = vmatpush.msra.mxu0 %v6387
    %6749 = vmatmul.f32.gmra.mxu0 %v6671
    %v6750 = vpop.f32.mrf.mxu0
    %v6751 = vadd.f32 %v6405, %v6750
    %6752 = vdwg.mxu0
    %v6757 = vrot.slane %v6711, 7
    %v6758 = vrot.slane %v6731, 6
    %v6759 = vrot.slane %v6751, 5
    %v6760 = vsel %vm6500, %v6691, %v6757
    %v6761 = vsel %vm6502, %v6758, %v6759
    %v6762 = vsel %vm6504, %v6760, %v6761
    %v6763 = vsel %vm6506, %v6691, %v6757
    %v6764 = vsel %vm6508, %v6758, %v6759
    %v6765 = vsel %vm6510, %v6763, %v6764
    %v6766 = vrot.slane %v6765, 1
    %v6767 = vperm.slane %v6762, 0
    %v6768 = vperm.slane %v6762, 1
    %v6769 = vperm.slane %v6762, 2
    %v6770 = vperm.slane %v6762, 3
    %v6771 = vperm.slane %v6766, 0
    %v6772 = vperm.slane %v6766, 1
    %v6773 = vperm.slane %v6766, 2
    %v6774 = vperm.slane %v6766, 3
    %v6783 = vadd.f32 %v6320, %v6767
    %v6784 = vadd.f32 %v6340, %v6768
    %v6785 = vadd.f32 %v6360, %v6769
    %v6786 = vadd.f32 %v6380, %v6770
    %v6787 = vadd.f32 %v6320, %v6771
    %v6788 = vadd.f32 %v6340, %v6772
    %v6789 = vadd.f32 %v6360, %v6773
    %v6790 = vadd.f32 %v6380, %v6774
    %v6791 = vtanh.pop %v6783
    %v6792 = vtanh.pop %v6784
    %v6793 = vtanh.pop %v6785
    %v6794 = vtanh.pop %v6786
    %v6795 = vtanh.pop %v6787
    %v6796 = vtanh.pop %v6788
    %v6797 = vtanh.pop %v6789
    %v6798 = vtanh.pop %v6790
    %v6799 = vmul.f32 %v6791, %v6546
    %v6800 = vmul.f32 %v6792, %v6547
    %v6801 = vmul.f32 %v6793, %v6548
    %v6802 = vmul.f32 %v6794, %v6549
    %v6803 = vmul.f32 %v6795, %v6546
    %v6804 = vmul.f32 %v6796, %v6547
    %v6805 = vmul.f32 %v6797, %v6548
    %v6806 = vmul.f32 %v6798, %v6549
    %v6807 = vsel %vm6504, %v6799, 0.0
    %v6808 = vsel %vm6504, %v6800, 0.0
    %v6809 = vadd.f32 %v6807, %v6808
    %v6810 = vsel %vm6504, %v6801, 0.0
    %v6811 = vadd.f32 %v6809, %v6810
    %v6812 = vsel %vm6504, %v6802, 0.0
    %v6813 = vadd.f32 %v6811, %v6812
    %6814 = vadd.xlane.f32.xlu0 %v6813
    %v6815 = vpop.xlane.xlu0 %6814
    %v6816 = vsel %vm6504, %v6803, 0.0
    %v6817 = vsel %vm6504, %v6804, 0.0
    %v6818 = vadd.f32 %v6816, %v6817
    %v6819 = vsel %vm6504, %v6805, 0.0
    %v6820 = vadd.f32 %v6818, %v6819
    %v6821 = vsel %vm6504, %v6806, 0.0
    %v6822 = vadd.f32 %v6820, %v6821
    %6823 = vadd.xlane.f32.xlu0 %v6822
    %v6824 = vpop.xlane.xlu0 %6823
    %v6825 = vadd.f32 %v6815, %v6584
    %v6826 = vadd.f32 %v6824, %v6584
    %v6829 = vperm.slane %v6825, %v6591
    %v6830 = vperm.slane %v6826, %v6591
    %v6831 = vsel %vm6506, %v6830, %v6829
    %v6833 = vsel %vm6596, %v6831, -inf
    %6834 = vmax.xlane.f32.xlu0 %v6833
    %v6835 = vpop.xlane.xlu0 %6834
    %v6837 = vperm.slane %v6835, 0
    %v6838 = vperm.slane %v6835, 1
    %v6841 = vsub.f32 %v6825, %v6837
    %v6842 = vsub.f32 %v6826, %v6838
    %v6843 = vmul.f32 %v6841, 1.442695
    %v6844 = vpow.pop %v6843
    %v6845 = vmul.f32 %v6842, 1.442695
    %v6846 = vpow.pop %v6845
    %6849 = vset.pattern.permute.xlu0 0
    %6850 = vperm.xlu0 %6849, %v6844
    %v6851 = vpop.permute.xlu0 %6850
    %6852 = vset.pattern.permute.xlu0 0
    %6853 = vperm.xlu0 %6852, %v6846
    %v6854 = vpop.permute.xlu0 %6853
    %v6855 = vperm.slane %v6851, %v6591
    %v6856 = vperm.slane %v6854, %v6591
    %v6857 = vsel %vm6506, %v6856, %v6855
    %v6859 = vsel %vm6596, %v6857, 0.0
    %6860 = vadd.xlane.f32.xlu0 %v6859
    %v6861 = vpop.xlane.xlu0 %6860
    %v6862 = vrcp.pop %v6861
    %v6864 = vperm.slane %v6862, 0
    %v6865 = vperm.slane %v6862, 1
    %v6868 = vmul.f32 %v6844, %v6864
    %v6869 = vmul.f32 %v6846, %v6865
    %6872 = vset.pattern.permute.xlu0 0
    %6873 = vperm.xlu0 %6872, %v6868
    %v6874 = vpop.permute.xlu0 %6873
    %6875 = vset.pattern.permute.xlu0 0
    %6876 = vperm.xlu0 %6875, %v6869
    %v6877 = vpop.permute.xlu0 %6876
    %v6878 = vperm.slane %v6874, %v6591
    %v6879 = vperm.slane %v6877, %v6591
    %v6880 = vsel %vm6506, %v6879, %v6878
    %v6881 = vsel %vm6645, %v6880, 0
    %6883 = vmatpush.msra.mxu0 0.0
    %6884 = vmatpush.msra.mxu0 0.0
    %6885 = vmatpush.msra.mxu0 0.0
    %6886 = vmatpush.msra.mxu0 0.0
    %6887 = vmatpush.msra.mxu0 0.0
    %6888 = vmatpush.msra.mxu0 0.0
    %6889 = vmatpush.msra.mxu0 0.0
    %6890 = vmatpush.msra.mxu0 0.0
    %6891 = vmatpush.msra.mxu0 0.0
    %6892 = vmatpush.msra.mxu0 0.0
    %6893 = vmatpush.msra.mxu0 0.0
    %6894 = vmatpush.msra.mxu0 0.0
    %6895 = vmatpush.msra.mxu0 0.0
    %6896 = vmatpush.msra.mxu0 0.0
    %6897 = vmatpush.msra.mxu0 0.0
    %6898 = vmatpush.msra.mxu0 %v6648
    %6899 = vmatmul.f32.gmra.mxu0 %v6881
    %v6900 = vpop.f32.mrf.mxu0
    %v6901 = vadd.f32 %v6668, %v6900
    %6902 = vdwg.mxu0
    %v6903 = vld [vmem:[%s23] sm:$0xff]
    %v6904 = vld [vmem:[%s23 + $0x8] sm:$0xff]
    %v6905 = vld [vmem:[%s23 + $0x10] sm:$0xff]
    %v6906 = vld [vmem:[%s23 + $0x18] sm:$0xff]
    %v6907 = vld [vmem:[%s24] sm:$0x1]
    %v6909 = vperm.slane %v6907, 0
    %v6912 = vsel %vm4638, %v6901, 0
    %6914 = vmatpush.msra.mxu0 0.0
    %6915 = vmatpush.msra.mxu0 0.0
    %6916 = vmatpush.msra.mxu0 0.0
    %6917 = vmatpush.msra.mxu0 0.0
    %6918 = vmatpush.msra.mxu0 0.0
    %6919 = vmatpush.msra.mxu0 0.0
    %6920 = vmatpush.msra.mxu0 0.0
    %6921 = vmatpush.msra.mxu0 0.0
    %6922 = vmatpush.msra.mxu0 0.0
    %6923 = vmatpush.msra.mxu0 0.0
    %6924 = vmatpush.msra.mxu0 0.0
    %6925 = vmatpush.msra.mxu0 0.0
    %6926 = vmatpush.msra.mxu0 %v6906
    %6927 = vmatpush.msra.mxu0 %v6905
    %6928 = vmatpush.msra.mxu0 %v6904
    %6929 = vmatpush.msra.mxu0 %v6903
    %6930 = vmatmul.f32.gmra.mxu0 %v6912
    %v6931 = vpop.f32.mrf.mxu0
    %v6932 = vadd.f32 %v6909, %v6931
    %6933 = vdwg.mxu0
    %vm6934 = vcmask 74752
    %6935 = vst.msk [vmem:[#allocation8] sm:$0x3] %vm6934, %v6932
    %6937 = vst.msk [vmem:[#allocation10] sm:$0x3] %vm6596, %v6644
    %6939 = vst.msk [vmem:[#allocation12] sm:$0x3] %vm6596, %v6880
    // Predicated region
    $region102: #{san_forward.1} parent=1 // pred_check
      _
    $region103: #{san_forward.1} parent=1 // pred_check_branch
      %6941 = sbr.rel (0) target = $region105
    $region104: #{san_forward.1} parent=1 // pred_region
      %6943 = vsyncadd [#allocation9], 0
      %s6945 = sshll.u32 [#allocation8], 4
      %s6946 = int_to_ptr.vmem [resolvable:$true] %s6945
      %s6947 = sshll.u32 %s25, 4
      %s6948 = int_to_ptr.hbm [resolvable:$true] %s6947
      %6950 = dma.vmem_to_hbm [thread:$0]  %s6946, 32, %s6948, [#allocation9]
    $region105: #{san_forward.1} parent=1 // pred_fallthru
      _
    // Predicated region
    $region106: #{san_forward.1} parent=1 // pred_check
      _
    $region107: #{san_forward.1} parent=1 // pred_check_branch
      %6952 = sbr.rel (0) target = $region109
    $region108: #{san_forward.1} parent=1 // pred_region
      %6954 = vsyncadd [#allocation11], 0
      %s6956 = sshll.u32 [#allocation10], 4
      %s6957 = int_to_ptr.vmem [resolvable:$true] %s6956
      %s6958 = sshll.u32 %s26, 4
      %s6959 = int_to_ptr.hbm [resolvable:$true] %s6958
      %6961 = dma.vmem_to_hbm [thread:$0]  %s6957, 32, %s6959, [#allocation11]
    $region109: #{san_forward.1} parent=1 // pred_fallthru
      _
    // Predicated region
    $region110: #{san_forward.1} parent=1 // pred_check
      _
    $region111: #{san_forward.1} parent=1 // pred_check_branch
      %6963 = sbr.rel (0) target = $region113
    $region112: #{san_forward.1} parent=1 // pred_region
      %6965 = vsyncadd [#allocation11], 0
      %s6967 = sshll.u32 [#allocation12], 4
      %s6968 = int_to_ptr.vmem [resolvable:$true] %s6967
      %s6969 = sshll.u32 %s27, 4
      %s6970 = int_to_ptr.hbm [resolvable:$true] %s6969
      %6972 = dma.vmem_to_hbm [thread:$0]  %s6968, 32, %s6970, [#allocation11]
    $region113: #{san_forward.1} parent=1 // pred_fallthru
      _
    // Predicated region
    $region114: #{san_forward.1} parent=1 // pred_check
      _
    $region115: #{san_forward.1} parent=1 // pred_check_branch
      %6974 = sbr.rel (0) target = $region117
    $region116: #{san_forward.1} parent=1 // pred_region
      %6976 = dma.done [#allocation9], 32
    $region117: #{san_forward.1} parent=1 // pred_fallthru
      _
    // Predicated region
    $region118: #{san_forward.1} parent=1 // pred_check
      _
    $region119: #{san_forward.1} parent=1 // pred_check_branch
      %6978 = sbr.rel (0) target = $region121
    $region120: #{san_forward.1} parent=1 // pred_region
      %6980 = dma.done [#allocation11], 32
    $region121: #{san_forward.1} parent=1 // pred_fallthru
      _
    // Predicated region
    $region122: #{san_forward.1} parent=1 // pred_check
      _
    $region123: #{san_forward.1} parent=1 // pred_check_branch
      %6982 = sbr.rel (0) target = $region125
    $region124: #{san_forward.1} parent=1 // pred_region
      %6984 = dma.done [#allocation11], 32
    $region125: #{san_forward.1} parent=1 // pred_fallthru
      _
    %6985 = vsyncpa [#allocation9], 1
    %6986 = vsyncpa [#allocation11], 1

</llo_original>
